<compile_context>
chip_gen: v6e
topology: v6e:2x2x1
jax: 0.10.0
libtpu: 0.0.40
codegen_flags: <defaults>
</compile_context>

<pallas_src>
import math
import functools

import jax
import jax.numpy as jnp
from jax import lax
from jax.experimental import pallas as pl
from jax.experimental.pallas import tpu as pltpu


# ----------------------------------------------------------------------------
# In-kernel helpers (2-D (rows, features) tiles; f32 VPU math, bf16 MXU operands)
# ----------------------------------------------------------------------------
def _layernorm(x, alpha, beta, eps=1e-6):
    # PyTorch `Norm`: alpha * (x - mean) / (std + eps) + bias; std unbiased (ddof=1),
    # eps added to the std.  Reciprocal goes to the EUP.
    d = x.shape[-1]
    mean = jnp.mean(x, axis=-1, keepdims=True)
    var = jnp.sum((x - mean) ** 2, axis=-1, keepdims=True) * (1.0 / (d - 1))
    inv = pl.reciprocal(jnp.sqrt(var) + eps, approx=True)
    return alpha * (x - mean) * inv + beta


def _linear(x, w, b):
    # y = x @ W^T + b   (nn.Linear convention: W (out, in), b (1, out)).
    y = lax.dot_general(x.astype(jnp.bfloat16), w.astype(jnp.bfloat16),
                        (((1,), (1,)), ((), ())),
                        preferred_element_type=jnp.float32)
    return y + b


def _mha_fold_wo(q_all, k_all, v_all, masks, wo, *, heads, bblk, sq, sk):
    """Multi-head attention for a block of `bblk` batch rows, with the output
    projection Wo folded into the per-head accumulation (no lane concatenate).

    q_all: (bblk*sq, d); k_all, v_all: (bblk*sk, d)
    masks: (bblk, 1, sk) or (bblk, sq, sk), 1 = keep / 0 = pad.
    wo:    (d, d) output projection weight (no bias here).
    Returns (bblk*sq, d) f32 = concat_h(softmax(qk)v) @ Wo^T.
    """
    d = wo.shape[0]
    dk = d // heads
    scale = 1.0 / math.sqrt(dk)
    wo_bf = wo.astype(jnp.bfloat16)

    rows = []
    for bi in range(bblk):                       # static unroll over batch rows
        q = q_all[bi * sq:(bi + 1) * sq, :]
        k = k_all[bi * sk:(bi + 1) * sk, :]
        v = v_all[bi * sk:(bi + 1) * sk, :]
        # additive mask hoisted out of the head loop (computed once per sublayer/row)
        neg = jnp.where(masks[bi] == 0.0, -1e9, 0.0)
        acc = jnp.zeros((sq, d), jnp.float32)
        for h in range(heads):                   # static unroll over heads
            sl = slice(h * dk, (h + 1) * dk)
            qh = q[:, sl].astype(jnp.bfloat16)
            kh = k[:, sl].astype(jnp.bfloat16)
            vh = v[:, sl].astype(jnp.bfloat16)
            sc = lax.dot_general(qh, kh, (((1,), (1,)), ((), ())),
                                 preferred_element_type=jnp.float32) * scale + neg
            m = jnp.max(sc, axis=-1, keepdims=True)
            e = jnp.exp(sc - m)
            p = e * pl.reciprocal(jnp.sum(e, axis=-1, keepdims=True), approx=True)
            oh = jnp.dot(p.astype(jnp.bfloat16), vh,
                         preferred_element_type=jnp.float32)          # (sq, dk)
            # fold into Wo: concat_h(oh) @ Wo^T == sum_h oh @ Wo[:, h*dk:(h+1)*dk]^T
            acc = acc + lax.dot_general(oh.astype(jnp.bfloat16), wo_bf[:, sl],
                                        (((1,), (1,)), ((), ())),
                                        preferred_element_type=jnp.float32)
        rows.append(acc)
    return rows[0] if bblk == 1 else jnp.concatenate(rows, axis=0)


# ----------------------------------------------------------------------------
# Fused encoder stack kernel: grid = (batch_blocks, n_layers), layer innermost.
# ----------------------------------------------------------------------------
def encoder_stack_kernel(x_ref, mask_ref,
                         n1_ref, wqkv_ref, bqkv_ref, wo_ref, bo_ref,
                         n2_ref, w1_ref, b1_ref, w2_ref, b2_ref,
                         fn_ref,
                         out_ref, x_scr, *, heads, bblk, seq):
    layer = pl.program_id(1)
    n_layers = pl.num_programs(1)
    d = x_scr.shape[-1]

    @pl.when(layer == 0)
    def _():
        x_scr[...] = x_ref[...].reshape(bblk * seq, d)   # load embeddings once per block

    x = x_scr[...]                        # (bblk*seq, d) residual stream, f32
    mask = mask_ref[...]                  # (bblk, 1, seq)

    # --- sublayer 1: pre-norm + multi-head self-attention + residual ---
    n1 = n1_ref[0]
    x2 = _layernorm(x, n1[0:1], n1[1:2])
    qkv = _linear(x2, wqkv_ref[0], bqkv_ref[0])                      # fused QKV
    attn = _mha_fold_wo(qkv[:, :d], qkv[:, d:2 * d], qkv[:, 2 * d:], mask, wo_ref[0],
                        heads=heads, bblk=bblk, sq=seq, sk=seq)
    x = x + attn + bo_ref[0]

    # --- sublayer 2: pre-norm + feed-forward + residual ---
    n2 = n2_ref[0]
    x2 = _layernorm(x, n2[0:1], n2[1:2])
    hid = jnp.maximum(_linear(x2, w1_ref[0], b1_ref[0]), 0.0)        # ReLU
    x = x + _linear(hid, w2_ref[0], b2_ref[0])

    x_scr[...] = x

    @pl.when(layer == n_layers - 1)
    def _():
        fn = fn_ref[...]
        out_ref[...] = _layernorm(x, fn[0:1], fn[1:2]).reshape(bblk, seq, d)


# ----------------------------------------------------------------------------
# Fused decoder stack kernel (+ final Norm at the last layer).
# ----------------------------------------------------------------------------
def decoder_stack_kernel(x_ref, eo_ref, smask_ref, tmask_ref,
                         n1_ref, wqkv_ref, bqkv_ref, wo1_ref, bo1_ref,
                         n2_ref, wq_ref, bq_ref, wkv_ref, bkv_ref, wo2_ref, bo2_ref,
                         n3_ref, w1_ref, b1_ref, w2_ref, b2_ref,
                         fn_ref,
                         out_ref, x_scr, *, heads, bblk, sq, sk):
    layer = pl.program_id(1)
    n_layers = pl.num_programs(1)
    d = x_scr.shape[-1]

    @pl.when(layer == 0)
    def _():
        x_scr[...] = x_ref[...].reshape(bblk * sq, d)

    x = x_scr[...]                        # (bblk*sq, d)
    eo = eo_ref[...].reshape(bblk * sk, d)
    smask = smask_ref[...]                # (bblk, 1, sk)
    tmask = tmask_ref[...]                # (bblk, sq, sq)

    # --- sublayer 1: masked self-attention ---
    n1 = n1_ref[0]
    x2 = _layernorm(x, n1[0:1], n1[1:2])
    qkv = _linear(x2, wqkv_ref[0], bqkv_ref[0])                      # fused QKV
    attn = _mha_fold_wo(qkv[:, :d], qkv[:, d:2 * d], qkv[:, 2 * d:], tmask, wo1_ref[0],
                        heads=heads, bblk=bblk, sq=sq, sk=sq)
    x = x + attn + bo1_ref[0]

    # --- sublayer 2: cross-attention over encoder outputs ---
    n2 = n2_ref[0]
    x2 = _layernorm(x, n2[0:1], n2[1:2])
    q = _linear(x2, wq_ref[0], bq_ref[0])
    kv = _linear(eo, wkv_ref[0], bkv_ref[0])                         # fused K/V
    attn = _mha_fold_wo(q, kv[:, :d], kv[:, d:], smask, wo2_ref[0],
                        heads=heads, bblk=bblk, sq=sq, sk=sk)
    x = x + attn + bo2_ref[0]

    # --- sublayer 3: feed-forward ---
    n3 = n3_ref[0]
    x2 = _layernorm(x, n3[0:1], n3[1:2])
    hid = jnp.maximum(_linear(x2, w1_ref[0], b1_ref[0]), 0.0)
    x = x + _linear(hid, w2_ref[0], b2_ref[0])

    x_scr[...] = x

    @pl.when(layer == n_layers - 1)
    def _():
        fn = fn_ref[...]
        out_ref[...] = _layernorm(x, fn[0:1], fn[1:2]).reshape(bblk, sq, d)


# ----------------------------------------------------------------------------
# Vocab projection kernel (out Linear), tiled over the vocab axis.
# ----------------------------------------------------------------------------
def out_proj_kernel(x_ref, w_ref, b_ref, o_ref, *, bblk, sq):
    d = x_ref.shape[-1]
    x = x_ref[...].reshape(bblk * sq, d)
    y = _linear(x, w_ref[...], b_ref[...])          # (bblk*sq, tv)
    o_ref[...] = y.reshape(bblk, sq, -1)


# ----------------------------------------------------------------------------
# Wrappers
# ----------------------------------------------------------------------------
def positional_encoding(max_len, d_model):
    pos = jnp.arange(max_len, dtype=jnp.float32)[:, None]
    i = jnp.arange(0, d_model, 2, dtype=jnp.float32)[None, :]
    div = jnp.exp(-jnp.log(10000.0) * i / d_model)
    pe = jnp.zeros((max_len, d_model), jnp.float32)
    pe = pe.at[:, 0::2].set(jnp.sin(pos * div))
    pe = pe.at[:, 1::2].set(jnp.cos(pos * div))
    return pe


def _lspec(shape):
    # one layer's slice of a (n_layers, *shape) stacked parameter
    return pl.BlockSpec((1,) + shape, lambda bi, l: (l,) + (0,) * len(shape))


def _cspec(shape):
    # parameter shared by every grid step
    return pl.BlockSpec(shape, lambda bi, l: (0,) * len(shape))


def _nbytes(a):
    return int(math.prod(a.shape)) * jnp.dtype(a.dtype).itemsize


def _pick_batch_block(b, s, cap_rows=512):
    # largest divisor of b whose row count (blk*s) stays within a sane VMEM footprint
    cap = max(1, cap_rows // max(1, s))
    blk = 1
    for cand in range(1, b + 1):
        if b % cand == 0 and cand <= cap:
            blk = cand
    return blk


def _pick_vocab_tile(vocab):
    for t in (2048, 1024, 512, 256, 128):
        if vocab % t == 0:
            return t
    return vocab


def _compiler_params(per_layer_weight_bytes, resident_bytes):
    # 2x for double-buffered per-layer weights + resident activations/consts + headroom.
    limit = int(2 * per_layer_weight_bytes + resident_bytes + (16 << 20))
    limit = max(32 << 20, min(limit, 100 << 20))
    return pltpu.CompilerParams(
        dimension_semantics=("parallel", "arbitrary"),
        vmem_limit_bytes=limit)


def encoder_forward(src, src_mask, params, heads):
    emb = params["src_emb"]
    b, s = src.shape
    d = emb.shape[1]
    enc = params["enc"]
    n_layers = enc["wqkv"].shape[0]
    dff = enc["w1"].shape[1]

    # plain-JAX glue: embedding gather + PositionalEncoder (x*sqrt(d) + pe)
    x = jnp.take(emb, src, axis=0) * math.sqrt(d) + positional_encoding(s, d)[None]
    mask = src_mask.astype(jnp.float32)

    bblk = _pick_batch_block(b, s)
    nb = b // bblk
    rows = bblk * s

    wstack_bytes = sum(_nbytes(v) for v in enc.values()) + _nbytes(params["enc_norm"])
    per_layer_w = wstack_bytes // n_layers
    act_bytes = rows * d * 4
    flops_layer = (2 * rows * d * 3 * d                       # fused QKV
                   + bblk * (4 * s * s * d + 2 * s * d * d)   # attention + Wo fold
                   + 4 * rows * d * dff)                      # FFN
    ce = pl.CostEstimate(
        flops=int(flops_layer * n_layers * nb),
        transcendentals=int((bblk * heads * s * s + 2 * rows) * n_layers * nb),
        bytes_accessed=int(wstack_bytes * nb + 2 * b * s * d * 4 + _nbytes(mask)))

    kernel = functools.partial(encoder_stack_kernel, heads=heads, bblk=bblk, seq=s)
    return pl.pallas_call(
        kernel,
        out_shape=jax.ShapeDtypeStruct((b, s, d), jnp.float32),
        grid=(nb, n_layers),
        in_specs=[
            pl.BlockSpec((bblk, s, d), lambda bi, l: (bi, 0, 0)),   # embeddings
            pl.BlockSpec((bblk, 1, s), lambda bi, l: (bi, 0, 0)),   # src mask
            _lspec((2, d)),                                         # norm1 (alpha, bias)
            _lspec((3 * d, d)), _lspec((1, 3 * d)),                 # Wqkv, bqkv
            _lspec((d, d)), _lspec((1, d)),                         # Wo, bo
            _lspec((2, d)),                                         # norm2
            _lspec((dff, d)), _lspec((1, dff)),                     # W1, b1
            _lspec((d, dff)), _lspec((1, d)),                       # W2, b2
            _cspec((2, d)),                                         # final encoder norm
        ],
        out_specs=pl.BlockSpec((bblk, s, d), lambda bi, l: (bi, 0, 0)),
        scratch_shapes=[pltpu.VMEM((rows, d), jnp.float32)],
        compiler_params=_compiler_params(per_layer_w, 4 * act_bytes),
        cost_estimate=ce,
    )(x.astype(jnp.float32), mask,
      enc["norm1"], enc["wqkv"], enc["bqkv"], enc["wo"], enc["bo"],
      enc["norm2"], enc["w1"], enc["b1"], enc["w2"], enc["b2"],
      params["enc_norm"])


def decoder_forward(trg, e_outputs, src_mask, trg_mask, params, heads):
    dec = params["dec"]
    b, s2 = trg.shape
    s1 = e_outputs.shape[1]
    d = params["trg_emb"].shape[1]
    vocab = params["wout"].shape[0]
    n_layers = dec["wqkv"].shape[0]
    dff = dec["w1"].shape[1]

    x = (jnp.take(params["trg_emb"], trg, axis=0) * math.sqrt(d)
         + positional_encoding(s2, d)[None])
    smask = src_mask.astype(jnp.float32)
    tmask = trg_mask.astype(jnp.float32)

    bblk = _pick_batch_block(b, max(s1, s2))
    nb = b // bblk
    rows = bblk * s2

    wstack_bytes = sum(_nbytes(v) for v in dec.values()) + _nbytes(params["dec_norm"])
    per_layer_w = wstack_bytes // n_layers
    act_bytes = bblk * (s1 + s2) * d * 4
    flops_layer = (2 * rows * d * 3 * d                             # self-attn QKV
                   + bblk * (4 * s2 * s2 * d + 2 * s2 * d * d)      # self-attn + Wo
                   + 2 * rows * d * d + 2 * bblk * s1 * d * 2 * d   # cross Q / KV
                   + bblk * (4 * s2 * s1 * d + 2 * s2 * d * d)      # cross-attn + Wo
                   + 4 * rows * d * dff)                            # FFN
    ce = pl.CostEstimate(
        flops=int(flops_layer * n_layers * nb),
        transcendentals=int((bblk * heads * (s2 * s2 + s2 * s1) + 3 * rows)
                            * n_layers * nb),
        bytes_accessed=int(wstack_bytes * nb + 2 * b * s2 * d * 4 + b * s1 * d * 4
                           + _nbytes(smask) + _nbytes(tmask)))

    kernel = functools.partial(decoder_stack_kernel, heads=heads, bblk=bblk, sq=s2, sk=s1)
    dec_out = pl.pallas_call(
        kernel,
        out_shape=jax.ShapeDtypeStruct((b, s2, d), jnp.float32),
        grid=(nb, n_layers),
        in_specs=[
            pl.BlockSpec((bblk, s2, d), lambda bi, l: (bi, 0, 0)),  # trg embeddings
            pl.BlockSpec((bblk, s1, d), lambda bi, l: (bi, 0, 0)),  # encoder outputs
            pl.BlockSpec((bblk, 1, s1), lambda bi, l: (bi, 0, 0)),  # src mask
            pl.BlockSpec((bblk, s2, s2), lambda bi, l: (bi, 0, 0)), # trg (causal) mask
            _lspec((2, d)),                                         # norm1
            _lspec((3 * d, d)), _lspec((1, 3 * d)),                 # self-attn Wqkv, b
            _lspec((d, d)), _lspec((1, d)),                         # self-attn Wo, bo
            _lspec((2, d)),                                         # norm2
            _lspec((d, d)), _lspec((1, d)),                         # cross-attn Wq, bq
            _lspec((2 * d, d)), _lspec((1, 2 * d)),                 # cross-attn Wkv, b
            _lspec((d, d)), _lspec((1, d)),                         # cross-attn Wo, bo
            _lspec((2, d)),                                         # norm3
            _lspec((dff, d)), _lspec((1, dff)),                     # W1, b1
            _lspec((d, dff)), _lspec((1, d)),                       # W2, b2
            _cspec((2, d)),                                         # final decoder norm
        ],
        out_specs=pl.BlockSpec((bblk, s2, d), lambda bi, l: (bi, 0, 0)),
        scratch_shapes=[pltpu.VMEM((rows, d), jnp.float32)],
        compiler_params=_compiler_params(per_layer_w, 4 * act_bytes),
        cost_estimate=ce,
    )(x.astype(jnp.float32), e_outputs, smask, tmask,
      dec["norm1"], dec["wqkv"], dec["bqkv"], dec["wo1"], dec["bo1"],
      dec["norm2"], dec["wq"], dec["bq"], dec["wkv"], dec["bkv"],
      dec["wo2"], dec["bo2"],
      dec["norm3"], dec["w1"], dec["b1"], dec["w2"], dec["b2"],
      params["dec_norm"])

    # ---- separate vocab projection: wout streams through VMEM in vocab tiles ----
    tv = _pick_vocab_tile(vocab)
    nv = vocab // tv
    ce_out = pl.CostEstimate(
        flops=int(2 * b * s2 * d * vocab),
        transcendentals=0,
        bytes_accessed=int(_nbytes(params["wout"]) * nb + b * s2 * d * 4
                           + b * s2 * vocab * 4))
    proj = functools.partial(out_proj_kernel, bblk=bblk, sq=s2)
    return pl.pallas_call(
        proj,
        out_shape=jax.ShapeDtypeStruct((b, s2, vocab), jnp.float32),
        grid=(nb, nv),
        in_specs=[
            pl.BlockSpec((bblk, s2, d), lambda bi, vi: (bi, 0, 0)),
            pl.BlockSpec((tv, d), lambda bi, vi: (vi, 0)),
            pl.BlockSpec((1, tv), lambda bi, vi: (0, vi)),
        ],
        out_specs=pl.BlockSpec((bblk, s2, tv), lambda bi, vi: (bi, 0, vi)),
        compiler_params=pltpu.CompilerParams(
            dimension_semantics=("parallel", "parallel")),
        cost_estimate=ce_out,
    )(dec_out, params["wout"], params["bout"])


def transformer_forward(src, trg, src_mask, trg_mask, params, *, heads):
    e_out = encoder_forward(src, src_mask, params, heads)                  # Pallas stack #1
    return decoder_forward(trg, e_out, src_mask, trg_mask, params, heads)  # stack #2 + proj


# ----------------------------------------------------------------------------
# Parameter construction (deterministic, synthetic).  Matmul weights are stored
# in bf16 (halved DMA); biases / norm params in f32.
# ----------------------------------------------------------------------------
def make_params(key, src_vocab, trg_vocab, d_model, n_layers, d_ff):
    cnt = [0]

    def nk():
        cnt[0] += 1
        return jax.random.fold_in(key, cnt[0])

    def weight(out_dim, in_dim):
        w = jax.random.normal(nk(), (out_dim, in_dim), jnp.float32) / math.sqrt(in_dim)
        return w.astype(jnp.bfloat16)

    def bias(n):
        return 0.02 * jax.random.normal(nk(), (1, n), jnp.float32)

    def norm():
        a = 1.0 + 0.1 * jax.random.normal(nk(), (d_model,), jnp.float32)
        b = 0.05 * jax.random.normal(nk(), (d_model,), jnp.float32)
        return jnp.stack([a, b], axis=0)                            # (2, d): alpha, bias

    enc_layers = []
    for _ in range(n_layers):
        enc_layers.append(dict(
            norm1=norm(),
            wqkv=weight(3 * d_model, d_model), bqkv=bias(3 * d_model),
            wo=weight(d_model, d_model), bo=bias(d_model),
            norm2=norm(),
            w1=weight(d_ff, d_model), b1=bias(d_ff),
            w2=weight(d_model, d_ff), b2=bias(d_model)))
    enc = {k: jnp.stack([l[k] for l in enc_layers]) for k in enc_layers[0]}

    dec_layers = []
    for _ in range(n_layers):
        dec_layers.append(dict(
            norm1=norm(),
            wqkv=weight(3 * d_model, d_model), bqkv=bias(3 * d_model),
            wo1=weight(d_model, d_model), bo1=bias(d_model),
            norm2=norm(),
            wq=weight(d_model, d_model), bq=bias(d_model),
            wkv=weight(2 * d_model, d_model), bkv=bias(2 * d_model),
            wo2=weight(d_model, d_model), bo2=bias(d_model),
            norm3=norm(),
            w1=weight(d_ff, d_model), b1=bias(d_ff),
            w2=weight(d_model, d_ff), b2=bias(d_model)))
    dec = {k: jnp.stack([l[k] for l in dec_layers]) for k in dec_layers[0]}

    return dict(
        src_emb=0.05 * jax.random.normal(nk(), (src_vocab, d_model), jnp.float32),
        trg_emb=0.05 * jax.random.normal(nk(), (trg_vocab, d_model), jnp.float32),
        enc=enc, enc_norm=norm(),
        dec=dec, dec_norm=norm(),
        wout=weight(trg_vocab, d_model), bout=bias(trg_vocab))


# ----------------------------------------------------------------------------
# Pure-JAX f32 reference (mirrors the PyTorch Transformer in eval mode)
# ----------------------------------------------------------------------------
def ref_transformer(src, trg, src_mask, trg_mask, params, heads):
    d = params["src_emb"].shape[1]
    s1 = src.shape[1]
    s2 = trg.shape[1]
    dk = d // heads

    def f32(w):
        return w.astype(jnp.float32)

    def ln(x, nb):
        mean = x.mean(-1, keepdims=True)
        var = ((x - mean) ** 2).sum(-1, keepdims=True) / (x.shape[-1] - 1)
        return nb[0] * (x - mean) / (jnp.sqrt(var) + 1e-6) + nb[1]

    def mha(q, k, v, mask):
        bq, sq, _ = q.shape
        sk = k.shape[1]
        qh = q.reshape(bq, sq, heads, dk).transpose(0, 2, 1, 3)
        kh = k.reshape(bq, sk, heads, dk).transpose(0, 2, 1, 3)
        vh = v.reshape(bq, sk, heads, dk).transpose(0, 2, 1, 3)
        sc = jnp.einsum("bhqe,bhke->bhqk", qh, kh) / math.sqrt(dk)
        sc = jnp.where(mask[:, None] == 0, -1e9, sc)
        p = jax.nn.softmax(sc, axis=-1)
        o = jnp.einsum("bhqk,bhke->bhqe", p, vh)
        return o.transpose(0, 2, 1, 3).reshape(bq, sq, d)

    smask = src_mask.astype(jnp.float32)
    tmask = trg_mask.astype(jnp.float32)

    # encoder
    x = jnp.take(params["src_emb"], src, axis=0) * math.sqrt(d) + positional_encoding(s1, d)[None]
    enc = params["enc"]
    for l in range(enc["wqkv"].shape[0]):
        x2 = ln(x, enc["norm1"][l])
        qkv = x2 @ f32(enc["wqkv"][l]).T + enc["bqkv"][l]
        q, k, v = qkv[..., :d], qkv[..., d:2 * d], qkv[..., 2 * d:]
        x = x + (mha(q, k, v, smask) @ f32(enc["wo"][l]).T + enc["bo"][l])
        x2 = ln(x, enc["norm2"][l])
        hid = jnp.maximum(x2 @ f32(enc["w1"][l]).T + enc["b1"][l], 0.0)
        x = x + (hid @ f32(enc["w2"][l]).T + enc["b2"][l])
    e_out = ln(x, params["enc_norm"])

    # decoder
    x = jnp.take(params["trg_emb"], trg, axis=0) * math.sqrt(d) + positional_encoding(s2, d)[None]
    dec = params["dec"]
    for l in range(dec["wqkv"].shape[0]):
        x2 = ln(x, dec["norm1"][l])
        qkv = x2 @ f32(dec["wqkv"][l]).T + dec["bqkv"][l]
        q, k, v = qkv[..., :d], qkv[..., d:2 * d], qkv[..., 2 * d:]
        x = x + (mha(q, k, v, tmask) @ f32(dec["wo1"][l]).T + dec["bo1"][l])
        x2 = ln(x, dec["norm2"][l])
        q = x2 @ f32(dec["wq"][l]).T + dec["bq"][l]
        kv = e_out @ f32(dec["wkv"][l]).T + dec["bkv"][l]
        k, v = kv[..., :d], kv[..., d:]
        x = x + (mha(q, k, v, smask) @ f32(dec["wo2"][l]).T + dec["bo2"][l])
        x2 = ln(x, dec["norm3"][l])
        hid = jnp.maximum(x2 @ f32(dec["w1"][l]).T + dec["b1"][l], 0.0)
        x = x + (hid @ f32(dec["w2"][l]).T + dec["b2"][l])
    x = ln(x, params["dec_norm"])
    return x @ f32(params["wout"]).T + params["bout"]


# ----------------------------------------------------------------------------
if __name__ == "__main__":
    # small shapes consistent with the module
    src_vocab, trg_vocab = 130, 128          # trg_vocab = 128 -> lane-dense logits store
    d_model, n_layers, heads, d_ff = 32, 2, 4, 64
    batch, seq_src, seq_trg = 2, 8, 8

    key = jax.random.PRNGKey(0)
    k_src, k_trg, k_par = jax.random.split(key, 3)
    src = jax.random.randint(k_src, (batch, seq_src), 0, src_vocab, dtype=jnp.int32)
    trg = jax.random.randint(k_trg, (batch, seq_trg), 0, trg_vocab, dtype=jnp.int32)

    src_lens = jnp.array([seq_src, 5], jnp.int32)
    trg_lens = jnp.array([seq_trg, 6], jnp.int32)
    src_mask = (jnp.arange(seq_src)[None, None, :] < src_lens[:, None, None]).astype(jnp.float32)
    causal = jnp.tril(jnp.ones((seq_trg, seq_trg), jnp.float32))
    trg_mask = ((jnp.arange(seq_trg)[None, None, :] < trg_lens[:, None, None]) * causal[None]
                ).astype(jnp.float32)

    params = make_params(k_par, src_vocab, trg_vocab, d_model, n_layers, d_ff)

    fwd = jax.jit(functools.partial(transformer_forward, heads=heads))
    out = jax.block_until_ready(fwd(src, trg, src_mask, trg_mask, params))

    ref = ref_transformer(src, trg, src_mask, trg_mask, params, heads)
    assert out.shape == (batch, seq_trg, trg_vocab)
    # Tolerance is looser than f32-vs-f32 because the kernels feed bf16 operands to the
    # MXU (with f32 accumulation) and use approx EUP reciprocals; the reference is pure f32.
    assert jnp.allclose(out, ref, atol=5e-2, rtol=5e-2), float(jnp.max(jnp.abs(out - ref)))

    print("KERNEL_OK")
</pallas_src>

<mosaic_0001>
module attributes {stable_mosaic.version = 11 : i64} {
  func.func @encoder_stack_kernel(%arg0: i32, %arg1: i32, %arg2: memref<2x8x32xf32, #tpu.memory_space<vmem>>, %arg3: memref<2x1x8xf32, #tpu.memory_space<vmem>>, %arg4: memref<1x2x32xf32, #tpu.memory_space<vmem>>, %arg5: memref<1x96x32xbf16, #tpu.memory_space<vmem>>, %arg6: memref<1x1x96xf32, #tpu.memory_space<vmem>>, %arg7: memref<1x32x32xbf16, #tpu.memory_space<vmem>>, %arg8: memref<1x1x32xf32, #tpu.memory_space<vmem>>, %arg9: memref<1x2x32xf32, #tpu.memory_space<vmem>>, %arg10: memref<1x64x32xbf16, #tpu.memory_space<vmem>>, %arg11: memref<1x1x64xf32, #tpu.memory_space<vmem>>, %arg12: memref<1x32x64xbf16, #tpu.memory_space<vmem>>, %arg13: memref<1x1x32xf32, #tpu.memory_space<vmem>>, %arg14: memref<2x32xf32, #tpu.memory_space<vmem>>, %arg15: memref<2x8x32xf32, #tpu.memory_space<vmem>>, %arg16: memref<16x32xf32, #tpu.memory_space<vmem>>) attributes {dimension_semantics = [#tpu.dimension_semantics<parallel>, #tpu.dimension_semantics<arbitrary>], iteration_bounds = array<i64: 1, 2>, scalar_prefetch = 0 : i64, scratch_operands = 1 : i64, tpu.core_type = #tpu.core_type<tc>, window_params = [{transform_indices = @transform_0, window_bounds = array<i64: 2, 8, 32>}, {transform_indices = @transform_1, window_bounds = array<i64: 2, 1, 8>}, {transform_indices = @transform_2, window_bounds = array<i64: 1, 2, 32>}, {transform_indices = @transform_3, window_bounds = array<i64: 1, 96, 32>}, {transform_indices = @transform_4, window_bounds = array<i64: 1, 1, 96>}, {transform_indices = @transform_5, window_bounds = array<i64: 1, 32, 32>}, {transform_indices = @transform_6, window_bounds = array<i64: 1, 1, 32>}, {transform_indices = @transform_7, window_bounds = array<i64: 1, 2, 32>}, {transform_indices = @transform_8, window_bounds = array<i64: 1, 64, 32>}, {transform_indices = @transform_9, window_bounds = array<i64: 1, 1, 64>}, {transform_indices = @transform_10, window_bounds = array<i64: 1, 32, 64>}, {transform_indices = @transform_11, window_bounds = array<i64: 1, 1, 32>}, {pipeline_mode = #tpu.pipeline_mode<synchronous>, transform_indices = @transform_12, window_bounds = array<i64: 2, 32>}, {transform_indices = @transform_13, window_bounds = array<i64: 2, 8, 32>}]} {
    %c0_i32 = arith.constant 0 : i32
    %0 = arith.cmpi eq, %arg1, %c0_i32 : i32
    %1 = arith.extui %0 : i1 to i32
    %c0_i32_0 = arith.constant 0 : i32
    %2 = arith.cmpi ne, %1, %c0_i32_0 : i32
    scf.if %2 {
      %c0_107 = arith.constant 0 : index
      %c0_108 = arith.constant 0 : index
      %c0_109 = arith.constant 0 : index
      %339 = vector.load %arg2[%c0_107, %c0_108, %c0_109] : memref<2x8x32xf32, #tpu.memory_space<vmem>>, vector<2x8x32xf32>
      %340 = vector.shape_cast %339 : vector<2x8x32xf32> to vector<16x32xf32>
      %c0_110 = arith.constant 0 : index
      %c0_111 = arith.constant 0 : index
      %341 = vector.load %arg16[%c0_110, %c0_111] : memref<16x32xf32, #tpu.memory_space<vmem>>, vector<16x32xf32>
      tpu.vector_store %arg16[%c0_110, %c0_111], %340 {strides = array<i32>} : memref<16x32xf32, #tpu.memory_space<vmem>>, vector<16x32xf32>,
    } else {
    }
    %c0 = arith.constant 0 : index
    %c0_1 = arith.constant 0 : index
    %3 = vector.load %arg16[%c0, %c0_1] : memref<16x32xf32, #tpu.memory_space<vmem>>, vector<16x32xf32>
    %c0_2 = arith.constant 0 : index
    %c0_3 = arith.constant 0 : index
    %c0_4 = arith.constant 0 : index
    %4 = vector.load %arg3[%c0_2, %c0_3, %c0_4] : memref<2x1x8xf32, #tpu.memory_space<vmem>>, vector<2x1x8xf32>
    %c0_5 = arith.constant 0 : index
    %c0_6 = arith.constant 0 : index
    %c0_7 = arith.constant 0 : index
    %5 = vector.load %arg4[%c0_5, %c0_6, %c0_7] : memref<1x2x32xf32, #tpu.memory_space<vmem>>, vector<1x2x32xf32>
    %6 = vector.shape_cast %5 : vector<1x2x32xf32> to vector<2x32xf32>
    %7 = vector.extract_strided_slice %6 {offsets = [0, 0], sizes = [1, 32], strides = [1, 1]} : vector<2x32xf32> to vector<1x32xf32>
    %8 = vector.extract_strided_slice %6 {offsets = [1, 0], sizes = [1, 32], strides = [1, 1]} : vector<2x32xf32> to vector<1x32xf32>
    %cst = arith.constant dense<0.000000e+00> : vector<16xf32>
    %9 = vector.multi_reduction <add>, %3, %cst [1] : vector<16x32xf32> to vector<16xf32>
    %10 = vector.shape_cast %9 : vector<16xf32> to vector<16x1xf32>
    %cst_8 = arith.constant 3.200000e+01 : f32
    %11 = vector.broadcast %cst_8 : f32 to vector<16x1xf32>
    %12 = arith.divf %10, %11 : vector<16x1xf32>
    %13 = vector.broadcast %12 : vector<16x1xf32> to vector<16x32xf32>
    %14 = arith.subf %3, %13 : vector<16x32xf32>
    %15 = arith.mulf %14, %14 : vector<16x32xf32>
    %cst_9 = arith.constant dense<0.000000e+00> : vector<16xf32>
    %16 = vector.multi_reduction <add>, %15, %cst_9 [1] : vector<16x32xf32> to vector<16xf32>
    %17 = vector.shape_cast %16 : vector<16xf32> to vector<16x1xf32>
    %cst_10 = arith.constant 0.0322580636 : f32
    %18 = vector.broadcast %cst_10 : f32 to vector<16x1xf32>
    %19 = arith.mulf %17, %18 : vector<16x1xf32>
    %20 = math.sqrt %19 : vector<16x1xf32>
    %cst_11 = arith.constant 9.99999997E-7 : f32
    %21 = vector.broadcast %cst_11 : f32 to vector<16x1xf32>
    %22 = arith.addf %20, %21 : vector<16x1xf32>
    %23 = tpu.reciprocal %22 {approx = true} : vector<16x1xf32> -> vector<16x1xf32>
    %24 = vector.broadcast %12 : vector<16x1xf32> to vector<16x32xf32>
    %25 = arith.subf %3, %24 : vector<16x32xf32>
    %26 = vector.broadcast %7 : vector<1x32xf32> to vector<16x32xf32>
    %27 = arith.mulf %26, %25 : vector<16x32xf32>
    %28 = vector.broadcast %23 : vector<16x1xf32> to vector<16x32xf32>
    %29 = arith.mulf %27, %28 : vector<16x32xf32>
    %30 = vector.broadcast %8 : vector<1x32xf32> to vector<16x32xf32>
    %31 = arith.addf %29, %30 : vector<16x32xf32>
    %c0_12 = arith.constant 0 : index
    %c0_13 = arith.constant 0 : index
    %c0_14 = arith.constant 0 : index
    %32 = vector.load %arg5[%c0_12, %c0_13, %c0_14] : memref<1x96x32xbf16, #tpu.memory_space<vmem>>, vector<1x96x32xbf16>
    %33 = vector.shape_cast %32 : vector<1x96x32xbf16> to vector<96x32xbf16>
    %c0_15 = arith.constant 0 : index
    %c0_16 = arith.constant 0 : index
    %c0_17 = arith.constant 0 : index
    %34 = vector.load %arg6[%c0_15, %c0_16, %c0_17] : memref<1x1x96xf32, #tpu.memory_space<vmem>>, vector<1x1x96xf32>
    %35 = vector.shape_cast %34 : vector<1x1x96xf32> to vector<1x96xf32>
    %36 = arith.truncf %31 : vector<16x32xf32> to vector<16x32xbf16>
    %cst_18 = arith.constant dense<0.000000e+00> : vector<16x96xf32>
    %37 = tpu.matmul %36, %33, %cst_18 {dimension_numbers = #tpu.dot_dimension_numbers<[1], [1], [0], [0], [0, 0, 1, 0], [], []>} : vector<16x32xbf16>, vector<96x32xbf16>, vector<16x96xf32> -> vector<16x96xf32>
    %38 = vector.broadcast %35 : vector<1x96xf32> to vector<16x96xf32>
    %39 = arith.addf %37, %38 : vector<16x96xf32>
    %40 = vector.extract_strided_slice %39 {offsets = [0, 0], sizes = [16, 32], strides = [1, 1]} : vector<16x96xf32> to vector<16x32xf32>
    %41 = vector.extract_strided_slice %39 {offsets = [0, 32], sizes = [16, 32], strides = [1, 1]} : vector<16x96xf32> to vector<16x32xf32>
    %42 = vector.extract_strided_slice %39 {offsets = [0, 64], sizes = [16, 32], strides = [1, 1]} : vector<16x96xf32> to vector<16x32xf32>
    %c0_19 = arith.constant 0 : index
    %c0_20 = arith.constant 0 : index
    %c0_21 = arith.constant 0 : index
    %43 = vector.load %arg7[%c0_19, %c0_20, %c0_21] : memref<1x32x32xbf16, #tpu.memory_space<vmem>>, vector<1x32x32xbf16>
    %44 = vector.shape_cast %43 : vector<1x32x32xbf16> to vector<32x32xbf16>
    %45 = vector.extract_strided_slice %40 {offsets = [0, 0], sizes = [8, 32], strides = [1, 1]} : vector<16x32xf32> to vector<8x32xf32>
    %46 = vector.extract_strided_slice %41 {offsets = [0, 0], sizes = [8, 32], strides = [1, 1]} : vector<16x32xf32> to vector<8x32xf32>
    %47 = vector.extract_strided_slice %42 {offsets = [0, 0], sizes = [8, 32], strides = [1, 1]} : vector<16x32xf32> to vector<8x32xf32>
    %48 = vector.extract_strided_slice %4 {offsets = [0, 0, 0], sizes = [1, 1, 8], strides = [1, 1, 1]} : vector<2x1x8xf32> to vector<1x1x8xf32>
    %49 = vector.shape_cast %48 : vector<1x1x8xf32> to vector<1x8xf32>
    %cst_22 = arith.constant 0.000000e+00 : f32
    %50 = vector.broadcast %cst_22 : f32 to vector<1x8xf32>
    %51 = arith.cmpf oeq, %49, %50 : vector<1x8xf32>
    %cst_23 = arith.constant -1.000000e+09 : f32
    %cst_24 = arith.constant 0.000000e+00 : f32
    %52 = vector.broadcast %cst_23 : f32 to vector<1x8xf32>
    %53 = vector.broadcast %cst_24 : f32 to vector<1x8xf32>
    %54 = arith.select %51, %52, %53 : vector<1x8xi1>, vector<1x8xf32>
    %cst_25 = arith.constant 0.000000e+00 : f32
    %55 = vector.broadcast %cst_25 : f32 to vector<8x32xf32>
    %56 = vector.extract_strided_slice %45 {offsets = [0, 0], sizes = [8, 8], strides = [1, 1]} : vector<8x32xf32> to vector<8x8xf32>
    %57 = arith.truncf %56 : vector<8x8xf32> to vector<8x8xbf16>
    %58 = vector.extract_strided_slice %46 {offsets = [0, 0], sizes = [8, 8], strides = [1, 1]} : vector<8x32xf32> to vector<8x8xf32>
    %59 = arith.truncf %58 : vector<8x8xf32> to vector<8x8xbf16>
    %60 = vector.extract_strided_slice %47 {offsets = [0, 0], sizes = [8, 8], strides = [1, 1]} : vector<8x32xf32> to vector<8x8xf32>
    %61 = arith.truncf %60 : vector<8x8xf32> to vector<8x8xbf16>
    %cst_26 = arith.constant dense<0.000000e+00> : vector<8x8xf32>
    %62 = tpu.matmul %57, %59, %cst_26 {dimension_numbers = #tpu.dot_dimension_numbers<[1], [1], [0], [0], [0, 0, 1, 0], [], []>} : vector<8x8xbf16>, vector<8x8xbf16>, vector<8x8xf32> -> vector<8x8xf32>
    %cst_27 = arith.constant 0.353553385 : f32
    %63 = vector.broadcast %cst_27 : f32 to vector<8x8xf32>
    %64 = arith.mulf %62, %63 : vector<8x8xf32>
    %65 = vector.broadcast %54 : vector<1x8xf32> to vector<8x8xf32>
    %66 = arith.addf %64, %65 : vector<8x8xf32>
    %cst_28 = arith.constant dense<0xFF800000> : vector<8xf32>
    %67 = vector.multi_reduction <maximumf>, %66, %cst_28 [1] : vector<8x8xf32> to vector<8xf32>
    %68 = vector.shape_cast %67 : vector<8xf32> to vector<8x1xf32>
    %69 = vector.broadcast %68 : vector<8x1xf32> to vector<8x8xf32>
    %70 = arith.subf %66, %69 : vector<8x8xf32>
    %71 = math.exp %70 : vector<8x8xf32>
    %cst_29 = arith.constant dense<0.000000e+00> : vector<8xf32>
    %72 = vector.multi_reduction <add>, %71, %cst_29 [1] : vector<8x8xf32> to vector<8xf32>
    %73 = vector.shape_cast %72 : vector<8xf32> to vector<8x1xf32>
    %74 = tpu.reciprocal %73 {approx = true} : vector<8x1xf32> -> vector<8x1xf32>
    %75 = vector.broadcast %74 : vector<8x1xf32> to vector<8x8xf32>
    %76 = arith.mulf %71, %75 : vector<8x8xf32>
    %77 = arith.truncf %76 : vector<8x8xf32> to vector<8x8xbf16>
    %cst_30 = arith.constant dense<0.000000e+00> : vector<8x8xf32>
    %78 = tpu.matmul %77, %61, %cst_30 {dimension_numbers = #tpu.dot_dimension_numbers<[1], [0], [0], [1], [0, 0, 1, 1], [], []>} : vector<8x8xbf16>, vector<8x8xbf16>, vector<8x8xf32> -> vector<8x8xf32>
    %79 = arith.truncf %78 : vector<8x8xf32> to vector<8x8xbf16>
    %80 = vector.extract_strided_slice %44 {offsets = [0, 0], sizes = [32, 8], strides = [1, 1]} : vector<32x32xbf16> to vector<32x8xbf16>
    %cst_31 = arith.constant dense<0.000000e+00> : vector<8x32xf32>
    %81 = tpu.matmul %79, %80, %cst_31 {dimension_numbers = #tpu.dot_dimension_numbers<[1], [1], [0], [0], [0, 0, 1, 0], [], []>} : vector<8x8xbf16>, vector<32x8xbf16>, vector<8x32xf32> -> vector<8x32xf32>
    %82 = arith.addf %55, %81 : vector<8x32xf32>
    %83 = vector.extract_strided_slice %45 {offsets = [0, 8], sizes = [8, 8], strides = [1, 1]} : vector<8x32xf32> to vector<8x8xf32>
    %84 = arith.truncf %83 : vector<8x8xf32> to vector<8x8xbf16>
    %85 = vector.extract_strided_slice %46 {offsets = [0, 8], sizes = [8, 8], strides = [1, 1]} : vector<8x32xf32> to vector<8x8xf32>
    %86 = arith.truncf %85 : vector<8x8xf32> to vector<8x8xbf16>
    %87 = vector.extract_strided_slice %47 {offsets = [0, 8], sizes = [8, 8], strides = [1, 1]} : vector<8x32xf32> to vector<8x8xf32>
    %88 = arith.truncf %87 : vector<8x8xf32> to vector<8x8xbf16>
    %cst_32 = arith.constant dense<0.000000e+00> : vector<8x8xf32>
    %89 = tpu.matmul %84, %86, %cst_32 {dimension_numbers = #tpu.dot_dimension_numbers<[1], [1], [0], [0], [0, 0, 1, 0], [], []>} : vector<8x8xbf16>, vector<8x8xbf16>, vector<8x8xf32> -> vector<8x8xf32>
    %cst_33 = arith.constant 0.353553385 : f32
    %90 = vector.broadcast %cst_33 : f32 to vector<8x8xf32>
    %91 = arith.mulf %89, %90 : vector<8x8xf32>
    %92 = vector.broadcast %54 : vector<1x8xf32> to vector<8x8xf32>
    %93 = arith.addf %91, %92 : vector<8x8xf32>
    %cst_34 = arith.constant dense<0xFF800000> : vector<8xf32>
    %94 = vector.multi_reduction <maximumf>, %93, %cst_34 [1] : vector<8x8xf32> to vector<8xf32>
    %95 = vector.shape_cast %94 : vector<8xf32> to vector<8x1xf32>
    %96 = vector.broadcast %95 : vector<8x1xf32> to vector<8x8xf32>
    %97 = arith.subf %93, %96 : vector<8x8xf32>
    %98 = math.exp %97 : vector<8x8xf32>
    %cst_35 = arith.constant dense<0.000000e+00> : vector<8xf32>
    %99 = vector.multi_reduction <add>, %98, %cst_35 [1] : vector<8x8xf32> to vector<8xf32>
    %100 = vector.shape_cast %99 : vector<8xf32> to vector<8x1xf32>
    %101 = tpu.reciprocal %100 {approx = true} : vector<8x1xf32> -> vector<8x1xf32>
    %102 = vector.broadcast %101 : vector<8x1xf32> to vector<8x8xf32>
    %103 = arith.mulf %98, %102 : vector<8x8xf32>
    %104 = arith.truncf %103 : vector<8x8xf32> to vector<8x8xbf16>
    %cst_36 = arith.constant dense<0.000000e+00> : vector<8x8xf32>
    %105 = tpu.matmul %104, %88, %cst_36 {dimension_numbers = #tpu.dot_dimension_numbers<[1], [0], [0], [1], [0, 0, 1, 1], [], []>} : vector<8x8xbf16>, vector<8x8xbf16>, vector<8x8xf32> -> vector<8x8xf32>
    %106 = arith.truncf %105 : vector<8x8xf32> to vector<8x8xbf16>
    %107 = vector.extract_strided_slice %44 {offsets = [0, 8], sizes = [32, 8], strides = [1, 1]} : vector<32x32xbf16> to vector<32x8xbf16>
    %cst_37 = arith.constant dense<0.000000e+00> : vector<8x32xf32>
    %108 = tpu.matmul %106, %107, %cst_37 {dimension_numbers = #tpu.dot_dimension_numbers<[1], [1], [0], [0], [0, 0, 1, 0], [], []>} : vector<8x8xbf16>, vector<32x8xbf16>, vector<8x32xf32> -> vector<8x32xf32>
    %109 = arith.addf %82, %108 : vector<8x32xf32>
    %110 = vector.extract_strided_slice %45 {offsets = [0, 16], sizes = [8, 8], strides = [1, 1]} : vector<8x32xf32> to vector<8x8xf32>
    %111 = arith.truncf %110 : vector<8x8xf32> to vector<8x8xbf16>
    %112 = vector.extract_strided_slice %46 {offsets = [0, 16], sizes = [8, 8], strides = [1, 1]} : vector<8x32xf32> to vector<8x8xf32>
    %113 = arith.truncf %112 : vector<8x8xf32> to vector<8x8xbf16>
    %114 = vector.extract_strided_slice %47 {offsets = [0, 16], sizes = [8, 8], strides = [1, 1]} : vector<8x32xf32> to vector<8x8xf32>
    %115 = arith.truncf %114 : vector<8x8xf32> to vector<8x8xbf16>
    %cst_38 = arith.constant dense<0.000000e+00> : vector<8x8xf32>
    %116 = tpu.matmul %111, %113, %cst_38 {dimension_numbers = #tpu.dot_dimension_numbers<[1], [1], [0], [0], [0, 0, 1, 0], [], []>} : vector<8x8xbf16>, vector<8x8xbf16>, vector<8x8xf32> -> vector<8x8xf32>
    %cst_39 = arith.constant 0.353553385 : f32
    %117 = vector.broadcast %cst_39 : f32 to vector<8x8xf32>
    %118 = arith.mulf %116, %117 : vector<8x8xf32>
    %119 = vector.broadcast %54 : vector<1x8xf32> to vector<8x8xf32>
    %120 = arith.addf %118, %119 : vector<8x8xf32>
    %cst_40 = arith.constant dense<0xFF800000> : vector<8xf32>
    %121 = vector.multi_reduction <maximumf>, %120, %cst_40 [1] : vector<8x8xf32> to vector<8xf32>
    %122 = vector.shape_cast %121 : vector<8xf32> to vector<8x1xf32>
    %123 = vector.broadcast %122 : vector<8x1xf32> to vector<8x8xf32>
    %124 = arith.subf %120, %123 : vector<8x8xf32>
    %125 = math.exp %124 : vector<8x8xf32>
    %cst_41 = arith.constant dense<0.000000e+00> : vector<8xf32>
    %126 = vector.multi_reduction <add>, %125, %cst_41 [1] : vector<8x8xf32> to vector<8xf32>
    %127 = vector.shape_cast %126 : vector<8xf32> to vector<8x1xf32>
    %128 = tpu.reciprocal %127 {approx = true} : vector<8x1xf32> -> vector<8x1xf32>
    %129 = vector.broadcast %128 : vector<8x1xf32> to vector<8x8xf32>
    %130 = arith.mulf %125, %129 : vector<8x8xf32>
    %131 = arith.truncf %130 : vector<8x8xf32> to vector<8x8xbf16>
    %cst_42 = arith.constant dense<0.000000e+00> : vector<8x8xf32>
    %132 = tpu.matmul %131, %115, %cst_42 {dimension_numbers = #tpu.dot_dimension_numbers<[1], [0], [0], [1], [0, 0, 1, 1], [], []>} : vector<8x8xbf16>, vector<8x8xbf16>, vector<8x8xf32> -> vector<8x8xf32>
    %133 = arith.truncf %132 : vector<8x8xf32> to vector<8x8xbf16>
    %134 = vector.extract_strided_slice %44 {offsets = [0, 16], sizes = [32, 8], strides = [1, 1]} : vector<32x32xbf16> to vector<32x8xbf16>
    %cst_43 = arith.constant dense<0.000000e+00> : vector<8x32xf32>
    %135 = tpu.matmul %133, %134, %cst_43 {dimension_numbers = #tpu.dot_dimension_numbers<[1], [1], [0], [0], [0, 0, 1, 0], [], []>} : vector<8x8xbf16>, vector<32x8xbf16>, vector<8x32xf32> -> vector<8x32xf32>
    %136 = arith.addf %109, %135 : vector<8x32xf32>
    %137 = vector.extract_strided_slice %45 {offsets = [0, 24], sizes = [8, 8], strides = [1, 1]} : vector<8x32xf32> to vector<8x8xf32>
    %138 = arith.truncf %137 : vector<8x8xf32> to vector<8x8xbf16>
    %139 = vector.extract_strided_slice %46 {offsets = [0, 24], sizes = [8, 8], strides = [1, 1]} : vector<8x32xf32> to vector<8x8xf32>
    %140 = arith.truncf %139 : vector<8x8xf32> to vector<8x8xbf16>
    %141 = vector.extract_strided_slice %47 {offsets = [0, 24], sizes = [8, 8], strides = [1, 1]} : vector<8x32xf32> to vector<8x8xf32>
    %142 = arith.truncf %141 : vector<8x8xf32> to vector<8x8xbf16>
    %cst_44 = arith.constant dense<0.000000e+00> : vector<8x8xf32>
    %143 = tpu.matmul %138, %140, %cst_44 {dimension_numbers = #tpu.dot_dimension_numbers<[1], [1], [0], [0], [0, 0, 1, 0], [], []>} : vector<8x8xbf16>, vector<8x8xbf16>, vector<8x8xf32> -> vector<8x8xf32>
    %cst_45 = arith.constant 0.353553385 : f32
    %144 = vector.broadcast %cst_45 : f32 to vector<8x8xf32>
    %145 = arith.mulf %143, %144 : vector<8x8xf32>
    %146 = vector.broadcast %54 : vector<1x8xf32> to vector<8x8xf32>
    %147 = arith.addf %145, %146 : vector<8x8xf32>
    %cst_46 = arith.constant dense<0xFF800000> : vector<8xf32>
    %148 = vector.multi_reduction <maximumf>, %147, %cst_46 [1] : vector<8x8xf32> to vector<8xf32>
    %149 = vector.shape_cast %148 : vector<8xf32> to vector<8x1xf32>
    %150 = vector.broadcast %149 : vector<8x1xf32> to vector<8x8xf32>
    %151 = arith.subf %147, %150 : vector<8x8xf32>
    %152 = math.exp %151 : vector<8x8xf32>
    %cst_47 = arith.constant dense<0.000000e+00> : vector<8xf32>
    %153 = vector.multi_reduction <add>, %152, %cst_47 [1] : vector<8x8xf32> to vector<8xf32>
    %154 = vector.shape_cast %153 : vector<8xf32> to vector<8x1xf32>
    %155 = tpu.reciprocal %154 {approx = true} : vector<8x1xf32> -> vector<8x1xf32>
    %156 = vector.broadcast %155 : vector<8x1xf32> to vector<8x8xf32>
    %157 = arith.mulf %152, %156 : vector<8x8xf32>
    %158 = arith.truncf %157 : vector<8x8xf32> to vector<8x8xbf16>
    %cst_48 = arith.constant dense<0.000000e+00> : vector<8x8xf32>
    %159 = tpu.matmul %158, %142, %cst_48 {dimension_numbers = #tpu.dot_dimension_numbers<[1], [0], [0], [1], [0, 0, 1, 1], [], []>} : vector<8x8xbf16>, vector<8x8xbf16>, vector<8x8xf32> -> vector<8x8xf32>
    %160 = arith.truncf %159 : vector<8x8xf32> to vector<8x8xbf16>
    %161 = vector.extract_strided_slice %44 {offsets = [0, 24], sizes = [32, 8], strides = [1, 1]} : vector<32x32xbf16> to vector<32x8xbf16>
    %cst_49 = arith.constant dense<0.000000e+00> : vector<8x32xf32>
    %162 = tpu.matmul %160, %161, %cst_49 {dimension_numbers = #tpu.dot_dimension_numbers<[1], [1], [0], [0], [0, 0, 1, 0], [], []>} : vector<8x8xbf16>, vector<32x8xbf16>, vector<8x32xf32> -> vector<8x32xf32>
    %163 = arith.addf %136, %162 : vector<8x32xf32>
    %164 = vector.extract_strided_slice %40 {offsets = [8, 0], sizes = [8, 32], strides = [1, 1]} : vector<16x32xf32> to vector<8x32xf32>
    %165 = vector.extract_strided_slice %41 {offsets = [8, 0], sizes = [8, 32], strides = [1, 1]} : vector<16x32xf32> to vector<8x32xf32>
    %166 = vector.extract_strided_slice %42 {offsets = [8, 0], sizes = [8, 32], strides = [1, 1]} : vector<16x32xf32> to vector<8x32xf32>
    %167 = vector.extract_strided_slice %4 {offsets = [1, 0, 0], sizes = [1, 1, 8], strides = [1, 1, 1]} : vector<2x1x8xf32> to vector<1x1x8xf32>
    %168 = vector.shape_cast %167 : vector<1x1x8xf32> to vector<1x8xf32>
    %cst_50 = arith.constant 0.000000e+00 : f32
    %169 = vector.broadcast %cst_50 : f32 to vector<1x8xf32>
    %170 = arith.cmpf oeq, %168, %169 : vector<1x8xf32>
    %cst_51 = arith.constant -1.000000e+09 : f32
    %cst_52 = arith.constant 0.000000e+00 : f32
    %171 = vector.broadcast %cst_51 : f32 to vector<1x8xf32>
    %172 = vector.broadcast %cst_52 : f32 to vector<1x8xf32>
    %173 = arith.select %170, %171, %172 : vector<1x8xi1>, vector<1x8xf32>
    %cst_53 = arith.constant 0.000000e+00 : f32
    %174 = vector.broadcast %cst_53 : f32 to vector<8x32xf32>
    %175 = vector.extract_strided_slice %164 {offsets = [0, 0], sizes = [8, 8], strides = [1, 1]} : vector<8x32xf32> to vector<8x8xf32>
    %176 = arith.truncf %175 : vector<8x8xf32> to vector<8x8xbf16>
    %177 = vector.extract_strided_slice %165 {offsets = [0, 0], sizes = [8, 8], strides = [1, 1]} : vector<8x32xf32> to vector<8x8xf32>
    %178 = arith.truncf %177 : vector<8x8xf32> to vector<8x8xbf16>
    %179 = vector.extract_strided_slice %166 {offsets = [0, 0], sizes = [8, 8], strides = [1, 1]} : vector<8x32xf32> to vector<8x8xf32>
    %180 = arith.truncf %179 : vector<8x8xf32> to vector<8x8xbf16>
    %cst_54 = arith.constant dense<0.000000e+00> : vector<8x8xf32>
    %181 = tpu.matmul %176, %178, %cst_54 {dimension_numbers = #tpu.dot_dimension_numbers<[1], [1], [0], [0], [0, 0, 1, 0], [], []>} : vector<8x8xbf16>, vector<8x8xbf16>, vector<8x8xf32> -> vector<8x8xf32>
    %cst_55 = arith.constant 0.353553385 : f32
    %182 = vector.broadcast %cst_55 : f32 to vector<8x8xf32>
    %183 = arith.mulf %181, %182 : vector<8x8xf32>
    %184 = vector.broadcast %173 : vector<1x8xf32> to vector<8x8xf32>
    %185 = arith.addf %183, %184 : vector<8x8xf32>
    %cst_56 = arith.constant dense<0xFF800000> : vector<8xf32>
    %186 = vector.multi_reduction <maximumf>, %185, %cst_56 [1] : vector<8x8xf32> to vector<8xf32>
    %187 = vector.shape_cast %186 : vector<8xf32> to vector<8x1xf32>
    %188 = vector.broadcast %187 : vector<8x1xf32> to vector<8x8xf32>
    %189 = arith.subf %185, %188 : vector<8x8xf32>
    %190 = math.exp %189 : vector<8x8xf32>
    %cst_57 = arith.constant dense<0.000000e+00> : vector<8xf32>
    %191 = vector.multi_reduction <add>, %190, %cst_57 [1] : vector<8x8xf32> to vector<8xf32>
    %192 = vector.shape_cast %191 : vector<8xf32> to vector<8x1xf32>
    %193 = tpu.reciprocal %192 {approx = true} : vector<8x1xf32> -> vector<8x1xf32>
    %194 = vector.broadcast %193 : vector<8x1xf32> to vector<8x8xf32>
    %195 = arith.mulf %190, %194 : vector<8x8xf32>
    %196 = arith.truncf %195 : vector<8x8xf32> to vector<8x8xbf16>
    %cst_58 = arith.constant dense<0.000000e+00> : vector<8x8xf32>
    %197 = tpu.matmul %196, %180, %cst_58 {dimension_numbers = #tpu.dot_dimension_numbers<[1], [0], [0], [1], [0, 0, 1, 1], [], []>} : vector<8x8xbf16>, vector<8x8xbf16>, vector<8x8xf32> -> vector<8x8xf32>
    %198 = arith.truncf %197 : vector<8x8xf32> to vector<8x8xbf16>
    %199 = vector.extract_strided_slice %44 {offsets = [0, 0], sizes = [32, 8], strides = [1, 1]} : vector<32x32xbf16> to vector<32x8xbf16>
    %cst_59 = arith.constant dense<0.000000e+00> : vector<8x32xf32>
    %200 = tpu.matmul %198, %199, %cst_59 {dimension_numbers = #tpu.dot_dimension_numbers<[1], [1], [0], [0], [0, 0, 1, 0], [], []>} : vector<8x8xbf16>, vector<32x8xbf16>, vector<8x32xf32> -> vector<8x32xf32>
    %201 = arith.addf %174, %200 : vector<8x32xf32>
    %202 = vector.extract_strided_slice %164 {offsets = [0, 8], sizes = [8, 8], strides = [1, 1]} : vector<8x32xf32> to vector<8x8xf32>
    %203 = arith.truncf %202 : vector<8x8xf32> to vector<8x8xbf16>
    %204 = vector.extract_strided_slice %165 {offsets = [0, 8], sizes = [8, 8], strides = [1, 1]} : vector<8x32xf32> to vector<8x8xf32>
    %205 = arith.truncf %204 : vector<8x8xf32> to vector<8x8xbf16>
    %206 = vector.extract_strided_slice %166 {offsets = [0, 8], sizes = [8, 8], strides = [1, 1]} : vector<8x32xf32> to vector<8x8xf32>
    %207 = arith.truncf %206 : vector<8x8xf32> to vector<8x8xbf16>
    %cst_60 = arith.constant dense<0.000000e+00> : vector<8x8xf32>
    %208 = tpu.matmul %203, %205, %cst_60 {dimension_numbers = #tpu.dot_dimension_numbers<[1], [1], [0], [0], [0, 0, 1, 0], [], []>} : vector<8x8xbf16>, vector<8x8xbf16>, vector<8x8xf32> -> vector<8x8xf32>
    %cst_61 = arith.constant 0.353553385 : f32
    %209 = vector.broadcast %cst_61 : f32 to vector<8x8xf32>
    %210 = arith.mulf %208, %209 : vector<8x8xf32>
    %211 = vector.broadcast %173 : vector<1x8xf32> to vector<8x8xf32>
    %212 = arith.addf %210, %211 : vector<8x8xf32>
    %cst_62 = arith.constant dense<0xFF800000> : vector<8xf32>
    %213 = vector.multi_reduction <maximumf>, %212, %cst_62 [1] : vector<8x8xf32> to vector<8xf32>
    %214 = vector.shape_cast %213 : vector<8xf32> to vector<8x1xf32>
    %215 = vector.broadcast %214 : vector<8x1xf32> to vector<8x8xf32>
    %216 = arith.subf %212, %215 : vector<8x8xf32>
    %217 = math.exp %216 : vector<8x8xf32>
    %cst_63 = arith.constant dense<0.000000e+00> : vector<8xf32>
    %218 = vector.multi_reduction <add>, %217, %cst_63 [1] : vector<8x8xf32> to vector<8xf32>
    %219 = vector.shape_cast %218 : vector<8xf32> to vector<8x1xf32>
    %220 = tpu.reciprocal %219 {approx = true} : vector<8x1xf32> -> vector<8x1xf32>
    %221 = vector.broadcast %220 : vector<8x1xf32> to vector<8x8xf32>
    %222 = arith.mulf %217, %221 : vector<8x8xf32>
    %223 = arith.truncf %222 : vector<8x8xf32> to vector<8x8xbf16>
    %cst_64 = arith.constant dense<0.000000e+00> : vector<8x8xf32>
    %224 = tpu.matmul %223, %207, %cst_64 {dimension_numbers = #tpu.dot_dimension_numbers<[1], [0], [0], [1], [0, 0, 1, 1], [], []>} : vector<8x8xbf16>, vector<8x8xbf16>, vector<8x8xf32> -> vector<8x8xf32>
    %225 = arith.truncf %224 : vector<8x8xf32> to vector<8x8xbf16>
    %226 = vector.extract_strided_slice %44 {offsets = [0, 8], sizes = [32, 8], strides = [1, 1]} : vector<32x32xbf16> to vector<32x8xbf16>
    %cst_65 = arith.constant dense<0.000000e+00> : vector<8x32xf32>
    %227 = tpu.matmul %225, %226, %cst_65 {dimension_numbers = #tpu.dot_dimension_numbers<[1], [1], [0], [0], [0, 0, 1, 0], [], []>} : vector<8x8xbf16>, vector<32x8xbf16>, vector<8x32xf32> -> vector<8x32xf32>
    %228 = arith.addf %201, %227 : vector<8x32xf32>
    %229 = vector.extract_strided_slice %164 {offsets = [0, 16], sizes = [8, 8], strides = [1, 1]} : vector<8x32xf32> to vector<8x8xf32>
    %230 = arith.truncf %229 : vector<8x8xf32> to vector<8x8xbf16>
    %231 = vector.extract_strided_slice %165 {offsets = [0, 16], sizes = [8, 8], strides = [1, 1]} : vector<8x32xf32> to vector<8x8xf32>
    %232 = arith.truncf %231 : vector<8x8xf32> to vector<8x8xbf16>
    %233 = vector.extract_strided_slice %166 {offsets = [0, 16], sizes = [8, 8], strides = [1, 1]} : vector<8x32xf32> to vector<8x8xf32>
    %234 = arith.truncf %233 : vector<8x8xf32> to vector<8x8xbf16>
    %cst_66 = arith.constant dense<0.000000e+00> : vector<8x8xf32>
    %235 = tpu.matmul %230, %232, %cst_66 {dimension_numbers = #tpu.dot_dimension_numbers<[1], [1], [0], [0], [0, 0, 1, 0], [], []>} : vector<8x8xbf16>, vector<8x8xbf16>, vector<8x8xf32> -> vector<8x8xf32>
    %cst_67 = arith.constant 0.353553385 : f32
    %236 = vector.broadcast %cst_67 : f32 to vector<8x8xf32>
    %237 = arith.mulf %235, %236 : vector<8x8xf32>
    %238 = vector.broadcast %173 : vector<1x8xf32> to vector<8x8xf32>
    %239 = arith.addf %237, %238 : vector<8x8xf32>
    %cst_68 = arith.constant dense<0xFF800000> : vector<8xf32>
    %240 = vector.multi_reduction <maximumf>, %239, %cst_68 [1] : vector<8x8xf32> to vector<8xf32>
    %241 = vector.shape_cast %240 : vector<8xf32> to vector<8x1xf32>
    %242 = vector.broadcast %241 : vector<8x1xf32> to vector<8x8xf32>
    %243 = arith.subf %239, %242 : vector<8x8xf32>
    %244 = math.exp %243 : vector<8x8xf32>
    %cst_69 = arith.constant dense<0.000000e+00> : vector<8xf32>
    %245 = vector.multi_reduction <add>, %244, %cst_69 [1] : vector<8x8xf32> to vector<8xf32>
    %246 = vector.shape_cast %245 : vector<8xf32> to vector<8x1xf32>
    %247 = tpu.reciprocal %246 {approx = true} : vector<8x1xf32> -> vector<8x1xf32>
    %248 = vector.broadcast %247 : vector<8x1xf32> to vector<8x8xf32>
    %249 = arith.mulf %244, %248 : vector<8x8xf32>
    %250 = arith.truncf %249 : vector<8x8xf32> to vector<8x8xbf16>
    %cst_70 = arith.constant dense<0.000000e+00> : vector<8x8xf32>
    %251 = tpu.matmul %250, %234, %cst_70 {dimension_numbers = #tpu.dot_dimension_numbers<[1], [0], [0], [1], [0, 0, 1, 1], [], []>} : vector<8x8xbf16>, vector<8x8xbf16>, vector<8x8xf32> -> vector<8x8xf32>
    %252 = arith.truncf %251 : vector<8x8xf32> to vector<8x8xbf16>
    %253 = vector.extract_strided_slice %44 {offsets = [0, 16], sizes = [32, 8], strides = [1, 1]} : vector<32x32xbf16> to vector<32x8xbf16>
    %cst_71 = arith.constant dense<0.000000e+00> : vector<8x32xf32>
    %254 = tpu.matmul %252, %253, %cst_71 {dimension_numbers = #tpu.dot_dimension_numbers<[1], [1], [0], [0], [0, 0, 1, 0], [], []>} : vector<8x8xbf16>, vector<32x8xbf16>, vector<8x32xf32> -> vector<8x32xf32>
    %255 = arith.addf %228, %254 : vector<8x32xf32>
    %256 = vector.extract_strided_slice %164 {offsets = [0, 24], sizes = [8, 8], strides = [1, 1]} : vector<8x32xf32> to vector<8x8xf32>
    %257 = arith.truncf %256 : vector<8x8xf32> to vector<8x8xbf16>
    %258 = vector.extract_strided_slice %165 {offsets = [0, 24], sizes = [8, 8], strides = [1, 1]} : vector<8x32xf32> to vector<8x8xf32>
    %259 = arith.truncf %258 : vector<8x8xf32> to vector<8x8xbf16>
    %260 = vector.extract_strided_slice %166 {offsets = [0, 24], sizes = [8, 8], strides = [1, 1]} : vector<8x32xf32> to vector<8x8xf32>
    %261 = arith.truncf %260 : vector<8x8xf32> to vector<8x8xbf16>
    %cst_72 = arith.constant dense<0.000000e+00> : vector<8x8xf32>
    %262 = tpu.matmul %257, %259, %cst_72 {dimension_numbers = #tpu.dot_dimension_numbers<[1], [1], [0], [0], [0, 0, 1, 0], [], []>} : vector<8x8xbf16>, vector<8x8xbf16>, vector<8x8xf32> -> vector<8x8xf32>
    %cst_73 = arith.constant 0.353553385 : f32
    %263 = vector.broadcast %cst_73 : f32 to vector<8x8xf32>
    %264 = arith.mulf %262, %263 : vector<8x8xf32>
    %265 = vector.broadcast %173 : vector<1x8xf32> to vector<8x8xf32>
    %266 = arith.addf %264, %265 : vector<8x8xf32>
    %cst_74 = arith.constant dense<0xFF800000> : vector<8xf32>
    %267 = vector.multi_reduction <maximumf>, %266, %cst_74 [1] : vector<8x8xf32> to vector<8xf32>
    %268 = vector.shape_cast %267 : vector<8xf32> to vector<8x1xf32>
    %269 = vector.broadcast %268 : vector<8x1xf32> to vector<8x8xf32>
    %270 = arith.subf %266, %269 : vector<8x8xf32>
    %271 = math.exp %270 : vector<8x8xf32>
    %cst_75 = arith.constant dense<0.000000e+00> : vector<8xf32>
    %272 = vector.multi_reduction <add>, %271, %cst_75 [1] : vector<8x8xf32> to vector<8xf32>
    %273 = vector.shape_cast %272 : vector<8xf32> to vector<8x1xf32>
    %274 = tpu.reciprocal %273 {approx = true} : vector<8x1xf32> -> vector<8x1xf32>
    %275 = vector.broadcast %274 : vector<8x1xf32> to vector<8x8xf32>
    %276 = arith.mulf %271, %275 : vector<8x8xf32>
    %277 = arith.truncf %276 : vector<8x8xf32> to vector<8x8xbf16>
    %cst_76 = arith.constant dense<0.000000e+00> : vector<8x8xf32>
    %278 = tpu.matmul %277, %261, %cst_76 {dimension_numbers = #tpu.dot_dimension_numbers<[1], [0], [0], [1], [0, 0, 1, 1], [], []>} : vector<8x8xbf16>, vector<8x8xbf16>, vector<8x8xf32> -> vector<8x8xf32>
    %279 = arith.truncf %278 : vector<8x8xf32> to vector<8x8xbf16>
    %280 = vector.extract_strided_slice %44 {offsets = [0, 24], sizes = [32, 8], strides = [1, 1]} : vector<32x32xbf16> to vector<32x8xbf16>
    %cst_77 = arith.constant dense<0.000000e+00> : vector<8x32xf32>
    %281 = tpu.matmul %279, %280, %cst_77 {dimension_numbers = #tpu.dot_dimension_numbers<[1], [1], [0], [0], [0, 0, 1, 0], [], []>} : vector<8x8xbf16>, vector<32x8xbf16>, vector<8x32xf32> -> vector<8x32xf32>
    %282 = arith.addf %255, %281 : vector<8x32xf32>
    %283 = tpu.concatenate %163, %282 in 0 : vector<8x32xf32>, vector<8x32xf32> -> vector<16x32xf32>
    %284 = arith.addf %3, %283 : vector<16x32xf32>
    %c0_78 = arith.constant 0 : index
    %c0_79 = arith.constant 0 : index
    %c0_80 = arith.constant 0 : index
    %285 = vector.load %arg8[%c0_78, %c0_79, %c0_80] : memref<1x1x32xf32, #tpu.memory_space<vmem>>, vector<1x1x32xf32>
    %286 = vector.shape_cast %285 : vector<1x1x32xf32> to vector<1x32xf32>
    %287 = vector.broadcast %286 : vector<1x32xf32> to vector<16x32xf32>
    %288 = arith.addf %284, %287 : vector<16x32xf32>
    %c0_81 = arith.constant 0 : index
    %c0_82 = arith.constant 0 : index
    %c0_83 = arith.constant 0 : index
    %289 = vector.load %arg9[%c0_81, %c0_82, %c0_83] : memref<1x2x32xf32, #tpu.memory_space<vmem>>, vector<1x2x32xf32>
    %290 = vector.shape_cast %289 : vector<1x2x32xf32> to vector<2x32xf32>
    %291 = vector.extract_strided_slice %290 {offsets = [0, 0], sizes = [1, 32], strides = [1, 1]} : vector<2x32xf32> to vector<1x32xf32>
    %292 = vector.extract_strided_slice %290 {offsets = [1, 0], sizes = [1, 32], strides = [1, 1]} : vector<2x32xf32> to vector<1x32xf32>
    %cst_84 = arith.constant dense<0.000000e+00> : vector<16xf32>
    %293 = vector.multi_reduction <add>, %288, %cst_84 [1] : vector<16x32xf32> to vector<16xf32>
    %294 = vector.shape_cast %293 : vector<16xf32> to vector<16x1xf32>
    %cst_85 = arith.constant 3.200000e+01 : f32
    %295 = vector.broadcast %cst_85 : f32 to vector<16x1xf32>
    %296 = arith.divf %294, %295 : vector<16x1xf32>
    %297 = vector.broadcast %296 : vector<16x1xf32> to vector<16x32xf32>
    %298 = arith.subf %288, %297 : vector<16x32xf32>
    %299 = arith.mulf %298, %298 : vector<16x32xf32>
    %cst_86 = arith.constant dense<0.000000e+00> : vector<16xf32>
    %300 = vector.multi_reduction <add>, %299, %cst_86 [1] : vector<16x32xf32> to vector<16xf32>
    %301 = vector.shape_cast %300 : vector<16xf32> to vector<16x1xf32>
    %cst_87 = arith.constant 0.0322580636 : f32
    %302 = vector.broadcast %cst_87 : f32 to vector<16x1xf32>
    %303 = arith.mulf %301, %302 : vector<16x1xf32>
    %304 = math.sqrt %303 : vector<16x1xf32>
    %cst_88 = arith.constant 9.99999997E-7 : f32
    %305 = vector.broadcast %cst_88 : f32 to vector<16x1xf32>
    %306 = arith.addf %304, %305 : vector<16x1xf32>
    %307 = tpu.reciprocal %306 {approx = true} : vector<16x1xf32> -> vector<16x1xf32>
    %308 = vector.broadcast %296 : vector<16x1xf32> to vector<16x32xf32>
    %309 = arith.subf %288, %308 : vector<16x32xf32>
    %310 = vector.broadcast %291 : vector<1x32xf32> to vector<16x32xf32>
    %311 = arith.mulf %310, %309 : vector<16x32xf32>
    %312 = vector.broadcast %307 : vector<16x1xf32> to vector<16x32xf32>
    %313 = arith.mulf %311, %312 : vector<16x32xf32>
    %314 = vector.broadcast %292 : vector<1x32xf32> to vector<16x32xf32>
    %315 = arith.addf %313, %314 : vector<16x32xf32>
    %c0_89 = arith.constant 0 : index
    %c0_90 = arith.constant 0 : index
    %c0_91 = arith.constant 0 : index
    %316 = vector.load %arg10[%c0_89, %c0_90, %c0_91] : memref<1x64x32xbf16, #tpu.memory_space<vmem>>, vector<1x64x32xbf16>
    %317 = vector.shape_cast %316 : vector<1x64x32xbf16> to vector<64x32xbf16>
    %c0_92 = arith.constant 0 : index
    %c0_93 = arith.constant 0 : index
    %c0_94 = arith.constant 0 : index
    %318 = vector.load %arg11[%c0_92, %c0_93, %c0_94] : memref<1x1x64xf32, #tpu.memory_space<vmem>>, vector<1x1x64xf32>
    %319 = vector.shape_cast %318 : vector<1x1x64xf32> to vector<1x64xf32>
    %320 = arith.truncf %315 : vector<16x32xf32> to vector<16x32xbf16>
    %cst_95 = arith.constant dense<0.000000e+00> : vector<16x64xf32>
    %321 = tpu.matmul %320, %317, %cst_95 {dimension_numbers = #tpu.dot_dimension_numbers<[1], [1], [0], [0], [0, 0, 1, 0], [], []>} : vector<16x32xbf16>, vector<64x32xbf16>, vector<16x64xf32> -> vector<16x64xf32>
    %322 = vector.broadcast %319 : vector<1x64xf32> to vector<16x64xf32>
    %323 = arith.addf %321, %322 : vector<16x64xf32>
    %cst_96 = arith.constant 0.000000e+00 : f32
    %324 = vector.broadcast %cst_96 : f32 to vector<16x64xf32>
    %325 = arith.maximumf %323, %324 : vector<16x64xf32>
    %c0_97 = arith.constant 0 : index
    %c0_98 = arith.constant 0 : index
    %c0_99 = arith.constant 0 : index
    %326 = vector.load %arg12[%c0_97, %c0_98, %c0_99] : memref<1x32x64xbf16, #tpu.memory_space<vmem>>, vector<1x32x64xbf16>
    %327 = vector.shape_cast %326 : vector<1x32x64xbf16> to vector<32x64xbf16>
    %c0_100 = arith.constant 0 : index
    %c0_101 = arith.constant 0 : index
    %c0_102 = arith.constant 0 : index
    %328 = vector.load %arg13[%c0_100, %c0_101, %c0_102] : memref<1x1x32xf32, #tpu.memory_space<vmem>>, vector<1x1x32xf32>
    %329 = vector.shape_cast %328 : vector<1x1x32xf32> to vector<1x32xf32>
    %330 = arith.truncf %325 : vector<16x64xf32> to vector<16x64xbf16>
    %cst_103 = arith.constant dense<0.000000e+00> : vector<16x32xf32>
    %331 = tpu.matmul %330, %327, %cst_103 {dimension_numbers = #tpu.dot_dimension_numbers<[1], [1], [0], [0], [0, 0, 1, 0], [], []>} : vector<16x64xbf16>, vector<32x64xbf16>, vector<16x32xf32> -> vector<16x32xf32>
    %332 = vector.broadcast %329 : vector<1x32xf32> to vector<16x32xf32>
    %333 = arith.addf %331, %332 : vector<16x32xf32>
    %334 = arith.addf %288, %333 : vector<16x32xf32>
    %c0_104 = arith.constant 0 : index
    %c0_105 = arith.constant 0 : index
    %335 = vector.load %arg16[%c0_104, %c0_105] : memref<16x32xf32, #tpu.memory_space<vmem>>, vector<16x32xf32>
    tpu.vector_store %arg16[%c0_104, %c0_105], %334 {strides = array<i32>} : memref<16x32xf32, #tpu.memory_space<vmem>>, vector<16x32xf32>,
    %c1_i32 = arith.constant 1 : i32
    %336 = arith.cmpi eq, %arg1, %c1_i32 : i32
    %337 = arith.extui %336 : i1 to i32
    %c0_i32_106 = arith.constant 0 : i32
    %338 = arith.cmpi ne, %337, %c0_i32_106 : i32
    scf.if %338 {
      %c0_107 = arith.constant 0 : index
      %c0_108 = arith.constant 0 : index
      %339 = vector.load %arg14[%c0_107, %c0_108] : memref<2x32xf32, #tpu.memory_space<vmem>>, vector<2x32xf32>
      %340 = vector.extract_strided_slice %339 {offsets = [0, 0], sizes = [1, 32], strides = [1, 1]} : vector<2x32xf32> to vector<1x32xf32>
      %341 = vector.extract_strided_slice %339 {offsets = [1, 0], sizes = [1, 32], strides = [1, 1]} : vector<2x32xf32> to vector<1x32xf32>
      %cst_109 = arith.constant dense<0.000000e+00> : vector<16xf32>
      %342 = vector.multi_reduction <add>, %334, %cst_109 [1] : vector<16x32xf32> to vector<16xf32>
      %343 = vector.shape_cast %342 : vector<16xf32> to vector<16x1xf32>
      %cst_110 = arith.constant 3.200000e+01 : f32
      %344 = vector.broadcast %cst_110 : f32 to vector<16x1xf32>
      %345 = arith.divf %343, %344 : vector<16x1xf32>
      %346 = vector.broadcast %345 : vector<16x1xf32> to vector<16x32xf32>
      %347 = arith.subf %334, %346 : vector<16x32xf32>
      %348 = arith.mulf %347, %347 : vector<16x32xf32>
      %cst_111 = arith.constant dense<0.000000e+00> : vector<16xf32>
      %349 = vector.multi_reduction <add>, %348, %cst_111 [1] : vector<16x32xf32> to vector<16xf32>
      %350 = vector.shape_cast %349 : vector<16xf32> to vector<16x1xf32>
      %cst_112 = arith.constant 0.0322580636 : f32
      %351 = vector.broadcast %cst_112 : f32 to vector<16x1xf32>
      %352 = arith.mulf %350, %351 : vector<16x1xf32>
      %353 = math.sqrt %352 : vector<16x1xf32>
      %cst_113 = arith.constant 9.99999997E-7 : f32
      %354 = vector.broadcast %cst_113 : f32 to vector<16x1xf32>
      %355 = arith.addf %353, %354 : vector<16x1xf32>
      %356 = tpu.reciprocal %355 {approx = true} : vector<16x1xf32> -> vector<16x1xf32>
      %357 = vector.broadcast %345 : vector<16x1xf32> to vector<16x32xf32>
      %358 = arith.subf %334, %357 : vector<16x32xf32>
      %359 = vector.broadcast %340 : vector<1x32xf32> to vector<16x32xf32>
      %360 = arith.mulf %359, %358 : vector<16x32xf32>
      %361 = vector.broadcast %356 : vector<16x1xf32> to vector<16x32xf32>
      %362 = arith.mulf %360, %361 : vector<16x32xf32>
      %363 = vector.broadcast %341 : vector<1x32xf32> to vector<16x32xf32>
      %364 = arith.addf %362, %363 : vector<16x32xf32>
      %365 = vector.shape_cast %364 : vector<16x32xf32> to vector<2x8x32xf32>
      %c0_114 = arith.constant 0 : index
      %c0_115 = arith.constant 0 : index
      %c0_116 = arith.constant 0 : index
      %366 = vector.load %arg15[%c0_114, %c0_115, %c0_116] : memref<2x8x32xf32, #tpu.memory_space<vmem>>, vector<2x8x32xf32>
      tpu.vector_store %arg15[%c0_114, %c0_115, %c0_116], %365 {strides = array<i32>} : memref<2x8x32xf32, #tpu.memory_space<vmem>>, vector<2x8x32xf32>,
    } else {
    }
    return
  }
  func.func @transform_0(%arg0: i32, %arg1: i32) -> (i32, i32, i32) {
    %c0_i32 = arith.constant 0 : i32
    %c0_i32_0 = arith.constant 0 : i32
    %c0_i32_1 = arith.constant 0 : i32
    return %arg0, %c0_i32, %c0_i32_0 : i32, i32, i32
  }
  func.func @transform_1(%arg0: i32, %arg1: i32) -> (i32, i32, i32) {
    %c0_i32 = arith.constant 0 : i32
    %c0_i32_0 = arith.constant 0 : i32
    %c0_i32_1 = arith.constant 0 : i32
    return %arg0, %c0_i32, %c0_i32_0 : i32, i32, i32
  }
  func.func @transform_2(%arg0: i32, %arg1: i32) -> (i32, i32, i32) {
    %c0_i32 = arith.constant 0 : i32
    %c0_i32_0 = arith.constant 0 : i32
    %c0_i32_1 = arith.constant 0 : i32
    return %arg1, %c0_i32, %c0_i32_0 : i32, i32, i32
  }
  func.func @transform_3(%arg0: i32, %arg1: i32) -> (i32, i32, i32) {
    %c0_i32 = arith.constant 0 : i32
    %c0_i32_0 = arith.constant 0 : i32
    %c0_i32_1 = arith.constant 0 : i32
    return %arg1, %c0_i32, %c0_i32_0 : i32, i32, i32
  }
  func.func @transform_4(%arg0: i32, %arg1: i32) -> (i32, i32, i32) {
    %c0_i32 = arith.constant 0 : i32
    %c0_i32_0 = arith.constant 0 : i32
    %c0_i32_1 = arith.constant 0 : i32
    return %arg1, %c0_i32, %c0_i32_0 : i32, i32, i32
  }
  func.func @transform_5(%arg0: i32, %arg1: i32) -> (i32, i32, i32) {
    %c0_i32 = arith.constant 0 : i32
    %c0_i32_0 = arith.constant 0 : i32
    %c0_i32_1 = arith.constant 0 : i32
    return %arg1, %c0_i32, %c0_i32_0 : i32, i32, i32
  }
  func.func @transform_6(%arg0: i32, %arg1: i32) -> (i32, i32, i32) {
    %c0_i32 = arith.constant 0 : i32
    %c0_i32_0 = arith.constant 0 : i32
    %c0_i32_1 = arith.constant 0 : i32
    return %arg1, %c0_i32, %c0_i32_0 : i32, i32, i32
  }
  func.func @transform_7(%arg0: i32, %arg1: i32) -> (i32, i32, i32) {
    %c0_i32 = arith.constant 0 : i32
    %c0_i32_0 = arith.constant 0 : i32
    %c0_i32_1 = arith.constant 0 : i32
    return %arg1, %c0_i32, %c0_i32_0 : i32, i32, i32
  }
  func.func @transform_8(%arg0: i32, %arg1: i32) -> (i32, i32, i32) {
    %c0_i32 = arith.constant 0 : i32
    %c0_i32_0 = arith.constant 0 : i32
    %c0_i32_1 = arith.constant 0 : i32
    return %arg1, %c0_i32, %c0_i32_0 : i32, i32, i32
  }
  func.func @transform_9(%arg0: i32, %arg1: i32) -> (i32, i32, i32) {
    %c0_i32 = arith.constant 0 : i32
    %c0_i32_0 = arith.constant 0 : i32
    %c0_i32_1 = arith.constant 0 : i32
    return %arg1, %c0_i32, %c0_i32_0 : i32, i32, i32
  }
  func.func @transform_10(%arg0: i32, %arg1: i32) -> (i32, i32, i32) {
    %c0_i32 = arith.constant 0 : i32
    %c0_i32_0 = arith.constant 0 : i32
    %c0_i32_1 = arith.constant 0 : i32
    return %arg1, %c0_i32, %c0_i32_0 : i32, i32, i32
  }
  func.func @transform_11(%arg0: i32, %arg1: i32) -> (i32, i32, i32) {
    %c0_i32 = arith.constant 0 : i32
    %c0_i32_0 = arith.constant 0 : i32
    %c0_i32_1 = arith.constant 0 : i32
    return %arg1, %c0_i32, %c0_i32_0 : i32, i32, i32
  }
  func.func @transform_12(%arg0: i32, %arg1: i32) -> (i32, i32) {
    %c0_i32 = arith.constant 0 : i32
    %c0_i32_0 = arith.constant 0 : i32
    %c0_i32_1 = arith.constant 0 : i32
    return %c0_i32, %c0_i32_0 : i32, i32
  }
  func.func @transform_13(%arg0: i32, %arg1: i32) -> (i32, i32, i32) {
    %c0_i32 = arith.constant 0 : i32
    %c0_i32_0 = arith.constant 0 : i32
    %c0_i32_1 = arith.constant 0 : i32
    return %arg0, %c0_i32, %c0_i32_0 : i32, i32, i32
  }
}

module attributes {stable_mosaic.version = 11 : i64} {
  func.func @out_proj_kernel(%arg0: i32, %arg1: i32, %arg2: memref<2x8x32xf32, #tpu.memory_space<vmem>>, %arg3: memref<128x32xbf16, #tpu.memory_space<vmem>>, %arg4: memref<1x128xf32, #tpu.memory_space<vmem>>, %arg5: memref<2x8x128xf32, #tpu.memory_space<vmem>>) attributes {dimension_semantics = [#tpu.dimension_semantics<parallel>, #tpu.dimension_semantics<parallel>], iteration_bounds = array<i64: 1, 1>, scalar_prefetch = 0 : i64, scratch_operands = 0 : i64, tpu.core_type = #tpu.core_type<tc>, window_params = [{transform_indices = @transform_0, window_bounds = array<i64: 2, 8, 32>}, {transform_indices = @transform_1, window_bounds = array<i64: 128, 32>}, {transform_indices = @transform_2, window_bounds = array<i64: 1, 128>}, {transform_indices = @transform_3, window_bounds = array<i64: 2, 8, 128>}]} {
    %c0 = arith.constant 0 : index
    %c0_0 = arith.constant 0 : index
    %c0_1 = arith.constant 0 : index
    %0 = vector.load %arg2[%c0, %c0_0, %c0_1] : memref<2x8x32xf32, #tpu.memory_space<vmem>>, vector<2x8x32xf32>
    %1 = vector.shape_cast %0 : vector<2x8x32xf32> to vector<16x32xf32>
    %c0_2 = arith.constant 0 : index
    %c0_3 = arith.constant 0 : index
    %2 = vector.load %arg3[%c0_2, %c0_3] : memref<128x32xbf16, #tpu.memory_space<vmem>>, vector<128x32xbf16>
    %c0_4 = arith.constant 0 : index
    %c0_5 = arith.constant 0 : index
    %3 = vector.load %arg4[%c0_4, %c0_5] : memref<1x128xf32, #tpu.memory_space<vmem>>, vector<1x128xf32>
    %4 = arith.truncf %1 : vector<16x32xf32> to vector<16x32xbf16>
    %cst = arith.constant dense<0.000000e+00> : vector<16x128xf32>
    %5 = tpu.matmul %4, %2, %cst {dimension_numbers = #tpu.dot_dimension_numbers<[1], [1], [0], [0], [0, 0, 1, 0], [], []>} : vector<16x32xbf16>, vector<128x32xbf16>, vector<16x128xf32> -> vector<16x128xf32>
    %6 = vector.broadcast %3 : vector<1x128xf32> to vector<16x128xf32>
    %7 = arith.addf %5, %6 : vector<16x128xf32>
    %8 = vector.shape_cast %7 : vector<16x128xf32> to vector<2x8x128xf32>
    %c0_6 = arith.constant 0 : index
    %c0_7 = arith.constant 0 : index
    %c0_8 = arith.constant 0 : index
    %9 = vector.load %arg5[%c0_6, %c0_7, %c0_8] : memref<2x8x128xf32, #tpu.memory_space<vmem>>, vector<2x8x128xf32>
    tpu.vector_store %arg5[%c0_6, %c0_7, %c0_8], %8 {strides = array<i32>} : memref<2x8x128xf32, #tpu.memory_space<vmem>>, vector<2x8x128xf32>,
    return
  }
  func.func @transform_0(%arg0: i32, %arg1: i32) -> (i32, i32, i32) {
    %c0_i32 = arith.constant 0 : i32
    %c0_i32_0 = arith.constant 0 : i32
    %c0_i32_1 = arith.constant 0 : i32
    return %arg0, %c0_i32, %c0_i32_0 : i32, i32, i32
  }
  func.func @transform_1(%arg0: i32, %arg1: i32) -> (i32, i32) {
    %c0_i32 = arith.constant 0 : i32
    %c0_i32_0 = arith.constant 0 : i32
    return %arg1, %c0_i32 : i32, i32
  }
  func.func @transform_2(%arg0: i32, %arg1: i32) -> (i32, i32) {
    %c0_i32 = arith.constant 0 : i32
    %c0_i32_0 = arith.constant 0 : i32
    return %c0_i32, %arg1 : i32, i32
  }
  func.func @transform_3(%arg0: i32, %arg1: i32) -> (i32, i32, i32) {
    %c0_i32 = arith.constant 0 : i32
    %c0_i32_0 = arith.constant 0 : i32
    return %arg0, %c0_i32, %arg1 : i32, i32, i32
  }
}

module attributes {stable_mosaic.version = 11 : i64} {
  func.func @decoder_stack_kernel(%arg0: i32, %arg1: i32, %arg2: memref<2x8x32xf32, #tpu.memory_space<vmem>>, %arg3: memref<2x8x32xf32, #tpu.memory_space<vmem>>, %arg4: memref<2x1x8xf32, #tpu.memory_space<vmem>>, %arg5: memref<2x8x8xf32, #tpu.memory_space<vmem>>, %arg6: memref<1x2x32xf32, #tpu.memory_space<vmem>>, %arg7: memref<1x96x32xbf16, #tpu.memory_space<vmem>>, %arg8: memref<1x1x96xf32, #tpu.memory_space<vmem>>, %arg9: memref<1x32x32xbf16, #tpu.memory_space<vmem>>, %arg10: memref<1x1x32xf32, #tpu.memory_space<vmem>>, %arg11: memref<1x2x32xf32, #tpu.memory_space<vmem>>, %arg12: memref<1x32x32xbf16, #tpu.memory_space<vmem>>, %arg13: memref<1x1x32xf32, #tpu.memory_space<vmem>>, %arg14: memref<1x64x32xbf16, #tpu.memory_space<vmem>>, %arg15: memref<1x1x64xf32, #tpu.memory_space<vmem>>, %arg16: memref<1x32x32xbf16, #tpu.memory_space<vmem>>, %arg17: memref<1x1x32xf32, #tpu.memory_space<vmem>>, %arg18: memref<1x2x32xf32, #tpu.memory_space<vmem>>, %arg19: memref<1x64x32xbf16, #tpu.memory_space<vmem>>, %arg20: memref<1x1x64xf32, #tpu.memory_space<vmem>>, %arg21: memref<1x32x64xbf16, #tpu.memory_space<vmem>>, %arg22: memref<1x1x32xf32, #tpu.memory_space<vmem>>, %arg23: memref<2x32xf32, #tpu.memory_space<vmem>>, %arg24: memref<2x8x32xf32, #tpu.memory_space<vmem>>, %arg25: memref<16x32xf32, #tpu.memory_space<vmem>>) attributes {dimension_semantics = [#tpu.dimension_semantics<parallel>, #tpu.dimension_semantics<arbitrary>], iteration_bounds = array<i64: 1, 2>, scalar_prefetch = 0 : i64, scratch_operands = 1 : i64, tpu.core_type = #tpu.core_type<tc>, window_params = [{transform_indices = @transform_0, window_bounds = array<i64: 2, 8, 32>}, {transform_indices = @transform_1, window_bounds = array<i64: 2, 8, 32>}, {transform_indices = @transform_2, window_bounds = array<i64: 2, 1, 8>}, {transform_indices = @transform_3, window_bounds = array<i64: 2, 8, 8>}, {transform_indices = @transform_4, window_bounds = array<i64: 1, 2, 32>}, {transform_indices = @transform_5, window_bounds = array<i64: 1, 96, 32>}, {transform_indices = @transform_6, window_bounds = array<i64: 1, 1, 96>}, {transform_indices = @transform_7, window_bounds = array<i64: 1, 32, 32>}, {transform_indices = @transform_8, window_bounds = array<i64: 1, 1, 32>}, {transform_indices = @transform_9, window_bounds = array<i64: 1, 2, 32>}, {transform_indices = @transform_10, window_bounds = array<i64: 1, 32, 32>}, {transform_indices = @transform_11, window_bounds = array<i64: 1, 1, 32>}, {transform_indices = @transform_12, window_bounds = array<i64: 1, 64, 32>}, {transform_indices = @transform_13, window_bounds = array<i64: 1, 1, 64>}, {transform_indices = @transform_14, window_bounds = array<i64: 1, 32, 32>}, {transform_indices = @transform_15, window_bounds = array<i64: 1, 1, 32>}, {transform_indices = @transform_16, window_bounds = array<i64: 1, 2, 32>}, {transform_indices = @transform_17, window_bounds = array<i64: 1, 64, 32>}, {transform_indices = @transform_18, window_bounds = array<i64: 1, 1, 64>}, {transform_indices = @transform_19, window_bounds = array<i64: 1, 32, 64>}, {transform_indices = @transform_20, window_bounds = array<i64: 1, 1, 32>}, {pipeline_mode = #tpu.pipeline_mode<synchronous>, transform_indices = @transform_21, window_bounds = array<i64: 2, 32>}, {transform_indices = @transform_22, window_bounds = array<i64: 2, 8, 32>}]} {
    %c0_i32 = arith.constant 0 : i32
    %0 = arith.cmpi eq, %arg1, %c0_i32 : i32
    %1 = arith.extui %0 : i1 to i32
    %c0_i32_0 = arith.constant 0 : i32
    %2 = arith.cmpi ne, %1, %c0_i32_0 : i32
    scf.if %2 {
      %c0_197 = arith.constant 0 : index
      %c0_198 = arith.constant 0 : index
      %c0_199 = arith.constant 0 : index
      %625 = vector.load %arg2[%c0_197, %c0_198, %c0_199] : memref<2x8x32xf32, #tpu.memory_space<vmem>>, vector<2x8x32xf32>
      %626 = vector.shape_cast %625 : vector<2x8x32xf32> to vector<16x32xf32>
      %c0_200 = arith.constant 0 : index
      %c0_201 = arith.constant 0 : index
      %627 = vector.load %arg25[%c0_200, %c0_201] : memref<16x32xf32, #tpu.memory_space<vmem>>, vector<16x32xf32>
      tpu.vector_store %arg25[%c0_200, %c0_201], %626 {strides = array<i32>} : memref<16x32xf32, #tpu.memory_space<vmem>>, vector<16x32xf32>,
    } else {
    }
    %c0 = arith.constant 0 : index
    %c0_1 = arith.constant 0 : index
    %3 = vector.load %arg25[%c0, %c0_1] : memref<16x32xf32, #tpu.memory_space<vmem>>, vector<16x32xf32>
    %c0_2 = arith.constant 0 : index
    %c0_3 = arith.constant 0 : index
    %c0_4 = arith.constant 0 : index
    %4 = vector.load %arg3[%c0_2, %c0_3, %c0_4] : memref<2x8x32xf32, #tpu.memory_space<vmem>>, vector<2x8x32xf32>
    %5 = vector.shape_cast %4 : vector<2x8x32xf32> to vector<16x32xf32>
    %c0_5 = arith.constant 0 : index
    %c0_6 = arith.constant 0 : index
    %c0_7 = arith.constant 0 : index
    %6 = vector.load %arg4[%c0_5, %c0_6, %c0_7] : memref<2x1x8xf32, #tpu.memory_space<vmem>>, vector<2x1x8xf32>
    %c0_8 = arith.constant 0 : index
    %c0_9 = arith.constant 0 : index
    %c0_10 = arith.constant 0 : index
    %7 = vector.load %arg5[%c0_8, %c0_9, %c0_10] : memref<2x8x8xf32, #tpu.memory_space<vmem>>, vector<2x8x8xf32>
    %c0_11 = arith.constant 0 : index
    %c0_12 = arith.constant 0 : index
    %c0_13 = arith.constant 0 : index
    %8 = vector.load %arg6[%c0_11, %c0_12, %c0_13] : memref<1x2x32xf32, #tpu.memory_space<vmem>>, vector<1x2x32xf32>
    %9 = vector.shape_cast %8 : vector<1x2x32xf32> to vector<2x32xf32>
    %10 = vector.extract_strided_slice %9 {offsets = [0, 0], sizes = [1, 32], strides = [1, 1]} : vector<2x32xf32> to vector<1x32xf32>
    %11 = vector.extract_strided_slice %9 {offsets = [1, 0], sizes = [1, 32], strides = [1, 1]} : vector<2x32xf32> to vector<1x32xf32>
    %cst = arith.constant dense<0.000000e+00> : vector<16xf32>
    %12 = vector.multi_reduction <add>, %3, %cst [1] : vector<16x32xf32> to vector<16xf32>
    %13 = vector.shape_cast %12 : vector<16xf32> to vector<16x1xf32>
    %cst_14 = arith.constant 3.200000e+01 : f32
    %14 = vector.broadcast %cst_14 : f32 to vector<16x1xf32>
    %15 = arith.divf %13, %14 : vector<16x1xf32>
    %16 = vector.broadcast %15 : vector<16x1xf32> to vector<16x32xf32>
    %17 = arith.subf %3, %16 : vector<16x32xf32>
    %18 = arith.mulf %17, %17 : vector<16x32xf32>
    %cst_15 = arith.constant dense<0.000000e+00> : vector<16xf32>
    %19 = vector.multi_reduction <add>, %18, %cst_15 [1] : vector<16x32xf32> to vector<16xf32>
    %20 = vector.shape_cast %19 : vector<16xf32> to vector<16x1xf32>
    %cst_16 = arith.constant 0.0322580636 : f32
    %21 = vector.broadcast %cst_16 : f32 to vector<16x1xf32>
    %22 = arith.mulf %20, %21 : vector<16x1xf32>
    %23 = math.sqrt %22 : vector<16x1xf32>
    %cst_17 = arith.constant 9.99999997E-7 : f32
    %24 = vector.broadcast %cst_17 : f32 to vector<16x1xf32>
    %25 = arith.addf %23, %24 : vector<16x1xf32>
    %26 = tpu.reciprocal %25 {approx = true} : vector<16x1xf32> -> vector<16x1xf32>
    %27 = vector.broadcast %15 : vector<16x1xf32> to vector<16x32xf32>
    %28 = arith.subf %3, %27 : vector<16x32xf32>
    %29 = vector.broadcast %10 : vector<1x32xf32> to vector<16x32xf32>
    %30 = arith.mulf %29, %28 : vector<16x32xf32>
    %31 = vector.broadcast %26 : vector<16x1xf32> to vector<16x32xf32>
    %32 = arith.mulf %30, %31 : vector<16x32xf32>
    %33 = vector.broadcast %11 : vector<1x32xf32> to vector<16x32xf32>
    %34 = arith.addf %32, %33 : vector<16x32xf32>
    %c0_18 = arith.constant 0 : index
    %c0_19 = arith.constant 0 : index
    %c0_20 = arith.constant 0 : index
    %35 = vector.load %arg7[%c0_18, %c0_19, %c0_20] : memref<1x96x32xbf16, #tpu.memory_space<vmem>>, vector<1x96x32xbf16>
    %36 = vector.shape_cast %35 : vector<1x96x32xbf16> to vector<96x32xbf16>
    %c0_21 = arith.constant 0 : index
    %c0_22 = arith.constant 0 : index
    %c0_23 = arith.constant 0 : index
    %37 = vector.load %arg8[%c0_21, %c0_22, %c0_23] : memref<1x1x96xf32, #tpu.memory_space<vmem>>, vector<1x1x96xf32>
    %38 = vector.shape_cast %37 : vector<1x1x96xf32> to vector<1x96xf32>
    %39 = arith.truncf %34 : vector<16x32xf32> to vector<16x32xbf16>
    %cst_24 = arith.constant dense<0.000000e+00> : vector<16x96xf32>
    %40 = tpu.matmul %39, %36, %cst_24 {dimension_numbers = #tpu.dot_dimension_numbers<[1], [1], [0], [0], [0, 0, 1, 0], [], []>} : vector<16x32xbf16>, vector<96x32xbf16>, vector<16x96xf32> -> vector<16x96xf32>
    %41 = vector.broadcast %38 : vector<1x96xf32> to vector<16x96xf32>
    %42 = arith.addf %40, %41 : vector<16x96xf32>
    %43 = vector.extract_strided_slice %42 {offsets = [0, 0], sizes = [16, 32], strides = [1, 1]} : vector<16x96xf32> to vector<16x32xf32>
    %44 = vector.extract_strided_slice %42 {offsets = [0, 32], sizes = [16, 32], strides = [1, 1]} : vector<16x96xf32> to vector<16x32xf32>
    %45 = vector.extract_strided_slice %42 {offsets = [0, 64], sizes = [16, 32], strides = [1, 1]} : vector<16x96xf32> to vector<16x32xf32>
    %c0_25 = arith.constant 0 : index
    %c0_26 = arith.constant 0 : index
    %c0_27 = arith.constant 0 : index
    %46 = vector.load %arg9[%c0_25, %c0_26, %c0_27] : memref<1x32x32xbf16, #tpu.memory_space<vmem>>, vector<1x32x32xbf16>
    %47 = vector.shape_cast %46 : vector<1x32x32xbf16> to vector<32x32xbf16>
    %48 = vector.extract_strided_slice %43 {offsets = [0, 0], sizes = [8, 32], strides = [1, 1]} : vector<16x32xf32> to vector<8x32xf32>
    %49 = vector.extract_strided_slice %44 {offsets = [0, 0], sizes = [8, 32], strides = [1, 1]} : vector<16x32xf32> to vector<8x32xf32>
    %50 = vector.extract_strided_slice %45 {offsets = [0, 0], sizes = [8, 32], strides = [1, 1]} : vector<16x32xf32> to vector<8x32xf32>
    %51 = vector.extract_strided_slice %7 {offsets = [0, 0, 0], sizes = [1, 8, 8], strides = [1, 1, 1]} : vector<2x8x8xf32> to vector<1x8x8xf32>
    %52 = vector.shape_cast %51 : vector<1x8x8xf32> to vector<8x8xf32>
    %cst_28 = arith.constant 0.000000e+00 : f32
    %53 = vector.broadcast %cst_28 : f32 to vector<8x8xf32>
    %54 = arith.cmpf oeq, %52, %53 : vector<8x8xf32>
    %cst_29 = arith.constant -1.000000e+09 : f32
    %cst_30 = arith.constant 0.000000e+00 : f32
    %55 = vector.broadcast %cst_29 : f32 to vector<8x8xf32>
    %56 = vector.broadcast %cst_30 : f32 to vector<8x8xf32>
    %57 = arith.select %54, %55, %56 : vector<8x8xi1>, vector<8x8xf32>
    %cst_31 = arith.constant 0.000000e+00 : f32
    %58 = vector.broadcast %cst_31 : f32 to vector<8x32xf32>
    %59 = vector.extract_strided_slice %48 {offsets = [0, 0], sizes = [8, 8], strides = [1, 1]} : vector<8x32xf32> to vector<8x8xf32>
    %60 = arith.truncf %59 : vector<8x8xf32> to vector<8x8xbf16>
    %61 = vector.extract_strided_slice %49 {offsets = [0, 0], sizes = [8, 8], strides = [1, 1]} : vector<8x32xf32> to vector<8x8xf32>
    %62 = arith.truncf %61 : vector<8x8xf32> to vector<8x8xbf16>
    %63 = vector.extract_strided_slice %50 {offsets = [0, 0], sizes = [8, 8], strides = [1, 1]} : vector<8x32xf32> to vector<8x8xf32>
    %64 = arith.truncf %63 : vector<8x8xf32> to vector<8x8xbf16>
    %cst_32 = arith.constant dense<0.000000e+00> : vector<8x8xf32>
    %65 = tpu.matmul %60, %62, %cst_32 {dimension_numbers = #tpu.dot_dimension_numbers<[1], [1], [0], [0], [0, 0, 1, 0], [], []>} : vector<8x8xbf16>, vector<8x8xbf16>, vector<8x8xf32> -> vector<8x8xf32>
    %cst_33 = arith.constant 0.353553385 : f32
    %66 = vector.broadcast %cst_33 : f32 to vector<8x8xf32>
    %67 = arith.mulf %65, %66 : vector<8x8xf32>
    %68 = arith.addf %67, %57 : vector<8x8xf32>
    %cst_34 = arith.constant dense<0xFF800000> : vector<8xf32>
    %69 = vector.multi_reduction <maximumf>, %68, %cst_34 [1] : vector<8x8xf32> to vector<8xf32>
    %70 = vector.shape_cast %69 : vector<8xf32> to vector<8x1xf32>
    %71 = vector.broadcast %70 : vector<8x1xf32> to vector<8x8xf32>
    %72 = arith.subf %68, %71 : vector<8x8xf32>
    %73 = math.exp %72 : vector<8x8xf32>
    %cst_35 = arith.constant dense<0.000000e+00> : vector<8xf32>
    %74 = vector.multi_reduction <add>, %73, %cst_35 [1] : vector<8x8xf32> to vector<8xf32>
    %75 = vector.shape_cast %74 : vector<8xf32> to vector<8x1xf32>
    %76 = tpu.reciprocal %75 {approx = true} : vector<8x1xf32> -> vector<8x1xf32>
    %77 = vector.broadcast %76 : vector<8x1xf32> to vector<8x8xf32>
    %78 = arith.mulf %73, %77 : vector<8x8xf32>
    %79 = arith.truncf %78 : vector<8x8xf32> to vector<8x8xbf16>
    %cst_36 = arith.constant dense<0.000000e+00> : vector<8x8xf32>
    %80 = tpu.matmul %79, %64, %cst_36 {dimension_numbers = #tpu.dot_dimension_numbers<[1], [0], [0], [1], [0, 0, 1, 1], [], []>} : vector<8x8xbf16>, vector<8x8xbf16>, vector<8x8xf32> -> vector<8x8xf32>
    %81 = arith.truncf %80 : vector<8x8xf32> to vector<8x8xbf16>
    %82 = vector.extract_strided_slice %47 {offsets = [0, 0], sizes = [32, 8], strides = [1, 1]} : vector<32x32xbf16> to vector<32x8xbf16>
    %cst_37 = arith.constant dense<0.000000e+00> : vector<8x32xf32>
    %83 = tpu.matmul %81, %82, %cst_37 {dimension_numbers = #tpu.dot_dimension_numbers<[1], [1], [0], [0], [0, 0, 1, 0], [], []>} : vector<8x8xbf16>, vector<32x8xbf16>, vector<8x32xf32> -> vector<8x32xf32>
    %84 = arith.addf %58, %83 : vector<8x32xf32>
    %85 = vector.extract_strided_slice %48 {offsets = [0, 8], sizes = [8, 8], strides = [1, 1]} : vector<8x32xf32> to vector<8x8xf32>
    %86 = arith.truncf %85 : vector<8x8xf32> to vector<8x8xbf16>
    %87 = vector.extract_strided_slice %49 {offsets = [0, 8], sizes = [8, 8], strides = [1, 1]} : vector<8x32xf32> to vector<8x8xf32>
    %88 = arith.truncf %87 : vector<8x8xf32> to vector<8x8xbf16>
    %89 = vector.extract_strided_slice %50 {offsets = [0, 8], sizes = [8, 8], strides = [1, 1]} : vector<8x32xf32> to vector<8x8xf32>
    %90 = arith.truncf %89 : vector<8x8xf32> to vector<8x8xbf16>
    %cst_38 = arith.constant dense<0.000000e+00> : vector<8x8xf32>
    %91 = tpu.matmul %86, %88, %cst_38 {dimension_numbers = #tpu.dot_dimension_numbers<[1], [1], [0], [0], [0, 0, 1, 0], [], []>} : vector<8x8xbf16>, vector<8x8xbf16>, vector<8x8xf32> -> vector<8x8xf32>
    %cst_39 = arith.constant 0.353553385 : f32
    %92 = vector.broadcast %cst_39 : f32 to vector<8x8xf32>
    %93 = arith.mulf %91, %92 : vector<8x8xf32>
    %94 = arith.addf %93, %57 : vector<8x8xf32>
    %cst_40 = arith.constant dense<0xFF800000> : vector<8xf32>
    %95 = vector.multi_reduction <maximumf>, %94, %cst_40 [1] : vector<8x8xf32> to vector<8xf32>
    %96 = vector.shape_cast %95 : vector<8xf32> to vector<8x1xf32>
    %97 = vector.broadcast %96 : vector<8x1xf32> to vector<8x8xf32>
    %98 = arith.subf %94, %97 : vector<8x8xf32>
    %99 = math.exp %98 : vector<8x8xf32>
    %cst_41 = arith.constant dense<0.000000e+00> : vector<8xf32>
    %100 = vector.multi_reduction <add>, %99, %cst_41 [1] : vector<8x8xf32> to vector<8xf32>
    %101 = vector.shape_cast %100 : vector<8xf32> to vector<8x1xf32>
    %102 = tpu.reciprocal %101 {approx = true} : vector<8x1xf32> -> vector<8x1xf32>
    %103 = vector.broadcast %102 : vector<8x1xf32> to vector<8x8xf32>
    %104 = arith.mulf %99, %103 : vector<8x8xf32>
    %105 = arith.truncf %104 : vector<8x8xf32> to vector<8x8xbf16>
    %cst_42 = arith.constant dense<0.000000e+00> : vector<8x8xf32>
    %106 = tpu.matmul %105, %90, %cst_42 {dimension_numbers = #tpu.dot_dimension_numbers<[1], [0], [0], [1], [0, 0, 1, 1], [], []>} : vector<8x8xbf16>, vector<8x8xbf16>, vector<8x8xf32> -> vector<8x8xf32>
    %107 = arith.truncf %106 : vector<8x8xf32> to vector<8x8xbf16>
    %108 = vector.extract_strided_slice %47 {offsets = [0, 8], sizes = [32, 8], strides = [1, 1]} : vector<32x32xbf16> to vector<32x8xbf16>
    %cst_43 = arith.constant dense<0.000000e+00> : vector<8x32xf32>
    %109 = tpu.matmul %107, %108, %cst_43 {dimension_numbers = #tpu.dot_dimension_numbers<[1], [1], [0], [0], [0, 0, 1, 0], [], []>} : vector<8x8xbf16>, vector<32x8xbf16>, vector<8x32xf32> -> vector<8x32xf32>
    %110 = arith.addf %84, %109 : vector<8x32xf32>
    %111 = vector.extract_strided_slice %48 {offsets = [0, 16], sizes = [8, 8], strides = [1, 1]} : vector<8x32xf32> to vector<8x8xf32>
    %112 = arith.truncf %111 : vector<8x8xf32> to vector<8x8xbf16>
    %113 = vector.extract_strided_slice %49 {offsets = [0, 16], sizes = [8, 8], strides = [1, 1]} : vector<8x32xf32> to vector<8x8xf32>
    %114 = arith.truncf %113 : vector<8x8xf32> to vector<8x8xbf16>
    %115 = vector.extract_strided_slice %50 {offsets = [0, 16], sizes = [8, 8], strides = [1, 1]} : vector<8x32xf32> to vector<8x8xf32>
    %116 = arith.truncf %115 : vector<8x8xf32> to vector<8x8xbf16>
    %cst_44 = arith.constant dense<0.000000e+00> : vector<8x8xf32>
    %117 = tpu.matmul %112, %114, %cst_44 {dimension_numbers = #tpu.dot_dimension_numbers<[1], [1], [0], [0], [0, 0, 1, 0], [], []>} : vector<8x8xbf16>, vector<8x8xbf16>, vector<8x8xf32> -> vector<8x8xf32>
    %cst_45 = arith.constant 0.353553385 : f32
    %118 = vector.broadcast %cst_45 : f32 to vector<8x8xf32>
    %119 = arith.mulf %117, %118 : vector<8x8xf32>
    %120 = arith.addf %119, %57 : vector<8x8xf32>
    %cst_46 = arith.constant dense<0xFF800000> : vector<8xf32>
    %121 = vector.multi_reduction <maximumf>, %120, %cst_46 [1] : vector<8x8xf32> to vector<8xf32>
    %122 = vector.shape_cast %121 : vector<8xf32> to vector<8x1xf32>
    %123 = vector.broadcast %122 : vector<8x1xf32> to vector<8x8xf32>
    %124 = arith.subf %120, %123 : vector<8x8xf32>
    %125 = math.exp %124 : vector<8x8xf32>
    %cst_47 = arith.constant dense<0.000000e+00> : vector<8xf32>
    %126 = vector.multi_reduction <add>, %125, %cst_47 [1] : vector<8x8xf32> to vector<8xf32>
    %127 = vector.shape_cast %126 : vector<8xf32> to vector<8x1xf32>
    %128 = tpu.reciprocal %127 {approx = true} : vector<8x1xf32> -> vector<8x1xf32>
    %129 = vector.broadcast %128 : vector<8x1xf32> to vector<8x8xf32>
    %130 = arith.mulf %125, %129 : vector<8x8xf32>
    %131 = arith.truncf %130 : vector<8x8xf32> to vector<8x8xbf16>
    %cst_48 = arith.constant dense<0.000000e+00> : vector<8x8xf32>
    %132 = tpu.matmul %131, %116, %cst_48 {dimension_numbers = #tpu.dot_dimension_numbers<[1], [0], [0], [1], [0, 0, 1, 1], [], []>} : vector<8x8xbf16>, vector<8x8xbf16>, vector<8x8xf32> -> vector<8x8xf32>
    %133 = arith.truncf %132 : vector<8x8xf32> to vector<8x8xbf16>
    %134 = vector.extract_strided_slice %47 {offsets = [0, 16], sizes = [32, 8], strides = [1, 1]} : vector<32x32xbf16> to vector<32x8xbf16>
    %cst_49 = arith.constant dense<0.000000e+00> : vector<8x32xf32>
    %135 = tpu.matmul %133, %134, %cst_49 {dimension_numbers = #tpu.dot_dimension_numbers<[1], [1], [0], [0], [0, 0, 1, 0], [], []>} : vector<8x8xbf16>, vector<32x8xbf16>, vector<8x32xf32> -> vector<8x32xf32>
    %136 = arith.addf %110, %135 : vector<8x32xf32>
    %137 = vector.extract_strided_slice %48 {offsets = [0, 24], sizes = [8, 8], strides = [1, 1]} : vector<8x32xf32> to vector<8x8xf32>
    %138 = arith.truncf %137 : vector<8x8xf32> to vector<8x8xbf16>
    %139 = vector.extract_strided_slice %49 {offsets = [0, 24], sizes = [8, 8], strides = [1, 1]} : vector<8x32xf32> to vector<8x8xf32>
    %140 = arith.truncf %139 : vector<8x8xf32> to vector<8x8xbf16>
    %141 = vector.extract_strided_slice %50 {offsets = [0, 24], sizes = [8, 8], strides = [1, 1]} : vector<8x32xf32> to vector<8x8xf32>
    %142 = arith.truncf %141 : vector<8x8xf32> to vector<8x8xbf16>
    %cst_50 = arith.constant dense<0.000000e+00> : vector<8x8xf32>
    %143 = tpu.matmul %138, %140, %cst_50 {dimension_numbers = #tpu.dot_dimension_numbers<[1], [1], [0], [0], [0, 0, 1, 0], [], []>} : vector<8x8xbf16>, vector<8x8xbf16>, vector<8x8xf32> -> vector<8x8xf32>
    %cst_51 = arith.constant 0.353553385 : f32
    %144 = vector.broadcast %cst_51 : f32 to vector<8x8xf32>
    %145 = arith.mulf %143, %144 : vector<8x8xf32>
    %146 = arith.addf %145, %57 : vector<8x8xf32>
    %cst_52 = arith.constant dense<0xFF800000> : vector<8xf32>
    %147 = vector.multi_reduction <maximumf>, %146, %cst_52 [1] : vector<8x8xf32> to vector<8xf32>
    %148 = vector.shape_cast %147 : vector<8xf32> to vector<8x1xf32>
    %149 = vector.broadcast %148 : vector<8x1xf32> to vector<8x8xf32>
    %150 = arith.subf %146, %149 : vector<8x8xf32>
    %151 = math.exp %150 : vector<8x8xf32>
    %cst_53 = arith.constant dense<0.000000e+00> : vector<8xf32>
    %152 = vector.multi_reduction <add>, %151, %cst_53 [1] : vector<8x8xf32> to vector<8xf32>
    %153 = vector.shape_cast %152 : vector<8xf32> to vector<8x1xf32>
    %154 = tpu.reciprocal %153 {approx = true} : vector<8x1xf32> -> vector<8x1xf32>
    %155 = vector.broadcast %154 : vector<8x1xf32> to vector<8x8xf32>
    %156 = arith.mulf %151, %155 : vector<8x8xf32>
    %157 = arith.truncf %156 : vector<8x8xf32> to vector<8x8xbf16>
    %cst_54 = arith.constant dense<0.000000e+00> : vector<8x8xf32>
    %158 = tpu.matmul %157, %142, %cst_54 {dimension_numbers = #tpu.dot_dimension_numbers<[1], [0], [0], [1], [0, 0, 1, 1], [], []>} : vector<8x8xbf16>, vector<8x8xbf16>, vector<8x8xf32> -> vector<8x8xf32>
    %159 = arith.truncf %158 : vector<8x8xf32> to vector<8x8xbf16>
    %160 = vector.extract_strided_slice %47 {offsets = [0, 24], sizes = [32, 8], strides = [1, 1]} : vector<32x32xbf16> to vector<32x8xbf16>
    %cst_55 = arith.constant dense<0.000000e+00> : vector<8x32xf32>
    %161 = tpu.matmul %159, %160, %cst_55 {dimension_numbers = #tpu.dot_dimension_numbers<[1], [1], [0], [0], [0, 0, 1, 0], [], []>} : vector<8x8xbf16>, vector<32x8xbf16>, vector<8x32xf32> -> vector<8x32xf32>
    %162 = arith.addf %136, %161 : vector<8x32xf32>
    %163 = vector.extract_strided_slice %43 {offsets = [8, 0], sizes = [8, 32], strides = [1, 1]} : vector<16x32xf32> to vector<8x32xf32>
    %164 = vector.extract_strided_slice %44 {offsets = [8, 0], sizes = [8, 32], strides = [1, 1]} : vector<16x32xf32> to vector<8x32xf32>
    %165 = vector.extract_strided_slice %45 {offsets = [8, 0], sizes = [8, 32], strides = [1, 1]} : vector<16x32xf32> to vector<8x32xf32>
    %166 = vector.extract_strided_slice %7 {offsets = [1, 0, 0], sizes = [1, 8, 8], strides = [1, 1, 1]} : vector<2x8x8xf32> to vector<1x8x8xf32>
    %167 = vector.shape_cast %166 : vector<1x8x8xf32> to vector<8x8xf32>
    %cst_56 = arith.constant 0.000000e+00 : f32
    %168 = vector.broadcast %cst_56 : f32 to vector<8x8xf32>
    %169 = arith.cmpf oeq, %167, %168 : vector<8x8xf32>
    %cst_57 = arith.constant -1.000000e+09 : f32
    %cst_58 = arith.constant 0.000000e+00 : f32
    %170 = vector.broadcast %cst_57 : f32 to vector<8x8xf32>
    %171 = vector.broadcast %cst_58 : f32 to vector<8x8xf32>
    %172 = arith.select %169, %170, %171 : vector<8x8xi1>, vector<8x8xf32>
    %cst_59 = arith.constant 0.000000e+00 : f32
    %173 = vector.broadcast %cst_59 : f32 to vector<8x32xf32>
    %174 = vector.extract_strided_slice %163 {offsets = [0, 0], sizes = [8, 8], strides = [1, 1]} : vector<8x32xf32> to vector<8x8xf32>
    %175 = arith.truncf %174 : vector<8x8xf32> to vector<8x8xbf16>
    %176 = vector.extract_strided_slice %164 {offsets = [0, 0], sizes = [8, 8], strides = [1, 1]} : vector<8x32xf32> to vector<8x8xf32>
    %177 = arith.truncf %176 : vector<8x8xf32> to vector<8x8xbf16>
    %178 = vector.extract_strided_slice %165 {offsets = [0, 0], sizes = [8, 8], strides = [1, 1]} : vector<8x32xf32> to vector<8x8xf32>
    %179 = arith.truncf %178 : vector<8x8xf32> to vector<8x8xbf16>
    %cst_60 = arith.constant dense<0.000000e+00> : vector<8x8xf32>
    %180 = tpu.matmul %175, %177, %cst_60 {dimension_numbers = #tpu.dot_dimension_numbers<[1], [1], [0], [0], [0, 0, 1, 0], [], []>} : vector<8x8xbf16>, vector<8x8xbf16>, vector<8x8xf32> -> vector<8x8xf32>
    %cst_61 = arith.constant 0.353553385 : f32
    %181 = vector.broadcast %cst_61 : f32 to vector<8x8xf32>
    %182 = arith.mulf %180, %181 : vector<8x8xf32>
    %183 = arith.addf %182, %172 : vector<8x8xf32>
    %cst_62 = arith.constant dense<0xFF800000> : vector<8xf32>
    %184 = vector.multi_reduction <maximumf>, %183, %cst_62 [1] : vector<8x8xf32> to vector<8xf32>
    %185 = vector.shape_cast %184 : vector<8xf32> to vector<8x1xf32>
    %186 = vector.broadcast %185 : vector<8x1xf32> to vector<8x8xf32>
    %187 = arith.subf %183, %186 : vector<8x8xf32>
    %188 = math.exp %187 : vector<8x8xf32>
    %cst_63 = arith.constant dense<0.000000e+00> : vector<8xf32>
    %189 = vector.multi_reduction <add>, %188, %cst_63 [1] : vector<8x8xf32> to vector<8xf32>
    %190 = vector.shape_cast %189 : vector<8xf32> to vector<8x1xf32>
    %191 = tpu.reciprocal %190 {approx = true} : vector<8x1xf32> -> vector<8x1xf32>
    %192 = vector.broadcast %191 : vector<8x1xf32> to vector<8x8xf32>
    %193 = arith.mulf %188, %192 : vector<8x8xf32>
    %194 = arith.truncf %193 : vector<8x8xf32> to vector<8x8xbf16>
    %cst_64 = arith.constant dense<0.000000e+00> : vector<8x8xf32>
    %195 = tpu.matmul %194, %179, %cst_64 {dimension_numbers = #tpu.dot_dimension_numbers<[1], [0], [0], [1], [0, 0, 1, 1], [], []>} : vector<8x8xbf16>, vector<8x8xbf16>, vector<8x8xf32> -> vector<8x8xf32>
    %196 = arith.truncf %195 : vector<8x8xf32> to vector<8x8xbf16>
    %197 = vector.extract_strided_slice %47 {offsets = [0, 0], sizes = [32, 8], strides = [1, 1]} : vector<32x32xbf16> to vector<32x8xbf16>
    %cst_65 = arith.constant dense<0.000000e+00> : vector<8x32xf32>
    %198 = tpu.matmul %196, %197, %cst_65 {dimension_numbers = #tpu.dot_dimension_numbers<[1], [1], [0], [0], [0, 0, 1, 0], [], []>} : vector<8x8xbf16>, vector<32x8xbf16>, vector<8x32xf32> -> vector<8x32xf32>
    %199 = arith.addf %173, %198 : vector<8x32xf32>
    %200 = vector.extract_strided_slice %163 {offsets = [0, 8], sizes = [8, 8], strides = [1, 1]} : vector<8x32xf32> to vector<8x8xf32>
    %201 = arith.truncf %200 : vector<8x8xf32> to vector<8x8xbf16>
    %202 = vector.extract_strided_slice %164 {offsets = [0, 8], sizes = [8, 8], strides = [1, 1]} : vector<8x32xf32> to vector<8x8xf32>
    %203 = arith.truncf %202 : vector<8x8xf32> to vector<8x8xbf16>
    %204 = vector.extract_strided_slice %165 {offsets = [0, 8], sizes = [8, 8], strides = [1, 1]} : vector<8x32xf32> to vector<8x8xf32>
    %205 = arith.truncf %204 : vector<8x8xf32> to vector<8x8xbf16>
    %cst_66 = arith.constant dense<0.000000e+00> : vector<8x8xf32>
    %206 = tpu.matmul %201, %203, %cst_66 {dimension_numbers = #tpu.dot_dimension_numbers<[1], [1], [0], [0], [0, 0, 1, 0], [], []>} : vector<8x8xbf16>, vector<8x8xbf16>, vector<8x8xf32> -> vector<8x8xf32>
    %cst_67 = arith.constant 0.353553385 : f32
    %207 = vector.broadcast %cst_67 : f32 to vector<8x8xf32>
    %208 = arith.mulf %206, %207 : vector<8x8xf32>
    %209 = arith.addf %208, %172 : vector<8x8xf32>
    %cst_68 = arith.constant dense<0xFF800000> : vector<8xf32>
    %210 = vector.multi_reduction <maximumf>, %209, %cst_68 [1] : vector<8x8xf32> to vector<8xf32>
    %211 = vector.shape_cast %210 : vector<8xf32> to vector<8x1xf32>
    %212 = vector.broadcast %211 : vector<8x1xf32> to vector<8x8xf32>
    %213 = arith.subf %209, %212 : vector<8x8xf32>
    %214 = math.exp %213 : vector<8x8xf32>
    %cst_69 = arith.constant dense<0.000000e+00> : vector<8xf32>
    %215 = vector.multi_reduction <add>, %214, %cst_69 [1] : vector<8x8xf32> to vector<8xf32>
    %216 = vector.shape_cast %215 : vector<8xf32> to vector<8x1xf32>
    %217 = tpu.reciprocal %216 {approx = true} : vector<8x1xf32> -> vector<8x1xf32>
    %218 = vector.broadcast %217 : vector<8x1xf32> to vector<8x8xf32>
    %219 = arith.mulf %214, %218 : vector<8x8xf32>
    %220 = arith.truncf %219 : vector<8x8xf32> to vector<8x8xbf16>
    %cst_70 = arith.constant dense<0.000000e+00> : vector<8x8xf32>
    %221 = tpu.matmul %220, %205, %cst_70 {dimension_numbers = #tpu.dot_dimension_numbers<[1], [0], [0], [1], [0, 0, 1, 1], [], []>} : vector<8x8xbf16>, vector<8x8xbf16>, vector<8x8xf32> -> vector<8x8xf32>
    %222 = arith.truncf %221 : vector<8x8xf32> to vector<8x8xbf16>
    %223 = vector.extract_strided_slice %47 {offsets = [0, 8], sizes = [32, 8], strides = [1, 1]} : vector<32x32xbf16> to vector<32x8xbf16>
    %cst_71 = arith.constant dense<0.000000e+00> : vector<8x32xf32>
    %224 = tpu.matmul %222, %223, %cst_71 {dimension_numbers = #tpu.dot_dimension_numbers<[1], [1], [0], [0], [0, 0, 1, 0], [], []>} : vector<8x8xbf16>, vector<32x8xbf16>, vector<8x32xf32> -> vector<8x32xf32>
    %225 = arith.addf %199, %224 : vector<8x32xf32>
    %226 = vector.extract_strided_slice %163 {offsets = [0, 16], sizes = [8, 8], strides = [1, 1]} : vector<8x32xf32> to vector<8x8xf32>
    %227 = arith.truncf %226 : vector<8x8xf32> to vector<8x8xbf16>
    %228 = vector.extract_strided_slice %164 {offsets = [0, 16], sizes = [8, 8], strides = [1, 1]} : vector<8x32xf32> to vector<8x8xf32>
    %229 = arith.truncf %228 : vector<8x8xf32> to vector<8x8xbf16>
    %230 = vector.extract_strided_slice %165 {offsets = [0, 16], sizes = [8, 8], strides = [1, 1]} : vector<8x32xf32> to vector<8x8xf32>
    %231 = arith.truncf %230 : vector<8x8xf32> to vector<8x8xbf16>
    %cst_72 = arith.constant dense<0.000000e+00> : vector<8x8xf32>
    %232 = tpu.matmul %227, %229, %cst_72 {dimension_numbers = #tpu.dot_dimension_numbers<[1], [1], [0], [0], [0, 0, 1, 0], [], []>} : vector<8x8xbf16>, vector<8x8xbf16>, vector<8x8xf32> -> vector<8x8xf32>
    %cst_73 = arith.constant 0.353553385 : f32
    %233 = vector.broadcast %cst_73 : f32 to vector<8x8xf32>
    %234 = arith.mulf %232, %233 : vector<8x8xf32>
    %235 = arith.addf %234, %172 : vector<8x8xf32>
    %cst_74 = arith.constant dense<0xFF800000> : vector<8xf32>
    %236 = vector.multi_reduction <maximumf>, %235, %cst_74 [1] : vector<8x8xf32> to vector<8xf32>
    %237 = vector.shape_cast %236 : vector<8xf32> to vector<8x1xf32>
    %238 = vector.broadcast %237 : vector<8x1xf32> to vector<8x8xf32>
    %239 = arith.subf %235, %238 : vector<8x8xf32>
    %240 = math.exp %239 : vector<8x8xf32>
    %cst_75 = arith.constant dense<0.000000e+00> : vector<8xf32>
    %241 = vector.multi_reduction <add>, %240, %cst_75 [1] : vector<8x8xf32> to vector<8xf32>
    %242 = vector.shape_cast %241 : vector<8xf32> to vector<8x1xf32>
    %243 = tpu.reciprocal %242 {approx = true} : vector<8x1xf32> -> vector<8x1xf32>
    %244 = vector.broadcast %243 : vector<8x1xf32> to vector<8x8xf32>
    %245 = arith.mulf %240, %244 : vector<8x8xf32>
    %246 = arith.truncf %245 : vector<8x8xf32> to vector<8x8xbf16>
    %cst_76 = arith.constant dense<0.000000e+00> : vector<8x8xf32>
    %247 = tpu.matmul %246, %231, %cst_76 {dimension_numbers = #tpu.dot_dimension_numbers<[1], [0], [0], [1], [0, 0, 1, 1], [], []>} : vector<8x8xbf16>, vector<8x8xbf16>, vector<8x8xf32> -> vector<8x8xf32>
    %248 = arith.truncf %247 : vector<8x8xf32> to vector<8x8xbf16>
    %249 = vector.extract_strided_slice %47 {offsets = [0, 16], sizes = [32, 8], strides = [1, 1]} : vector<32x32xbf16> to vector<32x8xbf16>
    %cst_77 = arith.constant dense<0.000000e+00> : vector<8x32xf32>
    %250 = tpu.matmul %248, %249, %cst_77 {dimension_numbers = #tpu.dot_dimension_numbers<[1], [1], [0], [0], [0, 0, 1, 0], [], []>} : vector<8x8xbf16>, vector<32x8xbf16>, vector<8x32xf32> -> vector<8x32xf32>
    %251 = arith.addf %225, %250 : vector<8x32xf32>
    %252 = vector.extract_strided_slice %163 {offsets = [0, 24], sizes = [8, 8], strides = [1, 1]} : vector<8x32xf32> to vector<8x8xf32>
    %253 = arith.truncf %252 : vector<8x8xf32> to vector<8x8xbf16>
    %254 = vector.extract_strided_slice %164 {offsets = [0, 24], sizes = [8, 8], strides = [1, 1]} : vector<8x32xf32> to vector<8x8xf32>
    %255 = arith.truncf %254 : vector<8x8xf32> to vector<8x8xbf16>
    %256 = vector.extract_strided_slice %165 {offsets = [0, 24], sizes = [8, 8], strides = [1, 1]} : vector<8x32xf32> to vector<8x8xf32>
    %257 = arith.truncf %256 : vector<8x8xf32> to vector<8x8xbf16>
    %cst_78 = arith.constant dense<0.000000e+00> : vector<8x8xf32>
    %258 = tpu.matmul %253, %255, %cst_78 {dimension_numbers = #tpu.dot_dimension_numbers<[1], [1], [0], [0], [0, 0, 1, 0], [], []>} : vector<8x8xbf16>, vector<8x8xbf16>, vector<8x8xf32> -> vector<8x8xf32>
    %cst_79 = arith.constant 0.353553385 : f32
    %259 = vector.broadcast %cst_79 : f32 to vector<8x8xf32>
    %260 = arith.mulf %258, %259 : vector<8x8xf32>
    %261 = arith.addf %260, %172 : vector<8x8xf32>
    %cst_80 = arith.constant dense<0xFF800000> : vector<8xf32>
    %262 = vector.multi_reduction <maximumf>, %261, %cst_80 [1] : vector<8x8xf32> to vector<8xf32>
    %263 = vector.shape_cast %262 : vector<8xf32> to vector<8x1xf32>
    %264 = vector.broadcast %263 : vector<8x1xf32> to vector<8x8xf32>
    %265 = arith.subf %261, %264 : vector<8x8xf32>
    %266 = math.exp %265 : vector<8x8xf32>
    %cst_81 = arith.constant dense<0.000000e+00> : vector<8xf32>
    %267 = vector.multi_reduction <add>, %266, %cst_81 [1] : vector<8x8xf32> to vector<8xf32>
    %268 = vector.shape_cast %267 : vector<8xf32> to vector<8x1xf32>
    %269 = tpu.reciprocal %268 {approx = true} : vector<8x1xf32> -> vector<8x1xf32>
    %270 = vector.broadcast %269 : vector<8x1xf32> to vector<8x8xf32>
    %271 = arith.mulf %266, %270 : vector<8x8xf32>
    %272 = arith.truncf %271 : vector<8x8xf32> to vector<8x8xbf16>
    %cst_82 = arith.constant dense<0.000000e+00> : vector<8x8xf32>
    %273 = tpu.matmul %272, %257, %cst_82 {dimension_numbers = #tpu.dot_dimension_numbers<[1], [0], [0], [1], [0, 0, 1, 1], [], []>} : vector<8x8xbf16>, vector<8x8xbf16>, vector<8x8xf32> -> vector<8x8xf32>
    %274 = arith.truncf %273 : vector<8x8xf32> to vector<8x8xbf16>
    %275 = vector.extract_strided_slice %47 {offsets = [0, 24], sizes = [32, 8], strides = [1, 1]} : vector<32x32xbf16> to vector<32x8xbf16>
    %cst_83 = arith.constant dense<0.000000e+00> : vector<8x32xf32>
    %276 = tpu.matmul %274, %275, %cst_83 {dimension_numbers = #tpu.dot_dimension_numbers<[1], [1], [0], [0], [0, 0, 1, 0], [], []>} : vector<8x8xbf16>, vector<32x8xbf16>, vector<8x32xf32> -> vector<8x32xf32>
    %277 = arith.addf %251, %276 : vector<8x32xf32>
    %278 = tpu.concatenate %162, %277 in 0 : vector<8x32xf32>, vector<8x32xf32> -> vector<16x32xf32>
    %279 = arith.addf %3, %278 : vector<16x32xf32>
    %c0_84 = arith.constant 0 : index
    %c0_85 = arith.constant 0 : index
    %c0_86 = arith.constant 0 : index
    %280 = vector.load %arg10[%c0_84, %c0_85, %c0_86] : memref<1x1x32xf32, #tpu.memory_space<vmem>>, vector<1x1x32xf32>
    %281 = vector.shape_cast %280 : vector<1x1x32xf32> to vector<1x32xf32>
    %282 = vector.broadcast %281 : vector<1x32xf32> to vector<16x32xf32>
    %283 = arith.addf %279, %282 : vector<16x32xf32>
    %c0_87 = arith.constant 0 : index
    %c0_88 = arith.constant 0 : index
    %c0_89 = arith.constant 0 : index
    %284 = vector.load %arg11[%c0_87, %c0_88, %c0_89] : memref<1x2x32xf32, #tpu.memory_space<vmem>>, vector<1x2x32xf32>
    %285 = vector.shape_cast %284 : vector<1x2x32xf32> to vector<2x32xf32>
    %286 = vector.extract_strided_slice %285 {offsets = [0, 0], sizes = [1, 32], strides = [1, 1]} : vector<2x32xf32> to vector<1x32xf32>
    %287 = vector.extract_strided_slice %285 {offsets = [1, 0], sizes = [1, 32], strides = [1, 1]} : vector<2x32xf32> to vector<1x32xf32>
    %cst_90 = arith.constant dense<0.000000e+00> : vector<16xf32>
    %288 = vector.multi_reduction <add>, %283, %cst_90 [1] : vector<16x32xf32> to vector<16xf32>
    %289 = vector.shape_cast %288 : vector<16xf32> to vector<16x1xf32>
    %cst_91 = arith.constant 3.200000e+01 : f32
    %290 = vector.broadcast %cst_91 : f32 to vector<16x1xf32>
    %291 = arith.divf %289, %290 : vector<16x1xf32>
    %292 = vector.broadcast %291 : vector<16x1xf32> to vector<16x32xf32>
    %293 = arith.subf %283, %292 : vector<16x32xf32>
    %294 = arith.mulf %293, %293 : vector<16x32xf32>
    %cst_92 = arith.constant dense<0.000000e+00> : vector<16xf32>
    %295 = vector.multi_reduction <add>, %294, %cst_92 [1] : vector<16x32xf32> to vector<16xf32>
    %296 = vector.shape_cast %295 : vector<16xf32> to vector<16x1xf32>
    %cst_93 = arith.constant 0.0322580636 : f32
    %297 = vector.broadcast %cst_93 : f32 to vector<16x1xf32>
    %298 = arith.mulf %296, %297 : vector<16x1xf32>
    %299 = math.sqrt %298 : vector<16x1xf32>
    %cst_94 = arith.constant 9.99999997E-7 : f32
    %300 = vector.broadcast %cst_94 : f32 to vector<16x1xf32>
    %301 = arith.addf %299, %300 : vector<16x1xf32>
    %302 = tpu.reciprocal %301 {approx = true} : vector<16x1xf32> -> vector<16x1xf32>
    %303 = vector.broadcast %291 : vector<16x1xf32> to vector<16x32xf32>
    %304 = arith.subf %283, %303 : vector<16x32xf32>
    %305 = vector.broadcast %286 : vector<1x32xf32> to vector<16x32xf32>
    %306 = arith.mulf %305, %304 : vector<16x32xf32>
    %307 = vector.broadcast %302 : vector<16x1xf32> to vector<16x32xf32>
    %308 = arith.mulf %306, %307 : vector<16x32xf32>
    %309 = vector.broadcast %287 : vector<1x32xf32> to vector<16x32xf32>
    %310 = arith.addf %308, %309 : vector<16x32xf32>
    %c0_95 = arith.constant 0 : index
    %c0_96 = arith.constant 0 : index
    %c0_97 = arith.constant 0 : index
    %311 = vector.load %arg12[%c0_95, %c0_96, %c0_97] : memref<1x32x32xbf16, #tpu.memory_space<vmem>>, vector<1x32x32xbf16>
    %312 = vector.shape_cast %311 : vector<1x32x32xbf16> to vector<32x32xbf16>
    %c0_98 = arith.constant 0 : index
    %c0_99 = arith.constant 0 : index
    %c0_100 = arith.constant 0 : index
    %313 = vector.load %arg13[%c0_98, %c0_99, %c0_100] : memref<1x1x32xf32, #tpu.memory_space<vmem>>, vector<1x1x32xf32>
    %314 = vector.shape_cast %313 : vector<1x1x32xf32> to vector<1x32xf32>
    %315 = arith.truncf %310 : vector<16x32xf32> to vector<16x32xbf16>
    %cst_101 = arith.constant dense<0.000000e+00> : vector<16x32xf32>
    %316 = tpu.matmul %315, %312, %cst_101 {dimension_numbers = #tpu.dot_dimension_numbers<[1], [1], [0], [0], [0, 0, 1, 0], [], []>} : vector<16x32xbf16>, vector<32x32xbf16>, vector<16x32xf32> -> vector<16x32xf32>
    %317 = vector.broadcast %314 : vector<1x32xf32> to vector<16x32xf32>
    %318 = arith.addf %316, %317 : vector<16x32xf32>
    %c0_102 = arith.constant 0 : index
    %c0_103 = arith.constant 0 : index
    %c0_104 = arith.constant 0 : index
    %319 = vector.load %arg14[%c0_102, %c0_103, %c0_104] : memref<1x64x32xbf16, #tpu.memory_space<vmem>>, vector<1x64x32xbf16>
    %320 = vector.shape_cast %319 : vector<1x64x32xbf16> to vector<64x32xbf16>
    %c0_105 = arith.constant 0 : index
    %c0_106 = arith.constant 0 : index
    %c0_107 = arith.constant 0 : index
    %321 = vector.load %arg15[%c0_105, %c0_106, %c0_107] : memref<1x1x64xf32, #tpu.memory_space<vmem>>, vector<1x1x64xf32>
    %322 = vector.shape_cast %321 : vector<1x1x64xf32> to vector<1x64xf32>
    %323 = arith.truncf %5 : vector<16x32xf32> to vector<16x32xbf16>
    %cst_108 = arith.constant dense<0.000000e+00> : vector<16x64xf32>
    %324 = tpu.matmul %323, %320, %cst_108 {dimension_numbers = #tpu.dot_dimension_numbers<[1], [1], [0], [0], [0, 0, 1, 0], [], []>} : vector<16x32xbf16>, vector<64x32xbf16>, vector<16x64xf32> -> vector<16x64xf32>
    %325 = vector.broadcast %322 : vector<1x64xf32> to vector<16x64xf32>
    %326 = arith.addf %324, %325 : vector<16x64xf32>
    %327 = vector.extract_strided_slice %326 {offsets = [0, 0], sizes = [16, 32], strides = [1, 1]} : vector<16x64xf32> to vector<16x32xf32>
    %328 = vector.extract_strided_slice %326 {offsets = [0, 32], sizes = [16, 32], strides = [1, 1]} : vector<16x64xf32> to vector<16x32xf32>
    %c0_109 = arith.constant 0 : index
    %c0_110 = arith.constant 0 : index
    %c0_111 = arith.constant 0 : index
    %329 = vector.load %arg16[%c0_109, %c0_110, %c0_111] : memref<1x32x32xbf16, #tpu.memory_space<vmem>>, vector<1x32x32xbf16>
    %330 = vector.shape_cast %329 : vector<1x32x32xbf16> to vector<32x32xbf16>
    %331 = vector.extract_strided_slice %318 {offsets = [0, 0], sizes = [8, 32], strides = [1, 1]} : vector<16x32xf32> to vector<8x32xf32>
    %332 = vector.extract_strided_slice %327 {offsets = [0, 0], sizes = [8, 32], strides = [1, 1]} : vector<16x32xf32> to vector<8x32xf32>
    %333 = vector.extract_strided_slice %328 {offsets = [0, 0], sizes = [8, 32], strides = [1, 1]} : vector<16x32xf32> to vector<8x32xf32>
    %334 = vector.extract_strided_slice %6 {offsets = [0, 0, 0], sizes = [1, 1, 8], strides = [1, 1, 1]} : vector<2x1x8xf32> to vector<1x1x8xf32>
    %335 = vector.shape_cast %334 : vector<1x1x8xf32> to vector<1x8xf32>
    %cst_112 = arith.constant 0.000000e+00 : f32
    %336 = vector.broadcast %cst_112 : f32 to vector<1x8xf32>
    %337 = arith.cmpf oeq, %335, %336 : vector<1x8xf32>
    %cst_113 = arith.constant -1.000000e+09 : f32
    %cst_114 = arith.constant 0.000000e+00 : f32
    %338 = vector.broadcast %cst_113 : f32 to vector<1x8xf32>
    %339 = vector.broadcast %cst_114 : f32 to vector<1x8xf32>
    %340 = arith.select %337, %338, %339 : vector<1x8xi1>, vector<1x8xf32>
    %cst_115 = arith.constant 0.000000e+00 : f32
    %341 = vector.broadcast %cst_115 : f32 to vector<8x32xf32>
    %342 = vector.extract_strided_slice %331 {offsets = [0, 0], sizes = [8, 8], strides = [1, 1]} : vector<8x32xf32> to vector<8x8xf32>
    %343 = arith.truncf %342 : vector<8x8xf32> to vector<8x8xbf16>
    %344 = vector.extract_strided_slice %332 {offsets = [0, 0], sizes = [8, 8], strides = [1, 1]} : vector<8x32xf32> to vector<8x8xf32>
    %345 = arith.truncf %344 : vector<8x8xf32> to vector<8x8xbf16>
    %346 = vector.extract_strided_slice %333 {offsets = [0, 0], sizes = [8, 8], strides = [1, 1]} : vector<8x32xf32> to vector<8x8xf32>
    %347 = arith.truncf %346 : vector<8x8xf32> to vector<8x8xbf16>
    %cst_116 = arith.constant dense<0.000000e+00> : vector<8x8xf32>
    %348 = tpu.matmul %343, %345, %cst_116 {dimension_numbers = #tpu.dot_dimension_numbers<[1], [1], [0], [0], [0, 0, 1, 0], [], []>} : vector<8x8xbf16>, vector<8x8xbf16>, vector<8x8xf32> -> vector<8x8xf32>
    %cst_117 = arith.constant 0.353553385 : f32
    %349 = vector.broadcast %cst_117 : f32 to vector<8x8xf32>
    %350 = arith.mulf %348, %349 : vector<8x8xf32>
    %351 = vector.broadcast %340 : vector<1x8xf32> to vector<8x8xf32>
    %352 = arith.addf %350, %351 : vector<8x8xf32>
    %cst_118 = arith.constant dense<0xFF800000> : vector<8xf32>
    %353 = vector.multi_reduction <maximumf>, %352, %cst_118 [1] : vector<8x8xf32> to vector<8xf32>
    %354 = vector.shape_cast %353 : vector<8xf32> to vector<8x1xf32>
    %355 = vector.broadcast %354 : vector<8x1xf32> to vector<8x8xf32>
    %356 = arith.subf %352, %355 : vector<8x8xf32>
    %357 = math.exp %356 : vector<8x8xf32>
    %cst_119 = arith.constant dense<0.000000e+00> : vector<8xf32>
    %358 = vector.multi_reduction <add>, %357, %cst_119 [1] : vector<8x8xf32> to vector<8xf32>
    %359 = vector.shape_cast %358 : vector<8xf32> to vector<8x1xf32>
    %360 = tpu.reciprocal %359 {approx = true} : vector<8x1xf32> -> vector<8x1xf32>
    %361 = vector.broadcast %360 : vector<8x1xf32> to vector<8x8xf32>
    %362 = arith.mulf %357, %361 : vector<8x8xf32>
    %363 = arith.truncf %362 : vector<8x8xf32> to vector<8x8xbf16>
    %cst_120 = arith.constant dense<0.000000e+00> : vector<8x8xf32>
    %364 = tpu.matmul %363, %347, %cst_120 {dimension_numbers = #tpu.dot_dimension_numbers<[1], [0], [0], [1], [0, 0, 1, 1], [], []>} : vector<8x8xbf16>, vector<8x8xbf16>, vector<8x8xf32> -> vector<8x8xf32>
    %365 = arith.truncf %364 : vector<8x8xf32> to vector<8x8xbf16>
    %366 = vector.extract_strided_slice %330 {offsets = [0, 0], sizes = [32, 8], strides = [1, 1]} : vector<32x32xbf16> to vector<32x8xbf16>
    %cst_121 = arith.constant dense<0.000000e+00> : vector<8x32xf32>
    %367 = tpu.matmul %365, %366, %cst_121 {dimension_numbers = #tpu.dot_dimension_numbers<[1], [1], [0], [0], [0, 0, 1, 0], [], []>} : vector<8x8xbf16>, vector<32x8xbf16>, vector<8x32xf32> -> vector<8x32xf32>
    %368 = arith.addf %341, %367 : vector<8x32xf32>
    %369 = vector.extract_strided_slice %331 {offsets = [0, 8], sizes = [8, 8], strides = [1, 1]} : vector<8x32xf32> to vector<8x8xf32>
    %370 = arith.truncf %369 : vector<8x8xf32> to vector<8x8xbf16>
    %371 = vector.extract_strided_slice %332 {offsets = [0, 8], sizes = [8, 8], strides = [1, 1]} : vector<8x32xf32> to vector<8x8xf32>
    %372 = arith.truncf %371 : vector<8x8xf32> to vector<8x8xbf16>
    %373 = vector.extract_strided_slice %333 {offsets = [0, 8], sizes = [8, 8], strides = [1, 1]} : vector<8x32xf32> to vector<8x8xf32>
    %374 = arith.truncf %373 : vector<8x8xf32> to vector<8x8xbf16>
    %cst_122 = arith.constant dense<0.000000e+00> : vector<8x8xf32>
    %375 = tpu.matmul %370, %372, %cst_122 {dimension_numbers = #tpu.dot_dimension_numbers<[1], [1], [0], [0], [0, 0, 1, 0], [], []>} : vector<8x8xbf16>, vector<8x8xbf16>, vector<8x8xf32> -> vector<8x8xf32>
    %cst_123 = arith.constant 0.353553385 : f32
    %376 = vector.broadcast %cst_123 : f32 to vector<8x8xf32>
    %377 = arith.mulf %375, %376 : vector<8x8xf32>
    %378 = vector.broadcast %340 : vector<1x8xf32> to vector<8x8xf32>
    %379 = arith.addf %377, %378 : vector<8x8xf32>
    %cst_124 = arith.constant dense<0xFF800000> : vector<8xf32>
    %380 = vector.multi_reduction <maximumf>, %379, %cst_124 [1] : vector<8x8xf32> to vector<8xf32>
    %381 = vector.shape_cast %380 : vector<8xf32> to vector<8x1xf32>
    %382 = vector.broadcast %381 : vector<8x1xf32> to vector<8x8xf32>
    %383 = arith.subf %379, %382 : vector<8x8xf32>
    %384 = math.exp %383 : vector<8x8xf32>
    %cst_125 = arith.constant dense<0.000000e+00> : vector<8xf32>
    %385 = vector.multi_reduction <add>, %384, %cst_125 [1] : vector<8x8xf32> to vector<8xf32>
    %386 = vector.shape_cast %385 : vector<8xf32> to vector<8x1xf32>
    %387 = tpu.reciprocal %386 {approx = true} : vector<8x1xf32> -> vector<8x1xf32>
    %388 = vector.broadcast %387 : vector<8x1xf32> to vector<8x8xf32>
    %389 = arith.mulf %384, %388 : vector<8x8xf32>
    %390 = arith.truncf %389 : vector<8x8xf32> to vector<8x8xbf16>
    %cst_126 = arith.constant dense<0.000000e+00> : vector<8x8xf32>
    %391 = tpu.matmul %390, %374, %cst_126 {dimension_numbers = #tpu.dot_dimension_numbers<[1], [0], [0], [1], [0, 0, 1, 1], [], []>} : vector<8x8xbf16>, vector<8x8xbf16>, vector<8x8xf32> -> vector<8x8xf32>
    %392 = arith.truncf %391 : vector<8x8xf32> to vector<8x8xbf16>
    %393 = vector.extract_strided_slice %330 {offsets = [0, 8], sizes = [32, 8], strides = [1, 1]} : vector<32x32xbf16> to vector<32x8xbf16>
    %cst_127 = arith.constant dense<0.000000e+00> : vector<8x32xf32>
    %394 = tpu.matmul %392, %393, %cst_127 {dimension_numbers = #tpu.dot_dimension_numbers<[1], [1], [0], [0], [0, 0, 1, 0], [], []>} : vector<8x8xbf16>, vector<32x8xbf16>, vector<8x32xf32> -> vector<8x32xf32>
    %395 = arith.addf %368, %394 : vector<8x32xf32>
    %396 = vector.extract_strided_slice %331 {offsets = [0, 16], sizes = [8, 8], strides = [1, 1]} : vector<8x32xf32> to vector<8x8xf32>
    %397 = arith.truncf %396 : vector<8x8xf32> to vector<8x8xbf16>
    %398 = vector.extract_strided_slice %332 {offsets = [0, 16], sizes = [8, 8], strides = [1, 1]} : vector<8x32xf32> to vector<8x8xf32>
    %399 = arith.truncf %398 : vector<8x8xf32> to vector<8x8xbf16>
    %400 = vector.extract_strided_slice %333 {offsets = [0, 16], sizes = [8, 8], strides = [1, 1]} : vector<8x32xf32> to vector<8x8xf32>
    %401 = arith.truncf %400 : vector<8x8xf32> to vector<8x8xbf16>
    %cst_128 = arith.constant dense<0.000000e+00> : vector<8x8xf32>
    %402 = tpu.matmul %397, %399, %cst_128 {dimension_numbers = #tpu.dot_dimension_numbers<[1], [1], [0], [0], [0, 0, 1, 0], [], []>} : vector<8x8xbf16>, vector<8x8xbf16>, vector<8x8xf32> -> vector<8x8xf32>
    %cst_129 = arith.constant 0.353553385 : f32
    %403 = vector.broadcast %cst_129 : f32 to vector<8x8xf32>
    %404 = arith.mulf %402, %403 : vector<8x8xf32>
    %405 = vector.broadcast %340 : vector<1x8xf32> to vector<8x8xf32>
    %406 = arith.addf %404, %405 : vector<8x8xf32>
    %cst_130 = arith.constant dense<0xFF800000> : vector<8xf32>
    %407 = vector.multi_reduction <maximumf>, %406, %cst_130 [1] : vector<8x8xf32> to vector<8xf32>
    %408 = vector.shape_cast %407 : vector<8xf32> to vector<8x1xf32>
    %409 = vector.broadcast %408 : vector<8x1xf32> to vector<8x8xf32>
    %410 = arith.subf %406, %409 : vector<8x8xf32>
    %411 = math.exp %410 : vector<8x8xf32>
    %cst_131 = arith.constant dense<0.000000e+00> : vector<8xf32>
    %412 = vector.multi_reduction <add>, %411, %cst_131 [1] : vector<8x8xf32> to vector<8xf32>
    %413 = vector.shape_cast %412 : vector<8xf32> to vector<8x1xf32>
    %414 = tpu.reciprocal %413 {approx = true} : vector<8x1xf32> -> vector<8x1xf32>
    %415 = vector.broadcast %414 : vector<8x1xf32> to vector<8x8xf32>
    %416 = arith.mulf %411, %415 : vector<8x8xf32>
    %417 = arith.truncf %416 : vector<8x8xf32> to vector<8x8xbf16>
    %cst_132 = arith.constant dense<0.000000e+00> : vector<8x8xf32>
    %418 = tpu.matmul %417, %401, %cst_132 {dimension_numbers = #tpu.dot_dimension_numbers<[1], [0], [0], [1], [0, 0, 1, 1], [], []>} : vector<8x8xbf16>, vector<8x8xbf16>, vector<8x8xf32> -> vector<8x8xf32>
    %419 = arith.truncf %418 : vector<8x8xf32> to vector<8x8xbf16>
    %420 = vector.extract_strided_slice %330 {offsets = [0, 16], sizes = [32, 8], strides = [1, 1]} : vector<32x32xbf16> to vector<32x8xbf16>
    %cst_133 = arith.constant dense<0.000000e+00> : vector<8x32xf32>
    %421 = tpu.matmul %419, %420, %cst_133 {dimension_numbers = #tpu.dot_dimension_numbers<[1], [1], [0], [0], [0, 0, 1, 0], [], []>} : vector<8x8xbf16>, vector<32x8xbf16>, vector<8x32xf32> -> vector<8x32xf32>
    %422 = arith.addf %395, %421 : vector<8x32xf32>
    %423 = vector.extract_strided_slice %331 {offsets = [0, 24], sizes = [8, 8], strides = [1, 1]} : vector<8x32xf32> to vector<8x8xf32>
    %424 = arith.truncf %423 : vector<8x8xf32> to vector<8x8xbf16>
    %425 = vector.extract_strided_slice %332 {offsets = [0, 24], sizes = [8, 8], strides = [1, 1]} : vector<8x32xf32> to vector<8x8xf32>
    %426 = arith.truncf %425 : vector<8x8xf32> to vector<8x8xbf16>
    %427 = vector.extract_strided_slice %333 {offsets = [0, 24], sizes = [8, 8], strides = [1, 1]} : vector<8x32xf32> to vector<8x8xf32>
    %428 = arith.truncf %427 : vector<8x8xf32> to vector<8x8xbf16>
    %cst_134 = arith.constant dense<0.000000e+00> : vector<8x8xf32>
    %429 = tpu.matmul %424, %426, %cst_134 {dimension_numbers = #tpu.dot_dimension_numbers<[1], [1], [0], [0], [0, 0, 1, 0], [], []>} : vector<8x8xbf16>, vector<8x8xbf16>, vector<8x8xf32> -> vector<8x8xf32>
    %cst_135 = arith.constant 0.353553385 : f32
    %430 = vector.broadcast %cst_135 : f32 to vector<8x8xf32>
    %431 = arith.mulf %429, %430 : vector<8x8xf32>
    %432 = vector.broadcast %340 : vector<1x8xf32> to vector<8x8xf32>
    %433 = arith.addf %431, %432 : vector<8x8xf32>
    %cst_136 = arith.constant dense<0xFF800000> : vector<8xf32>
    %434 = vector.multi_reduction <maximumf>, %433, %cst_136 [1] : vector<8x8xf32> to vector<8xf32>
    %435 = vector.shape_cast %434 : vector<8xf32> to vector<8x1xf32>
    %436 = vector.broadcast %435 : vector<8x1xf32> to vector<8x8xf32>
    %437 = arith.subf %433, %436 : vector<8x8xf32>
    %438 = math.exp %437 : vector<8x8xf32>
    %cst_137 = arith.constant dense<0.000000e+00> : vector<8xf32>
    %439 = vector.multi_reduction <add>, %438, %cst_137 [1] : vector<8x8xf32> to vector<8xf32>
    %440 = vector.shape_cast %439 : vector<8xf32> to vector<8x1xf32>
    %441 = tpu.reciprocal %440 {approx = true} : vector<8x1xf32> -> vector<8x1xf32>
    %442 = vector.broadcast %441 : vector<8x1xf32> to vector<8x8xf32>
    %443 = arith.mulf %438, %442 : vector<8x8xf32>
    %444 = arith.truncf %443 : vector<8x8xf32> to vector<8x8xbf16>
    %cst_138 = arith.constant dense<0.000000e+00> : vector<8x8xf32>
    %445 = tpu.matmul %444, %428, %cst_138 {dimension_numbers = #tpu.dot_dimension_numbers<[1], [0], [0], [1], [0, 0, 1, 1], [], []>} : vector<8x8xbf16>, vector<8x8xbf16>, vector<8x8xf32> -> vector<8x8xf32>
    %446 = arith.truncf %445 : vector<8x8xf32> to vector<8x8xbf16>
    %447 = vector.extract_strided_slice %330 {offsets = [0, 24], sizes = [32, 8], strides = [1, 1]} : vector<32x32xbf16> to vector<32x8xbf16>
    %cst_139 = arith.constant dense<0.000000e+00> : vector<8x32xf32>
    %448 = tpu.matmul %446, %447, %cst_139 {dimension_numbers = #tpu.dot_dimension_numbers<[1], [1], [0], [0], [0, 0, 1, 0], [], []>} : vector<8x8xbf16>, vector<32x8xbf16>, vector<8x32xf32> -> vector<8x32xf32>
    %449 = arith.addf %422, %448 : vector<8x32xf32>
    %450 = vector.extract_strided_slice %318 {offsets = [8, 0], sizes = [8, 32], strides = [1, 1]} : vector<16x32xf32> to vector<8x32xf32>
    %451 = vector.extract_strided_slice %327 {offsets = [8, 0], sizes = [8, 32], strides = [1, 1]} : vector<16x32xf32> to vector<8x32xf32>
    %452 = vector.extract_strided_slice %328 {offsets = [8, 0], sizes = [8, 32], strides = [1, 1]} : vector<16x32xf32> to vector<8x32xf32>
    %453 = vector.extract_strided_slice %6 {offsets = [1, 0, 0], sizes = [1, 1, 8], strides = [1, 1, 1]} : vector<2x1x8xf32> to vector<1x1x8xf32>
    %454 = vector.shape_cast %453 : vector<1x1x8xf32> to vector<1x8xf32>
    %cst_140 = arith.constant 0.000000e+00 : f32
    %455 = vector.broadcast %cst_140 : f32 to vector<1x8xf32>
    %456 = arith.cmpf oeq, %454, %455 : vector<1x8xf32>
    %cst_141 = arith.constant -1.000000e+09 : f32
    %cst_142 = arith.constant 0.000000e+00 : f32
    %457 = vector.broadcast %cst_141 : f32 to vector<1x8xf32>
    %458 = vector.broadcast %cst_142 : f32 to vector<1x8xf32>
    %459 = arith.select %456, %457, %458 : vector<1x8xi1>, vector<1x8xf32>
    %cst_143 = arith.constant 0.000000e+00 : f32
    %460 = vector.broadcast %cst_143 : f32 to vector<8x32xf32>
    %461 = vector.extract_strided_slice %450 {offsets = [0, 0], sizes = [8, 8], strides = [1, 1]} : vector<8x32xf32> to vector<8x8xf32>
    %462 = arith.truncf %461 : vector<8x8xf32> to vector<8x8xbf16>
    %463 = vector.extract_strided_slice %451 {offsets = [0, 0], sizes = [8, 8], strides = [1, 1]} : vector<8x32xf32> to vector<8x8xf32>
    %464 = arith.truncf %463 : vector<8x8xf32> to vector<8x8xbf16>
    %465 = vector.extract_strided_slice %452 {offsets = [0, 0], sizes = [8, 8], strides = [1, 1]} : vector<8x32xf32> to vector<8x8xf32>
    %466 = arith.truncf %465 : vector<8x8xf32> to vector<8x8xbf16>
    %cst_144 = arith.constant dense<0.000000e+00> : vector<8x8xf32>
    %467 = tpu.matmul %462, %464, %cst_144 {dimension_numbers = #tpu.dot_dimension_numbers<[1], [1], [0], [0], [0, 0, 1, 0], [], []>} : vector<8x8xbf16>, vector<8x8xbf16>, vector<8x8xf32> -> vector<8x8xf32>
    %cst_145 = arith.constant 0.353553385 : f32
    %468 = vector.broadcast %cst_145 : f32 to vector<8x8xf32>
    %469 = arith.mulf %467, %468 : vector<8x8xf32>
    %470 = vector.broadcast %459 : vector<1x8xf32> to vector<8x8xf32>
    %471 = arith.addf %469, %470 : vector<8x8xf32>
    %cst_146 = arith.constant dense<0xFF800000> : vector<8xf32>
    %472 = vector.multi_reduction <maximumf>, %471, %cst_146 [1] : vector<8x8xf32> to vector<8xf32>
    %473 = vector.shape_cast %472 : vector<8xf32> to vector<8x1xf32>
    %474 = vector.broadcast %473 : vector<8x1xf32> to vector<8x8xf32>
    %475 = arith.subf %471, %474 : vector<8x8xf32>
    %476 = math.exp %475 : vector<8x8xf32>
    %cst_147 = arith.constant dense<0.000000e+00> : vector<8xf32>
    %477 = vector.multi_reduction <add>, %476, %cst_147 [1] : vector<8x8xf32> to vector<8xf32>
    %478 = vector.shape_cast %477 : vector<8xf32> to vector<8x1xf32>
    %479 = tpu.reciprocal %478 {approx = true} : vector<8x1xf32> -> vector<8x1xf32>
    %480 = vector.broadcast %479 : vector<8x1xf32> to vector<8x8xf32>
    %481 = arith.mulf %476, %480 : vector<8x8xf32>
    %482 = arith.truncf %481 : vector<8x8xf32> to vector<8x8xbf16>
    %cst_148 = arith.constant dense<0.000000e+00> : vector<8x8xf32>
    %483 = tpu.matmul %482, %466, %cst_148 {dimension_numbers = #tpu.dot_dimension_numbers<[1], [0], [0], [1], [0, 0, 1, 1], [], []>} : vector<8x8xbf16>, vector<8x8xbf16>, vector<8x8xf32> -> vector<8x8xf32>
    %484 = arith.truncf %483 : vector<8x8xf32> to vector<8x8xbf16>
    %485 = vector.extract_strided_slice %330 {offsets = [0, 0], sizes = [32, 8], strides = [1, 1]} : vector<32x32xbf16> to vector<32x8xbf16>
    %cst_149 = arith.constant dense<0.000000e+00> : vector<8x32xf32>
    %486 = tpu.matmul %484, %485, %cst_149 {dimension_numbers = #tpu.dot_dimension_numbers<[1], [1], [0], [0], [0, 0, 1, 0], [], []>} : vector<8x8xbf16>, vector<32x8xbf16>, vector<8x32xf32> -> vector<8x32xf32>
    %487 = arith.addf %460, %486 : vector<8x32xf32>
    %488 = vector.extract_strided_slice %450 {offsets = [0, 8], sizes = [8, 8], strides = [1, 1]} : vector<8x32xf32> to vector<8x8xf32>
    %489 = arith.truncf %488 : vector<8x8xf32> to vector<8x8xbf16>
    %490 = vector.extract_strided_slice %451 {offsets = [0, 8], sizes = [8, 8], strides = [1, 1]} : vector<8x32xf32> to vector<8x8xf32>
    %491 = arith.truncf %490 : vector<8x8xf32> to vector<8x8xbf16>
    %492 = vector.extract_strided_slice %452 {offsets = [0, 8], sizes = [8, 8], strides = [1, 1]} : vector<8x32xf32> to vector<8x8xf32>
    %493 = arith.truncf %492 : vector<8x8xf32> to vector<8x8xbf16>
    %cst_150 = arith.constant dense<0.000000e+00> : vector<8x8xf32>
    %494 = tpu.matmul %489, %491, %cst_150 {dimension_numbers = #tpu.dot_dimension_numbers<[1], [1], [0], [0], [0, 0, 1, 0], [], []>} : vector<8x8xbf16>, vector<8x8xbf16>, vector<8x8xf32> -> vector<8x8xf32>
    %cst_151 = arith.constant 0.353553385 : f32
    %495 = vector.broadcast %cst_151 : f32 to vector<8x8xf32>
    %496 = arith.mulf %494, %495 : vector<8x8xf32>
    %497 = vector.broadcast %459 : vector<1x8xf32> to vector<8x8xf32>
    %498 = arith.addf %496, %497 : vector<8x8xf32>
    %cst_152 = arith.constant dense<0xFF800000> : vector<8xf32>
    %499 = vector.multi_reduction <maximumf>, %498, %cst_152 [1] : vector<8x8xf32> to vector<8xf32>
    %500 = vector.shape_cast %499 : vector<8xf32> to vector<8x1xf32>
    %501 = vector.broadcast %500 : vector<8x1xf32> to vector<8x8xf32>
    %502 = arith.subf %498, %501 : vector<8x8xf32>
    %503 = math.exp %502 : vector<8x8xf32>
    %cst_153 = arith.constant dense<0.000000e+00> : vector<8xf32>
    %504 = vector.multi_reduction <add>, %503, %cst_153 [1] : vector<8x8xf32> to vector<8xf32>
    %505 = vector.shape_cast %504 : vector<8xf32> to vector<8x1xf32>
    %506 = tpu.reciprocal %505 {approx = true} : vector<8x1xf32> -> vector<8x1xf32>
    %507 = vector.broadcast %506 : vector<8x1xf32> to vector<8x8xf32>
    %508 = arith.mulf %503, %507 : vector<8x8xf32>
    %509 = arith.truncf %508 : vector<8x8xf32> to vector<8x8xbf16>
    %cst_154 = arith.constant dense<0.000000e+00> : vector<8x8xf32>
    %510 = tpu.matmul %509, %493, %cst_154 {dimension_numbers = #tpu.dot_dimension_numbers<[1], [0], [0], [1], [0, 0, 1, 1], [], []>} : vector<8x8xbf16>, vector<8x8xbf16>, vector<8x8xf32> -> vector<8x8xf32>
    %511 = arith.truncf %510 : vector<8x8xf32> to vector<8x8xbf16>
    %512 = vector.extract_strided_slice %330 {offsets = [0, 8], sizes = [32, 8], strides = [1, 1]} : vector<32x32xbf16> to vector<32x8xbf16>
    %cst_155 = arith.constant dense<0.000000e+00> : vector<8x32xf32>
    %513 = tpu.matmul %511, %512, %cst_155 {dimension_numbers = #tpu.dot_dimension_numbers<[1], [1], [0], [0], [0, 0, 1, 0], [], []>} : vector<8x8xbf16>, vector<32x8xbf16>, vector<8x32xf32> -> vector<8x32xf32>
    %514 = arith.addf %487, %513 : vector<8x32xf32>
    %515 = vector.extract_strided_slice %450 {offsets = [0, 16], sizes = [8, 8], strides = [1, 1]} : vector<8x32xf32> to vector<8x8xf32>
    %516 = arith.truncf %515 : vector<8x8xf32> to vector<8x8xbf16>
    %517 = vector.extract_strided_slice %451 {offsets = [0, 16], sizes = [8, 8], strides = [1, 1]} : vector<8x32xf32> to vector<8x8xf32>
    %518 = arith.truncf %517 : vector<8x8xf32> to vector<8x8xbf16>
    %519 = vector.extract_strided_slice %452 {offsets = [0, 16], sizes = [8, 8], strides = [1, 1]} : vector<8x32xf32> to vector<8x8xf32>
    %520 = arith.truncf %519 : vector<8x8xf32> to vector<8x8xbf16>
    %cst_156 = arith.constant dense<0.000000e+00> : vector<8x8xf32>
    %521 = tpu.matmul %516, %518, %cst_156 {dimension_numbers = #tpu.dot_dimension_numbers<[1], [1], [0], [0], [0, 0, 1, 0], [], []>} : vector<8x8xbf16>, vector<8x8xbf16>, vector<8x8xf32> -> vector<8x8xf32>
    %cst_157 = arith.constant 0.353553385 : f32
    %522 = vector.broadcast %cst_157 : f32 to vector<8x8xf32>
    %523 = arith.mulf %521, %522 : vector<8x8xf32>
    %524 = vector.broadcast %459 : vector<1x8xf32> to vector<8x8xf32>
    %525 = arith.addf %523, %524 : vector<8x8xf32>
    %cst_158 = arith.constant dense<0xFF800000> : vector<8xf32>
    %526 = vector.multi_reduction <maximumf>, %525, %cst_158 [1] : vector<8x8xf32> to vector<8xf32>
    %527 = vector.shape_cast %526 : vector<8xf32> to vector<8x1xf32>
    %528 = vector.broadcast %527 : vector<8x1xf32> to vector<8x8xf32>
    %529 = arith.subf %525, %528 : vector<8x8xf32>
    %530 = math.exp %529 : vector<8x8xf32>
    %cst_159 = arith.constant dense<0.000000e+00> : vector<8xf32>
    %531 = vector.multi_reduction <add>, %530, %cst_159 [1] : vector<8x8xf32> to vector<8xf32>
    %532 = vector.shape_cast %531 : vector<8xf32> to vector<8x1xf32>
    %533 = tpu.reciprocal %532 {approx = true} : vector<8x1xf32> -> vector<8x1xf32>
    %534 = vector.broadcast %533 : vector<8x1xf32> to vector<8x8xf32>
    %535 = arith.mulf %530, %534 : vector<8x8xf32>
    %536 = arith.truncf %535 : vector<8x8xf32> to vector<8x8xbf16>
    %cst_160 = arith.constant dense<0.000000e+00> : vector<8x8xf32>
    %537 = tpu.matmul %536, %520, %cst_160 {dimension_numbers = #tpu.dot_dimension_numbers<[1], [0], [0], [1], [0, 0, 1, 1], [], []>} : vector<8x8xbf16>, vector<8x8xbf16>, vector<8x8xf32> -> vector<8x8xf32>
    %538 = arith.truncf %537 : vector<8x8xf32> to vector<8x8xbf16>
    %539 = vector.extract_strided_slice %330 {offsets = [0, 16], sizes = [32, 8], strides = [1, 1]} : vector<32x32xbf16> to vector<32x8xbf16>
    %cst_161 = arith.constant dense<0.000000e+00> : vector<8x32xf32>
    %540 = tpu.matmul %538, %539, %cst_161 {dimension_numbers = #tpu.dot_dimension_numbers<[1], [1], [0], [0], [0, 0, 1, 0], [], []>} : vector<8x8xbf16>, vector<32x8xbf16>, vector<8x32xf32> -> vector<8x32xf32>
    %541 = arith.addf %514, %540 : vector<8x32xf32>
    %542 = vector.extract_strided_slice %450 {offsets = [0, 24], sizes = [8, 8], strides = [1, 1]} : vector<8x32xf32> to vector<8x8xf32>
    %543 = arith.truncf %542 : vector<8x8xf32> to vector<8x8xbf16>
    %544 = vector.extract_strided_slice %451 {offsets = [0, 24], sizes = [8, 8], strides = [1, 1]} : vector<8x32xf32> to vector<8x8xf32>
    %545 = arith.truncf %544 : vector<8x8xf32> to vector<8x8xbf16>
    %546 = vector.extract_strided_slice %452 {offsets = [0, 24], sizes = [8, 8], strides = [1, 1]} : vector<8x32xf32> to vector<8x8xf32>
    %547 = arith.truncf %546 : vector<8x8xf32> to vector<8x8xbf16>
    %cst_162 = arith.constant dense<0.000000e+00> : vector<8x8xf32>
    %548 = tpu.matmul %543, %545, %cst_162 {dimension_numbers = #tpu.dot_dimension_numbers<[1], [1], [0], [0], [0, 0, 1, 0], [], []>} : vector<8x8xbf16>, vector<8x8xbf16>, vector<8x8xf32> -> vector<8x8xf32>
    %cst_163 = arith.constant 0.353553385 : f32
    %549 = vector.broadcast %cst_163 : f32 to vector<8x8xf32>
    %550 = arith.mulf %548, %549 : vector<8x8xf32>
    %551 = vector.broadcast %459 : vector<1x8xf32> to vector<8x8xf32>
    %552 = arith.addf %550, %551 : vector<8x8xf32>
    %cst_164 = arith.constant dense<0xFF800000> : vector<8xf32>
    %553 = vector.multi_reduction <maximumf>, %552, %cst_164 [1] : vector<8x8xf32> to vector<8xf32>
    %554 = vector.shape_cast %553 : vector<8xf32> to vector<8x1xf32>
    %555 = vector.broadcast %554 : vector<8x1xf32> to vector<8x8xf32>
    %556 = arith.subf %552, %555 : vector<8x8xf32>
    %557 = math.exp %556 : vector<8x8xf32>
    %cst_165 = arith.constant dense<0.000000e+00> : vector<8xf32>
    %558 = vector.multi_reduction <add>, %557, %cst_165 [1] : vector<8x8xf32> to vector<8xf32>
    %559 = vector.shape_cast %558 : vector<8xf32> to vector<8x1xf32>
    %560 = tpu.reciprocal %559 {approx = true} : vector<8x1xf32> -> vector<8x1xf32>
    %561 = vector.broadcast %560 : vector<8x1xf32> to vector<8x8xf32>
    %562 = arith.mulf %557, %561 : vector<8x8xf32>
    %563 = arith.truncf %562 : vector<8x8xf32> to vector<8x8xbf16>
    %cst_166 = arith.constant dense<0.000000e+00> : vector<8x8xf32>
    %564 = tpu.matmul %563, %547, %cst_166 {dimension_numbers = #tpu.dot_dimension_numbers<[1], [0], [0], [1], [0, 0, 1, 1], [], []>} : vector<8x8xbf16>, vector<8x8xbf16>, vector<8x8xf32> -> vector<8x8xf32>
    %565 = arith.truncf %564 : vector<8x8xf32> to vector<8x8xbf16>
    %566 = vector.extract_strided_slice %330 {offsets = [0, 24], sizes = [32, 8], strides = [1, 1]} : vector<32x32xbf16> to vector<32x8xbf16>
    %cst_167 = arith.constant dense<0.000000e+00> : vector<8x32xf32>
    %567 = tpu.matmul %565, %566, %cst_167 {dimension_numbers = #tpu.dot_dimension_numbers<[1], [1], [0], [0], [0, 0, 1, 0], [], []>} : vector<8x8xbf16>, vector<32x8xbf16>, vector<8x32xf32> -> vector<8x32xf32>
    %568 = arith.addf %541, %567 : vector<8x32xf32>
    %569 = tpu.concatenate %449, %568 in 0 : vector<8x32xf32>, vector<8x32xf32> -> vector<16x32xf32>
    %570 = arith.addf %283, %569 : vector<16x32xf32>
    %c0_168 = arith.constant 0 : index
    %c0_169 = arith.constant 0 : index
    %c0_170 = arith.constant 0 : index
    %571 = vector.load %arg17[%c0_168, %c0_169, %c0_170] : memref<1x1x32xf32, #tpu.memory_space<vmem>>, vector<1x1x32xf32>
    %572 = vector.shape_cast %571 : vector<1x1x32xf32> to vector<1x32xf32>
    %573 = vector.broadcast %572 : vector<1x32xf32> to vector<16x32xf32>
    %574 = arith.addf %570, %573 : vector<16x32xf32>
    %c0_171 = arith.constant 0 : index
    %c0_172 = arith.constant 0 : index
    %c0_173 = arith.constant 0 : index
    %575 = vector.load %arg18[%c0_171, %c0_172, %c0_173] : memref<1x2x32xf32, #tpu.memory_space<vmem>>, vector<1x2x32xf32>
    %576 = vector.shape_cast %575 : vector<1x2x32xf32> to vector<2x32xf32>
    %577 = vector.extract_strided_slice %576 {offsets = [0, 0], sizes = [1, 32], strides = [1, 1]} : vector<2x32xf32> to vector<1x32xf32>
    %578 = vector.extract_strided_slice %576 {offsets = [1, 0], sizes = [1, 32], strides = [1, 1]} : vector<2x32xf32> to vector<1x32xf32>
    %cst_174 = arith.constant dense<0.000000e+00> : vector<16xf32>
    %579 = vector.multi_reduction <add>, %574, %cst_174 [1] : vector<16x32xf32> to vector<16xf32>
    %580 = vector.shape_cast %579 : vector<16xf32> to vector<16x1xf32>
    %cst_175 = arith.constant 3.200000e+01 : f32
    %581 = vector.broadcast %cst_175 : f32 to vector<16x1xf32>
    %582 = arith.divf %580, %581 : vector<16x1xf32>
    %583 = vector.broadcast %582 : vector<16x1xf32> to vector<16x32xf32>
    %584 = arith.subf %574, %583 : vector<16x32xf32>
    %585 = arith.mulf %584, %584 : vector<16x32xf32>
    %cst_176 = arith.constant dense<0.000000e+00> : vector<16xf32>
    %586 = vector.multi_reduction <add>, %585, %cst_176 [1] : vector<16x32xf32> to vector<16xf32>
    %587 = vector.shape_cast %586 : vector<16xf32> to vector<16x1xf32>
    %cst_177 = arith.constant 0.0322580636 : f32
    %588 = vector.broadcast %cst_177 : f32 to vector<16x1xf32>
    %589 = arith.mulf %587, %588 : vector<16x1xf32>
    %590 = math.sqrt %589 : vector<16x1xf32>
    %cst_178 = arith.constant 9.99999997E-7 : f32
    %591 = vector.broadcast %cst_178 : f32 to vector<16x1xf32>
    %592 = arith.addf %590, %591 : vector<16x1xf32>
    %593 = tpu.reciprocal %592 {approx = true} : vector<16x1xf32> -> vector<16x1xf32>
    %594 = vector.broadcast %582 : vector<16x1xf32> to vector<16x32xf32>
    %595 = arith.subf %574, %594 : vector<16x32xf32>
    %596 = vector.broadcast %577 : vector<1x32xf32> to vector<16x32xf32>
    %597 = arith.mulf %596, %595 : vector<16x32xf32>
    %598 = vector.broadcast %593 : vector<16x1xf32> to vector<16x32xf32>
    %599 = arith.mulf %597, %598 : vector<16x32xf32>
    %600 = vector.broadcast %578 : vector<1x32xf32> to vector<16x32xf32>
    %601 = arith.addf %599, %600 : vector<16x32xf32>
    %c0_179 = arith.constant 0 : index
    %c0_180 = arith.constant 0 : index
    %c0_181 = arith.constant 0 : index
    %602 = vector.load %arg19[%c0_179, %c0_180, %c0_181] : memref<1x64x32xbf16, #tpu.memory_space<vmem>>, vector<1x64x32xbf16>
    %603 = vector.shape_cast %602 : vector<1x64x32xbf16> to vector<64x32xbf16>
    %c0_182 = arith.constant 0 : index
    %c0_183 = arith.constant 0 : index
    %c0_184 = arith.constant 0 : index
    %604 = vector.load %arg20[%c0_182, %c0_183, %c0_184] : memref<1x1x64xf32, #tpu.memory_space<vmem>>, vector<1x1x64xf32>
    %605 = vector.shape_cast %604 : vector<1x1x64xf32> to vector<1x64xf32>
    %606 = arith.truncf %601 : vector<16x32xf32> to vector<16x32xbf16>
    %cst_185 = arith.constant dense<0.000000e+00> : vector<16x64xf32>
    %607 = tpu.matmul %606, %603, %cst_185 {dimension_numbers = #tpu.dot_dimension_numbers<[1], [1], [0], [0], [0, 0, 1, 0], [], []>} : vector<16x32xbf16>, vector<64x32xbf16>, vector<16x64xf32> -> vector<16x64xf32>
    %608 = vector.broadcast %605 : vector<1x64xf32> to vector<16x64xf32>
    %609 = arith.addf %607, %608 : vector<16x64xf32>
    %cst_186 = arith.constant 0.000000e+00 : f32
    %610 = vector.broadcast %cst_186 : f32 to vector<16x64xf32>
    %611 = arith.maximumf %609, %610 : vector<16x64xf32>
    %c0_187 = arith.constant 0 : index
    %c0_188 = arith.constant 0 : index
    %c0_189 = arith.constant 0 : index
    %612 = vector.load %arg21[%c0_187, %c0_188, %c0_189] : memref<1x32x64xbf16, #tpu.memory_space<vmem>>, vector<1x32x64xbf16>
    %613 = vector.shape_cast %612 : vector<1x32x64xbf16> to vector<32x64xbf16>
    %c0_190 = arith.constant 0 : index
    %c0_191 = arith.constant 0 : index
    %c0_192 = arith.constant 0 : index
    %614 = vector.load %arg22[%c0_190, %c0_191, %c0_192] : memref<1x1x32xf32, #tpu.memory_space<vmem>>, vector<1x1x32xf32>
    %615 = vector.shape_cast %614 : vector<1x1x32xf32> to vector<1x32xf32>
    %616 = arith.truncf %611 : vector<16x64xf32> to vector<16x64xbf16>
    %cst_193 = arith.constant dense<0.000000e+00> : vector<16x32xf32>
    %617 = tpu.matmul %616, %613, %cst_193 {dimension_numbers = #tpu.dot_dimension_numbers<[1], [1], [0], [0], [0, 0, 1, 0], [], []>} : vector<16x64xbf16>, vector<32x64xbf16>, vector<16x32xf32> -> vector<16x32xf32>
    %618 = vector.broadcast %615 : vector<1x32xf32> to vector<16x32xf32>
    %619 = arith.addf %617, %618 : vector<16x32xf32>
    %620 = arith.addf %574, %619 : vector<16x32xf32>
    %c0_194 = arith.constant 0 : index
    %c0_195 = arith.constant 0 : index
    %621 = vector.load %arg25[%c0_194, %c0_195] : memref<16x32xf32, #tpu.memory_space<vmem>>, vector<16x32xf32>
    tpu.vector_store %arg25[%c0_194, %c0_195], %620 {strides = array<i32>} : memref<16x32xf32, #tpu.memory_space<vmem>>, vector<16x32xf32>,
    %c1_i32 = arith.constant 1 : i32
    %622 = arith.cmpi eq, %arg1, %c1_i32 : i32
    %623 = arith.extui %622 : i1 to i32
    %c0_i32_196 = arith.constant 0 : i32
    %624 = arith.cmpi ne, %623, %c0_i32_196 : i32
    scf.if %624 {
      %c0_197 = arith.constant 0 : index
      %c0_198 = arith.constant 0 : index
      %625 = vector.load %arg23[%c0_197, %c0_198] : memref<2x32xf32, #tpu.memory_space<vmem>>, vector<2x32xf32>
      %626 = vector.extract_strided_slice %625 {offsets = [0, 0], sizes = [1, 32], strides = [1, 1]} : vector<2x32xf32> to vector<1x32xf32>
      %627 = vector.extract_strided_slice %625 {offsets = [1, 0], sizes = [1, 32], strides = [1, 1]} : vector<2x32xf32> to vector<1x32xf32>
      %cst_199 = arith.constant dense<0.000000e+00> : vector<16xf32>
      %628 = vector.multi_reduction <add>, %620, %cst_199 [1] : vector<16x32xf32> to vector<16xf32>
      %629 = vector.shape_cast %628 : vector<16xf32> to vector<16x1xf32>
      %cst_200 = arith.constant 3.200000e+01 : f32
      %630 = vector.broadcast %cst_200 : f32 to vector<16x1xf32>
      %631 = arith.divf %629, %630 : vector<16x1xf32>
      %632 = vector.broadcast %631 : vector<16x1xf32> to vector<16x32xf32>
      %633 = arith.subf %620, %632 : vector<16x32xf32>
      %634 = arith.mulf %633, %633 : vector<16x32xf32>
      %cst_201 = arith.constant dense<0.000000e+00> : vector<16xf32>
      %635 = vector.multi_reduction <add>, %634, %cst_201 [1] : vector<16x32xf32> to vector<16xf32>
      %636 = vector.shape_cast %635 : vector<16xf32> to vector<16x1xf32>
      %cst_202 = arith.constant 0.0322580636 : f32
      %637 = vector.broadcast %cst_202 : f32 to vector<16x1xf32>
      %638 = arith.mulf %636, %637 : vector<16x1xf32>
      %639 = math.sqrt %638 : vector<16x1xf32>
      %cst_203 = arith.constant 9.99999997E-7 : f32
      %640 = vector.broadcast %cst_203 : f32 to vector<16x1xf32>
      %641 = arith.addf %639, %640 : vector<16x1xf32>
      %642 = tpu.reciprocal %641 {approx = true} : vector<16x1xf32> -> vector<16x1xf32>
      %643 = vector.broadcast %631 : vector<16x1xf32> to vector<16x32xf32>
      %644 = arith.subf %620, %643 : vector<16x32xf32>
      %645 = vector.broadcast %626 : vector<1x32xf32> to vector<16x32xf32>
      %646 = arith.mulf %645, %644 : vector<16x32xf32>
      %647 = vector.broadcast %642 : vector<16x1xf32> to vector<16x32xf32>
      %648 = arith.mulf %646, %647 : vector<16x32xf32>
      %649 = vector.broadcast %627 : vector<1x32xf32> to vector<16x32xf32>
      %650 = arith.addf %648, %649 : vector<16x32xf32>
      %651 = vector.shape_cast %650 : vector<16x32xf32> to vector<2x8x32xf32>
      %c0_204 = arith.constant 0 : index
      %c0_205 = arith.constant 0 : index
      %c0_206 = arith.constant 0 : index
      %652 = vector.load %arg24[%c0_204, %c0_205, %c0_206] : memref<2x8x32xf32, #tpu.memory_space<vmem>>, vector<2x8x32xf32>
      tpu.vector_store %arg24[%c0_204, %c0_205, %c0_206], %651 {strides = array<i32>} : memref<2x8x32xf32, #tpu.memory_space<vmem>>, vector<2x8x32xf32>,
    } else {
    }
    return
  }
  func.func @transform_0(%arg0: i32, %arg1: i32) -> (i32, i32, i32) {
    %c0_i32 = arith.constant 0 : i32
    %c0_i32_0 = arith.constant 0 : i32
    %c0_i32_1 = arith.constant 0 : i32
    return %arg0, %c0_i32, %c0_i32_0 : i32, i32, i32
  }
  func.func @transform_1(%arg0: i32, %arg1: i32) -> (i32, i32, i32) {
    %c0_i32 = arith.constant 0 : i32
    %c0_i32_0 = arith.constant 0 : i32
    %c0_i32_1 = arith.constant 0 : i32
    return %arg0, %c0_i32, %c0_i32_0 : i32, i32, i32
  }
  func.func @transform_2(%arg0: i32, %arg1: i32) -> (i32, i32, i32) {
    %c0_i32 = arith.constant 0 : i32
    %c0_i32_0 = arith.constant 0 : i32
    %c0_i32_1 = arith.constant 0 : i32
    return %arg0, %c0_i32, %c0_i32_0 : i32, i32, i32
  }
  func.func @transform_3(%arg0: i32, %arg1: i32) -> (i32, i32, i32) {
    %c0_i32 = arith.constant 0 : i32
    %c0_i32_0 = arith.constant 0 : i32
    %c0_i32_1 = arith.constant 0 : i32
    return %arg0, %c0_i32, %c0_i32_0 : i32, i32, i32
  }
  func.func @transform_4(%arg0: i32, %arg1: i32) -> (i32, i32, i32) {
    %c0_i32 = arith.constant 0 : i32
    %c0_i32_0 = arith.constant 0 : i32
    %c0_i32_1 = arith.constant 0 : i32
    return %arg1, %c0_i32, %c0_i32_0 : i32, i32, i32
  }
  func.func @transform_5(%arg0: i32, %arg1: i32) -> (i32, i32, i32) {
    %c0_i32 = arith.constant 0 : i32
    %c0_i32_0 = arith.constant 0 : i32
    %c0_i32_1 = arith.constant 0 : i32
    return %arg1, %c0_i32, %c0_i32_0 : i32, i32, i32
  }
  func.func @transform_6(%arg0: i32, %arg1: i32) -> (i32, i32, i32) {
    %c0_i32 = arith.constant 0 : i32
    %c0_i32_0 = arith.constant 0 : i32
    %c0_i32_1 = arith.constant 0 : i32
    return %arg1, %c0_i32, %c0_i32_0 : i32, i32, i32
  }
  func.func @transform_7(%arg0: i32, %arg1: i32) -> (i32, i32, i32) {
    %c0_i32 = arith.constant 0 : i32
    %c0_i32_0 = arith.constant 0 : i32
    %c0_i32_1 = arith.constant 0 : i32
    return %arg1, %c0_i32, %c0_i32_0 : i32, i32, i32
  }
  func.func @transform_8(%arg0: i32, %arg1: i32) -> (i32, i32, i32) {
    %c0_i32 = arith.constant 0 : i32
    %c0_i32_0 = arith.constant 0 : i32
    %c0_i32_1 = arith.constant 0 : i32
    return %arg1, %c0_i32, %c0_i32_0 : i32, i32, i32
  }
  func.func @transform_9(%arg0: i32, %arg1: i32) -> (i32, i32, i32) {
    %c0_i32 = arith.constant 0 : i32
    %c0_i32_0 = arith.constant 0 : i32
    %c0_i32_1 = arith.constant 0 : i32
    return %arg1, %c0_i32, %c0_i32_0 : i32, i32, i32
  }
  func.func @transform_10(%arg0: i32, %arg1: i32) -> (i32, i32, i32) {
    %c0_i32 = arith.constant 0 : i32
    %c0_i32_0 = arith.constant 0 : i32
    %c0_i32_1 = arith.constant 0 : i32
    return %arg1, %c0_i32, %c0_i32_0 : i32, i32, i32
  }
  func.func @transform_11(%arg0: i32, %arg1: i32) -> (i32, i32, i32) {
    %c0_i32 = arith.constant 0 : i32
    %c0_i32_0 = arith.constant 0 : i32
    %c0_i32_1 = arith.constant 0 : i32
    return %arg1, %c0_i32, %c0_i32_0 : i32, i32, i32
  }
  func.func @transform_12(%arg0: i32, %arg1: i32) -> (i32, i32, i32) {
    %c0_i32 = arith.constant 0 : i32
    %c0_i32_0 = arith.constant 0 : i32
    %c0_i32_1 = arith.constant 0 : i32
    return %arg1, %c0_i32, %c0_i32_0 : i32, i32, i32
  }
  func.func @transform_13(%arg0: i32, %arg1: i32) -> (i32, i32, i32) {
    %c0_i32 = arith.constant 0 : i32
    %c0_i32_0 = arith.constant 0 : i32
    %c0_i32_1 = arith.constant 0 : i32
    return %arg1, %c0_i32, %c0_i32_0 : i32, i32, i32
  }
  func.func @transform_14(%arg0: i32, %arg1: i32) -> (i32, i32, i32) {
    %c0_i32 = arith.constant 0 : i32
    %c0_i32_0 = arith.constant 0 : i32
    %c0_i32_1 = arith.constant 0 : i32
    return %arg1, %c0_i32, %c0_i32_0 : i32, i32, i32
  }
  func.func @transform_15(%arg0: i32, %arg1: i32) -> (i32, i32, i32) {
    %c0_i32 = arith.constant 0 : i32
    %c0_i32_0 = arith.constant 0 : i32
    %c0_i32_1 = arith.constant 0 : i32
    return %arg1, %c0_i32, %c0_i32_0 : i32, i32, i32
  }
  func.func @transform_16(%arg0: i32, %arg1: i32) -> (i32, i32, i32) {
    %c0_i32 = arith.constant 0 : i32
    %c0_i32_0 = arith.constant 0 : i32
    %c0_i32_1 = arith.constant 0 : i32
    return %arg1, %c0_i32, %c0_i32_0 : i32, i32, i32
  }
  func.func @transform_17(%arg0: i32, %arg1: i32) -> (i32, i32, i32) {
    %c0_i32 = arith.constant 0 : i32
    %c0_i32_0 = arith.constant 0 : i32
    %c0_i32_1 = arith.constant 0 : i32
    return %arg1, %c0_i32, %c0_i32_0 : i32, i32, i32
  }
  func.func @transform_18(%arg0: i32, %arg1: i32) -> (i32, i32, i32) {
    %c0_i32 = arith.constant 0 : i32
    %c0_i32_0 = arith.constant 0 : i32
    %c0_i32_1 = arith.constant 0 : i32
    return %arg1, %c0_i32, %c0_i32_0 : i32, i32, i32
  }
  func.func @transform_19(%arg0: i32, %arg1: i32) -> (i32, i32, i32) {
    %c0_i32 = arith.constant 0 : i32
    %c0_i32_0 = arith.constant 0 : i32
    %c0_i32_1 = arith.constant 0 : i32
    return %arg1, %c0_i32, %c0_i32_0 : i32, i32, i32
  }
  func.func @transform_20(%arg0: i32, %arg1: i32) -> (i32, i32, i32) {
    %c0_i32 = arith.constant 0 : i32
    %c0_i32_0 = arith.constant 0 : i32
    %c0_i32_1 = arith.constant 0 : i32
    return %arg1, %c0_i32, %c0_i32_0 : i32, i32, i32
  }
  func.func @transform_21(%arg0: i32, %arg1: i32) -> (i32, i32) {
    %c0_i32 = arith.constant 0 : i32
    %c0_i32_0 = arith.constant 0 : i32
    %c0_i32_1 = arith.constant 0 : i32
    return %c0_i32, %c0_i32_0 : i32, i32
  }
  func.func @transform_22(%arg0: i32, %arg1: i32) -> (i32, i32, i32) {
    %c0_i32 = arith.constant 0 : i32
    %c0_i32_0 = arith.constant 0 : i32
    %c0_i32_1 = arith.constant 0 : i32
    return %arg0, %c0_i32, %c0_i32_0 : i32, i32, i32
  }
}

</mosaic_0001>

<llo_original>
// kernel: transformer_forward.5
$region0: #{transformer_forward.5}
  #allocation0 [shape = 'u32[]', space=smem, size = 0x4, offset = 0x4, fixed_abs, tag = 'smem constant byte address 0x4 - core index']
  #allocation1 [shape = 'u32[144,128]{1,0:T(1,128)}', space=vmem, size = 0x12000, scoped, tag = 'internal scratch']
  %s0 = inlined_call_operand.vmem [shape: f32[2,8,32], index: 0, kind: input, shape index: {}]
  %s1 = inlined_call_operand.vmem [shape: bf16[128,32], index: 1, kind: input, shape index: {}]
  %s2 = inlined_call_operand.vmem [shape: f32[1,128], index: 2, kind: input, shape index: {}]
  %s3 = inlined_call_operand.hbm [shape: f32[2,8,128], index: 3, kind: output, shape index: {}]
  %s4 = sld [smem:[#allocation0]]
  $region22: #{transformer_forward.5} parent=0
    _
  %s6 = ssub.s32 1, %s4
  %s7 = scalar_select 0, %s6, %s4
  $region1: #{transformer_forward.5} parent=0
    #allocation2 [shape = 'u8[8192]{0}', space=vmem, size = 0x2000, scoped, tag = 'output window, operand 0, single buffered']
    #allocation3 [shape = 's32[1]{0}', space=sflag, size = 0x4, scoped, tag = 'scoped memory for transformer_forward.5']
    %8 = vsyncpa [#allocation3], 0
    // Predicated region
    $region2: #{transformer_forward.5} parent=1 // pred_check
      _
    $region3: #{transformer_forward.5} parent=1 // pred_check_branch
      %10 = sbr.rel (0) target = $region5
    $region4: #{transformer_forward.5} parent=1 // pred_region
      _
    $region5: #{transformer_forward.5} parent=1 // pred_fallthru
      _
    // Predicated region
    $region6: #{transformer_forward.5} parent=1 // pred_check
      _
    $region7: #{transformer_forward.5} parent=1 // pred_check_branch
      %12 = sbr.rel (0) target = $region9
    $region8: #{transformer_forward.5} parent=1 // pred_region
      _
    $region9: #{transformer_forward.5} parent=1 // pred_fallthru
      _
    // Predicated region
    $region10: #{transformer_forward.5} parent=1 // pred_check
      _
    $region11: #{transformer_forward.5} parent=1 // pred_check_branch
      %14 = sbr.rel (0) target = $region13
    $region12: #{transformer_forward.5} parent=1 // pred_region
      _
    $region13: #{transformer_forward.5} parent=1 // pred_fallthru
      _
    %v16 = vld [vmem:[%s0] sm:$0xff]
    %v17 = vld [vmem:[%s0 + $0x8] sm:$0xff]
    %v18 = vld [vmem:[%s1] sm:$0xf]
    %v19 = vld [vmem:[%s1 + $0x4] sm:$0xf]
    %v20 = vld [vmem:[%s1 + $0x8] sm:$0xf]
    %v21 = vld [vmem:[%s1 + $0xc] sm:$0xf]
    %v22 = vld [vmem:[%s1 + $0x10] sm:$0xf]
    %v23 = vld [vmem:[%s1 + $0x14] sm:$0xf]
    %v24 = vld [vmem:[%s1 + $0x18] sm:$0xf]
    %v25 = vld [vmem:[%s1 + $0x1c] sm:$0xf]
    %v26 = vld [vmem:[%s1 + $0x20] sm:$0xf]
    %v27 = vld [vmem:[%s1 + $0x24] sm:$0xf]
    %v28 = vld [vmem:[%s1 + $0x28] sm:$0xf]
    %v29 = vld [vmem:[%s1 + $0x2c] sm:$0xf]
    %v30 = vld [vmem:[%s1 + $0x30] sm:$0xf]
    %v31 = vld [vmem:[%s1 + $0x34] sm:$0xf]
    %v32 = vld [vmem:[%s1 + $0x38] sm:$0xf]
    %v33 = vld [vmem:[%s1 + $0x3c] sm:$0xf]
    %v34 = vld [vmem:[%s2] sm:$0x1]
    %v35 = vpack.c.bf16 %v17, %v16
    %v37 = vlaneseq
    %v38 = vshrl.u32 %v37, 7
    %v39 = vsub.s32 0, %v38
    %v40 = vrot.slane %v34, %v39
    %v58 = vunpack.c.l.b16 %v18
    %v59 = vunpack.c.l.b16 %v19
    %v60 = vunpack.c.l.b16 %v20
    %v61 = vunpack.c.l.b16 %v21
    %v62 = vunpack.c.l.b16 %v22
    %v63 = vunpack.c.l.b16 %v23
    %v64 = vunpack.c.l.b16 %v24
    %v65 = vunpack.c.l.b16 %v25
    %v66 = vunpack.c.l.b16 %v26
    %v67 = vunpack.c.l.b16 %v27
    %v68 = vunpack.c.l.b16 %v28
    %v69 = vunpack.c.l.b16 %v29
    %v70 = vunpack.c.l.b16 %v30
    %v71 = vunpack.c.l.b16 %v31
    %v72 = vunpack.c.l.b16 %v32
    %v73 = vunpack.c.l.b16 %v33
    %v74 = vpack.c.b16 %v59, %v58
    %v75 = vpack.c.b16 %v61, %v60
    %v76 = vpack.c.b16 %v63, %v62
    %v77 = vpack.c.b16 %v65, %v64
    %v78 = vpack.c.b16 %v67, %v66
    %v79 = vpack.c.b16 %v69, %v68
    %v80 = vpack.c.b16 %v71, %v70
    %v81 = vpack.c.b16 %v73, %v72
    %vm82 = vcmask 261120
    %v84 = vsel %vm82, %v35, 0
    %v87 = vsel %vm82, %v74, 0
    %v90 = vsel %vm82, %v75, 0
    %v93 = vsel %vm82, %v76, 0
    %v96 = vsel %vm82, %v77, 0
    %v99 = vsel %vm82, %v78, 0
    %v102 = vsel %vm82, %v79, 0
    %v105 = vsel %vm82, %v80, 0
    %v108 = vsel %vm82, %v81, 0
    %110 = vmatprep.subr.bf16.mxu0 0
    %111 = vmatpush1.bf16.xpose.msra.mxu0 %v108
    %112 = vmatprep.subr.bf16.mxu0 0
    %113 = vmatpush1.bf16.xpose.msra.mxu0 %v105
    %114 = vmatprep.subr.bf16.mxu0 0
    %115 = vmatpush1.bf16.xpose.msra.mxu0 %v102
    %116 = vmatprep.subr.bf16.mxu0 0
    %117 = vmatpush1.bf16.xpose.msra.mxu0 %v99
    %118 = vmatprep.subr.bf16.mxu0 0
    %119 = vmatpush1.bf16.xpose.msra.mxu0 %v96
    %120 = vmatprep.subr.bf16.mxu0 0
    %121 = vmatpush1.bf16.xpose.msra.mxu0 %v93
    %122 = vmatprep.subr.bf16.mxu0 0
    %123 = vmatpush1.bf16.xpose.msra.mxu0 %v90
    %124 = vmatprep.subr.bf16.mxu0 0
    %125 = vmatpush1.bf16.xpose.msra.mxu0 %v87
    %126 = vmatprep.subr.bf16.mxu0 0
    %127 = vmatpush2.bf16.xpose.msra.mxu0 0
    %128 = vmatprep.subr.bf16.mxu0 0
    %129 = vmatpush2.bf16.xpose.msra.mxu0 0
    %130 = vmatprep.subr.bf16.mxu0 0
    %131 = vmatpush2.bf16.xpose.msra.mxu0 0
    %132 = vmatprep.subr.bf16.mxu0 0
    %133 = vmatpush2.bf16.xpose.msra.mxu0 0
    %134 = vmatprep.subr.bf16.mxu0 0
    %135 = vmatpush2.bf16.xpose.msra.mxu0 0
    %136 = vmatprep.subr.bf16.mxu0 0
    %137 = vmatpush2.bf16.xpose.msra.mxu0 0
    %138 = vmatprep.subr.bf16.mxu0 0
    %139 = vmatpush2.bf16.xpose.msra.mxu0 0
    %140 = vmatprep.subr.bf16.mxu0 0
    %141 = vmatpush2.bf16.xpose.msra.mxu0 0
    %142 = vmatprep.mubr.bf16.mxu0 0
    %143 = vmatmul.mubr.bf16.gmra.mxu0 %v84
    %v144 = vpop.f32.mrf.mxu0
    %v145 = vadd.f32 %v40, %v144
    %v146 = vpop.f32.mrf.mxu0
    %v147 = vpop.f32.mrf.mxu0
    %v148 = vadd.f32 %v40, %v147
    %v149 = vpop.f32.mrf.mxu0
    %150 = vdwg.mxu0
    %151 = vst [vmem:[#allocation2] sm:$0xff] %v145
    %152 = vst [vmem:[#allocation2 + $0x8] sm:$0xff] %v148
    // Predicated region
    $region14: #{transformer_forward.5} parent=1 // pred_check
      _
    $region15: #{transformer_forward.5} parent=1 // pred_check_branch
      %154 = sbr.rel (0) target = $region17
    $region16: #{transformer_forward.5} parent=1 // pred_region
      %s156 = ssub.s32 256, 256
      %157 = vsyncadd [#allocation3], %s156
      %s158 = sshll.u32 [#allocation2], 4
      %s159 = int_to_ptr.vmem [resolvable:$true] %s158
      %164 = dma.vmem_to_hbm [thread:$0]  %s159, 256, %s3, [#allocation3], 128, 128, 8
    $region17: #{transformer_forward.5} parent=1 // pred_fallthru
      _
    // Predicated region
    $region18: #{transformer_forward.5} parent=1 // pred_check
      _
    $region19: #{transformer_forward.5} parent=1 // pred_check_branch
      %166 = sbr.rel (0) target = $region21
    $region20: #{transformer_forward.5} parent=1 // pred_region
      %167 = dma.done [#allocation3], 256
    $region21: #{transformer_forward.5} parent=1 // pred_fallthru
      _
    %168 = vsyncpa [#allocation3], 1

// kernel: transformer_forward.3
$region0: #{transformer_forward.3}
  #allocation0 [shape = 'u32[]', space=smem, size = 0x4, offset = 0x4, fixed_abs, tag = 'smem constant byte address 0x4 - core index']
  #allocation1 [shape = 'u32[144,128]{1,0:T(1,128)}', space=vmem, size = 0x12000, scoped, tag = 'internal scratch']
  #allocation2 [shape = 'f32[16,32]{1,0:T(8,128)}', space=vmem, size = 0x2000, scoped, tag = 'scratch operand']
  %s0 = inlined_call_operand.vmem [shape: f32[2,8,32], index: 0, kind: input, shape index: {}]
  %s1 = inlined_call_operand.vmem [shape: f32[2,1,8], index: 1, kind: input, shape index: {}]
  %s2 = inlined_call_operand.vmem [shape: f32[2,2,32], index: 2, kind: input, shape index: {}]
  %s3 = inlined_call_operand.vmem [shape: bf16[2,96,32], index: 3, kind: input, shape index: {}]
  %s4 = inlined_call_operand.vmem [shape: f32[2,1,96], index: 4, kind: input, shape index: {}]
  %s5 = inlined_call_operand.vmem [shape: bf16[2,32,32], index: 5, kind: input, shape index: {}]
  %s6 = inlined_call_operand.vmem [shape: f32[2,1,32], index: 6, kind: input, shape index: {}]
  %s7 = inlined_call_operand.vmem [shape: f32[2,2,32], index: 7, kind: input, shape index: {}]
  %s8 = inlined_call_operand.vmem [shape: bf16[2,64,32], index: 8, kind: input, shape index: {}]
  %s9 = inlined_call_operand.vmem [shape: f32[2,1,64], index: 9, kind: input, shape index: {}]
  %s10 = inlined_call_operand.vmem [shape: bf16[2,32,64], index: 10, kind: input, shape index: {}]
  %s11 = inlined_call_operand.vmem [shape: f32[2,1,32], index: 11, kind: input, shape index: {}]
  %s12 = inlined_call_operand.vmem [shape: f32[2,32], index: 12, kind: input, shape index: {}]
  %s13 = inlined_call_operand.vmem [shape: f32[2,8,32], index: 13, kind: output, shape index: {}]
  %s14 = sld [smem:[#allocation0]]
  $region93: #{transformer_forward.3} parent=0
    _
  %s16 = ssub.s32 1, %s14
  %s17 = scalar_select 0, %s16, %s14
  loop: start=0, step=1, limit=4
  $region2: #{transformer_forward.3} parent=0 // loop_pre_header
    _
  $region3: #{transformer_forward.3} parent=0 // loop_header
    %s19 = sphi 0, %s23
    %p20 = scmp.ge.s32.totalorder %s19, 4
    %s26 = sphi 0, %s38
    %s27 = sphi 0, %s34
    %s28 = sphi 0, %s26
    %s29 = sphi 0, %s27
    %s30 = sphi 0, %s28
    %s31 = sphi 0, %s29
    %s41 = sphi 0, %s43
    %s44 = sphi 0, %s41
    %s45 = sphi 0, %s44
    %s61 = sphi 0, %s45
    %s67 = sphi 0, %s69
    %s70 = sphi 0, %s67
    %s71 = sphi 0, %s70
    %s87 = sphi 0, %s71
    %s93 = sphi 0, %s95
    %s96 = sphi 0, %s93
    %s97 = sphi 0, %s96
    %s113 = sphi 0, %s97
    %s119 = sphi 0, %s121
    %s122 = sphi 0, %s119
    %s123 = sphi 0, %s122
    %s139 = sphi 0, %s123
    %s145 = sphi 0, %s147
    %s148 = sphi 0, %s145
    %s149 = sphi 0, %s148
    %s165 = sphi 0, %s149
    %s171 = sphi 0, %s173
    %s174 = sphi 0, %s171
    %s175 = sphi 0, %s174
    %s191 = sphi 0, %s175
    %s197 = sphi 0, %s199
    %s200 = sphi 0, %s197
    %s201 = sphi 0, %s200
    %s217 = sphi 0, %s201
    %s223 = sphi 0, %s225
    %s226 = sphi 0, %s223
    %s227 = sphi 0, %s226
    %s243 = sphi 0, %s227
    %s249 = sphi 0, %s251
    %s252 = sphi 0, %s249
    %s253 = sphi 0, %s252
    %s269 = sphi 0, %s253
    %s275 = sphi 0, %s277
    %s278 = sphi 0, %s275
    %s279 = sphi 0, %s278
    %s295 = sphi 0, %s279
    %s301 = sphi 0, %s303
    %s304 = sphi 0, %s301
    %s305 = sphi 0, %s304
    %s321 = sphi 0, %s305
    %s327 = sphi 0, %s329
    %s330 = sphi 0, %s327
    %s331 = sphi 0, %s330
    %s347 = sphi 0, %s331
    %s351 = sphi 0, %s351
    %s353 = sphi 0, %s351
    %s354 = sphi 0, %s353
    %s368 = sphi 0, %s354
    %s374 = sphi 0, %s376
    %s377 = sphi 0, %s374
    %s378 = sphi 0, %s377
    %s394 = sphi 0, %s378
  $region4: #{transformer_forward.3} parent=0 // loop_header_branch
    %22 = sbr.rel (%p20) target = $region8
  $region5: #{transformer_forward.3} parent=0 // loop_body
    %s24 = ssub.s32 %s19, 1
    %s25 = ssub.s32 %s19, 2
    %s32 = sadd.s32 1, %s27
    %p33 = scmp.ge.s32.totalorder %s32, 2
    %s34 = scalar_select %p33, 0, %s32
    %s35 = sadd.s32 1, %s26
    %s36 = scalar_select %p33, %s35, %s26
    %p37 = scmp.ge.s32.totalorder %s36, 1
    %s38 = scalar_select %p37, 0, %s36
    %s39 = ssub.s32 %s26, %s38
    %p40 = scmp.eq.s32.totalorder %s39, 0
    %s42 = sadd.s32 %s41, 1
    %s43 = scalar_select %p40, %s41, %s42
    %p46 = pneg %p40
    %p47 = scmp.eq.s32.totalorder %s19, 1
    %p48 = por %p46, %p47
    %p49 = scmp.ne.s32.totalorder %s41, %s44
    %p50 = scmp.eq.s32.totalorder %s19, 0
    %p51 = por %p49, %p50
    %p52 = scmp.ne.s32.totalorder %s41, %s44
    %p53 = scmp.eq.s32.totalorder %s24, 1
    %p54 = por %p52, %p53
    %p55 = scmp.ne.s32.totalorder %s44, %s45
    %p56 = scmp.eq.s32.totalorder %s24, 0
    %p57 = por %p55, %p56
    %p58 = scmp.ne.s32.totalorder %s44, %s45
    %p59 = scmp.eq.s32.totalorder %s25, 1
    %p60 = por %p58, %p59
    %p62 = scmp.ne.s32.totalorder %s45, %s61
    %p63 = scmp.eq.s32.totalorder %s25, 0
    %p64 = por %p62, %p63
    %s65 = ssub.s32 %s26, %s38
    %p66 = scmp.eq.s32.totalorder %s65, 0
    %s68 = sadd.s32 %s67, 1
    %s69 = scalar_select %p66, %s67, %s68
    %p72 = pneg %p66
    %p73 = scmp.eq.s32.totalorder %s19, 1
    %p74 = por %p72, %p73
    %p75 = scmp.ne.s32.totalorder %s67, %s70
    %p76 = scmp.eq.s32.totalorder %s19, 0
    %p77 = por %p75, %p76
    %p78 = scmp.ne.s32.totalorder %s67, %s70
    %p79 = scmp.eq.s32.totalorder %s24, 1
    %p80 = por %p78, %p79
    %p81 = scmp.ne.s32.totalorder %s70, %s71
    %p82 = scmp.eq.s32.totalorder %s24, 0
    %p83 = por %p81, %p82
    %p84 = scmp.ne.s32.totalorder %s70, %s71
    %p85 = scmp.eq.s32.totalorder %s25, 1
    %p86 = por %p84, %p85
    %p88 = scmp.ne.s32.totalorder %s71, %s87
    %p89 = scmp.eq.s32.totalorder %s25, 0
    %p90 = por %p88, %p89
    %s91 = ssub.s32 %s27, %s34
    %p92 = scmp.eq.s32.totalorder %s91, 0
    %s94 = sadd.s32 %s93, 1
    %s95 = scalar_select %p92, %s93, %s94
    %p98 = pneg %p92
    %p99 = scmp.eq.s32.totalorder %s19, 1
    %p100 = por %p98, %p99
    %p101 = scmp.ne.s32.totalorder %s93, %s96
    %p102 = scmp.eq.s32.totalorder %s19, 0
    %p103 = por %p101, %p102
    %p104 = scmp.ne.s32.totalorder %s93, %s96
    %p105 = scmp.eq.s32.totalorder %s24, 1
    %p106 = por %p104, %p105
    %p107 = scmp.ne.s32.totalorder %s96, %s97
    %p108 = scmp.eq.s32.totalorder %s24, 0
    %p109 = por %p107, %p108
    %p110 = scmp.ne.s32.totalorder %s96, %s97
    %p111 = scmp.eq.s32.totalorder %s25, 1
    %p112 = por %p110, %p111
    %p114 = scmp.ne.s32.totalorder %s97, %s113
    %p115 = scmp.eq.s32.totalorder %s25, 0
    %p116 = por %p114, %p115
    %s117 = ssub.s32 %s27, %s34
    %p118 = scmp.eq.s32.totalorder %s117, 0
    %s120 = sadd.s32 %s119, 1
    %s121 = scalar_select %p118, %s119, %s120
    %p124 = pneg %p118
    %p125 = scmp.eq.s32.totalorder %s19, 1
    %p126 = por %p124, %p125
    %p127 = scmp.ne.s32.totalorder %s119, %s122
    %p128 = scmp.eq.s32.totalorder %s19, 0
    %p129 = por %p127, %p128
    %p130 = scmp.ne.s32.totalorder %s119, %s122
    %p131 = scmp.eq.s32.totalorder %s24, 1
    %p132 = por %p130, %p131
    %p133 = scmp.ne.s32.totalorder %s122, %s123
    %p134 = scmp.eq.s32.totalorder %s24, 0
    %p135 = por %p133, %p134
    %p136 = scmp.ne.s32.totalorder %s122, %s123
    %p137 = scmp.eq.s32.totalorder %s25, 1
    %p138 = por %p136, %p137
    %p140 = scmp.ne.s32.totalorder %s123, %s139
    %p141 = scmp.eq.s32.totalorder %s25, 0
    %p142 = por %p140, %p141
    %s143 = ssub.s32 %s27, %s34
    %p144 = scmp.eq.s32.totalorder %s143, 0
    %s146 = sadd.s32 %s145, 1
    %s147 = scalar_select %p144, %s145, %s146
    %p150 = pneg %p144
    %p151 = scmp.eq.s32.totalorder %s19, 1
    %p152 = por %p150, %p151
    %p153 = scmp.ne.s32.totalorder %s145, %s148
    %p154 = scmp.eq.s32.totalorder %s19, 0
    %p155 = por %p153, %p154
    %p156 = scmp.ne.s32.totalorder %s145, %s148
    %p157 = scmp.eq.s32.totalorder %s24, 1
    %p158 = por %p156, %p157
    %p159 = scmp.ne.s32.totalorder %s148, %s149
    %p160 = scmp.eq.s32.totalorder %s24, 0
    %p161 = por %p159, %p160
    %p162 = scmp.ne.s32.totalorder %s148, %s149
    %p163 = scmp.eq.s32.totalorder %s25, 1
    %p164 = por %p162, %p163
    %p166 = scmp.ne.s32.totalorder %s149, %s165
    %p167 = scmp.eq.s32.totalorder %s25, 0
    %p168 = por %p166, %p167
    %s169 = ssub.s32 %s27, %s34
    %p170 = scmp.eq.s32.totalorder %s169, 0
    %s172 = sadd.s32 %s171, 1
    %s173 = scalar_select %p170, %s171, %s172
    %p176 = pneg %p170
    %p177 = scmp.eq.s32.totalorder %s19, 1
    %p178 = por %p176, %p177
    %p179 = scmp.ne.s32.totalorder %s171, %s174
    %p180 = scmp.eq.s32.totalorder %s19, 0
    %p181 = por %p179, %p180
    %p182 = scmp.ne.s32.totalorder %s171, %s174
    %p183 = scmp.eq.s32.totalorder %s24, 1
    %p184 = por %p182, %p183
    %p185 = scmp.ne.s32.totalorder %s174, %s175
    %p186 = scmp.eq.s32.totalorder %s24, 0
    %p187 = por %p185, %p186
    %p188 = scmp.ne.s32.totalorder %s174, %s175
    %p189 = scmp.eq.s32.totalorder %s25, 1
    %p190 = por %p188, %p189
    %p192 = scmp.ne.s32.totalorder %s175, %s191
    %p193 = scmp.eq.s32.totalorder %s25, 0
    %p194 = por %p192, %p193
    %s195 = ssub.s32 %s27, %s34
    %p196 = scmp.eq.s32.totalorder %s195, 0
    %s198 = sadd.s32 %s197, 1
    %s199 = scalar_select %p196, %s197, %s198
    %p202 = pneg %p196
    %p203 = scmp.eq.s32.totalorder %s19, 1
    %p204 = por %p202, %p203
    %p205 = scmp.ne.s32.totalorder %s197, %s200
    %p206 = scmp.eq.s32.totalorder %s19, 0
    %p207 = por %p205, %p206
    %p208 = scmp.ne.s32.totalorder %s197, %s200
    %p209 = scmp.eq.s32.totalorder %s24, 1
    %p210 = por %p208, %p209
    %p211 = scmp.ne.s32.totalorder %s200, %s201
    %p212 = scmp.eq.s32.totalorder %s24, 0
    %p213 = por %p211, %p212
    %p214 = scmp.ne.s32.totalorder %s200, %s201
    %p215 = scmp.eq.s32.totalorder %s25, 1
    %p216 = por %p214, %p215
    %p218 = scmp.ne.s32.totalorder %s201, %s217
    %p219 = scmp.eq.s32.totalorder %s25, 0
    %p220 = por %p218, %p219
    %s221 = ssub.s32 %s27, %s34
    %p222 = scmp.eq.s32.totalorder %s221, 0
    %s224 = sadd.s32 %s223, 1
    %s225 = scalar_select %p222, %s223, %s224
    %p228 = pneg %p222
    %p229 = scmp.eq.s32.totalorder %s19, 1
    %p230 = por %p228, %p229
    %p231 = scmp.ne.s32.totalorder %s223, %s226
    %p232 = scmp.eq.s32.totalorder %s19, 0
    %p233 = por %p231, %p232
    %p234 = scmp.ne.s32.totalorder %s223, %s226
    %p235 = scmp.eq.s32.totalorder %s24, 1
    %p236 = por %p234, %p235
    %p237 = scmp.ne.s32.totalorder %s226, %s227
    %p238 = scmp.eq.s32.totalorder %s24, 0
    %p239 = por %p237, %p238
    %p240 = scmp.ne.s32.totalorder %s226, %s227
    %p241 = scmp.eq.s32.totalorder %s25, 1
    %p242 = por %p240, %p241
    %p244 = scmp.ne.s32.totalorder %s227, %s243
    %p245 = scmp.eq.s32.totalorder %s25, 0
    %p246 = por %p244, %p245
    %s247 = ssub.s32 %s27, %s34
    %p248 = scmp.eq.s32.totalorder %s247, 0
    %s250 = sadd.s32 %s249, 1
    %s251 = scalar_select %p248, %s249, %s250
    %p254 = pneg %p248
    %p255 = scmp.eq.s32.totalorder %s19, 1
    %p256 = por %p254, %p255
    %p257 = scmp.ne.s32.totalorder %s249, %s252
    %p258 = scmp.eq.s32.totalorder %s19, 0
    %p259 = por %p257, %p258
    %p260 = scmp.ne.s32.totalorder %s249, %s252
    %p261 = scmp.eq.s32.totalorder %s24, 1
    %p262 = por %p260, %p261
    %p263 = scmp.ne.s32.totalorder %s252, %s253
    %p264 = scmp.eq.s32.totalorder %s24, 0
    %p265 = por %p263, %p264
    %p266 = scmp.ne.s32.totalorder %s252, %s253
    %p267 = scmp.eq.s32.totalorder %s25, 1
    %p268 = por %p266, %p267
    %p270 = scmp.ne.s32.totalorder %s253, %s269
    %p271 = scmp.eq.s32.totalorder %s25, 0
    %p272 = por %p270, %p271
    %s273 = ssub.s32 %s27, %s34
    %p274 = scmp.eq.s32.totalorder %s273, 0
    %s276 = sadd.s32 %s275, 1
    %s277 = scalar_select %p274, %s275, %s276
    %p280 = pneg %p274
    %p281 = scmp.eq.s32.totalorder %s19, 1
    %p282 = por %p280, %p281
    %p283 = scmp.ne.s32.totalorder %s275, %s278
    %p284 = scmp.eq.s32.totalorder %s19, 0
    %p285 = por %p283, %p284
    %p286 = scmp.ne.s32.totalorder %s275, %s278
    %p287 = scmp.eq.s32.totalorder %s24, 1
    %p288 = por %p286, %p287
    %p289 = scmp.ne.s32.totalorder %s278, %s279
    %p290 = scmp.eq.s32.totalorder %s24, 0
    %p291 = por %p289, %p290
    %p292 = scmp.ne.s32.totalorder %s278, %s279
    %p293 = scmp.eq.s32.totalorder %s25, 1
    %p294 = por %p292, %p293
    %p296 = scmp.ne.s32.totalorder %s279, %s295
    %p297 = scmp.eq.s32.totalorder %s25, 0
    %p298 = por %p296, %p297
    %s299 = ssub.s32 %s27, %s34
    %p300 = scmp.eq.s32.totalorder %s299, 0
    %s302 = sadd.s32 %s301, 1
    %s303 = scalar_select %p300, %s301, %s302
    %p306 = pneg %p300
    %p307 = scmp.eq.s32.totalorder %s19, 1
    %p308 = por %p306, %p307
    %p309 = scmp.ne.s32.totalorder %s301, %s304
    %p310 = scmp.eq.s32.totalorder %s19, 0
    %p311 = por %p309, %p310
    %p312 = scmp.ne.s32.totalorder %s301, %s304
    %p313 = scmp.eq.s32.totalorder %s24, 1
    %p314 = por %p312, %p313
    %p315 = scmp.ne.s32.totalorder %s304, %s305
    %p316 = scmp.eq.s32.totalorder %s24, 0
    %p317 = por %p315, %p316
    %p318 = scmp.ne.s32.totalorder %s304, %s305
    %p319 = scmp.eq.s32.totalorder %s25, 1
    %p320 = por %p318, %p319
    %p322 = scmp.ne.s32.totalorder %s305, %s321
    %p323 = scmp.eq.s32.totalorder %s25, 0
    %p324 = por %p322, %p323
    %s325 = ssub.s32 %s27, %s34
    %p326 = scmp.eq.s32.totalorder %s325, 0
    %s328 = sadd.s32 %s327, 1
    %s329 = scalar_select %p326, %s327, %s328
    %p332 = pneg %p326
    %p333 = scmp.eq.s32.totalorder %s19, 1
    %p334 = por %p332, %p333
    %p335 = scmp.ne.s32.totalorder %s327, %s330
    %p336 = scmp.eq.s32.totalorder %s19, 0
    %p337 = por %p335, %p336
    %p338 = scmp.ne.s32.totalorder %s327, %s330
    %p339 = scmp.eq.s32.totalorder %s24, 1
    %p340 = por %p338, %p339
    %p341 = scmp.ne.s32.totalorder %s330, %s331
    %p342 = scmp.eq.s32.totalorder %s24, 0
    %p343 = por %p341, %p342
    %p344 = scmp.ne.s32.totalorder %s330, %s331
    %p345 = scmp.eq.s32.totalorder %s25, 1
    %p346 = por %p344, %p345
    %p348 = scmp.ne.s32.totalorder %s331, %s347
    %p349 = scmp.eq.s32.totalorder %s25, 0
    %p350 = por %p348, %p349
    %s352 = sadd.s32 %s351, 1
    %p355 = scmp.eq.s32.totalorder %s19, 1
    %p356 = scmp.ne.s32.totalorder %s351, %s353
    %p357 = scmp.eq.s32.totalorder %s19, 0
    %p358 = por %p356, %p357
    %p359 = scmp.ne.s32.totalorder %s351, %s353
    %p360 = scmp.eq.s32.totalorder %s24, 1
    %p361 = por %p359, %p360
    %p362 = scmp.ne.s32.totalorder %s353, %s354
    %p363 = scmp.eq.s32.totalorder %s24, 0
    %p364 = por %p362, %p363
    %p365 = scmp.ne.s32.totalorder %s353, %s354
    %p366 = scmp.eq.s32.totalorder %s25, 1
    %p367 = por %p365, %p366
    %p369 = scmp.ne.s32.totalorder %s354, %s368
    %p370 = scmp.eq.s32.totalorder %s25, 0
    %p371 = por %p369, %p370
    %s372 = ssub.s32 %s26, %s38
    %p373 = scmp.eq.s32.totalorder %s372, 0
    %s375 = sadd.s32 %s374, 1
    %s376 = scalar_select %p373, %s374, %s375
    %p379 = pneg %p373
    %p380 = scmp.eq.s32.totalorder %s19, 1
    %p381 = por %p379, %p380
    %p382 = scmp.ne.s32.totalorder %s374, %s377
    %p383 = scmp.eq.s32.totalorder %s19, 0
    %p384 = por %p382, %p383
    %p385 = scmp.ne.s32.totalorder %s374, %s377
    %p386 = scmp.eq.s32.totalorder %s24, 1
    %p387 = por %p385, %p386
    %p388 = scmp.ne.s32.totalorder %s377, %s378
    %p389 = scmp.eq.s32.totalorder %s24, 0
    %p390 = por %p388, %p389
    %p391 = scmp.ne.s32.totalorder %s377, %s378
    %p392 = scmp.eq.s32.totalorder %s25, 1
    %p393 = por %p391, %p392
    %p395 = scmp.ne.s32.totalorder %s378, %s394
    %p396 = scmp.eq.s32.totalorder %s25, 0
    %p397 = por %p395, %p396
    %p398 = scmp.le.s32.totalorder 1, %s19
    %p399 = scmp.lt.s32.totalorder %s19, 3
    %p400 = pnand %p398, %p399
    %p401 = pneg %p400
    // Predicated region
    $region9: #{transformer_forward.3} parent=5 // pred_check
      _
    $region10: #{transformer_forward.3} parent=5 // pred_check_branch
      %403 = sbr.rel (%p400) target = $region12
    $region11: #{transformer_forward.3} parent=5 // pred_region
      %s404 = ssub.s32 %s19, 1
      // Predicated region
      $region13: #{transformer_forward.3} parent=11 // pred_check
        %p405 = pneg %p57
      $region14: #{transformer_forward.3} parent=11 // pred_check_branch
        %407 = sbr.rel (%p405) target = $region16
      $region15: #{transformer_forward.3} parent=11 // pred_region
        %s408 = smul.u32 2, %s28
        %p409 = scmp.lt.s32.totalorder %s408, 1
        %s410 = scalar_select %p409, %s408, 1
        %s411 = smul.addr %s410, 8
        %s412 = scalar_lea.vmem %s0, %s411
        %s413 = smul.u32 2, %s28
      $region16: #{transformer_forward.3} parent=11 // pred_fallthru
        _
      // Predicated region
      $region17: #{transformer_forward.3} parent=11 // pred_check
        %p414 = pneg %p83
      $region18: #{transformer_forward.3} parent=11 // pred_check_branch
        %416 = sbr.rel (%p414) target = $region20
      $region19: #{transformer_forward.3} parent=11 // pred_region
        %s417 = smul.u32 2, %s28
        %p418 = scmp.lt.s32.totalorder %s417, 1
        %s419 = scalar_select %p418, %s417, 1
        %s420 = scalar_lea.vmem %s1, %s419
        %s421 = smul.u32 2, %s28
      $region20: #{transformer_forward.3} parent=11 // pred_fallthru
        _
      // Predicated region
      $region21: #{transformer_forward.3} parent=11 // pred_check
        %p422 = pneg %p364
      $region22: #{transformer_forward.3} parent=11 // pred_check_branch
        %424 = sbr.rel (%p422) target = $region24
      $region23: #{transformer_forward.3} parent=11 // pred_region
        _
      $region24: #{transformer_forward.3} parent=11 // pred_fallthru
        _
    $region12: #{transformer_forward.3} parent=5 // pred_fallthru
      _
    %p425 = scmp.lt.s32.totalorder %s19, 2
    // Predicated region
    $region25: #{transformer_forward.3} parent=5 // pred_check
      %p426 = pneg %p425
    $region26: #{transformer_forward.3} parent=5 // pred_check_branch
      %428 = sbr.rel (%p426) target = $region28
    $region27: #{transformer_forward.3} parent=5 // pred_region
      // Predicated region
      $region29: #{transformer_forward.3} parent=27 // pred_check
        %p429 = pneg %p103
      $region30: #{transformer_forward.3} parent=27 // pred_check_branch
        %431 = sbr.rel (%p429) target = $region32
      $region31: #{transformer_forward.3} parent=27 // pred_region
        %p432 = scmp.lt.s32.totalorder %s27, 1
        %s433 = scalar_select %p432, %s27, 1
        %s434 = smul.addr %s433, 2
        %s435 = scalar_lea.vmem %s2, %s434
      $region32: #{transformer_forward.3} parent=27 // pred_fallthru
        _
      // Predicated region
      $region33: #{transformer_forward.3} parent=27 // pred_check
        %p436 = pneg %p129
      $region34: #{transformer_forward.3} parent=27 // pred_check_branch
        %438 = sbr.rel (%p436) target = $region36
      $region35: #{transformer_forward.3} parent=27 // pred_region
        %p439 = scmp.lt.s32.totalorder %s27, 1
        %s440 = scalar_select %p439, %s27, 1
        %s441 = smul.addr %s440, 12
        %s442 = smul.addr %s441, 4
        %s443 = scalar_lea.vmem %s3, %s442
      $region36: #{transformer_forward.3} parent=27 // pred_fallthru
        _
      // Predicated region
      $region37: #{transformer_forward.3} parent=27 // pred_check
        %p444 = pneg %p155
      $region38: #{transformer_forward.3} parent=27 // pred_check_branch
        %446 = sbr.rel (%p444) target = $region40
      $region39: #{transformer_forward.3} parent=27 // pred_region
        %p447 = scmp.lt.s32.totalorder %s27, 1
        %s448 = scalar_select %p447, %s27, 1
        %s449 = scalar_lea.vmem %s4, %s448
      $region40: #{transformer_forward.3} parent=27 // pred_fallthru
        _
      // Predicated region
      $region41: #{transformer_forward.3} parent=27 // pred_check
        %p450 = pneg %p181
      $region42: #{transformer_forward.3} parent=27 // pred_check_branch
        %452 = sbr.rel (%p450) target = $region44
      $region43: #{transformer_forward.3} parent=27 // pred_region
        %p453 = scmp.lt.s32.totalorder %s27, 1
        %s454 = scalar_select %p453, %s27, 1
        %s455 = smul.addr %s454, 4
        %s456 = smul.addr %s455, 4
        %s457 = scalar_lea.vmem %s5, %s456
      $region44: #{transformer_forward.3} parent=27 // pred_fallthru
        _
      // Predicated region
      $region45: #{transformer_forward.3} parent=27 // pred_check
        %p458 = pneg %p207
      $region46: #{transformer_forward.3} parent=27 // pred_check_branch
        %460 = sbr.rel (%p458) target = $region48
      $region47: #{transformer_forward.3} parent=27 // pred_region
        %p461 = scmp.lt.s32.totalorder %s27, 1
        %s462 = scalar_select %p461, %s27, 1
        %s463 = scalar_lea.vmem %s6, %s462
      $region48: #{transformer_forward.3} parent=27 // pred_fallthru
        _
      // Predicated region
      $region49: #{transformer_forward.3} parent=27 // pred_check
        %p464 = pneg %p233
      $region50: #{transformer_forward.3} parent=27 // pred_check_branch
        %466 = sbr.rel (%p464) target = $region52
      $region51: #{transformer_forward.3} parent=27 // pred_region
        %p467 = scmp.lt.s32.totalorder %s27, 1
        %s468 = scalar_select %p467, %s27, 1
        %s469 = smul.addr %s468, 2
        %s470 = scalar_lea.vmem %s7, %s469
      $region52: #{transformer_forward.3} parent=27 // pred_fallthru
        _
      // Predicated region
      $region53: #{transformer_forward.3} parent=27 // pred_check
        %p471 = pneg %p259
      $region54: #{transformer_forward.3} parent=27 // pred_check_branch
        %473 = sbr.rel (%p471) target = $region56
      $region55: #{transformer_forward.3} parent=27 // pred_region
        %p474 = scmp.lt.s32.totalorder %s27, 1
        %s475 = scalar_select %p474, %s27, 1
        %s476 = smul.addr %s475, 8
        %s477 = smul.addr %s476, 4
        %s478 = scalar_lea.vmem %s8, %s477
      $region56: #{transformer_forward.3} parent=27 // pred_fallthru
        _
      // Predicated region
      $region57: #{transformer_forward.3} parent=27 // pred_check
        %p479 = pneg %p285
      $region58: #{transformer_forward.3} parent=27 // pred_check_branch
        %481 = sbr.rel (%p479) target = $region60
      $region59: #{transformer_forward.3} parent=27 // pred_region
        %p482 = scmp.lt.s32.totalorder %s27, 1
        %s483 = scalar_select %p482, %s27, 1
        %s484 = scalar_lea.vmem %s9, %s483
      $region60: #{transformer_forward.3} parent=27 // pred_fallthru
        _
      // Predicated region
      $region61: #{transformer_forward.3} parent=27 // pred_check
        %p485 = pneg %p311
      $region62: #{transformer_forward.3} parent=27 // pred_check_branch
        %487 = sbr.rel (%p485) target = $region64
      $region63: #{transformer_forward.3} parent=27 // pred_region
        %p488 = scmp.lt.s32.totalorder %s27, 1
        %s489 = scalar_select %p488, %s27, 1
        %s490 = smul.addr %s489, 4
        %s491 = smul.addr %s490, 4
        %s492 = scalar_lea.vmem %s10, %s491
      $region64: #{transformer_forward.3} parent=27 // pred_fallthru
        _
      // Predicated region
      $region65: #{transformer_forward.3} parent=27 // pred_check
        %p493 = pneg %p337
      $region66: #{transformer_forward.3} parent=27 // pred_check_branch
        %495 = sbr.rel (%p493) target = $region68
      $region67: #{transformer_forward.3} parent=27 // pred_region
        %p496 = scmp.lt.s32.totalorder %s27, 1
        %s497 = scalar_select %p496, %s27, 1
        %s498 = scalar_lea.vmem %s11, %s497
      $region68: #{transformer_forward.3} parent=27 // pred_fallthru
        _
    $region28: #{transformer_forward.3} parent=5 // pred_fallthru
      _
    %p499 = scmp.le.s32.totalorder 1, %s19
    %p500 = scmp.lt.s32.totalorder %s19, 3
    %p501 = pnand %p499, %p500
    %p502 = pneg %p501
    // Predicated region
    $region69: #{transformer_forward.3} parent=5 // pred_check
      _
    $region70: #{transformer_forward.3} parent=5 // pred_check_branch
      %504 = sbr.rel (%p501) target = $region72
    $region71: #{transformer_forward.3} parent=5 // pred_region
      %s505 = ssub.s32 %s19, 1
      %s506 = smul.u32 2, %s28
      %p507 = scmp.lt.s32.totalorder %s506, 1
      %s508 = scalar_select %p507, %s506, 1
      %s509 = smul.addr %s508, 8
      %s510 = scalar_lea.vmem %s0, %s509
      %p511 = pneg %p57
      %p512 = pneg %p54
      %s513 = smul.u32 2, %s28
      %p514 = scmp.lt.s32.totalorder %s513, 1
      %s515 = scalar_select %p514, %s513, 1
      %s516 = scalar_lea.vmem %s1, %s515
      %p517 = pneg %p83
      %p518 = pneg %p80
      %p519 = scmp.lt.s32.totalorder %s29, 1
      %s520 = scalar_select %p519, %s29, 1
      %s521 = smul.addr %s520, 2
      %s522 = scalar_lea.vmem %s2, %s521
      %p523 = pneg %p109
      %p524 = pneg %p106
      %p525 = scmp.lt.s32.totalorder %s29, 1
      %s526 = scalar_select %p525, %s29, 1
      %s527 = smul.addr %s526, 12
      %s528 = smul.addr %s527, 4
      %s529 = scalar_lea.vmem %s3, %s528
      %p530 = pneg %p135
      %p531 = pneg %p132
      %p532 = scmp.lt.s32.totalorder %s29, 1
      %s533 = scalar_select %p532, %s29, 1
      %s534 = scalar_lea.vmem %s4, %s533
      %p535 = pneg %p161
      %p536 = pneg %p158
      %p537 = scmp.lt.s32.totalorder %s29, 1
      %s538 = scalar_select %p537, %s29, 1
      %s539 = smul.addr %s538, 4
      %s540 = smul.addr %s539, 4
      %s541 = scalar_lea.vmem %s5, %s540
      %p542 = pneg %p187
      %p543 = pneg %p184
      %p544 = scmp.lt.s32.totalorder %s29, 1
      %s545 = scalar_select %p544, %s29, 1
      %s546 = scalar_lea.vmem %s6, %s545
      %p547 = pneg %p213
      %p548 = pneg %p210
      %p549 = scmp.lt.s32.totalorder %s29, 1
      %s550 = scalar_select %p549, %s29, 1
      %s551 = smul.addr %s550, 2
      %s552 = scalar_lea.vmem %s7, %s551
      %p553 = pneg %p239
      %p554 = pneg %p236
      %p555 = scmp.lt.s32.totalorder %s29, 1
      %s556 = scalar_select %p555, %s29, 1
      %s557 = smul.addr %s556, 8
      %s558 = smul.addr %s557, 4
      %s559 = scalar_lea.vmem %s8, %s558
      %p560 = pneg %p265
      %p561 = pneg %p262
      %p562 = scmp.lt.s32.totalorder %s29, 1
      %s563 = scalar_select %p562, %s29, 1
      %s564 = scalar_lea.vmem %s9, %s563
      %p565 = pneg %p291
      %p566 = pneg %p288
      %p567 = scmp.lt.s32.totalorder %s29, 1
      %s568 = scalar_select %p567, %s29, 1
      %s569 = smul.addr %s568, 4
      %s570 = smul.addr %s569, 4
      %s571 = scalar_lea.vmem %s10, %s570
      %p572 = pneg %p317
      %p573 = pneg %p314
      %p574 = scmp.lt.s32.totalorder %s29, 1
      %s575 = scalar_select %p574, %s29, 1
      %s576 = scalar_lea.vmem %s11, %s575
      %p577 = pneg %p343
      %p578 = pneg %p340
      %p579 = pneg %p364
      %p580 = pneg %p361
      %p581 = pneg %p390
      %p582 = pneg %p387
      %s583 = smul.u32 2, %s28
      %p584 = scmp.lt.s32.totalorder %s583, 1
      %s585 = scalar_select %p584, %s583, 1
      %s586 = smul.addr %s585, 8
      %s587 = scalar_lea.vmem %s13, %s586
      %s588 = smul.u32 2, %s28
      %p589 = scmp.lt.s32.totalorder %s588, 1
      %s590 = scalar_select %p589, %s588, 1
      %s591 = smul.addr %s590, 8
      %s592 = scalar_lea.vmem %s0, %s591
      %s593 = smul.u32 2, %s28
      %s594 = smul.u32 2, %s28
      %p595 = scmp.lt.s32.totalorder %s594, 1
      %s596 = scalar_select %p595, %s594, 1
      %s597 = scalar_lea.vmem %s1, %s596
      %s598 = smul.u32 2, %s28
      %p599 = scmp.lt.s32.totalorder %s29, 1
      %s600 = scalar_select %p599, %s29, 1
      %s601 = smul.addr %s600, 2
      %s602 = scalar_lea.vmem %s2, %s601
      %p603 = scmp.lt.s32.totalorder %s29, 1
      %s604 = scalar_select %p603, %s29, 1
      %s605 = smul.addr %s604, 12
      %s606 = smul.addr %s605, 4
      %s607 = scalar_lea.vmem %s3, %s606
      %p608 = scmp.lt.s32.totalorder %s29, 1
      %s609 = scalar_select %p608, %s29, 1
      %s610 = scalar_lea.vmem %s4, %s609
      %p611 = scmp.lt.s32.totalorder %s29, 1
      %s612 = scalar_select %p611, %s29, 1
      %s613 = smul.addr %s612, 4
      %s614 = smul.addr %s613, 4
      %s615 = scalar_lea.vmem %s5, %s614
      %p616 = scmp.lt.s32.totalorder %s29, 1
      %s617 = scalar_select %p616, %s29, 1
      %s618 = scalar_lea.vmem %s6, %s617
      %p619 = scmp.lt.s32.totalorder %s29, 1
      %s620 = scalar_select %p619, %s29, 1
      %s621 = smul.addr %s620, 2
      %s622 = scalar_lea.vmem %s7, %s621
      %p623 = scmp.lt.s32.totalorder %s29, 1
      %s624 = scalar_select %p623, %s29, 1
      %s625 = smul.addr %s624, 8
      %s626 = smul.addr %s625, 4
      %s627 = scalar_lea.vmem %s8, %s626
      %p628 = scmp.lt.s32.totalorder %s29, 1
      %s629 = scalar_select %p628, %s29, 1
      %s630 = scalar_lea.vmem %s9, %s629
      %p631 = scmp.lt.s32.totalorder %s29, 1
      %s632 = scalar_select %p631, %s29, 1
      %s633 = smul.addr %s632, 4
      %s634 = smul.addr %s633, 4
      %s635 = scalar_lea.vmem %s10, %s634
      %p636 = scmp.lt.s32.totalorder %s29, 1
      %s637 = scalar_select %p636, %s29, 1
      %s638 = scalar_lea.vmem %s11, %s637
      %s639 = smul.u32 2, %s28
      %p640 = scmp.lt.s32.totalorder %s639, 1
      %s641 = scalar_select %p640, %s639, 1
      %s642 = smul.addr %s641, 8
      %s643 = scalar_lea.vmem %s13, %s642
      %s644 = smul.u32 2, %s28
      %p646 = scmp.eq.s32.totalorder %s29, 0
      // Predicated region
      $region73: #{transformer_forward.3} parent=71 // pred_check
        %p647 = pneg %p646
      $region74: #{transformer_forward.3} parent=71 // pred_check_branch
        %649 = sbr.rel (%p647) target = $region76
      $region75: #{transformer_forward.3} parent=71 // pred_region
        %v650 = vld [vmem:[%s592] sm:$0xff]
        %v651 = vld [vmem:[%s592 + $0x8] sm:$0xff]
        %vm652 = vcmask 261120
        %653 = vst.msk [vmem:[#allocation2] sm:$0xff] %vm652, %v650
        %654 = vst.msk [vmem:[#allocation2 + $0x8] sm:$0xff] %vm652, %v651
      $region76: #{transformer_forward.3} parent=71 // pred_fallthru
        _
      %v655 = vld [vmem:[#allocation2] sm:$0xff]
      %v656 = vld [vmem:[#allocation2 + $0x8] sm:$0xff]
      %v657 = vld [vmem:[%s597] sm:$0x1]
      %v658 = vld [vmem:[%s597 + $0x1] sm:$0x1]
      %v659 = vld [vmem:[%s602] sm:$0x3]
      %vm660 = vcmask 261120
      %v661 = vsel %vm660, %v655, 0.0
      %662 = vadd.xlane.f32.xlu0 %v661
      %v663 = vpop.xlane.xlu0 %662
      %v664 = vsel %vm660, %v656, 0.0
      %665 = vadd.xlane.f32.xlu0 %v664
      %v666 = vpop.xlane.xlu0 %665
      %v667 = vrcp.pop 32.0
      %v668 = vmul.f32 %v663, %v667
      %v669 = vmul.f32 %v666, %v667
      %v670 = vsub.f32 %v655, %v668
      %v671 = vsub.f32 %v656, %v669
      %v672 = vmul.f32 %v670, %v670
      %v673 = vmul.f32 %v671, %v671
      %v674 = vsel %vm660, %v672, 0.0
      %675 = vadd.xlane.f32.xlu0 %v674
      %v676 = vpop.xlane.xlu0 %675
      %v677 = vsel %vm660, %v673, 0.0
      %678 = vadd.xlane.f32.xlu0 %v677
      %v679 = vpop.xlane.xlu0 %678
      %v680 = vmul.f32 %v676, 0.032258064
      %v681 = vmul.f32 %v679, 0.032258064
      %v682 = vrsqrt.pop %v680
      %v683 = vmul.f32 %v680, %v682
      %vm684 = vcmp.eq.f32.partialorder %v680, inf
      %v685 = vsel %vm684, %v680, %v683
      %vm686 = vcmp.eq.f32.partialorder %v680, 0.0
      %v687 = vand.u32 %v680, 2147483648
      %v688 = vsel %vm686, %v687, %v685
      %v689 = vrsqrt.pop %v681
      %v690 = vmul.f32 %v681, %v689
      %vm691 = vcmp.eq.f32.partialorder %v681, inf
      %v692 = vsel %vm691, %v681, %v690
      %vm693 = vcmp.eq.f32.partialorder %v681, 0.0
      %v694 = vand.u32 %v681, 2147483648
      %v695 = vsel %vm693, %v694, %v692
      %v696 = vadd.f32 %v688, 1e-06
      %v697 = vadd.f32 %v695, 1e-06
      %v698 = vrcp.pop %v696
      %v699 = vrcp.pop %v697
      %v700 = vlaneseq
      %v701 = vshrl.u32 %v700, 7
      %v702 = vsub.s32 0, %v701
      %v703 = vrot.slane %v659, %v702
      %v704 = vmul.f32 %v703, %v670
      %v705 = vmul.f32 %v703, %v671
      %v706 = vmul.f32 %v704, %v698
      %v707 = vmul.f32 %v705, %v699
      %v708 = vlaneseq
      %v709 = vshrl.u32 %v708, 7
      %v710 = vsub.s32 1, %v709
      %v711 = vrot.slane %v659, %v710
      %v712 = vadd.f32 %v706, %v711
      %v713 = vadd.f32 %v707, %v711
      %v714 = vld [vmem:[%s607] sm:$0xf]
      %v715 = vld [vmem:[%s607 + $0x4] sm:$0xf]
      %v716 = vld [vmem:[%s607 + $0x8] sm:$0xf]
      %v717 = vld [vmem:[%s607 + $0xc] sm:$0xf]
      %v718 = vld [vmem:[%s607 + $0x10] sm:$0xf]
      %v719 = vld [vmem:[%s607 + $0x14] sm:$0xf]
      %v720 = vld [vmem:[%s607 + $0x18] sm:$0xf]
      %v721 = vld [vmem:[%s607 + $0x1c] sm:$0xf]
      %v722 = vld [vmem:[%s607 + $0x20] sm:$0xf]
      %v723 = vld [vmem:[%s607 + $0x24] sm:$0xf]
      %v724 = vld [vmem:[%s607 + $0x28] sm:$0xf]
      %v725 = vld [vmem:[%s607 + $0x2c] sm:$0xf]
      %v726 = vld [vmem:[%s610] sm:$0x1]
      %v727 = vpack.c.bf16 %v713, %v712
      %v729 = vlaneseq
      %v730 = vshrl.u32 %v729, 7
      %v731 = vsub.s32 0, %v730
      %v732 = vrot.slane %v726, %v731
      %v746 = vunpack.c.l.b16 %v714
      %v747 = vunpack.c.l.b16 %v715
      %v748 = vunpack.c.l.b16 %v716
      %v749 = vunpack.c.l.b16 %v717
      %v750 = vunpack.c.l.b16 %v718
      %v751 = vunpack.c.l.b16 %v719
      %v752 = vunpack.c.l.b16 %v720
      %v753 = vunpack.c.l.b16 %v721
      %v754 = vunpack.c.l.b16 %v722
      %v755 = vunpack.c.l.b16 %v723
      %v756 = vunpack.c.l.b16 %v724
      %v757 = vunpack.c.l.b16 %v725
      %v758 = vpack.c.b16 %v747, %v746
      %v759 = vpack.c.b16 %v749, %v748
      %v760 = vpack.c.b16 %v751, %v750
      %v761 = vpack.c.b16 %v753, %v752
      %v762 = vpack.c.b16 %v755, %v754
      %v763 = vpack.c.b16 %v757, %v756
      %v765 = vsel %vm660, %v727, 0
      %v768 = vsel %vm660, %v758, 0
      %v771 = vsel %vm660, %v759, 0
      %v774 = vsel %vm660, %v760, 0
      %v777 = vsel %vm660, %v761, 0
      %v780 = vsel %vm660, %v762, 0
      %v783 = vsel %vm660, %v763, 0
      %785 = vmatprep.subr.bf16.mxu0 0
      %786 = vmatpush1.bf16.xpose.msra.mxu0 0
      %787 = vmatprep.subr.bf16.mxu0 0
      %788 = vmatpush1.bf16.xpose.msra.mxu0 0
      %789 = vmatprep.subr.bf16.mxu0 0
      %790 = vmatpush1.bf16.xpose.msra.mxu0 %v783
      %791 = vmatprep.subr.bf16.mxu0 0
      %792 = vmatpush1.bf16.xpose.msra.mxu0 %v780
      %793 = vmatprep.subr.bf16.mxu0 0
      %794 = vmatpush1.bf16.xpose.msra.mxu0 %v777
      %795 = vmatprep.subr.bf16.mxu0 0
      %796 = vmatpush1.bf16.xpose.msra.mxu0 %v774
      %797 = vmatprep.subr.bf16.mxu0 0
      %798 = vmatpush1.bf16.xpose.msra.mxu0 %v771
      %799 = vmatprep.subr.bf16.mxu0 0
      %800 = vmatpush1.bf16.xpose.msra.mxu0 %v768
      %801 = vmatprep.subr.bf16.mxu0 0
      %802 = vmatpush2.bf16.xpose.msra.mxu0 0
      %803 = vmatprep.subr.bf16.mxu0 0
      %804 = vmatpush2.bf16.xpose.msra.mxu0 0
      %805 = vmatprep.subr.bf16.mxu0 0
      %806 = vmatpush2.bf16.xpose.msra.mxu0 0
      %807 = vmatprep.subr.bf16.mxu0 0
      %808 = vmatpush2.bf16.xpose.msra.mxu0 0
      %809 = vmatprep.subr.bf16.mxu0 0
      %810 = vmatpush2.bf16.xpose.msra.mxu0 0
      %811 = vmatprep.subr.bf16.mxu0 0
      %812 = vmatpush2.bf16.xpose.msra.mxu0 0
      %813 = vmatprep.subr.bf16.mxu0 0
      %814 = vmatpush2.bf16.xpose.msra.mxu0 0
      %815 = vmatprep.subr.bf16.mxu0 0
      %816 = vmatpush2.bf16.xpose.msra.mxu0 0
      %817 = vmatprep.mubr.bf16.mxu0 0
      %818 = vmatmul.mubr.bf16.gmra.mxu0 %v765
      %v819 = vpop.f32.mrf.mxu0
      %v820 = vadd.f32 %v732, %v819
      %v821 = vpop.f32.mrf.mxu0
      %v822 = vpop.f32.mrf.mxu0
      %v823 = vadd.f32 %v732, %v822
      %v824 = vpop.f32.mrf.mxu0
      %825 = vdwg.mxu0
      %v826 = vld [vmem:[%s615] sm:$0xf]
      %v827 = vld [vmem:[%s615 + $0x4] sm:$0xf]
      %v828 = vld [vmem:[%s615 + $0x8] sm:$0xf]
      %v829 = vld [vmem:[%s615 + $0xc] sm:$0xf]
      %vm830 = vcmp.eq.f32.partialorder %v657, 0.0
      %v831 = vsel %vm830, -1e+09, 0.0
      %v832 = vpack.c.bf16 %v820, %v820
      %834 = vrot.lane.b32.xlu0 %v832, 96
      %v835 = vpop.permute.xlu0 %834
      %vm836 = vcmask 64512
      %v838 = vsel %vm836, %v832, 0
      %v841 = vsel %vm836, %v835, 0
      %843 = vmatprep.subr.bf16.mxu0 0
      %844 = vmatpush1.bf16.xpose.msra.mxu0 0
      %845 = vmatprep.subr.bf16.mxu0 0
      %846 = vmatpush1.bf16.xpose.msra.mxu0 0
      %847 = vmatprep.subr.bf16.mxu0 0
      %848 = vmatpush1.bf16.xpose.msra.mxu0 0
      %849 = vmatprep.subr.bf16.mxu0 0
      %850 = vmatpush1.bf16.xpose.msra.mxu0 0
      %851 = vmatprep.subr.bf16.mxu0 0
      %852 = vmatpush1.bf16.xpose.msra.mxu0 0
      %853 = vmatprep.subr.bf16.mxu0 0
      %854 = vmatpush1.bf16.xpose.msra.mxu0 0
      %855 = vmatprep.subr.bf16.mxu0 0
      %856 = vmatpush1.bf16.xpose.msra.mxu0 0
      %857 = vmatprep.subr.bf16.mxu0 0
      %858 = vmatpush1.bf16.xpose.msra.mxu0 %v841
      %859 = vmatprep.subr.bf16.mxu0 0
      %860 = vmatpush2.bf16.xpose.msra.mxu0 0
      %861 = vmatprep.subr.bf16.mxu0 0
      %862 = vmatpush2.bf16.xpose.msra.mxu0 0
      %863 = vmatprep.subr.bf16.mxu0 0
      %864 = vmatpush2.bf16.xpose.msra.mxu0 0
      %865 = vmatprep.subr.bf16.mxu0 0
      %866 = vmatpush2.bf16.xpose.msra.mxu0 0
      %867 = vmatprep.subr.bf16.mxu0 0
      %868 = vmatpush2.bf16.xpose.msra.mxu0 0
      %869 = vmatprep.subr.bf16.mxu0 0
      %870 = vmatpush2.bf16.xpose.msra.mxu0 0
      %871 = vmatprep.subr.bf16.mxu0 0
      %872 = vmatpush2.bf16.xpose.msra.mxu0 0
      %873 = vmatprep.subr.bf16.mxu0 0
      %874 = vmatpush2.bf16.xpose.msra.mxu0 0
      %875 = vmatprep.mubr.bf16.mxu0 0
      %876 = vmatmul.mubr.bf16.gmra.mxu0 %v838
      %v877 = vpop.f32.mrf.mxu0
      %v878 = vadd.f32 0.0, %v877
      %v879 = vpop.f32.mrf.mxu0
      %v880 = vpop.f32.mrf.mxu0
      %v881 = vpop.f32.mrf.mxu0
      %882 = vdwg.mxu0
      %v883 = vmul.f32 %v878, 0.35355338
      %v885 = vlaneseq
      %v886 = vshrl.u32 %v885, 7
      %v887 = vsub.s32 0, %v886
      %v888 = vrot.slane %v831, %v887
      %v890 = vadd.f32 %v883, %v888
      %v891 = vsel %vm836, %v890, -inf
      %892 = vmax.xlane.f32.xlu0 %v891
      %v893 = vpop.xlane.xlu0 %892
      %v894 = vsub.f32 %v890, %v893
      %v895 = vmul.f32 %v894, 1.442695
      %v896 = vpow.pop %v895
      %v897 = vsel %vm836, %v896, 0.0
      %898 = vadd.xlane.f32.xlu0 %v897
      %v899 = vpop.xlane.xlu0 %898
      %v900 = vrcp.pop %v899
      %v901 = vmul.f32 %v896, %v900
      %v902 = vpack.c.bf16 %v901, %v901
      %903 = vrot.lane.b32.xlu0 %v832, 64
      %v904 = vpop.permute.xlu0 %903
      %v906 = vsel %vm836, %v902, 0
      %vm908 = vcmask 1043456
      %v910 = vsel %vm908, %v904, 0
      %912 = vmatprep.subr.bf16.mxu0 0
      %913 = vmatpush1.bf16.msra.mxu0 0
      %914 = vmatprep.subr.bf16.mxu0 0
      %915 = vmatpush1.bf16.msra.mxu0 0
      %916 = vmatprep.subr.bf16.mxu0 0
      %917 = vmatpush1.bf16.msra.mxu0 0
      %918 = vmatprep.subr.bf16.mxu0 0
      %919 = vmatpush1.bf16.msra.mxu0 0
      %920 = vmatprep.subr.bf16.mxu0 0
      %921 = vmatpush1.bf16.msra.mxu0 0
      %922 = vmatprep.subr.bf16.mxu0 0
      %923 = vmatpush1.bf16.msra.mxu0 0
      %924 = vmatprep.subr.bf16.mxu0 0
      %925 = vmatpush1.bf16.msra.mxu0 0
      %926 = vmatprep.subr.bf16.mxu0 0
      %927 = vmatpush1.bf16.msra.mxu0 %v910
      %928 = vmatprep.subr.bf16.mxu0 0
      %929 = vmatpush2.bf16.msra.mxu0 0
      %930 = vmatprep.subr.bf16.mxu0 0
      %931 = vmatpush2.bf16.msra.mxu0 0
      %932 = vmatprep.subr.bf16.mxu0 0
      %933 = vmatpush2.bf16.msra.mxu0 0
      %934 = vmatprep.subr.bf16.mxu0 0
      %935 = vmatpush2.bf16.msra.mxu0 0
      %936 = vmatprep.subr.bf16.mxu0 0
      %937 = vmatpush2.bf16.msra.mxu0 0
      %938 = vmatprep.subr.bf16.mxu0 0
      %939 = vmatpush2.bf16.msra.mxu0 0
      %940 = vmatprep.subr.bf16.mxu0 0
      %941 = vmatpush2.bf16.msra.mxu0 0
      %942 = vmatprep.subr.bf16.mxu0 0
      %943 = vmatpush2.bf16.msra.mxu0 0
      %944 = vmatprep.mubr.bf16.mxu0 0
      %945 = vmatmul.mubr.bf16.gmra.mxu0 %v906
      %v946 = vpop.f32.mrf.mxu0
      %v947 = vadd.f32 0.0, %v946
      %v948 = vpop.f32.mrf.mxu0
      %v949 = vpop.f32.mrf.mxu0
      %v950 = vpop.f32.mrf.mxu0
      %951 = vdwg.mxu0
      %v952 = vpack.c.bf16 %v947, %v947
      %953 = vrot.lane.b32.xlu0 %v832, 120
      %v954 = vpop.permute.xlu0 %953
      %955 = vrot.lane.b32.xlu0 %v832, 88
      %v956 = vpop.permute.xlu0 %955
      %v958 = vsel %vm836, %v954, 0
      %v961 = vsel %vm836, %v956, 0
      %963 = vmatprep.subr.bf16.mxu0 0
      %964 = vmatpush1.bf16.xpose.msra.mxu0 0
      %965 = vmatprep.subr.bf16.mxu0 0
      %966 = vmatpush1.bf16.xpose.msra.mxu0 0
      %967 = vmatprep.subr.bf16.mxu0 0
      %968 = vmatpush1.bf16.xpose.msra.mxu0 0
      %969 = vmatprep.subr.bf16.mxu0 0
      %970 = vmatpush1.bf16.xpose.msra.mxu0 0
      %971 = vmatprep.subr.bf16.mxu0 0
      %972 = vmatpush1.bf16.xpose.msra.mxu0 0
      %973 = vmatprep.subr.bf16.mxu0 0
      %974 = vmatpush1.bf16.xpose.msra.mxu0 0
      %975 = vmatprep.subr.bf16.mxu0 0
      %976 = vmatpush1.bf16.xpose.msra.mxu0 0
      %977 = vmatprep.subr.bf16.mxu0 0
      %978 = vmatpush1.bf16.xpose.msra.mxu0 %v961
      %979 = vmatprep.subr.bf16.mxu0 0
      %980 = vmatpush2.bf16.xpose.msra.mxu0 0
      %981 = vmatprep.subr.bf16.mxu0 0
      %982 = vmatpush2.bf16.xpose.msra.mxu0 0
      %983 = vmatprep.subr.bf16.mxu0 0
      %984 = vmatpush2.bf16.xpose.msra.mxu0 0
      %985 = vmatprep.subr.bf16.mxu0 0
      %986 = vmatpush2.bf16.xpose.msra.mxu0 0
      %987 = vmatprep.subr.bf16.mxu0 0
      %988 = vmatpush2.bf16.xpose.msra.mxu0 0
      %989 = vmatprep.subr.bf16.mxu0 0
      %990 = vmatpush2.bf16.xpose.msra.mxu0 0
      %991 = vmatprep.subr.bf16.mxu0 0
      %992 = vmatpush2.bf16.xpose.msra.mxu0 0
      %993 = vmatprep.subr.bf16.mxu0 0
      %994 = vmatpush2.bf16.xpose.msra.mxu0 0
      %995 = vmatprep.mubr.bf16.mxu0 0
      %996 = vmatmul.mubr.bf16.gmra.mxu0 %v958
      %v997 = vpop.f32.mrf.mxu0
      %v998 = vadd.f32 0.0, %v997
      %v999 = vpop.f32.mrf.mxu0
      %v1000 = vpop.f32.mrf.mxu0
      %v1001 = vpop.f32.mrf.mxu0
      %1002 = vdwg.mxu0
      %v1003 = vmul.f32 %v998, 0.35355338
      %v1004 = vadd.f32 %v1003, %v888
      %v1005 = vsel %vm836, %v1004, -inf
      %1006 = vmax.xlane.f32.xlu0 %v1005
      %v1007 = vpop.xlane.xlu0 %1006
      %v1008 = vsub.f32 %v1004, %v1007
      %v1009 = vmul.f32 %v1008, 1.442695
      %v1010 = vpow.pop %v1009
      %v1011 = vsel %vm836, %v1010, 0.0
      %1012 = vadd.xlane.f32.xlu0 %v1011
      %v1013 = vpop.xlane.xlu0 %1012
      %v1014 = vrcp.pop %v1013
      %v1015 = vmul.f32 %v1010, %v1014
      %v1016 = vpack.c.bf16 %v1015, %v1015
      %1017 = vrot.lane.b32.xlu0 %v832, 56
      %v1018 = vpop.permute.xlu0 %1017
      %v1020 = vsel %vm836, %v1016, 0
      %v1023 = vsel %vm908, %v1018, 0
      %1025 = vmatprep.subr.bf16.mxu0 0
      %1026 = vmatpush1.bf16.msra.mxu0 0
      %1027 = vmatprep.subr.bf16.mxu0 0
      %1028 = vmatpush1.bf16.msra.mxu0 0
      %1029 = vmatprep.subr.bf16.mxu0 0
      %1030 = vmatpush1.bf16.msra.mxu0 0
      %1031 = vmatprep.subr.bf16.mxu0 0
      %1032 = vmatpush1.bf16.msra.mxu0 0
      %1033 = vmatprep.subr.bf16.mxu0 0
      %1034 = vmatpush1.bf16.msra.mxu0 0
      %1035 = vmatprep.subr.bf16.mxu0 0
      %1036 = vmatpush1.bf16.msra.mxu0 0
      %1037 = vmatprep.subr.bf16.mxu0 0
      %1038 = vmatpush1.bf16.msra.mxu0 0
      %1039 = vmatprep.subr.bf16.mxu0 0
      %1040 = vmatpush1.bf16.msra.mxu0 %v1023
      %1041 = vmatprep.subr.bf16.mxu0 0
      %1042 = vmatpush2.bf16.msra.mxu0 0
      %1043 = vmatprep.subr.bf16.mxu0 0
      %1044 = vmatpush2.bf16.msra.mxu0 0
      %1045 = vmatprep.subr.bf16.mxu0 0
      %1046 = vmatpush2.bf16.msra.mxu0 0
      %1047 = vmatprep.subr.bf16.mxu0 0
      %1048 = vmatpush2.bf16.msra.mxu0 0
      %1049 = vmatprep.subr.bf16.mxu0 0
      %1050 = vmatpush2.bf16.msra.mxu0 0
      %1051 = vmatprep.subr.bf16.mxu0 0
      %1052 = vmatpush2.bf16.msra.mxu0 0
      %1053 = vmatprep.subr.bf16.mxu0 0
      %1054 = vmatpush2.bf16.msra.mxu0 0
      %1055 = vmatprep.subr.bf16.mxu0 0
      %1056 = vmatpush2.bf16.msra.mxu0 0
      %1057 = vmatprep.mubr.bf16.mxu0 0
      %1058 = vmatmul.mubr.bf16.gmra.mxu0 %v1020
      %v1059 = vpop.f32.mrf.mxu0
      %v1060 = vadd.f32 0.0, %v1059
      %v1061 = vpop.f32.mrf.mxu0
      %v1062 = vpop.f32.mrf.mxu0
      %v1063 = vpop.f32.mrf.mxu0
      %1064 = vdwg.mxu0
      %v1065 = vpack.c.bf16 %v1060, %v1060
      %v1070 = vunpack.c.l.b16 %v826
      %v1071 = vunpack.c.l.b16 %v827
      %v1072 = vunpack.c.l.b16 %v828
      %v1073 = vunpack.c.l.b16 %v829
      %v1074 = vpack.c.b16 %v1071, %v1070
      %v1075 = vpack.c.b16 %v1073, %v1072
      %1076 = vrot.lane.b32.xlu0 %v1074, 120
      %v1077 = vpop.permute.xlu0 %1076
      %1078 = vrot.lane.b32.xlu0 %v1075, 120
      %v1079 = vpop.permute.xlu0 %1078
      %v1081 = vsel %vm836, %v1065, 0
      %v1084 = vsel %vm836, %v1077, 0
      %v1087 = vsel %vm836, %v1079, 0
      %1089 = vmatprep.subr.bf16.mxu0 0
      %1090 = vmatpush1.bf16.xpose.msra.mxu0 0
      %1091 = vmatprep.subr.bf16.mxu0 0
      %1092 = vmatpush1.bf16.xpose.msra.mxu0 0
      %1093 = vmatprep.subr.bf16.mxu0 0
      %1094 = vmatpush1.bf16.xpose.msra.mxu0 0
      %1095 = vmatprep.subr.bf16.mxu0 0
      %1096 = vmatpush1.bf16.xpose.msra.mxu0 0
      %1097 = vmatprep.subr.bf16.mxu0 0
      %1098 = vmatpush1.bf16.xpose.msra.mxu0 0
      %1099 = vmatprep.subr.bf16.mxu0 0
      %1100 = vmatpush1.bf16.xpose.msra.mxu0 0
      %1101 = vmatprep.subr.bf16.mxu0 0
      %1102 = vmatpush1.bf16.xpose.msra.mxu0 %v1087
      %1103 = vmatprep.subr.bf16.mxu0 0
      %1104 = vmatpush1.bf16.xpose.msra.mxu0 %v1084
      %1105 = vmatprep.subr.bf16.mxu0 0
      %1106 = vmatpush2.bf16.xpose.msra.mxu0 0
      %1107 = vmatprep.subr.bf16.mxu0 0
      %1108 = vmatpush2.bf16.xpose.msra.mxu0 0
      %1109 = vmatprep.subr.bf16.mxu0 0
      %1110 = vmatpush2.bf16.xpose.msra.mxu0 0
      %1111 = vmatprep.subr.bf16.mxu0 0
      %1112 = vmatpush2.bf16.xpose.msra.mxu0 0
      %1113 = vmatprep.subr.bf16.mxu0 0
      %1114 = vmatpush2.bf16.xpose.msra.mxu0 0
      %1115 = vmatprep.subr.bf16.mxu0 0
      %1116 = vmatpush2.bf16.xpose.msra.mxu0 0
      %1117 = vmatprep.subr.bf16.mxu0 0
      %1118 = vmatpush2.bf16.xpose.msra.mxu0 0
      %1119 = vmatprep.subr.bf16.mxu0 0
      %1120 = vmatpush2.bf16.xpose.msra.mxu0 0
      %1121 = vmatprep.mubr.bf16.mxu0 0
      %1122 = vmatmul.mubr.bf16.gmra.mxu0 %v1081
      %v1123 = vpop.f32.mrf.mxu0
      %v1124 = vadd.f32 0.0, %v1123
      %v1125 = vpop.f32.mrf.mxu0
      %v1126 = vpop.f32.mrf.mxu0
      %v1127 = vpop.f32.mrf.mxu0
      %1128 = vdwg.mxu0
      %v1130 = vsel %vm836, %v952, 0
      %v1133 = vsel %vm836, %v1074, 0
      %v1136 = vsel %vm836, %v1075, 0
      %1138 = vmatprep.subr.bf16.mxu0 0
      %1139 = vmatpush1.bf16.xpose.msra.mxu0 0
      %1140 = vmatprep.subr.bf16.mxu0 0
      %1141 = vmatpush1.bf16.xpose.msra.mxu0 0
      %1142 = vmatprep.subr.bf16.mxu0 0
      %1143 = vmatpush1.bf16.xpose.msra.mxu0 0
      %1144 = vmatprep.subr.bf16.mxu0 0
      %1145 = vmatpush1.bf16.xpose.msra.mxu0 0
      %1146 = vmatprep.subr.bf16.mxu0 0
      %1147 = vmatpush1.bf16.xpose.msra.mxu0 0
      %1148 = vmatprep.subr.bf16.mxu0 0
      %1149 = vmatpush1.bf16.xpose.msra.mxu0 0
      %1150 = vmatprep.subr.bf16.mxu0 0
      %1151 = vmatpush1.bf16.xpose.msra.mxu0 %v1136
      %1152 = vmatprep.subr.bf16.mxu0 0
      %1153 = vmatpush1.bf16.xpose.msra.mxu0 %v1133
      %1154 = vmatprep.subr.bf16.mxu0 0
      %1155 = vmatpush2.bf16.xpose.msra.mxu0 0
      %1156 = vmatprep.subr.bf16.mxu0 0
      %1157 = vmatpush2.bf16.xpose.msra.mxu0 0
      %1158 = vmatprep.subr.bf16.mxu0 0
      %1159 = vmatpush2.bf16.xpose.msra.mxu0 0
      %1160 = vmatprep.subr.bf16.mxu0 0
      %1161 = vmatpush2.bf16.xpose.msra.mxu0 0
      %1162 = vmatprep.subr.bf16.mxu0 0
      %1163 = vmatpush2.bf16.xpose.msra.mxu0 0
      %1164 = vmatprep.subr.bf16.mxu0 0
      %1165 = vmatpush2.bf16.xpose.msra.mxu0 0
      %1166 = vmatprep.subr.bf16.mxu0 0
      %1167 = vmatpush2.bf16.xpose.msra.mxu0 0
      %1168 = vmatprep.subr.bf16.mxu0 0
      %1169 = vmatpush2.bf16.xpose.msra.mxu0 0
      %1170 = vmatprep.mubr.bf16.mxu0 0
      %1171 = vmatmul.mubr.bf16.gmra.mxu0 %v1130
      %v1172 = vpop.f32.mrf.mxu0
      %v1173 = vadd.f32 %v1124, %v1172
      %v1174 = vpop.f32.mrf.mxu0
      %v1175 = vpop.f32.mrf.mxu0
      %v1176 = vpop.f32.mrf.mxu0
      %1177 = vdwg.mxu0
      %1178 = vrot.lane.b32.xlu0 %v832, 112
      %v1179 = vpop.permute.xlu0 %1178
      %1180 = vrot.lane.b32.xlu0 %v832, 80
      %v1181 = vpop.permute.xlu0 %1180
      %v1183 = vsel %vm836, %v1179, 0
      %v1186 = vsel %vm836, %v1181, 0
      %1188 = vmatprep.subr.bf16.mxu0 0
      %1189 = vmatpush1.bf16.xpose.msra.mxu0 0
      %1190 = vmatprep.subr.bf16.mxu0 0
      %1191 = vmatpush1.bf16.xpose.msra.mxu0 0
      %1192 = vmatprep.subr.bf16.mxu0 0
      %1193 = vmatpush1.bf16.xpose.msra.mxu0 0
      %1194 = vmatprep.subr.bf16.mxu0 0
      %1195 = vmatpush1.bf16.xpose.msra.mxu0 0
      %1196 = vmatprep.subr.bf16.mxu0 0
      %1197 = vmatpush1.bf16.xpose.msra.mxu0 0
      %1198 = vmatprep.subr.bf16.mxu0 0
      %1199 = vmatpush1.bf16.xpose.msra.mxu0 0
      %1200 = vmatprep.subr.bf16.mxu0 0
      %1201 = vmatpush1.bf16.xpose.msra.mxu0 0
      %1202 = vmatprep.subr.bf16.mxu0 0
      %1203 = vmatpush1.bf16.xpose.msra.mxu0 %v1186
      %1204 = vmatprep.subr.bf16.mxu0 0
      %1205 = vmatpush2.bf16.xpose.msra.mxu0 0
      %1206 = vmatprep.subr.bf16.mxu0 0
      %1207 = vmatpush2.bf16.xpose.msra.mxu0 0
      %1208 = vmatprep.subr.bf16.mxu0 0
      %1209 = vmatpush2.bf16.xpose.msra.mxu0 0
      %1210 = vmatprep.subr.bf16.mxu0 0
      %1211 = vmatpush2.bf16.xpose.msra.mxu0 0
      %1212 = vmatprep.subr.bf16.mxu0 0
      %1213 = vmatpush2.bf16.xpose.msra.mxu0 0
      %1214 = vmatprep.subr.bf16.mxu0 0
      %1215 = vmatpush2.bf16.xpose.msra.mxu0 0
      %1216 = vmatprep.subr.bf16.mxu0 0
      %1217 = vmatpush2.bf16.xpose.msra.mxu0 0
      %1218 = vmatprep.subr.bf16.mxu0 0
      %1219 = vmatpush2.bf16.xpose.msra.mxu0 0
      %1220 = vmatprep.mubr.bf16.mxu0 0
      %1221 = vmatmul.mubr.bf16.gmra.mxu0 %v1183
      %v1222 = vpop.f32.mrf.mxu0
      %v1223 = vadd.f32 0.0, %v1222
      %v1224 = vpop.f32.mrf.mxu0
      %v1225 = vpop.f32.mrf.mxu0
      %v1226 = vpop.f32.mrf.mxu0
      %1227 = vdwg.mxu0
      %v1228 = vmul.f32 %v1223, 0.35355338
      %v1229 = vadd.f32 %v1228, %v888
      %v1230 = vsel %vm836, %v1229, -inf
      %1231 = vmax.xlane.f32.xlu0 %v1230
      %v1232 = vpop.xlane.xlu0 %1231
      %v1233 = vsub.f32 %v1229, %v1232
      %v1234 = vmul.f32 %v1233, 1.442695
      %v1235 = vpow.pop %v1234
      %v1236 = vsel %vm836, %v1235, 0.0
      %1237 = vadd.xlane.f32.xlu0 %v1236
      %v1238 = vpop.xlane.xlu0 %1237
      %v1239 = vrcp.pop %v1238
      %v1240 = vmul.f32 %v1235, %v1239
      %v1241 = vpack.c.bf16 %v1240, %v1240
      %1242 = vrot.lane.b32.xlu0 %v832, 48
      %v1243 = vpop.permute.xlu0 %1242
      %v1245 = vsel %vm836, %v1241, 0
      %v1248 = vsel %vm908, %v1243, 0
      %1250 = vmatprep.subr.bf16.mxu0 0
      %1251 = vmatpush1.bf16.msra.mxu0 0
      %1252 = vmatprep.subr.bf16.mxu0 0
      %1253 = vmatpush1.bf16.msra.mxu0 0
      %1254 = vmatprep.subr.bf16.mxu0 0
      %1255 = vmatpush1.bf16.msra.mxu0 0
      %1256 = vmatprep.subr.bf16.mxu0 0
      %1257 = vmatpush1.bf16.msra.mxu0 0
      %1258 = vmatprep.subr.bf16.mxu0 0
      %1259 = vmatpush1.bf16.msra.mxu0 0
      %1260 = vmatprep.subr.bf16.mxu0 0
      %1261 = vmatpush1.bf16.msra.mxu0 0
      %1262 = vmatprep.subr.bf16.mxu0 0
      %1263 = vmatpush1.bf16.msra.mxu0 0
      %1264 = vmatprep.subr.bf16.mxu0 0
      %1265 = vmatpush1.bf16.msra.mxu0 %v1248
      %1266 = vmatprep.subr.bf16.mxu0 0
      %1267 = vmatpush2.bf16.msra.mxu0 0
      %1268 = vmatprep.subr.bf16.mxu0 0
      %1269 = vmatpush2.bf16.msra.mxu0 0
      %1270 = vmatprep.subr.bf16.mxu0 0
      %1271 = vmatpush2.bf16.msra.mxu0 0
      %1272 = vmatprep.subr.bf16.mxu0 0
      %1273 = vmatpush2.bf16.msra.mxu0 0
      %1274 = vmatprep.subr.bf16.mxu0 0
      %1275 = vmatpush2.bf16.msra.mxu0 0
      %1276 = vmatprep.subr.bf16.mxu0 0
      %1277 = vmatpush2.bf16.msra.mxu0 0
      %1278 = vmatprep.subr.bf16.mxu0 0
      %1279 = vmatpush2.bf16.msra.mxu0 0
      %1280 = vmatprep.subr.bf16.mxu0 0
      %1281 = vmatpush2.bf16.msra.mxu0 0
      %1282 = vmatprep.mubr.bf16.mxu0 0
      %1283 = vmatmul.mubr.bf16.gmra.mxu0 %v1245
      %v1284 = vpop.f32.mrf.mxu0
      %v1285 = vadd.f32 0.0, %v1284
      %v1286 = vpop.f32.mrf.mxu0
      %v1287 = vpop.f32.mrf.mxu0
      %v1288 = vpop.f32.mrf.mxu0
      %1289 = vdwg.mxu0
      %v1290 = vpack.c.bf16 %v1285, %v1285
      %1291 = vrot.lane.b32.xlu0 %v1074, 112
      %v1292 = vpop.permute.xlu0 %1291
      %1293 = vrot.lane.b32.xlu0 %v1075, 112
      %v1294 = vpop.permute.xlu0 %1293
      %v1296 = vsel %vm836, %v1290, 0
      %v1299 = vsel %vm836, %v1292, 0
      %v1302 = vsel %vm836, %v1294, 0
      %1304 = vmatprep.subr.bf16.mxu0 0
      %1305 = vmatpush1.bf16.xpose.msra.mxu0 0
      %1306 = vmatprep.subr.bf16.mxu0 0
      %1307 = vmatpush1.bf16.xpose.msra.mxu0 0
      %1308 = vmatprep.subr.bf16.mxu0 0
      %1309 = vmatpush1.bf16.xpose.msra.mxu0 0
      %1310 = vmatprep.subr.bf16.mxu0 0
      %1311 = vmatpush1.bf16.xpose.msra.mxu0 0
      %1312 = vmatprep.subr.bf16.mxu0 0
      %1313 = vmatpush1.bf16.xpose.msra.mxu0 0
      %1314 = vmatprep.subr.bf16.mxu0 0
      %1315 = vmatpush1.bf16.xpose.msra.mxu0 0
      %1316 = vmatprep.subr.bf16.mxu0 0
      %1317 = vmatpush1.bf16.xpose.msra.mxu0 %v1302
      %1318 = vmatprep.subr.bf16.mxu0 0
      %1319 = vmatpush1.bf16.xpose.msra.mxu0 %v1299
      %1320 = vmatprep.subr.bf16.mxu0 0
      %1321 = vmatpush2.bf16.xpose.msra.mxu0 0
      %1322 = vmatprep.subr.bf16.mxu0 0
      %1323 = vmatpush2.bf16.xpose.msra.mxu0 0
      %1324 = vmatprep.subr.bf16.mxu0 0
      %1325 = vmatpush2.bf16.xpose.msra.mxu0 0
      %1326 = vmatprep.subr.bf16.mxu0 0
      %1327 = vmatpush2.bf16.xpose.msra.mxu0 0
      %1328 = vmatprep.subr.bf16.mxu0 0
      %1329 = vmatpush2.bf16.xpose.msra.mxu0 0
      %1330 = vmatprep.subr.bf16.mxu0 0
      %1331 = vmatpush2.bf16.xpose.msra.mxu0 0
      %1332 = vmatprep.subr.bf16.mxu0 0
      %1333 = vmatpush2.bf16.xpose.msra.mxu0 0
      %1334 = vmatprep.subr.bf16.mxu0 0
      %1335 = vmatpush2.bf16.xpose.msra.mxu0 0
      %1336 = vmatprep.mubr.bf16.mxu0 0
      %1337 = vmatmul.mubr.bf16.gmra.mxu0 %v1296
      %v1338 = vpop.f32.mrf.mxu0
      %v1339 = vadd.f32 0.0, %v1338
      %v1340 = vpop.f32.mrf.mxu0
      %v1341 = vpop.f32.mrf.mxu0
      %v1342 = vpop.f32.mrf.mxu0
      %1343 = vdwg.mxu0
      %v1344 = vadd.f32 %v1173, %v1339
      %1345 = vrot.lane.b32.xlu0 %v832, 104
      %v1346 = vpop.permute.xlu0 %1345
      %1347 = vrot.lane.b32.xlu0 %v832, 72
      %v1348 = vpop.permute.xlu0 %1347
      %v1350 = vsel %vm836, %v1346, 0
      %v1353 = vsel %vm836, %v1348, 0
      %1355 = vmatprep.subr.bf16.mxu0 0
      %1356 = vmatpush1.bf16.xpose.msra.mxu0 0
      %1357 = vmatprep.subr.bf16.mxu0 0
      %1358 = vmatpush1.bf16.xpose.msra.mxu0 0
      %1359 = vmatprep.subr.bf16.mxu0 0
      %1360 = vmatpush1.bf16.xpose.msra.mxu0 0
      %1361 = vmatprep.subr.bf16.mxu0 0
      %1362 = vmatpush1.bf16.xpose.msra.mxu0 0
      %1363 = vmatprep.subr.bf16.mxu0 0
      %1364 = vmatpush1.bf16.xpose.msra.mxu0 0
      %1365 = vmatprep.subr.bf16.mxu0 0
      %1366 = vmatpush1.bf16.xpose.msra.mxu0 0
      %1367 = vmatprep.subr.bf16.mxu0 0
      %1368 = vmatpush1.bf16.xpose.msra.mxu0 0
      %1369 = vmatprep.subr.bf16.mxu0 0
      %1370 = vmatpush1.bf16.xpose.msra.mxu0 %v1353
      %1371 = vmatprep.subr.bf16.mxu0 0
      %1372 = vmatpush2.bf16.xpose.msra.mxu0 0
      %1373 = vmatprep.subr.bf16.mxu0 0
      %1374 = vmatpush2.bf16.xpose.msra.mxu0 0
      %1375 = vmatprep.subr.bf16.mxu0 0
      %1376 = vmatpush2.bf16.xpose.msra.mxu0 0
      %1377 = vmatprep.subr.bf16.mxu0 0
      %1378 = vmatpush2.bf16.xpose.msra.mxu0 0
      %1379 = vmatprep.subr.bf16.mxu0 0
      %1380 = vmatpush2.bf16.xpose.msra.mxu0 0
      %1381 = vmatprep.subr.bf16.mxu0 0
      %1382 = vmatpush2.bf16.xpose.msra.mxu0 0
      %1383 = vmatprep.subr.bf16.mxu0 0
      %1384 = vmatpush2.bf16.xpose.msra.mxu0 0
      %1385 = vmatprep.subr.bf16.mxu0 0
      %1386 = vmatpush2.bf16.xpose.msra.mxu0 0
      %1387 = vmatprep.mubr.bf16.mxu0 0
      %1388 = vmatmul.mubr.bf16.gmra.mxu0 %v1350
      %v1389 = vpop.f32.mrf.mxu0
      %v1390 = vadd.f32 0.0, %v1389
      %v1391 = vpop.f32.mrf.mxu0
      %v1392 = vpop.f32.mrf.mxu0
      %v1393 = vpop.f32.mrf.mxu0
      %1394 = vdwg.mxu0
      %v1395 = vmul.f32 %v1390, 0.35355338
      %v1396 = vadd.f32 %v1395, %v888
      %v1397 = vsel %vm836, %v1396, -inf
      %1398 = vmax.xlane.f32.xlu0 %v1397
      %v1399 = vpop.xlane.xlu0 %1398
      %v1400 = vsub.f32 %v1396, %v1399
      %v1401 = vmul.f32 %v1400, 1.442695
      %v1402 = vpow.pop %v1401
      %v1403 = vsel %vm836, %v1402, 0.0
      %1404 = vadd.xlane.f32.xlu0 %v1403
      %v1405 = vpop.xlane.xlu0 %1404
      %v1406 = vrcp.pop %v1405
      %v1407 = vmul.f32 %v1402, %v1406
      %v1408 = vpack.c.bf16 %v1407, %v1407
      %1409 = vrot.lane.b32.xlu0 %v832, 40
      %v1410 = vpop.permute.xlu0 %1409
      %v1412 = vsel %vm836, %v1408, 0
      %v1415 = vsel %vm908, %v1410, 0
      %1417 = vmatprep.subr.bf16.mxu0 0
      %1418 = vmatpush1.bf16.msra.mxu0 0
      %1419 = vmatprep.subr.bf16.mxu0 0
      %1420 = vmatpush1.bf16.msra.mxu0 0
      %1421 = vmatprep.subr.bf16.mxu0 0
      %1422 = vmatpush1.bf16.msra.mxu0 0
      %1423 = vmatprep.subr.bf16.mxu0 0
      %1424 = vmatpush1.bf16.msra.mxu0 0
      %1425 = vmatprep.subr.bf16.mxu0 0
      %1426 = vmatpush1.bf16.msra.mxu0 0
      %1427 = vmatprep.subr.bf16.mxu0 0
      %1428 = vmatpush1.bf16.msra.mxu0 0
      %1429 = vmatprep.subr.bf16.mxu0 0
      %1430 = vmatpush1.bf16.msra.mxu0 0
      %1431 = vmatprep.subr.bf16.mxu0 0
      %1432 = vmatpush1.bf16.msra.mxu0 %v1415
      %1433 = vmatprep.subr.bf16.mxu0 0
      %1434 = vmatpush2.bf16.msra.mxu0 0
      %1435 = vmatprep.subr.bf16.mxu0 0
      %1436 = vmatpush2.bf16.msra.mxu0 0
      %1437 = vmatprep.subr.bf16.mxu0 0
      %1438 = vmatpush2.bf16.msra.mxu0 0
      %1439 = vmatprep.subr.bf16.mxu0 0
      %1440 = vmatpush2.bf16.msra.mxu0 0
      %1441 = vmatprep.subr.bf16.mxu0 0
      %1442 = vmatpush2.bf16.msra.mxu0 0
      %1443 = vmatprep.subr.bf16.mxu0 0
      %1444 = vmatpush2.bf16.msra.mxu0 0
      %1445 = vmatprep.subr.bf16.mxu0 0
      %1446 = vmatpush2.bf16.msra.mxu0 0
      %1447 = vmatprep.subr.bf16.mxu0 0
      %1448 = vmatpush2.bf16.msra.mxu0 0
      %1449 = vmatprep.mubr.bf16.mxu0 0
      %1450 = vmatmul.mubr.bf16.gmra.mxu0 %v1412
      %v1451 = vpop.f32.mrf.mxu0
      %v1452 = vadd.f32 0.0, %v1451
      %v1453 = vpop.f32.mrf.mxu0
      %v1454 = vpop.f32.mrf.mxu0
      %v1455 = vpop.f32.mrf.mxu0
      %1456 = vdwg.mxu0
      %v1457 = vpack.c.bf16 %v1452, %v1452
      %1458 = vrot.lane.b32.xlu0 %v1074, 104
      %v1459 = vpop.permute.xlu0 %1458
      %1460 = vrot.lane.b32.xlu0 %v1075, 104
      %v1461 = vpop.permute.xlu0 %1460
      %v1463 = vsel %vm836, %v1457, 0
      %v1466 = vsel %vm836, %v1459, 0
      %v1469 = vsel %vm836, %v1461, 0
      %1471 = vmatprep.subr.bf16.mxu0 0
      %1472 = vmatpush1.bf16.xpose.msra.mxu0 0
      %1473 = vmatprep.subr.bf16.mxu0 0
      %1474 = vmatpush1.bf16.xpose.msra.mxu0 0
      %1475 = vmatprep.subr.bf16.mxu0 0
      %1476 = vmatpush1.bf16.xpose.msra.mxu0 0
      %1477 = vmatprep.subr.bf16.mxu0 0
      %1478 = vmatpush1.bf16.xpose.msra.mxu0 0
      %1479 = vmatprep.subr.bf16.mxu0 0
      %1480 = vmatpush1.bf16.xpose.msra.mxu0 0
      %1481 = vmatprep.subr.bf16.mxu0 0
      %1482 = vmatpush1.bf16.xpose.msra.mxu0 0
      %1483 = vmatprep.subr.bf16.mxu0 0
      %1484 = vmatpush1.bf16.xpose.msra.mxu0 %v1469
      %1485 = vmatprep.subr.bf16.mxu0 0
      %1486 = vmatpush1.bf16.xpose.msra.mxu0 %v1466
      %1487 = vmatprep.subr.bf16.mxu0 0
      %1488 = vmatpush2.bf16.xpose.msra.mxu0 0
      %1489 = vmatprep.subr.bf16.mxu0 0
      %1490 = vmatpush2.bf16.xpose.msra.mxu0 0
      %1491 = vmatprep.subr.bf16.mxu0 0
      %1492 = vmatpush2.bf16.xpose.msra.mxu0 0
      %1493 = vmatprep.subr.bf16.mxu0 0
      %1494 = vmatpush2.bf16.xpose.msra.mxu0 0
      %1495 = vmatprep.subr.bf16.mxu0 0
      %1496 = vmatpush2.bf16.xpose.msra.mxu0 0
      %1497 = vmatprep.subr.bf16.mxu0 0
      %1498 = vmatpush2.bf16.xpose.msra.mxu0 0
      %1499 = vmatprep.subr.bf16.mxu0 0
      %1500 = vmatpush2.bf16.xpose.msra.mxu0 0
      %1501 = vmatprep.subr.bf16.mxu0 0
      %1502 = vmatpush2.bf16.xpose.msra.mxu0 0
      %1503 = vmatprep.mubr.bf16.mxu0 0
      %1504 = vmatmul.mubr.bf16.gmra.mxu0 %v1463
      %v1505 = vpop.f32.mrf.mxu0
      %v1506 = vadd.f32 0.0, %v1505
      %v1507 = vpop.f32.mrf.mxu0
      %v1508 = vpop.f32.mrf.mxu0
      %v1509 = vpop.f32.mrf.mxu0
      %1510 = vdwg.mxu0
      %v1511 = vadd.f32 %v1344, %v1506
      %vm1512 = vcmp.eq.f32.partialorder %v658, 0.0
      %v1513 = vsel %vm1512, -1e+09, 0.0
      %v1514 = vpack.c.bf16 %v823, %v823
      %1516 = vrot.lane.b32.xlu0 %v1514, 96
      %v1517 = vpop.permute.xlu0 %1516
      %v1519 = vsel %vm836, %v1514, 0
      %v1522 = vsel %vm836, %v1517, 0
      %1524 = vmatprep.subr.bf16.mxu0 0
      %1525 = vmatpush1.bf16.xpose.msra.mxu0 0
      %1526 = vmatprep.subr.bf16.mxu0 0
      %1527 = vmatpush1.bf16.xpose.msra.mxu0 0
      %1528 = vmatprep.subr.bf16.mxu0 0
      %1529 = vmatpush1.bf16.xpose.msra.mxu0 0
      %1530 = vmatprep.subr.bf16.mxu0 0
      %1531 = vmatpush1.bf16.xpose.msra.mxu0 0
      %1532 = vmatprep.subr.bf16.mxu0 0
      %1533 = vmatpush1.bf16.xpose.msra.mxu0 0
      %1534 = vmatprep.subr.bf16.mxu0 0
      %1535 = vmatpush1.bf16.xpose.msra.mxu0 0
      %1536 = vmatprep.subr.bf16.mxu0 0
      %1537 = vmatpush1.bf16.xpose.msra.mxu0 0
      %1538 = vmatprep.subr.bf16.mxu0 0
      %1539 = vmatpush1.bf16.xpose.msra.mxu0 %v1522
      %1540 = vmatprep.subr.bf16.mxu0 0
      %1541 = vmatpush2.bf16.xpose.msra.mxu0 0
      %1542 = vmatprep.subr.bf16.mxu0 0
      %1543 = vmatpush2.bf16.xpose.msra.mxu0 0
      %1544 = vmatprep.subr.bf16.mxu0 0
      %1545 = vmatpush2.bf16.xpose.msra.mxu0 0
      %1546 = vmatprep.subr.bf16.mxu0 0
      %1547 = vmatpush2.bf16.xpose.msra.mxu0 0
      %1548 = vmatprep.subr.bf16.mxu0 0
      %1549 = vmatpush2.bf16.xpose.msra.mxu0 0
      %1550 = vmatprep.subr.bf16.mxu0 0
      %1551 = vmatpush2.bf16.xpose.msra.mxu0 0
      %1552 = vmatprep.subr.bf16.mxu0 0
      %1553 = vmatpush2.bf16.xpose.msra.mxu0 0
      %1554 = vmatprep.subr.bf16.mxu0 0
      %1555 = vmatpush2.bf16.xpose.msra.mxu0 0
      %1556 = vmatprep.mubr.bf16.mxu0 0
      %1557 = vmatmul.mubr.bf16.gmra.mxu0 %v1519
      %v1558 = vpop.f32.mrf.mxu0
      %v1559 = vadd.f32 0.0, %v1558
      %v1560 = vpop.f32.mrf.mxu0
      %v1561 = vpop.f32.mrf.mxu0
      %v1562 = vpop.f32.mrf.mxu0
      %1563 = vdwg.mxu0
      %v1564 = vmul.f32 %v1559, 0.35355338
      %v1566 = vlaneseq
      %v1567 = vshrl.u32 %v1566, 7
      %v1568 = vsub.s32 0, %v1567
      %v1569 = vrot.slane %v1513, %v1568
      %v1571 = vadd.f32 %v1564, %v1569
      %v1572 = vsel %vm836, %v1571, -inf
      %1573 = vmax.xlane.f32.xlu0 %v1572
      %v1574 = vpop.xlane.xlu0 %1573
      %v1575 = vsub.f32 %v1571, %v1574
      %v1576 = vmul.f32 %v1575, 1.442695
      %v1577 = vpow.pop %v1576
      %v1578 = vsel %vm836, %v1577, 0.0
      %1579 = vadd.xlane.f32.xlu0 %v1578
      %v1580 = vpop.xlane.xlu0 %1579
      %v1581 = vrcp.pop %v1580
      %v1582 = vmul.f32 %v1577, %v1581
      %v1583 = vpack.c.bf16 %v1582, %v1582
      %1584 = vrot.lane.b32.xlu0 %v1514, 64
      %v1585 = vpop.permute.xlu0 %1584
      %v1587 = vsel %vm836, %v1583, 0
      %v1590 = vsel %vm908, %v1585, 0
      %1592 = vmatprep.subr.bf16.mxu0 0
      %1593 = vmatpush1.bf16.msra.mxu0 0
      %1594 = vmatprep.subr.bf16.mxu0 0
      %1595 = vmatpush1.bf16.msra.mxu0 0
      %1596 = vmatprep.subr.bf16.mxu0 0
      %1597 = vmatpush1.bf16.msra.mxu0 0
      %1598 = vmatprep.subr.bf16.mxu0 0
      %1599 = vmatpush1.bf16.msra.mxu0 0
      %1600 = vmatprep.subr.bf16.mxu0 0
      %1601 = vmatpush1.bf16.msra.mxu0 0
      %1602 = vmatprep.subr.bf16.mxu0 0
      %1603 = vmatpush1.bf16.msra.mxu0 0
      %1604 = vmatprep.subr.bf16.mxu0 0
      %1605 = vmatpush1.bf16.msra.mxu0 0
      %1606 = vmatprep.subr.bf16.mxu0 0
      %1607 = vmatpush1.bf16.msra.mxu0 %v1590
      %1608 = vmatprep.subr.bf16.mxu0 0
      %1609 = vmatpush2.bf16.msra.mxu0 0
      %1610 = vmatprep.subr.bf16.mxu0 0
      %1611 = vmatpush2.bf16.msra.mxu0 0
      %1612 = vmatprep.subr.bf16.mxu0 0
      %1613 = vmatpush2.bf16.msra.mxu0 0
      %1614 = vmatprep.subr.bf16.mxu0 0
      %1615 = vmatpush2.bf16.msra.mxu0 0
      %1616 = vmatprep.subr.bf16.mxu0 0
      %1617 = vmatpush2.bf16.msra.mxu0 0
      %1618 = vmatprep.subr.bf16.mxu0 0
      %1619 = vmatpush2.bf16.msra.mxu0 0
      %1620 = vmatprep.subr.bf16.mxu0 0
      %1621 = vmatpush2.bf16.msra.mxu0 0
      %1622 = vmatprep.subr.bf16.mxu0 0
      %1623 = vmatpush2.bf16.msra.mxu0 0
      %1624 = vmatprep.mubr.bf16.mxu0 0
      %1625 = vmatmul.mubr.bf16.gmra.mxu0 %v1587
      %v1626 = vpop.f32.mrf.mxu0
      %v1627 = vadd.f32 0.0, %v1626
      %v1628 = vpop.f32.mrf.mxu0
      %v1629 = vpop.f32.mrf.mxu0
      %v1630 = vpop.f32.mrf.mxu0
      %1631 = vdwg.mxu0
      %v1632 = vpack.c.bf16 %v1627, %v1627
      %1633 = vrot.lane.b32.xlu0 %v1514, 120
      %v1634 = vpop.permute.xlu0 %1633
      %1635 = vrot.lane.b32.xlu0 %v1514, 88
      %v1636 = vpop.permute.xlu0 %1635
      %v1638 = vsel %vm836, %v1634, 0
      %v1641 = vsel %vm836, %v1636, 0
      %1643 = vmatprep.subr.bf16.mxu0 0
      %1644 = vmatpush1.bf16.xpose.msra.mxu0 0
      %1645 = vmatprep.subr.bf16.mxu0 0
      %1646 = vmatpush1.bf16.xpose.msra.mxu0 0
      %1647 = vmatprep.subr.bf16.mxu0 0
      %1648 = vmatpush1.bf16.xpose.msra.mxu0 0
      %1649 = vmatprep.subr.bf16.mxu0 0
      %1650 = vmatpush1.bf16.xpose.msra.mxu0 0
      %1651 = vmatprep.subr.bf16.mxu0 0
      %1652 = vmatpush1.bf16.xpose.msra.mxu0 0
      %1653 = vmatprep.subr.bf16.mxu0 0
      %1654 = vmatpush1.bf16.xpose.msra.mxu0 0
      %1655 = vmatprep.subr.bf16.mxu0 0
      %1656 = vmatpush1.bf16.xpose.msra.mxu0 0
      %1657 = vmatprep.subr.bf16.mxu0 0
      %1658 = vmatpush1.bf16.xpose.msra.mxu0 %v1641
      %1659 = vmatprep.subr.bf16.mxu0 0
      %1660 = vmatpush2.bf16.xpose.msra.mxu0 0
      %1661 = vmatprep.subr.bf16.mxu0 0
      %1662 = vmatpush2.bf16.xpose.msra.mxu0 0
      %1663 = vmatprep.subr.bf16.mxu0 0
      %1664 = vmatpush2.bf16.xpose.msra.mxu0 0
      %1665 = vmatprep.subr.bf16.mxu0 0
      %1666 = vmatpush2.bf16.xpose.msra.mxu0 0
      %1667 = vmatprep.subr.bf16.mxu0 0
      %1668 = vmatpush2.bf16.xpose.msra.mxu0 0
      %1669 = vmatprep.subr.bf16.mxu0 0
      %1670 = vmatpush2.bf16.xpose.msra.mxu0 0
      %1671 = vmatprep.subr.bf16.mxu0 0
      %1672 = vmatpush2.bf16.xpose.msra.mxu0 0
      %1673 = vmatprep.subr.bf16.mxu0 0
      %1674 = vmatpush2.bf16.xpose.msra.mxu0 0
      %1675 = vmatprep.mubr.bf16.mxu0 0
      %1676 = vmatmul.mubr.bf16.gmra.mxu0 %v1638
      %v1677 = vpop.f32.mrf.mxu0
      %v1678 = vadd.f32 0.0, %v1677
      %v1679 = vpop.f32.mrf.mxu0
      %v1680 = vpop.f32.mrf.mxu0
      %v1681 = vpop.f32.mrf.mxu0
      %1682 = vdwg.mxu0
      %v1683 = vmul.f32 %v1678, 0.35355338
      %v1684 = vadd.f32 %v1683, %v1569
      %v1685 = vsel %vm836, %v1684, -inf
      %1686 = vmax.xlane.f32.xlu0 %v1685
      %v1687 = vpop.xlane.xlu0 %1686
      %v1688 = vsub.f32 %v1684, %v1687
      %v1689 = vmul.f32 %v1688, 1.442695
      %v1690 = vpow.pop %v1689
      %v1691 = vsel %vm836, %v1690, 0.0
      %1692 = vadd.xlane.f32.xlu0 %v1691
      %v1693 = vpop.xlane.xlu0 %1692
      %v1694 = vrcp.pop %v1693
      %v1695 = vmul.f32 %v1690, %v1694
      %v1696 = vpack.c.bf16 %v1695, %v1695
      %1697 = vrot.lane.b32.xlu0 %v1514, 56
      %v1698 = vpop.permute.xlu0 %1697
      %v1700 = vsel %vm836, %v1696, 0
      %v1703 = vsel %vm908, %v1698, 0
      %1705 = vmatprep.subr.bf16.mxu0 0
      %1706 = vmatpush1.bf16.msra.mxu0 0
      %1707 = vmatprep.subr.bf16.mxu0 0
      %1708 = vmatpush1.bf16.msra.mxu0 0
      %1709 = vmatprep.subr.bf16.mxu0 0
      %1710 = vmatpush1.bf16.msra.mxu0 0
      %1711 = vmatprep.subr.bf16.mxu0 0
      %1712 = vmatpush1.bf16.msra.mxu0 0
      %1713 = vmatprep.subr.bf16.mxu0 0
      %1714 = vmatpush1.bf16.msra.mxu0 0
      %1715 = vmatprep.subr.bf16.mxu0 0
      %1716 = vmatpush1.bf16.msra.mxu0 0
      %1717 = vmatprep.subr.bf16.mxu0 0
      %1718 = vmatpush1.bf16.msra.mxu0 0
      %1719 = vmatprep.subr.bf16.mxu0 0
      %1720 = vmatpush1.bf16.msra.mxu0 %v1703
      %1721 = vmatprep.subr.bf16.mxu0 0
      %1722 = vmatpush2.bf16.msra.mxu0 0
      %1723 = vmatprep.subr.bf16.mxu0 0
      %1724 = vmatpush2.bf16.msra.mxu0 0
      %1725 = vmatprep.subr.bf16.mxu0 0
      %1726 = vmatpush2.bf16.msra.mxu0 0
      %1727 = vmatprep.subr.bf16.mxu0 0
      %1728 = vmatpush2.bf16.msra.mxu0 0
      %1729 = vmatprep.subr.bf16.mxu0 0
      %1730 = vmatpush2.bf16.msra.mxu0 0
      %1731 = vmatprep.subr.bf16.mxu0 0
      %1732 = vmatpush2.bf16.msra.mxu0 0
      %1733 = vmatprep.subr.bf16.mxu0 0
      %1734 = vmatpush2.bf16.msra.mxu0 0
      %1735 = vmatprep.subr.bf16.mxu0 0
      %1736 = vmatpush2.bf16.msra.mxu0 0
      %1737 = vmatprep.mubr.bf16.mxu0 0
      %1738 = vmatmul.mubr.bf16.gmra.mxu0 %v1700
      %v1739 = vpop.f32.mrf.mxu0
      %v1740 = vadd.f32 0.0, %v1739
      %v1741 = vpop.f32.mrf.mxu0
      %v1742 = vpop.f32.mrf.mxu0
      %v1743 = vpop.f32.mrf.mxu0
      %1744 = vdwg.mxu0
      %v1745 = vpack.c.bf16 %v1740, %v1740
      %v1747 = vsel %vm836, %v1745, 0
      %1749 = vmatprep.subr.bf16.mxu0 0
      %1750 = vmatpush1.bf16.xpose.msra.mxu0 0
      %1751 = vmatprep.subr.bf16.mxu0 0
      %1752 = vmatpush1.bf16.xpose.msra.mxu0 0
      %1753 = vmatprep.subr.bf16.mxu0 0
      %1754 = vmatpush1.bf16.xpose.msra.mxu0 0
      %1755 = vmatprep.subr.bf16.mxu0 0
      %1756 = vmatpush1.bf16.xpose.msra.mxu0 0
      %1757 = vmatprep.subr.bf16.mxu0 0
      %1758 = vmatpush1.bf16.xpose.msra.mxu0 0
      %1759 = vmatprep.subr.bf16.mxu0 0
      %1760 = vmatpush1.bf16.xpose.msra.mxu0 0
      %1761 = vmatprep.subr.bf16.mxu0 0
      %1762 = vmatpush1.bf16.xpose.msra.mxu0 %v1087
      %1763 = vmatprep.subr.bf16.mxu0 0
      %1764 = vmatpush1.bf16.xpose.msra.mxu0 %v1084
      %1765 = vmatprep.subr.bf16.mxu0 0
      %1766 = vmatpush2.bf16.xpose.msra.mxu0 0
      %1767 = vmatprep.subr.bf16.mxu0 0
      %1768 = vmatpush2.bf16.xpose.msra.mxu0 0
      %1769 = vmatprep.subr.bf16.mxu0 0
      %1770 = vmatpush2.bf16.xpose.msra.mxu0 0
      %1771 = vmatprep.subr.bf16.mxu0 0
      %1772 = vmatpush2.bf16.xpose.msra.mxu0 0
      %1773 = vmatprep.subr.bf16.mxu0 0
      %1774 = vmatpush2.bf16.xpose.msra.mxu0 0
      %1775 = vmatprep.subr.bf16.mxu0 0
      %1776 = vmatpush2.bf16.xpose.msra.mxu0 0
      %1777 = vmatprep.subr.bf16.mxu0 0
      %1778 = vmatpush2.bf16.xpose.msra.mxu0 0
      %1779 = vmatprep.subr.bf16.mxu0 0
      %1780 = vmatpush2.bf16.xpose.msra.mxu0 0
      %1781 = vmatprep.mubr.bf16.mxu0 0
      %1782 = vmatmul.mubr.bf16.gmra.mxu0 %v1747
      %v1783 = vpop.f32.mrf.mxu0
      %v1784 = vadd.f32 0.0, %v1783
      %v1785 = vpop.f32.mrf.mxu0
      %v1786 = vpop.f32.mrf.mxu0
      %v1787 = vpop.f32.mrf.mxu0
      %1788 = vdwg.mxu0
      %v1790 = vsel %vm836, %v1632, 0
      %1792 = vmatprep.subr.bf16.mxu0 0
      %1793 = vmatpush1.bf16.xpose.msra.mxu0 0
      %1794 = vmatprep.subr.bf16.mxu0 0
      %1795 = vmatpush1.bf16.xpose.msra.mxu0 0
      %1796 = vmatprep.subr.bf16.mxu0 0
      %1797 = vmatpush1.bf16.xpose.msra.mxu0 0
      %1798 = vmatprep.subr.bf16.mxu0 0
      %1799 = vmatpush1.bf16.xpose.msra.mxu0 0
      %1800 = vmatprep.subr.bf16.mxu0 0
      %1801 = vmatpush1.bf16.xpose.msra.mxu0 0
      %1802 = vmatprep.subr.bf16.mxu0 0
      %1803 = vmatpush1.bf16.xpose.msra.mxu0 0
      %1804 = vmatprep.subr.bf16.mxu0 0
      %1805 = vmatpush1.bf16.xpose.msra.mxu0 %v1136
      %1806 = vmatprep.subr.bf16.mxu0 0
      %1807 = vmatpush1.bf16.xpose.msra.mxu0 %v1133
      %1808 = vmatprep.subr.bf16.mxu0 0
      %1809 = vmatpush2.bf16.xpose.msra.mxu0 0
      %1810 = vmatprep.subr.bf16.mxu0 0
      %1811 = vmatpush2.bf16.xpose.msra.mxu0 0
      %1812 = vmatprep.subr.bf16.mxu0 0
      %1813 = vmatpush2.bf16.xpose.msra.mxu0 0
      %1814 = vmatprep.subr.bf16.mxu0 0
      %1815 = vmatpush2.bf16.xpose.msra.mxu0 0
      %1816 = vmatprep.subr.bf16.mxu0 0
      %1817 = vmatpush2.bf16.xpose.msra.mxu0 0
      %1818 = vmatprep.subr.bf16.mxu0 0
      %1819 = vmatpush2.bf16.xpose.msra.mxu0 0
      %1820 = vmatprep.subr.bf16.mxu0 0
      %1821 = vmatpush2.bf16.xpose.msra.mxu0 0
      %1822 = vmatprep.subr.bf16.mxu0 0
      %1823 = vmatpush2.bf16.xpose.msra.mxu0 0
      %1824 = vmatprep.mubr.bf16.mxu0 0
      %1825 = vmatmul.mubr.bf16.gmra.mxu0 %v1790
      %v1826 = vpop.f32.mrf.mxu0
      %v1827 = vadd.f32 %v1784, %v1826
      %v1828 = vpop.f32.mrf.mxu0
      %v1829 = vpop.f32.mrf.mxu0
      %v1830 = vpop.f32.mrf.mxu0
      %1831 = vdwg.mxu0
      %1832 = vrot.lane.b32.xlu0 %v1514, 112
      %v1833 = vpop.permute.xlu0 %1832
      %1834 = vrot.lane.b32.xlu0 %v1514, 80
      %v1835 = vpop.permute.xlu0 %1834
      %v1837 = vsel %vm836, %v1833, 0
      %v1840 = vsel %vm836, %v1835, 0
      %1842 = vmatprep.subr.bf16.mxu0 0
      %1843 = vmatpush1.bf16.xpose.msra.mxu0 0
      %1844 = vmatprep.subr.bf16.mxu0 0
      %1845 = vmatpush1.bf16.xpose.msra.mxu0 0
      %1846 = vmatprep.subr.bf16.mxu0 0
      %1847 = vmatpush1.bf16.xpose.msra.mxu0 0
      %1848 = vmatprep.subr.bf16.mxu0 0
      %1849 = vmatpush1.bf16.xpose.msra.mxu0 0
      %1850 = vmatprep.subr.bf16.mxu0 0
      %1851 = vmatpush1.bf16.xpose.msra.mxu0 0
      %1852 = vmatprep.subr.bf16.mxu0 0
      %1853 = vmatpush1.bf16.xpose.msra.mxu0 0
      %1854 = vmatprep.subr.bf16.mxu0 0
      %1855 = vmatpush1.bf16.xpose.msra.mxu0 0
      %1856 = vmatprep.subr.bf16.mxu0 0
      %1857 = vmatpush1.bf16.xpose.msra.mxu0 %v1840
      %1858 = vmatprep.subr.bf16.mxu0 0
      %1859 = vmatpush2.bf16.xpose.msra.mxu0 0
      %1860 = vmatprep.subr.bf16.mxu0 0
      %1861 = vmatpush2.bf16.xpose.msra.mxu0 0
      %1862 = vmatprep.subr.bf16.mxu0 0
      %1863 = vmatpush2.bf16.xpose.msra.mxu0 0
      %1864 = vmatprep.subr.bf16.mxu0 0
      %1865 = vmatpush2.bf16.xpose.msra.mxu0 0
      %1866 = vmatprep.subr.bf16.mxu0 0
      %1867 = vmatpush2.bf16.xpose.msra.mxu0 0
      %1868 = vmatprep.subr.bf16.mxu0 0
      %1869 = vmatpush2.bf16.xpose.msra.mxu0 0
      %1870 = vmatprep.subr.bf16.mxu0 0
      %1871 = vmatpush2.bf16.xpose.msra.mxu0 0
      %1872 = vmatprep.subr.bf16.mxu0 0
      %1873 = vmatpush2.bf16.xpose.msra.mxu0 0
      %1874 = vmatprep.mubr.bf16.mxu0 0
      %1875 = vmatmul.mubr.bf16.gmra.mxu0 %v1837
      %v1876 = vpop.f32.mrf.mxu0
      %v1877 = vadd.f32 0.0, %v1876
      %v1878 = vpop.f32.mrf.mxu0
      %v1879 = vpop.f32.mrf.mxu0
      %v1880 = vpop.f32.mrf.mxu0
      %1881 = vdwg.mxu0
      %v1882 = vmul.f32 %v1877, 0.35355338
      %v1883 = vadd.f32 %v1882, %v1569
      %v1884 = vsel %vm836, %v1883, -inf
      %1885 = vmax.xlane.f32.xlu0 %v1884
      %v1886 = vpop.xlane.xlu0 %1885
      %v1887 = vsub.f32 %v1883, %v1886
      %v1888 = vmul.f32 %v1887, 1.442695
      %v1889 = vpow.pop %v1888
      %v1890 = vsel %vm836, %v1889, 0.0
      %1891 = vadd.xlane.f32.xlu0 %v1890
      %v1892 = vpop.xlane.xlu0 %1891
      %v1893 = vrcp.pop %v1892
      %v1894 = vmul.f32 %v1889, %v1893
      %v1895 = vpack.c.bf16 %v1894, %v1894
      %1896 = vrot.lane.b32.xlu0 %v1514, 48
      %v1897 = vpop.permute.xlu0 %1896
      %v1899 = vsel %vm836, %v1895, 0
      %v1902 = vsel %vm908, %v1897, 0
      %1904 = vmatprep.subr.bf16.mxu0 0
      %1905 = vmatpush1.bf16.msra.mxu0 0
      %1906 = vmatprep.subr.bf16.mxu0 0
      %1907 = vmatpush1.bf16.msra.mxu0 0
      %1908 = vmatprep.subr.bf16.mxu0 0
      %1909 = vmatpush1.bf16.msra.mxu0 0
      %1910 = vmatprep.subr.bf16.mxu0 0
      %1911 = vmatpush1.bf16.msra.mxu0 0
      %1912 = vmatprep.subr.bf16.mxu0 0
      %1913 = vmatpush1.bf16.msra.mxu0 0
      %1914 = vmatprep.subr.bf16.mxu0 0
      %1915 = vmatpush1.bf16.msra.mxu0 0
      %1916 = vmatprep.subr.bf16.mxu0 0
      %1917 = vmatpush1.bf16.msra.mxu0 0
      %1918 = vmatprep.subr.bf16.mxu0 0
      %1919 = vmatpush1.bf16.msra.mxu0 %v1902
      %1920 = vmatprep.subr.bf16.mxu0 0
      %1921 = vmatpush2.bf16.msra.mxu0 0
      %1922 = vmatprep.subr.bf16.mxu0 0
      %1923 = vmatpush2.bf16.msra.mxu0 0
      %1924 = vmatprep.subr.bf16.mxu0 0
      %1925 = vmatpush2.bf16.msra.mxu0 0
      %1926 = vmatprep.subr.bf16.mxu0 0
      %1927 = vmatpush2.bf16.msra.mxu0 0
      %1928 = vmatprep.subr.bf16.mxu0 0
      %1929 = vmatpush2.bf16.msra.mxu0 0
      %1930 = vmatprep.subr.bf16.mxu0 0
      %1931 = vmatpush2.bf16.msra.mxu0 0
      %1932 = vmatprep.subr.bf16.mxu0 0
      %1933 = vmatpush2.bf16.msra.mxu0 0
      %1934 = vmatprep.subr.bf16.mxu0 0
      %1935 = vmatpush2.bf16.msra.mxu0 0
      %1936 = vmatprep.mubr.bf16.mxu0 0
      %1937 = vmatmul.mubr.bf16.gmra.mxu0 %v1899
      %v1938 = vpop.f32.mrf.mxu0
      %v1939 = vadd.f32 0.0, %v1938
      %v1940 = vpop.f32.mrf.mxu0
      %v1941 = vpop.f32.mrf.mxu0
      %v1942 = vpop.f32.mrf.mxu0
      %1943 = vdwg.mxu0
      %v1944 = vpack.c.bf16 %v1939, %v1939
      %v1946 = vsel %vm836, %v1944, 0
      %1948 = vmatprep.subr.bf16.mxu0 0
      %1949 = vmatpush1.bf16.xpose.msra.mxu0 0
      %1950 = vmatprep.subr.bf16.mxu0 0
      %1951 = vmatpush1.bf16.xpose.msra.mxu0 0
      %1952 = vmatprep.subr.bf16.mxu0 0
      %1953 = vmatpush1.bf16.xpose.msra.mxu0 0
      %1954 = vmatprep.subr.bf16.mxu0 0
      %1955 = vmatpush1.bf16.xpose.msra.mxu0 0
      %1956 = vmatprep.subr.bf16.mxu0 0
      %1957 = vmatpush1.bf16.xpose.msra.mxu0 0
      %1958 = vmatprep.subr.bf16.mxu0 0
      %1959 = vmatpush1.bf16.xpose.msra.mxu0 0
      %1960 = vmatprep.subr.bf16.mxu0 0
      %1961 = vmatpush1.bf16.xpose.msra.mxu0 %v1302
      %1962 = vmatprep.subr.bf16.mxu0 0
      %1963 = vmatpush1.bf16.xpose.msra.mxu0 %v1299
      %1964 = vmatprep.subr.bf16.mxu0 0
      %1965 = vmatpush2.bf16.xpose.msra.mxu0 0
      %1966 = vmatprep.subr.bf16.mxu0 0
      %1967 = vmatpush2.bf16.xpose.msra.mxu0 0
      %1968 = vmatprep.subr.bf16.mxu0 0
      %1969 = vmatpush2.bf16.xpose.msra.mxu0 0
      %1970 = vmatprep.subr.bf16.mxu0 0
      %1971 = vmatpush2.bf16.xpose.msra.mxu0 0
      %1972 = vmatprep.subr.bf16.mxu0 0
      %1973 = vmatpush2.bf16.xpose.msra.mxu0 0
      %1974 = vmatprep.subr.bf16.mxu0 0
      %1975 = vmatpush2.bf16.xpose.msra.mxu0 0
      %1976 = vmatprep.subr.bf16.mxu0 0
      %1977 = vmatpush2.bf16.xpose.msra.mxu0 0
      %1978 = vmatprep.subr.bf16.mxu0 0
      %1979 = vmatpush2.bf16.xpose.msra.mxu0 0
      %1980 = vmatprep.mubr.bf16.mxu0 0
      %1981 = vmatmul.mubr.bf16.gmra.mxu0 %v1946
      %v1982 = vpop.f32.mrf.mxu0
      %v1983 = vadd.f32 0.0, %v1982
      %v1984 = vpop.f32.mrf.mxu0
      %v1985 = vpop.f32.mrf.mxu0
      %v1986 = vpop.f32.mrf.mxu0
      %1987 = vdwg.mxu0
      %v1988 = vadd.f32 %v1827, %v1983
      %1989 = vrot.lane.b32.xlu0 %v1514, 104
      %v1990 = vpop.permute.xlu0 %1989
      %1991 = vrot.lane.b32.xlu0 %v1514, 72
      %v1992 = vpop.permute.xlu0 %1991
      %v1994 = vsel %vm836, %v1990, 0
      %v1997 = vsel %vm836, %v1992, 0
      %1999 = vmatprep.subr.bf16.mxu0 0
      %2000 = vmatpush1.bf16.xpose.msra.mxu0 0
      %2001 = vmatprep.subr.bf16.mxu0 0
      %2002 = vmatpush1.bf16.xpose.msra.mxu0 0
      %2003 = vmatprep.subr.bf16.mxu0 0
      %2004 = vmatpush1.bf16.xpose.msra.mxu0 0
      %2005 = vmatprep.subr.bf16.mxu0 0
      %2006 = vmatpush1.bf16.xpose.msra.mxu0 0
      %2007 = vmatprep.subr.bf16.mxu0 0
      %2008 = vmatpush1.bf16.xpose.msra.mxu0 0
      %2009 = vmatprep.subr.bf16.mxu0 0
      %2010 = vmatpush1.bf16.xpose.msra.mxu0 0
      %2011 = vmatprep.subr.bf16.mxu0 0
      %2012 = vmatpush1.bf16.xpose.msra.mxu0 0
      %2013 = vmatprep.subr.bf16.mxu0 0
      %2014 = vmatpush1.bf16.xpose.msra.mxu0 %v1997
      %2015 = vmatprep.subr.bf16.mxu0 0
      %2016 = vmatpush2.bf16.xpose.msra.mxu0 0
      %2017 = vmatprep.subr.bf16.mxu0 0
      %2018 = vmatpush2.bf16.xpose.msra.mxu0 0
      %2019 = vmatprep.subr.bf16.mxu0 0
      %2020 = vmatpush2.bf16.xpose.msra.mxu0 0
      %2021 = vmatprep.subr.bf16.mxu0 0
      %2022 = vmatpush2.bf16.xpose.msra.mxu0 0
      %2023 = vmatprep.subr.bf16.mxu0 0
      %2024 = vmatpush2.bf16.xpose.msra.mxu0 0
      %2025 = vmatprep.subr.bf16.mxu0 0
      %2026 = vmatpush2.bf16.xpose.msra.mxu0 0
      %2027 = vmatprep.subr.bf16.mxu0 0
      %2028 = vmatpush2.bf16.xpose.msra.mxu0 0
      %2029 = vmatprep.subr.bf16.mxu0 0
      %2030 = vmatpush2.bf16.xpose.msra.mxu0 0
      %2031 = vmatprep.mubr.bf16.mxu0 0
      %2032 = vmatmul.mubr.bf16.gmra.mxu0 %v1994
      %v2033 = vpop.f32.mrf.mxu0
      %v2034 = vadd.f32 0.0, %v2033
      %v2035 = vpop.f32.mrf.mxu0
      %v2036 = vpop.f32.mrf.mxu0
      %v2037 = vpop.f32.mrf.mxu0
      %2038 = vdwg.mxu0
      %v2039 = vmul.f32 %v2034, 0.35355338
      %v2040 = vadd.f32 %v2039, %v1569
      %v2041 = vsel %vm836, %v2040, -inf
      %2042 = vmax.xlane.f32.xlu0 %v2041
      %v2043 = vpop.xlane.xlu0 %2042
      %v2044 = vsub.f32 %v2040, %v2043
      %v2045 = vmul.f32 %v2044, 1.442695
      %v2046 = vpow.pop %v2045
      %v2047 = vsel %vm836, %v2046, 0.0
      %2048 = vadd.xlane.f32.xlu0 %v2047
      %v2049 = vpop.xlane.xlu0 %2048
      %v2050 = vrcp.pop %v2049
      %v2051 = vmul.f32 %v2046, %v2050
      %v2052 = vpack.c.bf16 %v2051, %v2051
      %2053 = vrot.lane.b32.xlu0 %v1514, 40
      %v2054 = vpop.permute.xlu0 %2053
      %v2056 = vsel %vm836, %v2052, 0
      %v2059 = vsel %vm908, %v2054, 0
      %2061 = vmatprep.subr.bf16.mxu0 0
      %2062 = vmatpush1.bf16.msra.mxu0 0
      %2063 = vmatprep.subr.bf16.mxu0 0
      %2064 = vmatpush1.bf16.msra.mxu0 0
      %2065 = vmatprep.subr.bf16.mxu0 0
      %2066 = vmatpush1.bf16.msra.mxu0 0
      %2067 = vmatprep.subr.bf16.mxu0 0
      %2068 = vmatpush1.bf16.msra.mxu0 0
      %2069 = vmatprep.subr.bf16.mxu0 0
      %2070 = vmatpush1.bf16.msra.mxu0 0
      %2071 = vmatprep.subr.bf16.mxu0 0
      %2072 = vmatpush1.bf16.msra.mxu0 0
      %2073 = vmatprep.subr.bf16.mxu0 0
      %2074 = vmatpush1.bf16.msra.mxu0 0
      %2075 = vmatprep.subr.bf16.mxu0 0
      %2076 = vmatpush1.bf16.msra.mxu0 %v2059
      %2077 = vmatprep.subr.bf16.mxu0 0
      %2078 = vmatpush2.bf16.msra.mxu0 0
      %2079 = vmatprep.subr.bf16.mxu0 0
      %2080 = vmatpush2.bf16.msra.mxu0 0
      %2081 = vmatprep.subr.bf16.mxu0 0
      %2082 = vmatpush2.bf16.msra.mxu0 0
      %2083 = vmatprep.subr.bf16.mxu0 0
      %2084 = vmatpush2.bf16.msra.mxu0 0
      %2085 = vmatprep.subr.bf16.mxu0 0
      %2086 = vmatpush2.bf16.msra.mxu0 0
      %2087 = vmatprep.subr.bf16.mxu0 0
      %2088 = vmatpush2.bf16.msra.mxu0 0
      %2089 = vmatprep.subr.bf16.mxu0 0
      %2090 = vmatpush2.bf16.msra.mxu0 0
      %2091 = vmatprep.subr.bf16.mxu0 0
      %2092 = vmatpush2.bf16.msra.mxu0 0
      %2093 = vmatprep.mubr.bf16.mxu0 0
      %2094 = vmatmul.mubr.bf16.gmra.mxu0 %v2056
      %v2095 = vpop.f32.mrf.mxu0
      %v2096 = vadd.f32 0.0, %v2095
      %v2097 = vpop.f32.mrf.mxu0
      %v2098 = vpop.f32.mrf.mxu0
      %v2099 = vpop.f32.mrf.mxu0
      %2100 = vdwg.mxu0
      %v2101 = vpack.c.bf16 %v2096, %v2096
      %v2103 = vsel %vm836, %v2101, 0
      %2105 = vmatprep.subr.bf16.mxu0 0
      %2106 = vmatpush1.bf16.xpose.msra.mxu0 0
      %2107 = vmatprep.subr.bf16.mxu0 0
      %2108 = vmatpush1.bf16.xpose.msra.mxu0 0
      %2109 = vmatprep.subr.bf16.mxu0 0
      %2110 = vmatpush1.bf16.xpose.msra.mxu0 0
      %2111 = vmatprep.subr.bf16.mxu0 0
      %2112 = vmatpush1.bf16.xpose.msra.mxu0 0
      %2113 = vmatprep.subr.bf16.mxu0 0
      %2114 = vmatpush1.bf16.xpose.msra.mxu0 0
      %2115 = vmatprep.subr.bf16.mxu0 0
      %2116 = vmatpush1.bf16.xpose.msra.mxu0 0
      %2117 = vmatprep.subr.bf16.mxu0 0
      %2118 = vmatpush1.bf16.xpose.msra.mxu0 %v1469
      %2119 = vmatprep.subr.bf16.mxu0 0
      %2120 = vmatpush1.bf16.xpose.msra.mxu0 %v1466
      %2121 = vmatprep.subr.bf16.mxu0 0
      %2122 = vmatpush2.bf16.xpose.msra.mxu0 0
      %2123 = vmatprep.subr.bf16.mxu0 0
      %2124 = vmatpush2.bf16.xpose.msra.mxu0 0
      %2125 = vmatprep.subr.bf16.mxu0 0
      %2126 = vmatpush2.bf16.xpose.msra.mxu0 0
      %2127 = vmatprep.subr.bf16.mxu0 0
      %2128 = vmatpush2.bf16.xpose.msra.mxu0 0
      %2129 = vmatprep.subr.bf16.mxu0 0
      %2130 = vmatpush2.bf16.xpose.msra.mxu0 0
      %2131 = vmatprep.subr.bf16.mxu0 0
      %2132 = vmatpush2.bf16.xpose.msra.mxu0 0
      %2133 = vmatprep.subr.bf16.mxu0 0
      %2134 = vmatpush2.bf16.xpose.msra.mxu0 0
      %2135 = vmatprep.subr.bf16.mxu0 0
      %2136 = vmatpush2.bf16.xpose.msra.mxu0 0
      %2137 = vmatprep.mubr.bf16.mxu0 0
      %2138 = vmatmul.mubr.bf16.gmra.mxu0 %v2103
      %v2139 = vpop.f32.mrf.mxu0
      %v2140 = vadd.f32 0.0, %v2139
      %v2141 = vpop.f32.mrf.mxu0
      %v2142 = vpop.f32.mrf.mxu0
      %v2143 = vpop.f32.mrf.mxu0
      %2144 = vdwg.mxu0
      %v2145 = vadd.f32 %v1988, %v2140
      %v2146 = vadd.f32 %v655, %v1511
      %v2147 = vadd.f32 %v656, %v2145
      %v2148 = vld [vmem:[%s618] sm:$0x1]
      %v2150 = vlaneseq
      %v2151 = vshrl.u32 %v2150, 7
      %v2152 = vsub.s32 0, %v2151
      %v2153 = vrot.slane %v2148, %v2152
      %v2155 = vadd.f32 %v2146, %v2153
      %v2156 = vadd.f32 %v2147, %v2153
      %v2157 = vld [vmem:[%s622] sm:$0x3]
      %v2158 = vsel %vm660, %v2155, 0.0
      %2159 = vadd.xlane.f32.xlu0 %v2158
      %v2160 = vpop.xlane.xlu0 %2159
      %v2161 = vsel %vm660, %v2156, 0.0
      %2162 = vadd.xlane.f32.xlu0 %v2161
      %v2163 = vpop.xlane.xlu0 %2162
      %v2164 = vmul.f32 %v2160, %v667
      %v2165 = vmul.f32 %v2163, %v667
      %v2166 = vsub.f32 %v2155, %v2164
      %v2167 = vsub.f32 %v2156, %v2165
      %v2168 = vmul.f32 %v2166, %v2166
      %v2169 = vmul.f32 %v2167, %v2167
      %v2170 = vsel %vm660, %v2168, 0.0
      %2171 = vadd.xlane.f32.xlu0 %v2170
      %v2172 = vpop.xlane.xlu0 %2171
      %v2173 = vsel %vm660, %v2169, 0.0
      %2174 = vadd.xlane.f32.xlu0 %v2173
      %v2175 = vpop.xlane.xlu0 %2174
      %v2176 = vmul.f32 %v2172, 0.032258064
      %v2177 = vmul.f32 %v2175, 0.032258064
      %v2178 = vrsqrt.pop %v2176
      %v2179 = vmul.f32 %v2176, %v2178
      %vm2180 = vcmp.eq.f32.partialorder %v2176, inf
      %v2181 = vsel %vm2180, %v2176, %v2179
      %vm2182 = vcmp.eq.f32.partialorder %v2176, 0.0
      %v2183 = vand.u32 %v2176, 2147483648
      %v2184 = vsel %vm2182, %v2183, %v2181
      %v2185 = vrsqrt.pop %v2177
      %v2186 = vmul.f32 %v2177, %v2185
      %vm2187 = vcmp.eq.f32.partialorder %v2177, inf
      %v2188 = vsel %vm2187, %v2177, %v2186
      %vm2189 = vcmp.eq.f32.partialorder %v2177, 0.0
      %v2190 = vand.u32 %v2177, 2147483648
      %v2191 = vsel %vm2189, %v2190, %v2188
      %v2192 = vadd.f32 %v2184, 1e-06
      %v2193 = vadd.f32 %v2191, 1e-06
      %v2194 = vrcp.pop %v2192
      %v2195 = vrcp.pop %v2193
      %v2196 = vlaneseq
      %v2197 = vshrl.u32 %v2196, 7
      %v2198 = vsub.s32 0, %v2197
      %v2199 = vrot.slane %v2157, %v2198
      %v2200 = vmul.f32 %v2199, %v2166
      %v2201 = vmul.f32 %v2199, %v2167
      %v2202 = vmul.f32 %v2200, %v2194
      %v2203 = vmul.f32 %v2201, %v2195
      %v2204 = vlaneseq
      %v2205 = vshrl.u32 %v2204, 7
      %v2206 = vsub.s32 1, %v2205
      %v2207 = vrot.slane %v2157, %v2206
      %v2208 = vadd.f32 %v2202, %v2207
      %v2209 = vadd.f32 %v2203, %v2207
      %v2210 = vld [vmem:[%s627] sm:$0xf]
      %v2211 = vld [vmem:[%s627 + $0x4] sm:$0xf]
      %v2212 = vld [vmem:[%s627 + $0x8] sm:$0xf]
      %v2213 = vld [vmem:[%s627 + $0xc] sm:$0xf]
      %v2214 = vld [vmem:[%s627 + $0x10] sm:$0xf]
      %v2215 = vld [vmem:[%s627 + $0x14] sm:$0xf]
      %v2216 = vld [vmem:[%s627 + $0x18] sm:$0xf]
      %v2217 = vld [vmem:[%s627 + $0x1c] sm:$0xf]
      %v2218 = vld [vmem:[%s630] sm:$0x1]
      %v2219 = vpack.c.bf16 %v2209, %v2208
      %v2221 = vlaneseq
      %v2222 = vshrl.u32 %v2221, 7
      %v2223 = vsub.s32 0, %v2222
      %v2224 = vrot.slane %v2218, %v2223
      %v2234 = vunpack.c.l.b16 %v2210
      %v2235 = vunpack.c.l.b16 %v2211
      %v2236 = vunpack.c.l.b16 %v2212
      %v2237 = vunpack.c.l.b16 %v2213
      %v2238 = vunpack.c.l.b16 %v2214
      %v2239 = vunpack.c.l.b16 %v2215
      %v2240 = vunpack.c.l.b16 %v2216
      %v2241 = vunpack.c.l.b16 %v2217
      %v2242 = vpack.c.b16 %v2235, %v2234
      %v2243 = vpack.c.b16 %v2237, %v2236
      %v2244 = vpack.c.b16 %v2239, %v2238
      %v2245 = vpack.c.b16 %v2241, %v2240
      %v2247 = vsel %vm660, %v2219, 0
      %v2250 = vsel %vm660, %v2242, 0
      %v2253 = vsel %vm660, %v2243, 0
      %v2256 = vsel %vm660, %v2244, 0
      %v2259 = vsel %vm660, %v2245, 0
      %2261 = vmatprep.subr.bf16.mxu0 0
      %2262 = vmatpush1.bf16.xpose.msra.mxu0 0
      %2263 = vmatprep.subr.bf16.mxu0 0
      %2264 = vmatpush1.bf16.xpose.msra.mxu0 0
      %2265 = vmatprep.subr.bf16.mxu0 0
      %2266 = vmatpush1.bf16.xpose.msra.mxu0 0
      %2267 = vmatprep.subr.bf16.mxu0 0
      %2268 = vmatpush1.bf16.xpose.msra.mxu0 0
      %2269 = vmatprep.subr.bf16.mxu0 0
      %2270 = vmatpush1.bf16.xpose.msra.mxu0 %v2259
      %2271 = vmatprep.subr.bf16.mxu0 0
      %2272 = vmatpush1.bf16.xpose.msra.mxu0 %v2256
      %2273 = vmatprep.subr.bf16.mxu0 0
      %2274 = vmatpush1.bf16.xpose.msra.mxu0 %v2253
      %2275 = vmatprep.subr.bf16.mxu0 0
      %2276 = vmatpush1.bf16.xpose.msra.mxu0 %v2250
      %2277 = vmatprep.subr.bf16.mxu0 0
      %2278 = vmatpush2.bf16.xpose.msra.mxu0 0
      %2279 = vmatprep.subr.bf16.mxu0 0
      %2280 = vmatpush2.bf16.xpose.msra.mxu0 0
      %2281 = vmatprep.subr.bf16.mxu0 0
      %2282 = vmatpush2.bf16.xpose.msra.mxu0 0
      %2283 = vmatprep.subr.bf16.mxu0 0
      %2284 = vmatpush2.bf16.xpose.msra.mxu0 0
      %2285 = vmatprep.subr.bf16.mxu0 0
      %2286 = vmatpush2.bf16.xpose.msra.mxu0 0
      %2287 = vmatprep.subr.bf16.mxu0 0
      %2288 = vmatpush2.bf16.xpose.msra.mxu0 0
      %2289 = vmatprep.subr.bf16.mxu0 0
      %2290 = vmatpush2.bf16.xpose.msra.mxu0 0
      %2291 = vmatprep.subr.bf16.mxu0 0
      %2292 = vmatpush2.bf16.xpose.msra.mxu0 0
      %2293 = vmatprep.mubr.bf16.mxu0 0
      %2294 = vmatmul.mubr.bf16.gmra.mxu0 %v2247
      %v2295 = vpop.f32.mrf.mxu0
      %v2296 = vadd.f32 %v2224, %v2295
      %v2297 = vpop.f32.mrf.mxu0
      %v2298 = vpop.f32.mrf.mxu0
      %v2299 = vadd.f32 %v2224, %v2298
      %v2300 = vpop.f32.mrf.mxu0
      %2301 = vdwg.mxu0
      %v2302 = vmax.f32 %v2296, 0.0
      %v2303 = vmax.f32 %v2299, 0.0
      %v2304 = vld [vmem:[%s635] sm:$0xf]
      %v2305 = vld [vmem:[%s635 + $0x4] sm:$0xf]
      %v2306 = vld [vmem:[%s635 + $0x8] sm:$0xf]
      %v2307 = vld [vmem:[%s635 + $0xc] sm:$0xf]
      %v2308 = vld [vmem:[%s638] sm:$0x1]
      %v2309 = vpack.c.bf16 %v2303, %v2302
      %v2311 = vlaneseq
      %v2312 = vshrl.u32 %v2311, 7
      %v2313 = vsub.s32 0, %v2312
      %v2314 = vrot.slane %v2308, %v2313
      %v2320 = vunpack.c.l.b16 %v2304
      %v2321 = vunpack.c.l.b16 %v2305
      %v2322 = vunpack.c.l.b16 %v2306
      %v2323 = vunpack.c.l.b16 %v2307
      %v2324 = vpack.c.b16 %v2321, %v2320
      %v2325 = vpack.c.b16 %v2323, %v2322
      %vm2326 = vcmask 523264
      %v2328 = vsel %vm2326, %v2309, 0
      %v2331 = vsel %vm2326, %v2324, 0
      %v2334 = vsel %vm2326, %v2325, 0
      %2336 = vmatprep.subr.bf16.mxu0 0
      %2337 = vmatpush1.bf16.xpose.msra.mxu0 0
      %2338 = vmatprep.subr.bf16.mxu0 0
      %2339 = vmatpush1.bf16.xpose.msra.mxu0 0
      %2340 = vmatprep.subr.bf16.mxu0 0
      %2341 = vmatpush1.bf16.xpose.msra.mxu0 0
      %2342 = vmatprep.subr.bf16.mxu0 0
      %2343 = vmatpush1.bf16.xpose.msra.mxu0 0
      %2344 = vmatprep.subr.bf16.mxu0 0
      %2345 = vmatpush1.bf16.xpose.msra.mxu0 0
      %2346 = vmatprep.subr.bf16.mxu0 0
      %2347 = vmatpush1.bf16.xpose.msra.mxu0 0
      %2348 = vmatprep.subr.bf16.mxu0 0
      %2349 = vmatpush1.bf16.xpose.msra.mxu0 %v2334
      %2350 = vmatprep.subr.bf16.mxu0 0
      %2351 = vmatpush1.bf16.xpose.msra.mxu0 %v2331
      %2352 = vmatprep.subr.bf16.mxu0 0
      %2353 = vmatpush2.bf16.xpose.msra.mxu0 0
      %2354 = vmatprep.subr.bf16.mxu0 0
      %2355 = vmatpush2.bf16.xpose.msra.mxu0 0
      %2356 = vmatprep.subr.bf16.mxu0 0
      %2357 = vmatpush2.bf16.xpose.msra.mxu0 0
      %2358 = vmatprep.subr.bf16.mxu0 0
      %2359 = vmatpush2.bf16.xpose.msra.mxu0 0
      %2360 = vmatprep.subr.bf16.mxu0 0
      %2361 = vmatpush2.bf16.xpose.msra.mxu0 0
      %2362 = vmatprep.subr.bf16.mxu0 0
      %2363 = vmatpush2.bf16.xpose.msra.mxu0 0
      %2364 = vmatprep.subr.bf16.mxu0 0
      %2365 = vmatpush2.bf16.xpose.msra.mxu0 0
      %2366 = vmatprep.subr.bf16.mxu0 0
      %2367 = vmatpush2.bf16.xpose.msra.mxu0 0
      %2368 = vmatprep.mubr.bf16.mxu0 0
      %2369 = vmatmul.mubr.bf16.gmra.mxu0 %v2328
      %v2370 = vpop.f32.mrf.mxu0
      %v2371 = vadd.f32 %v2314, %v2370
      %v2372 = vpop.f32.mrf.mxu0
      %v2373 = vpop.f32.mrf.mxu0
      %v2374 = vadd.f32 %v2314, %v2373
      %v2375 = vpop.f32.mrf.mxu0
      %2376 = vdwg.mxu0
      %v2377 = vadd.f32 %v2155, %v2371
      %v2378 = vadd.f32 %v2156, %v2374
      %2379 = vst.msk [vmem:[#allocation2] sm:$0xff] %vm660, %v2377
      %2380 = vst.msk [vmem:[#allocation2 + $0x8] sm:$0xff] %vm660, %v2378
      %p2381 = scmp.eq.s32.totalorder %s29, 1
      // Predicated region
      $region77: #{transformer_forward.3} parent=71 // pred_check
        %p2382 = pneg %p2381
      $region78: #{transformer_forward.3} parent=71 // pred_check_branch
        %2384 = sbr.rel (%p2382) target = $region80
      $region79: #{transformer_forward.3} parent=71 // pred_region
        %v2385 = vld [vmem:[%s12] sm:$0x3]
        %v2386 = vsel %vm660, %v2377, 0.0
        %2387 = vadd.xlane.f32.xlu0 %v2386
        %v2388 = vpop.xlane.xlu0 %2387
        %v2389 = vsel %vm660, %v2378, 0.0
        %2390 = vadd.xlane.f32.xlu0 %v2389
        %v2391 = vpop.xlane.xlu0 %2390
        %v2392 = vmul.f32 %v2388, %v667
        %v2393 = vmul.f32 %v2391, %v667
        %v2394 = vsub.f32 %v2377, %v2392
        %v2395 = vsub.f32 %v2378, %v2393
        %v2396 = vmul.f32 %v2394, %v2394
        %v2397 = vmul.f32 %v2395, %v2395
        %v2398 = vsel %vm660, %v2396, 0.0
        %2399 = vadd.xlane.f32.xlu0 %v2398
        %v2400 = vpop.xlane.xlu0 %2399
        %v2401 = vsel %vm660, %v2397, 0.0
        %2402 = vadd.xlane.f32.xlu0 %v2401
        %v2403 = vpop.xlane.xlu0 %2402
        %v2404 = vmul.f32 %v2400, 0.032258064
        %v2405 = vmul.f32 %v2403, 0.032258064
        %v2406 = vrsqrt.pop %v2404
        %v2407 = vmul.f32 %v2404, %v2406
        %vm2408 = vcmp.eq.f32.partialorder %v2404, inf
        %v2409 = vsel %vm2408, %v2404, %v2407
        %vm2410 = vcmp.eq.f32.partialorder %v2404, 0.0
        %v2411 = vand.u32 %v2404, 2147483648
        %v2412 = vsel %vm2410, %v2411, %v2409
        %v2413 = vrsqrt.pop %v2405
        %v2414 = vmul.f32 %v2405, %v2413
        %vm2415 = vcmp.eq.f32.partialorder %v2405, inf
        %v2416 = vsel %vm2415, %v2405, %v2414
        %vm2417 = vcmp.eq.f32.partialorder %v2405, 0.0
        %v2418 = vand.u32 %v2405, 2147483648
        %v2419 = vsel %vm2417, %v2418, %v2416
        %v2420 = vadd.f32 %v2412, 1e-06
        %v2421 = vadd.f32 %v2419, 1e-06
        %v2422 = vrcp.pop %v2420
        %v2423 = vrcp.pop %v2421
        %v2424 = vlaneseq
        %v2425 = vshrl.u32 %v2424, 7
        %v2426 = vsub.s32 0, %v2425
        %v2427 = vrot.slane %v2385, %v2426
        %v2428 = vmul.f32 %v2427, %v2394
        %v2429 = vmul.f32 %v2427, %v2395
        %v2430 = vmul.f32 %v2428, %v2422
        %v2431 = vmul.f32 %v2429, %v2423
        %v2432 = vlaneseq
        %v2433 = vshrl.u32 %v2432, 7
        %v2434 = vsub.s32 1, %v2433
        %v2435 = vrot.slane %v2385, %v2434
        %v2436 = vadd.f32 %v2430, %v2435
        %v2437 = vadd.f32 %v2431, %v2435
        %2438 = vst.msk [vmem:[%s643] sm:$0xff] %vm660, %v2436
        %2439 = vst.msk [vmem:[%s643 + $0x8] sm:$0xff] %vm660, %v2437
      $region80: #{transformer_forward.3} parent=71 // pred_fallthru
        _
      %s2440 = smul.u32 2, %s28
      %p2441 = scmp.lt.s32.totalorder %s2440, 1
      %s2442 = scalar_select %p2441, %s2440, 1
      %s2443 = smul.addr %s2442, 8
      %s2444 = scalar_lea.vmem %s13, %s2443
      // Predicated region
      $region81: #{transformer_forward.3} parent=71 // pred_check
        %p2445 = pneg %p387
      $region82: #{transformer_forward.3} parent=71 // pred_check_branch
        %2447 = sbr.rel (%p2445) target = $region84
      $region83: #{transformer_forward.3} parent=71 // pred_region
        %s2448 = smul.u32 2, %s28
      $region84: #{transformer_forward.3} parent=71 // pred_fallthru
        _
      // Predicated region
      $region85: #{transformer_forward.3} parent=71 // pred_check
        %p2449 = pneg %p387
      $region86: #{transformer_forward.3} parent=71 // pred_check_branch
        %2451 = sbr.rel (%p2449) target = $region88
      $region87: #{transformer_forward.3} parent=71 // pred_region
        %s2452 = smul.u32 2, %s28
        %p2453 = scmp.lt.s32.totalorder %s2452, 1
        %s2454 = scalar_select %p2453, %s2452, 1
        %s2455 = smul.addr %s2454, 8
        %s2456 = scalar_lea.vmem %s13, %s2455
      $region88: #{transformer_forward.3} parent=71 // pred_fallthru
        _
    $region72: #{transformer_forward.3} parent=5 // pred_fallthru
      _
    %p2457 = scmp.le.s32.totalorder 2, %s19
    // Predicated region
    $region89: #{transformer_forward.3} parent=5 // pred_check
      %p2458 = pneg %p2457
    $region90: #{transformer_forward.3} parent=5 // pred_check_branch
      %2460 = sbr.rel (%p2458) target = $region92
    $region91: #{transformer_forward.3} parent=5 // pred_region
      %s2461 = ssub.s32 %s19, 2
    $region92: #{transformer_forward.3} parent=5 // pred_fallthru
      _
  $region6: #{transformer_forward.3} parent=0 // loop_footer
    %s23 = sadd.s32 1, %s19
  $region7: #{transformer_forward.3} parent=0 // loop_footer_branch
    %18 = sbr.rel target = $region3
  $region8: #{transformer_forward.3} parent=0 // loop_exit
    _

// kernel: transformer_forward.4
$region0: #{transformer_forward.4}
  #allocation0 [shape = 'u32[]', space=smem, size = 0x4, offset = 0x4, fixed_abs, tag = 'smem constant byte address 0x4 - core index']
  #allocation1 [shape = 'u32[144,128]{1,0:T(1,128)}', space=vmem, size = 0x12000, scoped, tag = 'internal scratch']
  #allocation2 [shape = 'f32[16,32]{1,0:T(8,128)}', space=vmem, size = 0x2000, scoped, tag = 'scratch operand']
  %s0 = inlined_call_operand.vmem [shape: f32[2,8,32], index: 0, kind: input, shape index: {}]
  %s1 = inlined_call_operand.vmem [shape: f32[2,8,32], index: 1, kind: input, shape index: {}]
  %s2 = inlined_call_operand.vmem [shape: f32[2,1,8], index: 2, kind: input, shape index: {}]
  %s3 = inlined_call_operand.vmem [shape: f32[2,8,8], index: 3, kind: input, shape index: {}]
  %s4 = inlined_call_operand.vmem [shape: f32[2,2,32], index: 4, kind: input, shape index: {}]
  %s5 = inlined_call_operand.vmem [shape: bf16[2,96,32], index: 5, kind: input, shape index: {}]
  %s6 = inlined_call_operand.vmem [shape: f32[2,1,96], index: 6, kind: input, shape index: {}]
  %s7 = inlined_call_operand.vmem [shape: bf16[2,32,32], index: 7, kind: input, shape index: {}]
  %s8 = inlined_call_operand.vmem [shape: f32[2,1,32], index: 8, kind: input, shape index: {}]
  %s9 = inlined_call_operand.vmem [shape: f32[2,2,32], index: 9, kind: input, shape index: {}]
  %s10 = inlined_call_operand.vmem [shape: bf16[2,32,32], index: 10, kind: input, shape index: {}]
  %s11 = inlined_call_operand.vmem [shape: f32[2,1,32], index: 11, kind: input, shape index: {}]
  %s12 = inlined_call_operand.vmem [shape: bf16[2,64,32], index: 12, kind: input, shape index: {}]
  %s13 = inlined_call_operand.vmem [shape: f32[2,1,64], index: 13, kind: input, shape index: {}]
  %s14 = inlined_call_operand.vmem [shape: bf16[2,32,32], index: 14, kind: input, shape index: {}]
  %s15 = inlined_call_operand.vmem [shape: f32[2,1,32], index: 15, kind: input, shape index: {}]
  %s16 = inlined_call_operand.vmem [shape: f32[2,2,32], index: 16, kind: input, shape index: {}]
  %s17 = inlined_call_operand.vmem [shape: bf16[2,64,32], index: 17, kind: input, shape index: {}]
  %s18 = inlined_call_operand.vmem [shape: f32[2,1,64], index: 18, kind: input, shape index: {}]
  %s19 = inlined_call_operand.vmem [shape: bf16[2,32,64], index: 19, kind: input, shape index: {}]
  %s20 = inlined_call_operand.vmem [shape: f32[2,1,32], index: 20, kind: input, shape index: {}]
  %s21 = inlined_call_operand.vmem [shape: f32[2,32], index: 21, kind: input, shape index: {}]
  %s22 = inlined_call_operand.vmem [shape: f32[2,8,32], index: 22, kind: output, shape index: {}]
  %s23 = sld [smem:[#allocation0]]
  $region129: #{transformer_forward.4} parent=0
    _
  %s25 = ssub.s32 1, %s23
  %s26 = scalar_select 0, %s25, %s23
  loop: start=0, step=1, limit=4
  $region2: #{transformer_forward.4} parent=0 // loop_pre_header
    _
  $region3: #{transformer_forward.4} parent=0 // loop_header
    %s28 = sphi 0, %s32
    %p29 = scmp.ge.s32.totalorder %s28, 4
    %s35 = sphi 0, %s47
    %s36 = sphi 0, %s43
    %s37 = sphi 0, %s35
    %s38 = sphi 0, %s36
    %s39 = sphi 0, %s37
    %s40 = sphi 0, %s38
    %s50 = sphi 0, %s52
    %s53 = sphi 0, %s50
    %s54 = sphi 0, %s53
    %s70 = sphi 0, %s54
    %s76 = sphi 0, %s78
    %s79 = sphi 0, %s76
    %s80 = sphi 0, %s79
    %s96 = sphi 0, %s80
    %s102 = sphi 0, %s104
    %s105 = sphi 0, %s102
    %s106 = sphi 0, %s105
    %s122 = sphi 0, %s106
    %s128 = sphi 0, %s130
    %s131 = sphi 0, %s128
    %s132 = sphi 0, %s131
    %s148 = sphi 0, %s132
    %s154 = sphi 0, %s156
    %s157 = sphi 0, %s154
    %s158 = sphi 0, %s157
    %s174 = sphi 0, %s158
    %s180 = sphi 0, %s182
    %s183 = sphi 0, %s180
    %s184 = sphi 0, %s183
    %s200 = sphi 0, %s184
    %s206 = sphi 0, %s208
    %s209 = sphi 0, %s206
    %s210 = sphi 0, %s209
    %s226 = sphi 0, %s210
    %s232 = sphi 0, %s234
    %s235 = sphi 0, %s232
    %s236 = sphi 0, %s235
    %s252 = sphi 0, %s236
    %s258 = sphi 0, %s260
    %s261 = sphi 0, %s258
    %s262 = sphi 0, %s261
    %s278 = sphi 0, %s262
    %s284 = sphi 0, %s286
    %s287 = sphi 0, %s284
    %s288 = sphi 0, %s287
    %s304 = sphi 0, %s288
    %s310 = sphi 0, %s312
    %s313 = sphi 0, %s310
    %s314 = sphi 0, %s313
    %s330 = sphi 0, %s314
    %s336 = sphi 0, %s338
    %s339 = sphi 0, %s336
    %s340 = sphi 0, %s339
    %s356 = sphi 0, %s340
    %s362 = sphi 0, %s364
    %s365 = sphi 0, %s362
    %s366 = sphi 0, %s365
    %s382 = sphi 0, %s366
    %s388 = sphi 0, %s390
    %s391 = sphi 0, %s388
    %s392 = sphi 0, %s391
    %s408 = sphi 0, %s392
    %s414 = sphi 0, %s416
    %s417 = sphi 0, %s414
    %s418 = sphi 0, %s417
    %s434 = sphi 0, %s418
    %s440 = sphi 0, %s442
    %s443 = sphi 0, %s440
    %s444 = sphi 0, %s443
    %s460 = sphi 0, %s444
    %s466 = sphi 0, %s468
    %s469 = sphi 0, %s466
    %s470 = sphi 0, %s469
    %s486 = sphi 0, %s470
    %s492 = sphi 0, %s494
    %s495 = sphi 0, %s492
    %s496 = sphi 0, %s495
    %s512 = sphi 0, %s496
    %s518 = sphi 0, %s520
    %s521 = sphi 0, %s518
    %s522 = sphi 0, %s521
    %s538 = sphi 0, %s522
    %s544 = sphi 0, %s546
    %s547 = sphi 0, %s544
    %s548 = sphi 0, %s547
    %s564 = sphi 0, %s548
    %s570 = sphi 0, %s572
    %s573 = sphi 0, %s570
    %s574 = sphi 0, %s573
    %s590 = sphi 0, %s574
    %s594 = sphi 0, %s594
    %s596 = sphi 0, %s594
    %s597 = sphi 0, %s596
    %s611 = sphi 0, %s597
    %s617 = sphi 0, %s619
    %s620 = sphi 0, %s617
    %s621 = sphi 0, %s620
    %s637 = sphi 0, %s621
  $region4: #{transformer_forward.4} parent=0 // loop_header_branch
    %31 = sbr.rel (%p29) target = $region8
  $region5: #{transformer_forward.4} parent=0 // loop_body
    %s33 = ssub.s32 %s28, 1
    %s34 = ssub.s32 %s28, 2
    %s41 = sadd.s32 1, %s36
    %p42 = scmp.ge.s32.totalorder %s41, 2
    %s43 = scalar_select %p42, 0, %s41
    %s44 = sadd.s32 1, %s35
    %s45 = scalar_select %p42, %s44, %s35
    %p46 = scmp.ge.s32.totalorder %s45, 1
    %s47 = scalar_select %p46, 0, %s45
    %s48 = ssub.s32 %s35, %s47
    %p49 = scmp.eq.s32.totalorder %s48, 0
    %s51 = sadd.s32 %s50, 1
    %s52 = scalar_select %p49, %s50, %s51
    %p55 = pneg %p49
    %p56 = scmp.eq.s32.totalorder %s28, 1
    %p57 = por %p55, %p56
    %p58 = scmp.ne.s32.totalorder %s50, %s53
    %p59 = scmp.eq.s32.totalorder %s28, 0
    %p60 = por %p58, %p59
    %p61 = scmp.ne.s32.totalorder %s50, %s53
    %p62 = scmp.eq.s32.totalorder %s33, 1
    %p63 = por %p61, %p62
    %p64 = scmp.ne.s32.totalorder %s53, %s54
    %p65 = scmp.eq.s32.totalorder %s33, 0
    %p66 = por %p64, %p65
    %p67 = scmp.ne.s32.totalorder %s53, %s54
    %p68 = scmp.eq.s32.totalorder %s34, 1
    %p69 = por %p67, %p68
    %p71 = scmp.ne.s32.totalorder %s54, %s70
    %p72 = scmp.eq.s32.totalorder %s34, 0
    %p73 = por %p71, %p72
    %s74 = ssub.s32 %s35, %s47
    %p75 = scmp.eq.s32.totalorder %s74, 0
    %s77 = sadd.s32 %s76, 1
    %s78 = scalar_select %p75, %s76, %s77
    %p81 = pneg %p75
    %p82 = scmp.eq.s32.totalorder %s28, 1
    %p83 = por %p81, %p82
    %p84 = scmp.ne.s32.totalorder %s76, %s79
    %p85 = scmp.eq.s32.totalorder %s28, 0
    %p86 = por %p84, %p85
    %p87 = scmp.ne.s32.totalorder %s76, %s79
    %p88 = scmp.eq.s32.totalorder %s33, 1
    %p89 = por %p87, %p88
    %p90 = scmp.ne.s32.totalorder %s79, %s80
    %p91 = scmp.eq.s32.totalorder %s33, 0
    %p92 = por %p90, %p91
    %p93 = scmp.ne.s32.totalorder %s79, %s80
    %p94 = scmp.eq.s32.totalorder %s34, 1
    %p95 = por %p93, %p94
    %p97 = scmp.ne.s32.totalorder %s80, %s96
    %p98 = scmp.eq.s32.totalorder %s34, 0
    %p99 = por %p97, %p98
    %s100 = ssub.s32 %s35, %s47
    %p101 = scmp.eq.s32.totalorder %s100, 0
    %s103 = sadd.s32 %s102, 1
    %s104 = scalar_select %p101, %s102, %s103
    %p107 = pneg %p101
    %p108 = scmp.eq.s32.totalorder %s28, 1
    %p109 = por %p107, %p108
    %p110 = scmp.ne.s32.totalorder %s102, %s105
    %p111 = scmp.eq.s32.totalorder %s28, 0
    %p112 = por %p110, %p111
    %p113 = scmp.ne.s32.totalorder %s102, %s105
    %p114 = scmp.eq.s32.totalorder %s33, 1
    %p115 = por %p113, %p114
    %p116 = scmp.ne.s32.totalorder %s105, %s106
    %p117 = scmp.eq.s32.totalorder %s33, 0
    %p118 = por %p116, %p117
    %p119 = scmp.ne.s32.totalorder %s105, %s106
    %p120 = scmp.eq.s32.totalorder %s34, 1
    %p121 = por %p119, %p120
    %p123 = scmp.ne.s32.totalorder %s106, %s122
    %p124 = scmp.eq.s32.totalorder %s34, 0
    %p125 = por %p123, %p124
    %s126 = ssub.s32 %s35, %s47
    %p127 = scmp.eq.s32.totalorder %s126, 0
    %s129 = sadd.s32 %s128, 1
    %s130 = scalar_select %p127, %s128, %s129
    %p133 = pneg %p127
    %p134 = scmp.eq.s32.totalorder %s28, 1
    %p135 = por %p133, %p134
    %p136 = scmp.ne.s32.totalorder %s128, %s131
    %p137 = scmp.eq.s32.totalorder %s28, 0
    %p138 = por %p136, %p137
    %p139 = scmp.ne.s32.totalorder %s128, %s131
    %p140 = scmp.eq.s32.totalorder %s33, 1
    %p141 = por %p139, %p140
    %p142 = scmp.ne.s32.totalorder %s131, %s132
    %p143 = scmp.eq.s32.totalorder %s33, 0
    %p144 = por %p142, %p143
    %p145 = scmp.ne.s32.totalorder %s131, %s132
    %p146 = scmp.eq.s32.totalorder %s34, 1
    %p147 = por %p145, %p146
    %p149 = scmp.ne.s32.totalorder %s132, %s148
    %p150 = scmp.eq.s32.totalorder %s34, 0
    %p151 = por %p149, %p150
    %s152 = ssub.s32 %s36, %s43
    %p153 = scmp.eq.s32.totalorder %s152, 0
    %s155 = sadd.s32 %s154, 1
    %s156 = scalar_select %p153, %s154, %s155
    %p159 = pneg %p153
    %p160 = scmp.eq.s32.totalorder %s28, 1
    %p161 = por %p159, %p160
    %p162 = scmp.ne.s32.totalorder %s154, %s157
    %p163 = scmp.eq.s32.totalorder %s28, 0
    %p164 = por %p162, %p163
    %p165 = scmp.ne.s32.totalorder %s154, %s157
    %p166 = scmp.eq.s32.totalorder %s33, 1
    %p167 = por %p165, %p166
    %p168 = scmp.ne.s32.totalorder %s157, %s158
    %p169 = scmp.eq.s32.totalorder %s33, 0
    %p170 = por %p168, %p169
    %p171 = scmp.ne.s32.totalorder %s157, %s158
    %p172 = scmp.eq.s32.totalorder %s34, 1
    %p173 = por %p171, %p172
    %p175 = scmp.ne.s32.totalorder %s158, %s174
    %p176 = scmp.eq.s32.totalorder %s34, 0
    %p177 = por %p175, %p176
    %s178 = ssub.s32 %s36, %s43
    %p179 = scmp.eq.s32.totalorder %s178, 0
    %s181 = sadd.s32 %s180, 1
    %s182 = scalar_select %p179, %s180, %s181
    %p185 = pneg %p179
    %p186 = scmp.eq.s32.totalorder %s28, 1
    %p187 = por %p185, %p186
    %p188 = scmp.ne.s32.totalorder %s180, %s183
    %p189 = scmp.eq.s32.totalorder %s28, 0
    %p190 = por %p188, %p189
    %p191 = scmp.ne.s32.totalorder %s180, %s183
    %p192 = scmp.eq.s32.totalorder %s33, 1
    %p193 = por %p191, %p192
    %p194 = scmp.ne.s32.totalorder %s183, %s184
    %p195 = scmp.eq.s32.totalorder %s33, 0
    %p196 = por %p194, %p195
    %p197 = scmp.ne.s32.totalorder %s183, %s184
    %p198 = scmp.eq.s32.totalorder %s34, 1
    %p199 = por %p197, %p198
    %p201 = scmp.ne.s32.totalorder %s184, %s200
    %p202 = scmp.eq.s32.totalorder %s34, 0
    %p203 = por %p201, %p202
    %s204 = ssub.s32 %s36, %s43
    %p205 = scmp.eq.s32.totalorder %s204, 0
    %s207 = sadd.s32 %s206, 1
    %s208 = scalar_select %p205, %s206, %s207
    %p211 = pneg %p205
    %p212 = scmp.eq.s32.totalorder %s28, 1
    %p213 = por %p211, %p212
    %p214 = scmp.ne.s32.totalorder %s206, %s209
    %p215 = scmp.eq.s32.totalorder %s28, 0
    %p216 = por %p214, %p215
    %p217 = scmp.ne.s32.totalorder %s206, %s209
    %p218 = scmp.eq.s32.totalorder %s33, 1
    %p219 = por %p217, %p218
    %p220 = scmp.ne.s32.totalorder %s209, %s210
    %p221 = scmp.eq.s32.totalorder %s33, 0
    %p222 = por %p220, %p221
    %p223 = scmp.ne.s32.totalorder %s209, %s210
    %p224 = scmp.eq.s32.totalorder %s34, 1
    %p225 = por %p223, %p224
    %p227 = scmp.ne.s32.totalorder %s210, %s226
    %p228 = scmp.eq.s32.totalorder %s34, 0
    %p229 = por %p227, %p228
    %s230 = ssub.s32 %s36, %s43
    %p231 = scmp.eq.s32.totalorder %s230, 0
    %s233 = sadd.s32 %s232, 1
    %s234 = scalar_select %p231, %s232, %s233
    %p237 = pneg %p231
    %p238 = scmp.eq.s32.totalorder %s28, 1
    %p239 = por %p237, %p238
    %p240 = scmp.ne.s32.totalorder %s232, %s235
    %p241 = scmp.eq.s32.totalorder %s28, 0
    %p242 = por %p240, %p241
    %p243 = scmp.ne.s32.totalorder %s232, %s235
    %p244 = scmp.eq.s32.totalorder %s33, 1
    %p245 = por %p243, %p244
    %p246 = scmp.ne.s32.totalorder %s235, %s236
    %p247 = scmp.eq.s32.totalorder %s33, 0
    %p248 = por %p246, %p247
    %p249 = scmp.ne.s32.totalorder %s235, %s236
    %p250 = scmp.eq.s32.totalorder %s34, 1
    %p251 = por %p249, %p250
    %p253 = scmp.ne.s32.totalorder %s236, %s252
    %p254 = scmp.eq.s32.totalorder %s34, 0
    %p255 = por %p253, %p254
    %s256 = ssub.s32 %s36, %s43
    %p257 = scmp.eq.s32.totalorder %s256, 0
    %s259 = sadd.s32 %s258, 1
    %s260 = scalar_select %p257, %s258, %s259
    %p263 = pneg %p257
    %p264 = scmp.eq.s32.totalorder %s28, 1
    %p265 = por %p263, %p264
    %p266 = scmp.ne.s32.totalorder %s258, %s261
    %p267 = scmp.eq.s32.totalorder %s28, 0
    %p268 = por %p266, %p267
    %p269 = scmp.ne.s32.totalorder %s258, %s261
    %p270 = scmp.eq.s32.totalorder %s33, 1
    %p271 = por %p269, %p270
    %p272 = scmp.ne.s32.totalorder %s261, %s262
    %p273 = scmp.eq.s32.totalorder %s33, 0
    %p274 = por %p272, %p273
    %p275 = scmp.ne.s32.totalorder %s261, %s262
    %p276 = scmp.eq.s32.totalorder %s34, 1
    %p277 = por %p275, %p276
    %p279 = scmp.ne.s32.totalorder %s262, %s278
    %p280 = scmp.eq.s32.totalorder %s34, 0
    %p281 = por %p279, %p280
    %s282 = ssub.s32 %s36, %s43
    %p283 = scmp.eq.s32.totalorder %s282, 0
    %s285 = sadd.s32 %s284, 1
    %s286 = scalar_select %p283, %s284, %s285
    %p289 = pneg %p283
    %p290 = scmp.eq.s32.totalorder %s28, 1
    %p291 = por %p289, %p290
    %p292 = scmp.ne.s32.totalorder %s284, %s287
    %p293 = scmp.eq.s32.totalorder %s28, 0
    %p294 = por %p292, %p293
    %p295 = scmp.ne.s32.totalorder %s284, %s287
    %p296 = scmp.eq.s32.totalorder %s33, 1
    %p297 = por %p295, %p296
    %p298 = scmp.ne.s32.totalorder %s287, %s288
    %p299 = scmp.eq.s32.totalorder %s33, 0
    %p300 = por %p298, %p299
    %p301 = scmp.ne.s32.totalorder %s287, %s288
    %p302 = scmp.eq.s32.totalorder %s34, 1
    %p303 = por %p301, %p302
    %p305 = scmp.ne.s32.totalorder %s288, %s304
    %p306 = scmp.eq.s32.totalorder %s34, 0
    %p307 = por %p305, %p306
    %s308 = ssub.s32 %s36, %s43
    %p309 = scmp.eq.s32.totalorder %s308, 0
    %s311 = sadd.s32 %s310, 1
    %s312 = scalar_select %p309, %s310, %s311
    %p315 = pneg %p309
    %p316 = scmp.eq.s32.totalorder %s28, 1
    %p317 = por %p315, %p316
    %p318 = scmp.ne.s32.totalorder %s310, %s313
    %p319 = scmp.eq.s32.totalorder %s28, 0
    %p320 = por %p318, %p319
    %p321 = scmp.ne.s32.totalorder %s310, %s313
    %p322 = scmp.eq.s32.totalorder %s33, 1
    %p323 = por %p321, %p322
    %p324 = scmp.ne.s32.totalorder %s313, %s314
    %p325 = scmp.eq.s32.totalorder %s33, 0
    %p326 = por %p324, %p325
    %p327 = scmp.ne.s32.totalorder %s313, %s314
    %p328 = scmp.eq.s32.totalorder %s34, 1
    %p329 = por %p327, %p328
    %p331 = scmp.ne.s32.totalorder %s314, %s330
    %p332 = scmp.eq.s32.totalorder %s34, 0
    %p333 = por %p331, %p332
    %s334 = ssub.s32 %s36, %s43
    %p335 = scmp.eq.s32.totalorder %s334, 0
    %s337 = sadd.s32 %s336, 1
    %s338 = scalar_select %p335, %s336, %s337
    %p341 = pneg %p335
    %p342 = scmp.eq.s32.totalorder %s28, 1
    %p343 = por %p341, %p342
    %p344 = scmp.ne.s32.totalorder %s336, %s339
    %p345 = scmp.eq.s32.totalorder %s28, 0
    %p346 = por %p344, %p345
    %p347 = scmp.ne.s32.totalorder %s336, %s339
    %p348 = scmp.eq.s32.totalorder %s33, 1
    %p349 = por %p347, %p348
    %p350 = scmp.ne.s32.totalorder %s339, %s340
    %p351 = scmp.eq.s32.totalorder %s33, 0
    %p352 = por %p350, %p351
    %p353 = scmp.ne.s32.totalorder %s339, %s340
    %p354 = scmp.eq.s32.totalorder %s34, 1
    %p355 = por %p353, %p354
    %p357 = scmp.ne.s32.totalorder %s340, %s356
    %p358 = scmp.eq.s32.totalorder %s34, 0
    %p359 = por %p357, %p358
    %s360 = ssub.s32 %s36, %s43
    %p361 = scmp.eq.s32.totalorder %s360, 0
    %s363 = sadd.s32 %s362, 1
    %s364 = scalar_select %p361, %s362, %s363
    %p367 = pneg %p361
    %p368 = scmp.eq.s32.totalorder %s28, 1
    %p369 = por %p367, %p368
    %p370 = scmp.ne.s32.totalorder %s362, %s365
    %p371 = scmp.eq.s32.totalorder %s28, 0
    %p372 = por %p370, %p371
    %p373 = scmp.ne.s32.totalorder %s362, %s365
    %p374 = scmp.eq.s32.totalorder %s33, 1
    %p375 = por %p373, %p374
    %p376 = scmp.ne.s32.totalorder %s365, %s366
    %p377 = scmp.eq.s32.totalorder %s33, 0
    %p378 = por %p376, %p377
    %p379 = scmp.ne.s32.totalorder %s365, %s366
    %p380 = scmp.eq.s32.totalorder %s34, 1
    %p381 = por %p379, %p380
    %p383 = scmp.ne.s32.totalorder %s366, %s382
    %p384 = scmp.eq.s32.totalorder %s34, 0
    %p385 = por %p383, %p384
    %s386 = ssub.s32 %s36, %s43
    %p387 = scmp.eq.s32.totalorder %s386, 0
    %s389 = sadd.s32 %s388, 1
    %s390 = scalar_select %p387, %s388, %s389
    %p393 = pneg %p387
    %p394 = scmp.eq.s32.totalorder %s28, 1
    %p395 = por %p393, %p394
    %p396 = scmp.ne.s32.totalorder %s388, %s391
    %p397 = scmp.eq.s32.totalorder %s28, 0
    %p398 = por %p396, %p397
    %p399 = scmp.ne.s32.totalorder %s388, %s391
    %p400 = scmp.eq.s32.totalorder %s33, 1
    %p401 = por %p399, %p400
    %p402 = scmp.ne.s32.totalorder %s391, %s392
    %p403 = scmp.eq.s32.totalorder %s33, 0
    %p404 = por %p402, %p403
    %p405 = scmp.ne.s32.totalorder %s391, %s392
    %p406 = scmp.eq.s32.totalorder %s34, 1
    %p407 = por %p405, %p406
    %p409 = scmp.ne.s32.totalorder %s392, %s408
    %p410 = scmp.eq.s32.totalorder %s34, 0
    %p411 = por %p409, %p410
    %s412 = ssub.s32 %s36, %s43
    %p413 = scmp.eq.s32.totalorder %s412, 0
    %s415 = sadd.s32 %s414, 1
    %s416 = scalar_select %p413, %s414, %s415
    %p419 = pneg %p413
    %p420 = scmp.eq.s32.totalorder %s28, 1
    %p421 = por %p419, %p420
    %p422 = scmp.ne.s32.totalorder %s414, %s417
    %p423 = scmp.eq.s32.totalorder %s28, 0
    %p424 = por %p422, %p423
    %p425 = scmp.ne.s32.totalorder %s414, %s417
    %p426 = scmp.eq.s32.totalorder %s33, 1
    %p427 = por %p425, %p426
    %p428 = scmp.ne.s32.totalorder %s417, %s418
    %p429 = scmp.eq.s32.totalorder %s33, 0
    %p430 = por %p428, %p429
    %p431 = scmp.ne.s32.totalorder %s417, %s418
    %p432 = scmp.eq.s32.totalorder %s34, 1
    %p433 = por %p431, %p432
    %p435 = scmp.ne.s32.totalorder %s418, %s434
    %p436 = scmp.eq.s32.totalorder %s34, 0
    %p437 = por %p435, %p436
    %s438 = ssub.s32 %s36, %s43
    %p439 = scmp.eq.s32.totalorder %s438, 0
    %s441 = sadd.s32 %s440, 1
    %s442 = scalar_select %p439, %s440, %s441
    %p445 = pneg %p439
    %p446 = scmp.eq.s32.totalorder %s28, 1
    %p447 = por %p445, %p446
    %p448 = scmp.ne.s32.totalorder %s440, %s443
    %p449 = scmp.eq.s32.totalorder %s28, 0
    %p450 = por %p448, %p449
    %p451 = scmp.ne.s32.totalorder %s440, %s443
    %p452 = scmp.eq.s32.totalorder %s33, 1
    %p453 = por %p451, %p452
    %p454 = scmp.ne.s32.totalorder %s443, %s444
    %p455 = scmp.eq.s32.totalorder %s33, 0
    %p456 = por %p454, %p455
    %p457 = scmp.ne.s32.totalorder %s443, %s444
    %p458 = scmp.eq.s32.totalorder %s34, 1
    %p459 = por %p457, %p458
    %p461 = scmp.ne.s32.totalorder %s444, %s460
    %p462 = scmp.eq.s32.totalorder %s34, 0
    %p463 = por %p461, %p462
    %s464 = ssub.s32 %s36, %s43
    %p465 = scmp.eq.s32.totalorder %s464, 0
    %s467 = sadd.s32 %s466, 1
    %s468 = scalar_select %p465, %s466, %s467
    %p471 = pneg %p465
    %p472 = scmp.eq.s32.totalorder %s28, 1
    %p473 = por %p471, %p472
    %p474 = scmp.ne.s32.totalorder %s466, %s469
    %p475 = scmp.eq.s32.totalorder %s28, 0
    %p476 = por %p474, %p475
    %p477 = scmp.ne.s32.totalorder %s466, %s469
    %p478 = scmp.eq.s32.totalorder %s33, 1
    %p479 = por %p477, %p478
    %p480 = scmp.ne.s32.totalorder %s469, %s470
    %p481 = scmp.eq.s32.totalorder %s33, 0
    %p482 = por %p480, %p481
    %p483 = scmp.ne.s32.totalorder %s469, %s470
    %p484 = scmp.eq.s32.totalorder %s34, 1
    %p485 = por %p483, %p484
    %p487 = scmp.ne.s32.totalorder %s470, %s486
    %p488 = scmp.eq.s32.totalorder %s34, 0
    %p489 = por %p487, %p488
    %s490 = ssub.s32 %s36, %s43
    %p491 = scmp.eq.s32.totalorder %s490, 0
    %s493 = sadd.s32 %s492, 1
    %s494 = scalar_select %p491, %s492, %s493
    %p497 = pneg %p491
    %p498 = scmp.eq.s32.totalorder %s28, 1
    %p499 = por %p497, %p498
    %p500 = scmp.ne.s32.totalorder %s492, %s495
    %p501 = scmp.eq.s32.totalorder %s28, 0
    %p502 = por %p500, %p501
    %p503 = scmp.ne.s32.totalorder %s492, %s495
    %p504 = scmp.eq.s32.totalorder %s33, 1
    %p505 = por %p503, %p504
    %p506 = scmp.ne.s32.totalorder %s495, %s496
    %p507 = scmp.eq.s32.totalorder %s33, 0
    %p508 = por %p506, %p507
    %p509 = scmp.ne.s32.totalorder %s495, %s496
    %p510 = scmp.eq.s32.totalorder %s34, 1
    %p511 = por %p509, %p510
    %p513 = scmp.ne.s32.totalorder %s496, %s512
    %p514 = scmp.eq.s32.totalorder %s34, 0
    %p515 = por %p513, %p514
    %s516 = ssub.s32 %s36, %s43
    %p517 = scmp.eq.s32.totalorder %s516, 0
    %s519 = sadd.s32 %s518, 1
    %s520 = scalar_select %p517, %s518, %s519
    %p523 = pneg %p517
    %p524 = scmp.eq.s32.totalorder %s28, 1
    %p525 = por %p523, %p524
    %p526 = scmp.ne.s32.totalorder %s518, %s521
    %p527 = scmp.eq.s32.totalorder %s28, 0
    %p528 = por %p526, %p527
    %p529 = scmp.ne.s32.totalorder %s518, %s521
    %p530 = scmp.eq.s32.totalorder %s33, 1
    %p531 = por %p529, %p530
    %p532 = scmp.ne.s32.totalorder %s521, %s522
    %p533 = scmp.eq.s32.totalorder %s33, 0
    %p534 = por %p532, %p533
    %p535 = scmp.ne.s32.totalorder %s521, %s522
    %p536 = scmp.eq.s32.totalorder %s34, 1
    %p537 = por %p535, %p536
    %p539 = scmp.ne.s32.totalorder %s522, %s538
    %p540 = scmp.eq.s32.totalorder %s34, 0
    %p541 = por %p539, %p540
    %s542 = ssub.s32 %s36, %s43
    %p543 = scmp.eq.s32.totalorder %s542, 0
    %s545 = sadd.s32 %s544, 1
    %s546 = scalar_select %p543, %s544, %s545
    %p549 = pneg %p543
    %p550 = scmp.eq.s32.totalorder %s28, 1
    %p551 = por %p549, %p550
    %p552 = scmp.ne.s32.totalorder %s544, %s547
    %p553 = scmp.eq.s32.totalorder %s28, 0
    %p554 = por %p552, %p553
    %p555 = scmp.ne.s32.totalorder %s544, %s547
    %p556 = scmp.eq.s32.totalorder %s33, 1
    %p557 = por %p555, %p556
    %p558 = scmp.ne.s32.totalorder %s547, %s548
    %p559 = scmp.eq.s32.totalorder %s33, 0
    %p560 = por %p558, %p559
    %p561 = scmp.ne.s32.totalorder %s547, %s548
    %p562 = scmp.eq.s32.totalorder %s34, 1
    %p563 = por %p561, %p562
    %p565 = scmp.ne.s32.totalorder %s548, %s564
    %p566 = scmp.eq.s32.totalorder %s34, 0
    %p567 = por %p565, %p566
    %s568 = ssub.s32 %s36, %s43
    %p569 = scmp.eq.s32.totalorder %s568, 0
    %s571 = sadd.s32 %s570, 1
    %s572 = scalar_select %p569, %s570, %s571
    %p575 = pneg %p569
    %p576 = scmp.eq.s32.totalorder %s28, 1
    %p577 = por %p575, %p576
    %p578 = scmp.ne.s32.totalorder %s570, %s573
    %p579 = scmp.eq.s32.totalorder %s28, 0
    %p580 = por %p578, %p579
    %p581 = scmp.ne.s32.totalorder %s570, %s573
    %p582 = scmp.eq.s32.totalorder %s33, 1
    %p583 = por %p581, %p582
    %p584 = scmp.ne.s32.totalorder %s573, %s574
    %p585 = scmp.eq.s32.totalorder %s33, 0
    %p586 = por %p584, %p585
    %p587 = scmp.ne.s32.totalorder %s573, %s574
    %p588 = scmp.eq.s32.totalorder %s34, 1
    %p589 = por %p587, %p588
    %p591 = scmp.ne.s32.totalorder %s574, %s590
    %p592 = scmp.eq.s32.totalorder %s34, 0
    %p593 = por %p591, %p592
    %s595 = sadd.s32 %s594, 1
    %p598 = scmp.eq.s32.totalorder %s28, 1
    %p599 = scmp.ne.s32.totalorder %s594, %s596
    %p600 = scmp.eq.s32.totalorder %s28, 0
    %p601 = por %p599, %p600
    %p602 = scmp.ne.s32.totalorder %s594, %s596
    %p603 = scmp.eq.s32.totalorder %s33, 1
    %p604 = por %p602, %p603
    %p605 = scmp.ne.s32.totalorder %s596, %s597
    %p606 = scmp.eq.s32.totalorder %s33, 0
    %p607 = por %p605, %p606
    %p608 = scmp.ne.s32.totalorder %s596, %s597
    %p609 = scmp.eq.s32.totalorder %s34, 1
    %p610 = por %p608, %p609
    %p612 = scmp.ne.s32.totalorder %s597, %s611
    %p613 = scmp.eq.s32.totalorder %s34, 0
    %p614 = por %p612, %p613
    %s615 = ssub.s32 %s35, %s47
    %p616 = scmp.eq.s32.totalorder %s615, 0
    %s618 = sadd.s32 %s617, 1
    %s619 = scalar_select %p616, %s617, %s618
    %p622 = pneg %p616
    %p623 = scmp.eq.s32.totalorder %s28, 1
    %p624 = por %p622, %p623
    %p625 = scmp.ne.s32.totalorder %s617, %s620
    %p626 = scmp.eq.s32.totalorder %s28, 0
    %p627 = por %p625, %p626
    %p628 = scmp.ne.s32.totalorder %s617, %s620
    %p629 = scmp.eq.s32.totalorder %s33, 1
    %p630 = por %p628, %p629
    %p631 = scmp.ne.s32.totalorder %s620, %s621
    %p632 = scmp.eq.s32.totalorder %s33, 0
    %p633 = por %p631, %p632
    %p634 = scmp.ne.s32.totalorder %s620, %s621
    %p635 = scmp.eq.s32.totalorder %s34, 1
    %p636 = por %p634, %p635
    %p638 = scmp.ne.s32.totalorder %s621, %s637
    %p639 = scmp.eq.s32.totalorder %s34, 0
    %p640 = por %p638, %p639
    %p641 = scmp.le.s32.totalorder 1, %s28
    %p642 = scmp.lt.s32.totalorder %s28, 3
    %p643 = pnand %p641, %p642
    %p644 = pneg %p643
    // Predicated region
    $region9: #{transformer_forward.4} parent=5 // pred_check
      _
    $region10: #{transformer_forward.4} parent=5 // pred_check_branch
      %646 = sbr.rel (%p643) target = $region12
    $region11: #{transformer_forward.4} parent=5 // pred_region
      %s647 = ssub.s32 %s28, 1
      // Predicated region
      $region13: #{transformer_forward.4} parent=11 // pred_check
        %p648 = pneg %p66
      $region14: #{transformer_forward.4} parent=11 // pred_check_branch
        %650 = sbr.rel (%p648) target = $region16
      $region15: #{transformer_forward.4} parent=11 // pred_region
        %s651 = smul.u32 2, %s37
        %p652 = scmp.lt.s32.totalorder %s651, 1
        %s653 = scalar_select %p652, %s651, 1
        %s654 = smul.addr %s653, 8
        %s655 = scalar_lea.vmem %s0, %s654
        %s656 = smul.u32 2, %s37
      $region16: #{transformer_forward.4} parent=11 // pred_fallthru
        _
      // Predicated region
      $region17: #{transformer_forward.4} parent=11 // pred_check
        %p657 = pneg %p92
      $region18: #{transformer_forward.4} parent=11 // pred_check_branch
        %659 = sbr.rel (%p657) target = $region20
      $region19: #{transformer_forward.4} parent=11 // pred_region
        %s660 = smul.u32 2, %s37
        %p661 = scmp.lt.s32.totalorder %s660, 1
        %s662 = scalar_select %p661, %s660, 1
        %s663 = smul.addr %s662, 8
        %s664 = scalar_lea.vmem %s1, %s663
        %s665 = smul.u32 2, %s37
      $region20: #{transformer_forward.4} parent=11 // pred_fallthru
        _
      // Predicated region
      $region21: #{transformer_forward.4} parent=11 // pred_check
        %p666 = pneg %p118
      $region22: #{transformer_forward.4} parent=11 // pred_check_branch
        %668 = sbr.rel (%p666) target = $region24
      $region23: #{transformer_forward.4} parent=11 // pred_region
        %s669 = smul.u32 2, %s37
        %p670 = scmp.lt.s32.totalorder %s669, 1
        %s671 = scalar_select %p670, %s669, 1
        %s672 = scalar_lea.vmem %s2, %s671
        %s673 = smul.u32 2, %s37
      $region24: #{transformer_forward.4} parent=11 // pred_fallthru
        _
      // Predicated region
      $region25: #{transformer_forward.4} parent=11 // pred_check
        %p674 = pneg %p144
      $region26: #{transformer_forward.4} parent=11 // pred_check_branch
        %676 = sbr.rel (%p674) target = $region28
      $region27: #{transformer_forward.4} parent=11 // pred_region
        %s677 = smul.u32 2, %s37
        %p678 = scmp.lt.s32.totalorder %s677, 1
        %s679 = scalar_select %p678, %s677, 1
        %s680 = smul.addr %s679, 8
        %s681 = scalar_lea.vmem %s3, %s680
        %s682 = smul.u32 2, %s37
      $region28: #{transformer_forward.4} parent=11 // pred_fallthru
        _
      // Predicated region
      $region29: #{transformer_forward.4} parent=11 // pred_check
        %p683 = pneg %p607
      $region30: #{transformer_forward.4} parent=11 // pred_check_branch
        %685 = sbr.rel (%p683) target = $region32
      $region31: #{transformer_forward.4} parent=11 // pred_region
        _
      $region32: #{transformer_forward.4} parent=11 // pred_fallthru
        _
    $region12: #{transformer_forward.4} parent=5 // pred_fallthru
      _
    %p686 = scmp.lt.s32.totalorder %s28, 2
    // Predicated region
    $region33: #{transformer_forward.4} parent=5 // pred_check
      %p687 = pneg %p686
    $region34: #{transformer_forward.4} parent=5 // pred_check_branch
      %689 = sbr.rel (%p687) target = $region36
    $region35: #{transformer_forward.4} parent=5 // pred_region
      // Predicated region
      $region37: #{transformer_forward.4} parent=35 // pred_check
        %p690 = pneg %p164
      $region38: #{transformer_forward.4} parent=35 // pred_check_branch
        %692 = sbr.rel (%p690) target = $region40
      $region39: #{transformer_forward.4} parent=35 // pred_region
        %p693 = scmp.lt.s32.totalorder %s36, 1
        %s694 = scalar_select %p693, %s36, 1
        %s695 = smul.addr %s694, 2
        %s696 = scalar_lea.vmem %s4, %s695
      $region40: #{transformer_forward.4} parent=35 // pred_fallthru
        _
      // Predicated region
      $region41: #{transformer_forward.4} parent=35 // pred_check
        %p697 = pneg %p190
      $region42: #{transformer_forward.4} parent=35 // pred_check_branch
        %699 = sbr.rel (%p697) target = $region44
      $region43: #{transformer_forward.4} parent=35 // pred_region
        %p700 = scmp.lt.s32.totalorder %s36, 1
        %s701 = scalar_select %p700, %s36, 1
        %s702 = smul.addr %s701, 12
        %s703 = smul.addr %s702, 4
        %s704 = scalar_lea.vmem %s5, %s703
      $region44: #{transformer_forward.4} parent=35 // pred_fallthru
        _
      // Predicated region
      $region45: #{transformer_forward.4} parent=35 // pred_check
        %p705 = pneg %p216
      $region46: #{transformer_forward.4} parent=35 // pred_check_branch
        %707 = sbr.rel (%p705) target = $region48
      $region47: #{transformer_forward.4} parent=35 // pred_region
        %p708 = scmp.lt.s32.totalorder %s36, 1
        %s709 = scalar_select %p708, %s36, 1
        %s710 = scalar_lea.vmem %s6, %s709
      $region48: #{transformer_forward.4} parent=35 // pred_fallthru
        _
      // Predicated region
      $region49: #{transformer_forward.4} parent=35 // pred_check
        %p711 = pneg %p242
      $region50: #{transformer_forward.4} parent=35 // pred_check_branch
        %713 = sbr.rel (%p711) target = $region52
      $region51: #{transformer_forward.4} parent=35 // pred_region
        %p714 = scmp.lt.s32.totalorder %s36, 1
        %s715 = scalar_select %p714, %s36, 1
        %s716 = smul.addr %s715, 4
        %s717 = smul.addr %s716, 4
        %s718 = scalar_lea.vmem %s7, %s717
      $region52: #{transformer_forward.4} parent=35 // pred_fallthru
        _
      // Predicated region
      $region53: #{transformer_forward.4} parent=35 // pred_check
        %p719 = pneg %p268
      $region54: #{transformer_forward.4} parent=35 // pred_check_branch
        %721 = sbr.rel (%p719) target = $region56
      $region55: #{transformer_forward.4} parent=35 // pred_region
        %p722 = scmp.lt.s32.totalorder %s36, 1
        %s723 = scalar_select %p722, %s36, 1
        %s724 = scalar_lea.vmem %s8, %s723
      $region56: #{transformer_forward.4} parent=35 // pred_fallthru
        _
      // Predicated region
      $region57: #{transformer_forward.4} parent=35 // pred_check
        %p725 = pneg %p294
      $region58: #{transformer_forward.4} parent=35 // pred_check_branch
        %727 = sbr.rel (%p725) target = $region60
      $region59: #{transformer_forward.4} parent=35 // pred_region
        %p728 = scmp.lt.s32.totalorder %s36, 1
        %s729 = scalar_select %p728, %s36, 1
        %s730 = smul.addr %s729, 2
        %s731 = scalar_lea.vmem %s9, %s730
      $region60: #{transformer_forward.4} parent=35 // pred_fallthru
        _
      // Predicated region
      $region61: #{transformer_forward.4} parent=35 // pred_check
        %p732 = pneg %p320
      $region62: #{transformer_forward.4} parent=35 // pred_check_branch
        %734 = sbr.rel (%p732) target = $region64
      $region63: #{transformer_forward.4} parent=35 // pred_region
        %p735 = scmp.lt.s32.totalorder %s36, 1
        %s736 = scalar_select %p735, %s36, 1
        %s737 = smul.addr %s736, 4
        %s738 = smul.addr %s737, 4
        %s739 = scalar_lea.vmem %s10, %s738
      $region64: #{transformer_forward.4} parent=35 // pred_fallthru
        _
      // Predicated region
      $region65: #{transformer_forward.4} parent=35 // pred_check
        %p740 = pneg %p346
      $region66: #{transformer_forward.4} parent=35 // pred_check_branch
        %742 = sbr.rel (%p740) target = $region68
      $region67: #{transformer_forward.4} parent=35 // pred_region
        %p743 = scmp.lt.s32.totalorder %s36, 1
        %s744 = scalar_select %p743, %s36, 1
        %s745 = scalar_lea.vmem %s11, %s744
      $region68: #{transformer_forward.4} parent=35 // pred_fallthru
        _
      // Predicated region
      $region69: #{transformer_forward.4} parent=35 // pred_check
        %p746 = pneg %p372
      $region70: #{transformer_forward.4} parent=35 // pred_check_branch
        %748 = sbr.rel (%p746) target = $region72
      $region71: #{transformer_forward.4} parent=35 // pred_region
        %p749 = scmp.lt.s32.totalorder %s36, 1
        %s750 = scalar_select %p749, %s36, 1
        %s751 = smul.addr %s750, 8
        %s752 = smul.addr %s751, 4
        %s753 = scalar_lea.vmem %s12, %s752
      $region72: #{transformer_forward.4} parent=35 // pred_fallthru
        _
      // Predicated region
      $region73: #{transformer_forward.4} parent=35 // pred_check
        %p754 = pneg %p398
      $region74: #{transformer_forward.4} parent=35 // pred_check_branch
        %756 = sbr.rel (%p754) target = $region76
      $region75: #{transformer_forward.4} parent=35 // pred_region
        %p757 = scmp.lt.s32.totalorder %s36, 1
        %s758 = scalar_select %p757, %s36, 1
        %s759 = scalar_lea.vmem %s13, %s758
      $region76: #{transformer_forward.4} parent=35 // pred_fallthru
        _
      // Predicated region
      $region77: #{transformer_forward.4} parent=35 // pred_check
        %p760 = pneg %p424
      $region78: #{transformer_forward.4} parent=35 // pred_check_branch
        %762 = sbr.rel (%p760) target = $region80
      $region79: #{transformer_forward.4} parent=35 // pred_region
        %p763 = scmp.lt.s32.totalorder %s36, 1
        %s764 = scalar_select %p763, %s36, 1
        %s765 = smul.addr %s764, 4
        %s766 = smul.addr %s765, 4
        %s767 = scalar_lea.vmem %s14, %s766
      $region80: #{transformer_forward.4} parent=35 // pred_fallthru
        _
      // Predicated region
      $region81: #{transformer_forward.4} parent=35 // pred_check
        %p768 = pneg %p450
      $region82: #{transformer_forward.4} parent=35 // pred_check_branch
        %770 = sbr.rel (%p768) target = $region84
      $region83: #{transformer_forward.4} parent=35 // pred_region
        %p771 = scmp.lt.s32.totalorder %s36, 1
        %s772 = scalar_select %p771, %s36, 1
        %s773 = scalar_lea.vmem %s15, %s772
      $region84: #{transformer_forward.4} parent=35 // pred_fallthru
        _
      // Predicated region
      $region85: #{transformer_forward.4} parent=35 // pred_check
        %p774 = pneg %p476
      $region86: #{transformer_forward.4} parent=35 // pred_check_branch
        %776 = sbr.rel (%p774) target = $region88
      $region87: #{transformer_forward.4} parent=35 // pred_region
        %p777 = scmp.lt.s32.totalorder %s36, 1
        %s778 = scalar_select %p777, %s36, 1
        %s779 = smul.addr %s778, 2
        %s780 = scalar_lea.vmem %s16, %s779
      $region88: #{transformer_forward.4} parent=35 // pred_fallthru
        _
      // Predicated region
      $region89: #{transformer_forward.4} parent=35 // pred_check
        %p781 = pneg %p502
      $region90: #{transformer_forward.4} parent=35 // pred_check_branch
        %783 = sbr.rel (%p781) target = $region92
      $region91: #{transformer_forward.4} parent=35 // pred_region
        %p784 = scmp.lt.s32.totalorder %s36, 1
        %s785 = scalar_select %p784, %s36, 1
        %s786 = smul.addr %s785, 8
        %s787 = smul.addr %s786, 4
        %s788 = scalar_lea.vmem %s17, %s787
      $region92: #{transformer_forward.4} parent=35 // pred_fallthru
        _
      // Predicated region
      $region93: #{transformer_forward.4} parent=35 // pred_check
        %p789 = pneg %p528
      $region94: #{transformer_forward.4} parent=35 // pred_check_branch
        %791 = sbr.rel (%p789) target = $region96
      $region95: #{transformer_forward.4} parent=35 // pred_region
        %p792 = scmp.lt.s32.totalorder %s36, 1
        %s793 = scalar_select %p792, %s36, 1
        %s794 = scalar_lea.vmem %s18, %s793
      $region96: #{transformer_forward.4} parent=35 // pred_fallthru
        _
      // Predicated region
      $region97: #{transformer_forward.4} parent=35 // pred_check
        %p795 = pneg %p554
      $region98: #{transformer_forward.4} parent=35 // pred_check_branch
        %797 = sbr.rel (%p795) target = $region100
      $region99: #{transformer_forward.4} parent=35 // pred_region
        %p798 = scmp.lt.s32.totalorder %s36, 1
        %s799 = scalar_select %p798, %s36, 1
        %s800 = smul.addr %s799, 4
        %s801 = smul.addr %s800, 4
        %s802 = scalar_lea.vmem %s19, %s801
      $region100: #{transformer_forward.4} parent=35 // pred_fallthru
        _
      // Predicated region
      $region101: #{transformer_forward.4} parent=35 // pred_check
        %p803 = pneg %p580
      $region102: #{transformer_forward.4} parent=35 // pred_check_branch
        %805 = sbr.rel (%p803) target = $region104
      $region103: #{transformer_forward.4} parent=35 // pred_region
        %p806 = scmp.lt.s32.totalorder %s36, 1
        %s807 = scalar_select %p806, %s36, 1
        %s808 = scalar_lea.vmem %s20, %s807
      $region104: #{transformer_forward.4} parent=35 // pred_fallthru
        _
    $region36: #{transformer_forward.4} parent=5 // pred_fallthru
      _
    %p809 = scmp.le.s32.totalorder 1, %s28
    %p810 = scmp.lt.s32.totalorder %s28, 3
    %p811 = pnand %p809, %p810
    %p812 = pneg %p811
    // Predicated region
    $region105: #{transformer_forward.4} parent=5 // pred_check
      _
    $region106: #{transformer_forward.4} parent=5 // pred_check_branch
      %814 = sbr.rel (%p811) target = $region108
    $region107: #{transformer_forward.4} parent=5 // pred_region
      %s815 = ssub.s32 %s28, 1
      %s816 = smul.u32 2, %s37
      %p817 = scmp.lt.s32.totalorder %s816, 1
      %s818 = scalar_select %p817, %s816, 1
      %s819 = smul.addr %s818, 8
      %s820 = scalar_lea.vmem %s0, %s819
      %p821 = pneg %p66
      %p822 = pneg %p63
      %s823 = smul.u32 2, %s37
      %p824 = scmp.lt.s32.totalorder %s823, 1
      %s825 = scalar_select %p824, %s823, 1
      %s826 = smul.addr %s825, 8
      %s827 = scalar_lea.vmem %s1, %s826
      %p828 = pneg %p92
      %p829 = pneg %p89
      %s830 = smul.u32 2, %s37
      %p831 = scmp.lt.s32.totalorder %s830, 1
      %s832 = scalar_select %p831, %s830, 1
      %s833 = scalar_lea.vmem %s2, %s832
      %p834 = pneg %p118
      %p835 = pneg %p115
      %s836 = smul.u32 2, %s37
      %p837 = scmp.lt.s32.totalorder %s836, 1
      %s838 = scalar_select %p837, %s836, 1
      %s839 = smul.addr %s838, 8
      %s840 = scalar_lea.vmem %s3, %s839
      %p841 = pneg %p144
      %p842 = pneg %p141
      %p843 = scmp.lt.s32.totalorder %s38, 1
      %s844 = scalar_select %p843, %s38, 1
      %s845 = smul.addr %s844, 2
      %s846 = scalar_lea.vmem %s4, %s845
      %p847 = pneg %p170
      %p848 = pneg %p167
      %p849 = scmp.lt.s32.totalorder %s38, 1
      %s850 = scalar_select %p849, %s38, 1
      %s851 = smul.addr %s850, 12
      %s852 = smul.addr %s851, 4
      %s853 = scalar_lea.vmem %s5, %s852
      %p854 = pneg %p196
      %p855 = pneg %p193
      %p856 = scmp.lt.s32.totalorder %s38, 1
      %s857 = scalar_select %p856, %s38, 1
      %s858 = scalar_lea.vmem %s6, %s857
      %p859 = pneg %p222
      %p860 = pneg %p219
      %p861 = scmp.lt.s32.totalorder %s38, 1
      %s862 = scalar_select %p861, %s38, 1
      %s863 = smul.addr %s862, 4
      %s864 = smul.addr %s863, 4
      %s865 = scalar_lea.vmem %s7, %s864
      %p866 = pneg %p248
      %p867 = pneg %p245
      %p868 = scmp.lt.s32.totalorder %s38, 1
      %s869 = scalar_select %p868, %s38, 1
      %s870 = scalar_lea.vmem %s8, %s869
      %p871 = pneg %p274
      %p872 = pneg %p271
      %p873 = scmp.lt.s32.totalorder %s38, 1
      %s874 = scalar_select %p873, %s38, 1
      %s875 = smul.addr %s874, 2
      %s876 = scalar_lea.vmem %s9, %s875
      %p877 = pneg %p300
      %p878 = pneg %p297
      %p879 = scmp.lt.s32.totalorder %s38, 1
      %s880 = scalar_select %p879, %s38, 1
      %s881 = smul.addr %s880, 4
      %s882 = smul.addr %s881, 4
      %s883 = scalar_lea.vmem %s10, %s882
      %p884 = pneg %p326
      %p885 = pneg %p323
      %p886 = scmp.lt.s32.totalorder %s38, 1
      %s887 = scalar_select %p886, %s38, 1
      %s888 = scalar_lea.vmem %s11, %s887
      %p889 = pneg %p352
      %p890 = pneg %p349
      %p891 = scmp.lt.s32.totalorder %s38, 1
      %s892 = scalar_select %p891, %s38, 1
      %s893 = smul.addr %s892, 8
      %s894 = smul.addr %s893, 4
      %s895 = scalar_lea.vmem %s12, %s894
      %p896 = pneg %p378
      %p897 = pneg %p375
      %p898 = scmp.lt.s32.totalorder %s38, 1
      %s899 = scalar_select %p898, %s38, 1
      %s900 = scalar_lea.vmem %s13, %s899
      %p901 = pneg %p404
      %p902 = pneg %p401
      %p903 = scmp.lt.s32.totalorder %s38, 1
      %s904 = scalar_select %p903, %s38, 1
      %s905 = smul.addr %s904, 4
      %s906 = smul.addr %s905, 4
      %s907 = scalar_lea.vmem %s14, %s906
      %p908 = pneg %p430
      %p909 = pneg %p427
      %p910 = scmp.lt.s32.totalorder %s38, 1
      %s911 = scalar_select %p910, %s38, 1
      %s912 = scalar_lea.vmem %s15, %s911
      %p913 = pneg %p456
      %p914 = pneg %p453
      %p915 = scmp.lt.s32.totalorder %s38, 1
      %s916 = scalar_select %p915, %s38, 1
      %s917 = smul.addr %s916, 2
      %s918 = scalar_lea.vmem %s16, %s917
      %p919 = pneg %p482
      %p920 = pneg %p479
      %p921 = scmp.lt.s32.totalorder %s38, 1
      %s922 = scalar_select %p921, %s38, 1
      %s923 = smul.addr %s922, 8
      %s924 = smul.addr %s923, 4
      %s925 = scalar_lea.vmem %s17, %s924
      %p926 = pneg %p508
      %p927 = pneg %p505
      %p928 = scmp.lt.s32.totalorder %s38, 1
      %s929 = scalar_select %p928, %s38, 1
      %s930 = scalar_lea.vmem %s18, %s929
      %p931 = pneg %p534
      %p932 = pneg %p531
      %p933 = scmp.lt.s32.totalorder %s38, 1
      %s934 = scalar_select %p933, %s38, 1
      %s935 = smul.addr %s934, 4
      %s936 = smul.addr %s935, 4
      %s937 = scalar_lea.vmem %s19, %s936
      %p938 = pneg %p560
      %p939 = pneg %p557
      %p940 = scmp.lt.s32.totalorder %s38, 1
      %s941 = scalar_select %p940, %s38, 1
      %s942 = scalar_lea.vmem %s20, %s941
      %p943 = pneg %p586
      %p944 = pneg %p583
      %p945 = pneg %p607
      %p946 = pneg %p604
      %p947 = pneg %p633
      %p948 = pneg %p630
      %s949 = smul.u32 2, %s37
      %p950 = scmp.lt.s32.totalorder %s949, 1
      %s951 = scalar_select %p950, %s949, 1
      %s952 = smul.addr %s951, 8
      %s953 = scalar_lea.vmem %s22, %s952
      %s954 = smul.u32 2, %s37
      %p955 = scmp.lt.s32.totalorder %s954, 1
      %s956 = scalar_select %p955, %s954, 1
      %s957 = smul.addr %s956, 8
      %s958 = scalar_lea.vmem %s0, %s957
      %s959 = smul.u32 2, %s37
      %s960 = smul.u32 2, %s37
      %p961 = scmp.lt.s32.totalorder %s960, 1
      %s962 = scalar_select %p961, %s960, 1
      %s963 = smul.addr %s962, 8
      %s964 = scalar_lea.vmem %s1, %s963
      %s965 = smul.u32 2, %s37
      %s966 = smul.u32 2, %s37
      %p967 = scmp.lt.s32.totalorder %s966, 1
      %s968 = scalar_select %p967, %s966, 1
      %s969 = scalar_lea.vmem %s2, %s968
      %s970 = smul.u32 2, %s37
      %s971 = smul.u32 2, %s37
      %p972 = scmp.lt.s32.totalorder %s971, 1
      %s973 = scalar_select %p972, %s971, 1
      %s974 = smul.addr %s973, 8
      %s975 = scalar_lea.vmem %s3, %s974
      %s976 = smul.u32 2, %s37
      %p977 = scmp.lt.s32.totalorder %s38, 1
      %s978 = scalar_select %p977, %s38, 1
      %s979 = smul.addr %s978, 2
      %s980 = scalar_lea.vmem %s4, %s979
      %p981 = scmp.lt.s32.totalorder %s38, 1
      %s982 = scalar_select %p981, %s38, 1
      %s983 = smul.addr %s982, 12
      %s984 = smul.addr %s983, 4
      %s985 = scalar_lea.vmem %s5, %s984
      %p986 = scmp.lt.s32.totalorder %s38, 1
      %s987 = scalar_select %p986, %s38, 1
      %s988 = scalar_lea.vmem %s6, %s987
      %p989 = scmp.lt.s32.totalorder %s38, 1
      %s990 = scalar_select %p989, %s38, 1
      %s991 = smul.addr %s990, 4
      %s992 = smul.addr %s991, 4
      %s993 = scalar_lea.vmem %s7, %s992
      %p994 = scmp.lt.s32.totalorder %s38, 1
      %s995 = scalar_select %p994, %s38, 1
      %s996 = scalar_lea.vmem %s8, %s995
      %p997 = scmp.lt.s32.totalorder %s38, 1
      %s998 = scalar_select %p997, %s38, 1
      %s999 = smul.addr %s998, 2
      %s1000 = scalar_lea.vmem %s9, %s999
      %p1001 = scmp.lt.s32.totalorder %s38, 1
      %s1002 = scalar_select %p1001, %s38, 1
      %s1003 = smul.addr %s1002, 4
      %s1004 = smul.addr %s1003, 4
      %s1005 = scalar_lea.vmem %s10, %s1004
      %p1006 = scmp.lt.s32.totalorder %s38, 1
      %s1007 = scalar_select %p1006, %s38, 1
      %s1008 = scalar_lea.vmem %s11, %s1007
      %p1009 = scmp.lt.s32.totalorder %s38, 1
      %s1010 = scalar_select %p1009, %s38, 1
      %s1011 = smul.addr %s1010, 8
      %s1012 = smul.addr %s1011, 4
      %s1013 = scalar_lea.vmem %s12, %s1012
      %p1014 = scmp.lt.s32.totalorder %s38, 1
      %s1015 = scalar_select %p1014, %s38, 1
      %s1016 = scalar_lea.vmem %s13, %s1015
      %p1017 = scmp.lt.s32.totalorder %s38, 1
      %s1018 = scalar_select %p1017, %s38, 1
      %s1019 = smul.addr %s1018, 4
      %s1020 = smul.addr %s1019, 4
      %s1021 = scalar_lea.vmem %s14, %s1020
      %p1022 = scmp.lt.s32.totalorder %s38, 1
      %s1023 = scalar_select %p1022, %s38, 1
      %s1024 = scalar_lea.vmem %s15, %s1023
      %p1025 = scmp.lt.s32.totalorder %s38, 1
      %s1026 = scalar_select %p1025, %s38, 1
      %s1027 = smul.addr %s1026, 2
      %s1028 = scalar_lea.vmem %s16, %s1027
      %p1029 = scmp.lt.s32.totalorder %s38, 1
      %s1030 = scalar_select %p1029, %s38, 1
      %s1031 = smul.addr %s1030, 8
      %s1032 = smul.addr %s1031, 4
      %s1033 = scalar_lea.vmem %s17, %s1032
      %p1034 = scmp.lt.s32.totalorder %s38, 1
      %s1035 = scalar_select %p1034, %s38, 1
      %s1036 = scalar_lea.vmem %s18, %s1035
      %p1037 = scmp.lt.s32.totalorder %s38, 1
      %s1038 = scalar_select %p1037, %s38, 1
      %s1039 = smul.addr %s1038, 4
      %s1040 = smul.addr %s1039, 4
      %s1041 = scalar_lea.vmem %s19, %s1040
      %p1042 = scmp.lt.s32.totalorder %s38, 1
      %s1043 = scalar_select %p1042, %s38, 1
      %s1044 = scalar_lea.vmem %s20, %s1043
      %s1045 = smul.u32 2, %s37
      %p1046 = scmp.lt.s32.totalorder %s1045, 1
      %s1047 = scalar_select %p1046, %s1045, 1
      %s1048 = smul.addr %s1047, 8
      %s1049 = scalar_lea.vmem %s22, %s1048
      %s1050 = smul.u32 2, %s37
      %p1052 = scmp.eq.s32.totalorder %s38, 0
      // Predicated region
      $region109: #{transformer_forward.4} parent=107 // pred_check
        %p1053 = pneg %p1052
      $region110: #{transformer_forward.4} parent=107 // pred_check_branch
        %1055 = sbr.rel (%p1053) target = $region112
      $region111: #{transformer_forward.4} parent=107 // pred_region
        %v1056 = vld [vmem:[%s958] sm:$0xff]
        %v1057 = vld [vmem:[%s958 + $0x8] sm:$0xff]
        %vm1058 = vcmask 261120
        %1059 = vst.msk [vmem:[#allocation2] sm:$0xff] %vm1058, %v1056
        %1060 = vst.msk [vmem:[#allocation2 + $0x8] sm:$0xff] %vm1058, %v1057
      $region112: #{transformer_forward.4} parent=107 // pred_fallthru
        _
      %v1061 = vld [vmem:[#allocation2] sm:$0xff]
      %v1062 = vld [vmem:[#allocation2 + $0x8] sm:$0xff]
      %v1063 = vld [vmem:[%s964] sm:$0xff]
      %v1064 = vld [vmem:[%s964 + $0x8] sm:$0xff]
      %v1065 = vld [vmem:[%s969] sm:$0x1]
      %v1066 = vld [vmem:[%s969 + $0x1] sm:$0x1]
      %v1067 = vld [vmem:[%s975] sm:$0xff]
      %v1068 = vld [vmem:[%s975 + $0x8] sm:$0xff]
      %v1069 = vld [vmem:[%s980] sm:$0x3]
      %vm1070 = vcmask 261120
      %v1071 = vsel %vm1070, %v1061, 0.0
      %1072 = vadd.xlane.f32.xlu0 %v1071
      %v1073 = vpop.xlane.xlu0 %1072
      %v1074 = vsel %vm1070, %v1062, 0.0
      %1075 = vadd.xlane.f32.xlu0 %v1074
      %v1076 = vpop.xlane.xlu0 %1075
      %v1077 = vrcp.pop 32.0
      %v1078 = vmul.f32 %v1073, %v1077
      %v1079 = vmul.f32 %v1076, %v1077
      %v1080 = vsub.f32 %v1061, %v1078
      %v1081 = vsub.f32 %v1062, %v1079
      %v1082 = vmul.f32 %v1080, %v1080
      %v1083 = vmul.f32 %v1081, %v1081
      %v1084 = vsel %vm1070, %v1082, 0.0
      %1085 = vadd.xlane.f32.xlu0 %v1084
      %v1086 = vpop.xlane.xlu0 %1085
      %v1087 = vsel %vm1070, %v1083, 0.0
      %1088 = vadd.xlane.f32.xlu0 %v1087
      %v1089 = vpop.xlane.xlu0 %1088
      %v1090 = vmul.f32 %v1086, 0.032258064
      %v1091 = vmul.f32 %v1089, 0.032258064
      %v1092 = vrsqrt.pop %v1090
      %v1093 = vmul.f32 %v1090, %v1092
      %vm1094 = vcmp.eq.f32.partialorder %v1090, inf
      %v1095 = vsel %vm1094, %v1090, %v1093
      %vm1096 = vcmp.eq.f32.partialorder %v1090, 0.0
      %v1097 = vand.u32 %v1090, 2147483648
      %v1098 = vsel %vm1096, %v1097, %v1095
      %v1099 = vrsqrt.pop %v1091
      %v1100 = vmul.f32 %v1091, %v1099
      %vm1101 = vcmp.eq.f32.partialorder %v1091, inf
      %v1102 = vsel %vm1101, %v1091, %v1100
      %vm1103 = vcmp.eq.f32.partialorder %v1091, 0.0
      %v1104 = vand.u32 %v1091, 2147483648
      %v1105 = vsel %vm1103, %v1104, %v1102
      %v1106 = vadd.f32 %v1098, 1e-06
      %v1107 = vadd.f32 %v1105, 1e-06
      %v1108 = vrcp.pop %v1106
      %v1109 = vrcp.pop %v1107
      %v1110 = vlaneseq
      %v1111 = vshrl.u32 %v1110, 7
      %v1112 = vsub.s32 0, %v1111
      %v1113 = vrot.slane %v1069, %v1112
      %v1114 = vmul.f32 %v1113, %v1080
      %v1115 = vmul.f32 %v1113, %v1081
      %v1116 = vmul.f32 %v1114, %v1108
      %v1117 = vmul.f32 %v1115, %v1109
      %v1118 = vlaneseq
      %v1119 = vshrl.u32 %v1118, 7
      %v1120 = vsub.s32 1, %v1119
      %v1121 = vrot.slane %v1069, %v1120
      %v1122 = vadd.f32 %v1116, %v1121
      %v1123 = vadd.f32 %v1117, %v1121
      %v1124 = vld [vmem:[%s985] sm:$0xf]
      %v1125 = vld [vmem:[%s985 + $0x4] sm:$0xf]
      %v1126 = vld [vmem:[%s985 + $0x8] sm:$0xf]
      %v1127 = vld [vmem:[%s985 + $0xc] sm:$0xf]
      %v1128 = vld [vmem:[%s985 + $0x10] sm:$0xf]
      %v1129 = vld [vmem:[%s985 + $0x14] sm:$0xf]
      %v1130 = vld [vmem:[%s985 + $0x18] sm:$0xf]
      %v1131 = vld [vmem:[%s985 + $0x1c] sm:$0xf]
      %v1132 = vld [vmem:[%s985 + $0x20] sm:$0xf]
      %v1133 = vld [vmem:[%s985 + $0x24] sm:$0xf]
      %v1134 = vld [vmem:[%s985 + $0x28] sm:$0xf]
      %v1135 = vld [vmem:[%s985 + $0x2c] sm:$0xf]
      %v1136 = vld [vmem:[%s988] sm:$0x1]
      %v1137 = vpack.c.bf16 %v1123, %v1122
      %v1139 = vlaneseq
      %v1140 = vshrl.u32 %v1139, 7
      %v1141 = vsub.s32 0, %v1140
      %v1142 = vrot.slane %v1136, %v1141
      %v1156 = vunpack.c.l.b16 %v1124
      %v1157 = vunpack.c.l.b16 %v1125
      %v1158 = vunpack.c.l.b16 %v1126
      %v1159 = vunpack.c.l.b16 %v1127
      %v1160 = vunpack.c.l.b16 %v1128
      %v1161 = vunpack.c.l.b16 %v1129
      %v1162 = vunpack.c.l.b16 %v1130
      %v1163 = vunpack.c.l.b16 %v1131
      %v1164 = vunpack.c.l.b16 %v1132
      %v1165 = vunpack.c.l.b16 %v1133
      %v1166 = vunpack.c.l.b16 %v1134
      %v1167 = vunpack.c.l.b16 %v1135
      %v1168 = vpack.c.b16 %v1157, %v1156
      %v1169 = vpack.c.b16 %v1159, %v1158
      %v1170 = vpack.c.b16 %v1161, %v1160
      %v1171 = vpack.c.b16 %v1163, %v1162
      %v1172 = vpack.c.b16 %v1165, %v1164
      %v1173 = vpack.c.b16 %v1167, %v1166
      %v1175 = vsel %vm1070, %v1137, 0
      %v1178 = vsel %vm1070, %v1168, 0
      %v1181 = vsel %vm1070, %v1169, 0
      %v1184 = vsel %vm1070, %v1170, 0
      %v1187 = vsel %vm1070, %v1171, 0
      %v1190 = vsel %vm1070, %v1172, 0
      %v1193 = vsel %vm1070, %v1173, 0
      %1195 = vmatprep.subr.bf16.mxu0 0
      %1196 = vmatpush1.bf16.xpose.msra.mxu0 0
      %1197 = vmatprep.subr.bf16.mxu0 0
      %1198 = vmatpush1.bf16.xpose.msra.mxu0 0
      %1199 = vmatprep.subr.bf16.mxu0 0
      %1200 = vmatpush1.bf16.xpose.msra.mxu0 %v1193
      %1201 = vmatprep.subr.bf16.mxu0 0
      %1202 = vmatpush1.bf16.xpose.msra.mxu0 %v1190
      %1203 = vmatprep.subr.bf16.mxu0 0
      %1204 = vmatpush1.bf16.xpose.msra.mxu0 %v1187
      %1205 = vmatprep.subr.bf16.mxu0 0
      %1206 = vmatpush1.bf16.xpose.msra.mxu0 %v1184
      %1207 = vmatprep.subr.bf16.mxu0 0
      %1208 = vmatpush1.bf16.xpose.msra.mxu0 %v1181
      %1209 = vmatprep.subr.bf16.mxu0 0
      %1210 = vmatpush1.bf16.xpose.msra.mxu0 %v1178
      %1211 = vmatprep.subr.bf16.mxu0 0
      %1212 = vmatpush2.bf16.xpose.msra.mxu0 0
      %1213 = vmatprep.subr.bf16.mxu0 0
      %1214 = vmatpush2.bf16.xpose.msra.mxu0 0
      %1215 = vmatprep.subr.bf16.mxu0 0
      %1216 = vmatpush2.bf16.xpose.msra.mxu0 0
      %1217 = vmatprep.subr.bf16.mxu0 0
      %1218 = vmatpush2.bf16.xpose.msra.mxu0 0
      %1219 = vmatprep.subr.bf16.mxu0 0
      %1220 = vmatpush2.bf16.xpose.msra.mxu0 0
      %1221 = vmatprep.subr.bf16.mxu0 0
      %1222 = vmatpush2.bf16.xpose.msra.mxu0 0
      %1223 = vmatprep.subr.bf16.mxu0 0
      %1224 = vmatpush2.bf16.xpose.msra.mxu0 0
      %1225 = vmatprep.subr.bf16.mxu0 0
      %1226 = vmatpush2.bf16.xpose.msra.mxu0 0
      %1227 = vmatprep.mubr.bf16.mxu0 0
      %1228 = vmatmul.mubr.bf16.gmra.mxu0 %v1175
      %v1229 = vpop.f32.mrf.mxu0
      %v1230 = vadd.f32 %v1142, %v1229
      %v1231 = vpop.f32.mrf.mxu0
      %v1232 = vpop.f32.mrf.mxu0
      %v1233 = vadd.f32 %v1142, %v1232
      %v1234 = vpop.f32.mrf.mxu0
      %1235 = vdwg.mxu0
      %v1236 = vld [vmem:[%s993] sm:$0xf]
      %v1237 = vld [vmem:[%s993 + $0x4] sm:$0xf]
      %v1238 = vld [vmem:[%s993 + $0x8] sm:$0xf]
      %v1239 = vld [vmem:[%s993 + $0xc] sm:$0xf]
      %vm1240 = vcmp.eq.f32.partialorder %v1067, 0.0
      %v1241 = vsel %vm1240, -1e+09, 0.0
      %v1242 = vpack.c.bf16 %v1230, %v1230
      %1244 = vrot.lane.b32.xlu0 %v1242, 96
      %v1245 = vpop.permute.xlu0 %1244
      %vm1246 = vcmask 64512
      %v1248 = vsel %vm1246, %v1242, 0
      %v1251 = vsel %vm1246, %v1245, 0
      %1253 = vmatprep.subr.bf16.mxu0 0
      %1254 = vmatpush1.bf16.xpose.msra.mxu0 0
      %1255 = vmatprep.subr.bf16.mxu0 0
      %1256 = vmatpush1.bf16.xpose.msra.mxu0 0
      %1257 = vmatprep.subr.bf16.mxu0 0
      %1258 = vmatpush1.bf16.xpose.msra.mxu0 0
      %1259 = vmatprep.subr.bf16.mxu0 0
      %1260 = vmatpush1.bf16.xpose.msra.mxu0 0
      %1261 = vmatprep.subr.bf16.mxu0 0
      %1262 = vmatpush1.bf16.xpose.msra.mxu0 0
      %1263 = vmatprep.subr.bf16.mxu0 0
      %1264 = vmatpush1.bf16.xpose.msra.mxu0 0
      %1265 = vmatprep.subr.bf16.mxu0 0
      %1266 = vmatpush1.bf16.xpose.msra.mxu0 0
      %1267 = vmatprep.subr.bf16.mxu0 0
      %1268 = vmatpush1.bf16.xpose.msra.mxu0 %v1251
      %1269 = vmatprep.subr.bf16.mxu0 0
      %1270 = vmatpush2.bf16.xpose.msra.mxu0 0
      %1271 = vmatprep.subr.bf16.mxu0 0
      %1272 = vmatpush2.bf16.xpose.msra.mxu0 0
      %1273 = vmatprep.subr.bf16.mxu0 0
      %1274 = vmatpush2.bf16.xpose.msra.mxu0 0
      %1275 = vmatprep.subr.bf16.mxu0 0
      %1276 = vmatpush2.bf16.xpose.msra.mxu0 0
      %1277 = vmatprep.subr.bf16.mxu0 0
      %1278 = vmatpush2.bf16.xpose.msra.mxu0 0
      %1279 = vmatprep.subr.bf16.mxu0 0
      %1280 = vmatpush2.bf16.xpose.msra.mxu0 0
      %1281 = vmatprep.subr.bf16.mxu0 0
      %1282 = vmatpush2.bf16.xpose.msra.mxu0 0
      %1283 = vmatprep.subr.bf16.mxu0 0
      %1284 = vmatpush2.bf16.xpose.msra.mxu0 0
      %1285 = vmatprep.mubr.bf16.mxu0 0
      %1286 = vmatmul.mubr.bf16.gmra.mxu0 %v1248
      %v1287 = vpop.f32.mrf.mxu0
      %v1288 = vadd.f32 0.0, %v1287
      %v1289 = vpop.f32.mrf.mxu0
      %v1290 = vpop.f32.mrf.mxu0
      %v1291 = vpop.f32.mrf.mxu0
      %1292 = vdwg.mxu0
      %v1293 = vmul.f32 %v1288, 0.35355338
      %v1294 = vadd.f32 %v1293, %v1241
      %v1295 = vsel %vm1246, %v1294, -inf
      %1296 = vmax.xlane.f32.xlu0 %v1295
      %v1297 = vpop.xlane.xlu0 %1296
      %v1298 = vsub.f32 %v1294, %v1297
      %v1299 = vmul.f32 %v1298, 1.442695
      %v1300 = vpow.pop %v1299
      %v1301 = vsel %vm1246, %v1300, 0.0
      %1302 = vadd.xlane.f32.xlu0 %v1301
      %v1303 = vpop.xlane.xlu0 %1302
      %v1304 = vrcp.pop %v1303
      %v1305 = vmul.f32 %v1300, %v1304
      %v1306 = vpack.c.bf16 %v1305, %v1305
      %1307 = vrot.lane.b32.xlu0 %v1242, 64
      %v1308 = vpop.permute.xlu0 %1307
      %v1310 = vsel %vm1246, %v1306, 0
      %vm1312 = vcmask 1043456
      %v1314 = vsel %vm1312, %v1308, 0
      %1316 = vmatprep.subr.bf16.mxu0 0
      %1317 = vmatpush1.bf16.msra.mxu0 0
      %1318 = vmatprep.subr.bf16.mxu0 0
      %1319 = vmatpush1.bf16.msra.mxu0 0
      %1320 = vmatprep.subr.bf16.mxu0 0
      %1321 = vmatpush1.bf16.msra.mxu0 0
      %1322 = vmatprep.subr.bf16.mxu0 0
      %1323 = vmatpush1.bf16.msra.mxu0 0
      %1324 = vmatprep.subr.bf16.mxu0 0
      %1325 = vmatpush1.bf16.msra.mxu0 0
      %1326 = vmatprep.subr.bf16.mxu0 0
      %1327 = vmatpush1.bf16.msra.mxu0 0
      %1328 = vmatprep.subr.bf16.mxu0 0
      %1329 = vmatpush1.bf16.msra.mxu0 0
      %1330 = vmatprep.subr.bf16.mxu0 0
      %1331 = vmatpush1.bf16.msra.mxu0 %v1314
      %1332 = vmatprep.subr.bf16.mxu0 0
      %1333 = vmatpush2.bf16.msra.mxu0 0
      %1334 = vmatprep.subr.bf16.mxu0 0
      %1335 = vmatpush2.bf16.msra.mxu0 0
      %1336 = vmatprep.subr.bf16.mxu0 0
      %1337 = vmatpush2.bf16.msra.mxu0 0
      %1338 = vmatprep.subr.bf16.mxu0 0
      %1339 = vmatpush2.bf16.msra.mxu0 0
      %1340 = vmatprep.subr.bf16.mxu0 0
      %1341 = vmatpush2.bf16.msra.mxu0 0
      %1342 = vmatprep.subr.bf16.mxu0 0
      %1343 = vmatpush2.bf16.msra.mxu0 0
      %1344 = vmatprep.subr.bf16.mxu0 0
      %1345 = vmatpush2.bf16.msra.mxu0 0
      %1346 = vmatprep.subr.bf16.mxu0 0
      %1347 = vmatpush2.bf16.msra.mxu0 0
      %1348 = vmatprep.mubr.bf16.mxu0 0
      %1349 = vmatmul.mubr.bf16.gmra.mxu0 %v1310
      %v1350 = vpop.f32.mrf.mxu0
      %v1351 = vadd.f32 0.0, %v1350
      %v1352 = vpop.f32.mrf.mxu0
      %v1353 = vpop.f32.mrf.mxu0
      %v1354 = vpop.f32.mrf.mxu0
      %1355 = vdwg.mxu0
      %v1356 = vpack.c.bf16 %v1351, %v1351
      %1357 = vrot.lane.b32.xlu0 %v1242, 120
      %v1358 = vpop.permute.xlu0 %1357
      %1359 = vrot.lane.b32.xlu0 %v1242, 88
      %v1360 = vpop.permute.xlu0 %1359
      %v1362 = vsel %vm1246, %v1358, 0
      %v1365 = vsel %vm1246, %v1360, 0
      %1367 = vmatprep.subr.bf16.mxu0 0
      %1368 = vmatpush1.bf16.xpose.msra.mxu0 0
      %1369 = vmatprep.subr.bf16.mxu0 0
      %1370 = vmatpush1.bf16.xpose.msra.mxu0 0
      %1371 = vmatprep.subr.bf16.mxu0 0
      %1372 = vmatpush1.bf16.xpose.msra.mxu0 0
      %1373 = vmatprep.subr.bf16.mxu0 0
      %1374 = vmatpush1.bf16.xpose.msra.mxu0 0
      %1375 = vmatprep.subr.bf16.mxu0 0
      %1376 = vmatpush1.bf16.xpose.msra.mxu0 0
      %1377 = vmatprep.subr.bf16.mxu0 0
      %1378 = vmatpush1.bf16.xpose.msra.mxu0 0
      %1379 = vmatprep.subr.bf16.mxu0 0
      %1380 = vmatpush1.bf16.xpose.msra.mxu0 0
      %1381 = vmatprep.subr.bf16.mxu0 0
      %1382 = vmatpush1.bf16.xpose.msra.mxu0 %v1365
      %1383 = vmatprep.subr.bf16.mxu0 0
      %1384 = vmatpush2.bf16.xpose.msra.mxu0 0
      %1385 = vmatprep.subr.bf16.mxu0 0
      %1386 = vmatpush2.bf16.xpose.msra.mxu0 0
      %1387 = vmatprep.subr.bf16.mxu0 0
      %1388 = vmatpush2.bf16.xpose.msra.mxu0 0
      %1389 = vmatprep.subr.bf16.mxu0 0
      %1390 = vmatpush2.bf16.xpose.msra.mxu0 0
      %1391 = vmatprep.subr.bf16.mxu0 0
      %1392 = vmatpush2.bf16.xpose.msra.mxu0 0
      %1393 = vmatprep.subr.bf16.mxu0 0
      %1394 = vmatpush2.bf16.xpose.msra.mxu0 0
      %1395 = vmatprep.subr.bf16.mxu0 0
      %1396 = vmatpush2.bf16.xpose.msra.mxu0 0
      %1397 = vmatprep.subr.bf16.mxu0 0
      %1398 = vmatpush2.bf16.xpose.msra.mxu0 0
      %1399 = vmatprep.mubr.bf16.mxu0 0
      %1400 = vmatmul.mubr.bf16.gmra.mxu0 %v1362
      %v1401 = vpop.f32.mrf.mxu0
      %v1402 = vadd.f32 0.0, %v1401
      %v1403 = vpop.f32.mrf.mxu0
      %v1404 = vpop.f32.mrf.mxu0
      %v1405 = vpop.f32.mrf.mxu0
      %1406 = vdwg.mxu0
      %v1407 = vmul.f32 %v1402, 0.35355338
      %v1408 = vadd.f32 %v1407, %v1241
      %v1409 = vsel %vm1246, %v1408, -inf
      %1410 = vmax.xlane.f32.xlu0 %v1409
      %v1411 = vpop.xlane.xlu0 %1410
      %v1412 = vsub.f32 %v1408, %v1411
      %v1413 = vmul.f32 %v1412, 1.442695
      %v1414 = vpow.pop %v1413
      %v1415 = vsel %vm1246, %v1414, 0.0
      %1416 = vadd.xlane.f32.xlu0 %v1415
      %v1417 = vpop.xlane.xlu0 %1416
      %v1418 = vrcp.pop %v1417
      %v1419 = vmul.f32 %v1414, %v1418
      %v1420 = vpack.c.bf16 %v1419, %v1419
      %1421 = vrot.lane.b32.xlu0 %v1242, 56
      %v1422 = vpop.permute.xlu0 %1421
      %v1424 = vsel %vm1246, %v1420, 0
      %v1427 = vsel %vm1312, %v1422, 0
      %1429 = vmatprep.subr.bf16.mxu0 0
      %1430 = vmatpush1.bf16.msra.mxu0 0
      %1431 = vmatprep.subr.bf16.mxu0 0
      %1432 = vmatpush1.bf16.msra.mxu0 0
      %1433 = vmatprep.subr.bf16.mxu0 0
      %1434 = vmatpush1.bf16.msra.mxu0 0
      %1435 = vmatprep.subr.bf16.mxu0 0
      %1436 = vmatpush1.bf16.msra.mxu0 0
      %1437 = vmatprep.subr.bf16.mxu0 0
      %1438 = vmatpush1.bf16.msra.mxu0 0
      %1439 = vmatprep.subr.bf16.mxu0 0
      %1440 = vmatpush1.bf16.msra.mxu0 0
      %1441 = vmatprep.subr.bf16.mxu0 0
      %1442 = vmatpush1.bf16.msra.mxu0 0
      %1443 = vmatprep.subr.bf16.mxu0 0
      %1444 = vmatpush1.bf16.msra.mxu0 %v1427
      %1445 = vmatprep.subr.bf16.mxu0 0
      %1446 = vmatpush2.bf16.msra.mxu0 0
      %1447 = vmatprep.subr.bf16.mxu0 0
      %1448 = vmatpush2.bf16.msra.mxu0 0
      %1449 = vmatprep.subr.bf16.mxu0 0
      %1450 = vmatpush2.bf16.msra.mxu0 0
      %1451 = vmatprep.subr.bf16.mxu0 0
      %1452 = vmatpush2.bf16.msra.mxu0 0
      %1453 = vmatprep.subr.bf16.mxu0 0
      %1454 = vmatpush2.bf16.msra.mxu0 0
      %1455 = vmatprep.subr.bf16.mxu0 0
      %1456 = vmatpush2.bf16.msra.mxu0 0
      %1457 = vmatprep.subr.bf16.mxu0 0
      %1458 = vmatpush2.bf16.msra.mxu0 0
      %1459 = vmatprep.subr.bf16.mxu0 0
      %1460 = vmatpush2.bf16.msra.mxu0 0
      %1461 = vmatprep.mubr.bf16.mxu0 0
      %1462 = vmatmul.mubr.bf16.gmra.mxu0 %v1424
      %v1463 = vpop.f32.mrf.mxu0
      %v1464 = vadd.f32 0.0, %v1463
      %v1465 = vpop.f32.mrf.mxu0
      %v1466 = vpop.f32.mrf.mxu0
      %v1467 = vpop.f32.mrf.mxu0
      %1468 = vdwg.mxu0
      %v1469 = vpack.c.bf16 %v1464, %v1464
      %v1474 = vunpack.c.l.b16 %v1236
      %v1475 = vunpack.c.l.b16 %v1237
      %v1476 = vunpack.c.l.b16 %v1238
      %v1477 = vunpack.c.l.b16 %v1239
      %v1478 = vpack.c.b16 %v1475, %v1474
      %v1479 = vpack.c.b16 %v1477, %v1476
      %1480 = vrot.lane.b32.xlu0 %v1478, 120
      %v1481 = vpop.permute.xlu0 %1480
      %1482 = vrot.lane.b32.xlu0 %v1479, 120
      %v1483 = vpop.permute.xlu0 %1482
      %v1485 = vsel %vm1246, %v1469, 0
      %v1488 = vsel %vm1246, %v1481, 0
      %v1491 = vsel %vm1246, %v1483, 0
      %1493 = vmatprep.subr.bf16.mxu0 0
      %1494 = vmatpush1.bf16.xpose.msra.mxu0 0
      %1495 = vmatprep.subr.bf16.mxu0 0
      %1496 = vmatpush1.bf16.xpose.msra.mxu0 0
      %1497 = vmatprep.subr.bf16.mxu0 0
      %1498 = vmatpush1.bf16.xpose.msra.mxu0 0
      %1499 = vmatprep.subr.bf16.mxu0 0
      %1500 = vmatpush1.bf16.xpose.msra.mxu0 0
      %1501 = vmatprep.subr.bf16.mxu0 0
      %1502 = vmatpush1.bf16.xpose.msra.mxu0 0
      %1503 = vmatprep.subr.bf16.mxu0 0
      %1504 = vmatpush1.bf16.xpose.msra.mxu0 0
      %1505 = vmatprep.subr.bf16.mxu0 0
      %1506 = vmatpush1.bf16.xpose.msra.mxu0 %v1491
      %1507 = vmatprep.subr.bf16.mxu0 0
      %1508 = vmatpush1.bf16.xpose.msra.mxu0 %v1488
      %1509 = vmatprep.subr.bf16.mxu0 0
      %1510 = vmatpush2.bf16.xpose.msra.mxu0 0
      %1511 = vmatprep.subr.bf16.mxu0 0
      %1512 = vmatpush2.bf16.xpose.msra.mxu0 0
      %1513 = vmatprep.subr.bf16.mxu0 0
      %1514 = vmatpush2.bf16.xpose.msra.mxu0 0
      %1515 = vmatprep.subr.bf16.mxu0 0
      %1516 = vmatpush2.bf16.xpose.msra.mxu0 0
      %1517 = vmatprep.subr.bf16.mxu0 0
      %1518 = vmatpush2.bf16.xpose.msra.mxu0 0
      %1519 = vmatprep.subr.bf16.mxu0 0
      %1520 = vmatpush2.bf16.xpose.msra.mxu0 0
      %1521 = vmatprep.subr.bf16.mxu0 0
      %1522 = vmatpush2.bf16.xpose.msra.mxu0 0
      %1523 = vmatprep.subr.bf16.mxu0 0
      %1524 = vmatpush2.bf16.xpose.msra.mxu0 0
      %1525 = vmatprep.mubr.bf16.mxu0 0
      %1526 = vmatmul.mubr.bf16.gmra.mxu0 %v1485
      %v1527 = vpop.f32.mrf.mxu0
      %v1528 = vadd.f32 0.0, %v1527
      %v1529 = vpop.f32.mrf.mxu0
      %v1530 = vpop.f32.mrf.mxu0
      %v1531 = vpop.f32.mrf.mxu0
      %1532 = vdwg.mxu0
      %v1534 = vsel %vm1246, %v1356, 0
      %v1537 = vsel %vm1246, %v1478, 0
      %v1540 = vsel %vm1246, %v1479, 0
      %1542 = vmatprep.subr.bf16.mxu0 0
      %1543 = vmatpush1.bf16.xpose.msra.mxu0 0
      %1544 = vmatprep.subr.bf16.mxu0 0
      %1545 = vmatpush1.bf16.xpose.msra.mxu0 0
      %1546 = vmatprep.subr.bf16.mxu0 0
      %1547 = vmatpush1.bf16.xpose.msra.mxu0 0
      %1548 = vmatprep.subr.bf16.mxu0 0
      %1549 = vmatpush1.bf16.xpose.msra.mxu0 0
      %1550 = vmatprep.subr.bf16.mxu0 0
      %1551 = vmatpush1.bf16.xpose.msra.mxu0 0
      %1552 = vmatprep.subr.bf16.mxu0 0
      %1553 = vmatpush1.bf16.xpose.msra.mxu0 0
      %1554 = vmatprep.subr.bf16.mxu0 0
      %1555 = vmatpush1.bf16.xpose.msra.mxu0 %v1540
      %1556 = vmatprep.subr.bf16.mxu0 0
      %1557 = vmatpush1.bf16.xpose.msra.mxu0 %v1537
      %1558 = vmatprep.subr.bf16.mxu0 0
      %1559 = vmatpush2.bf16.xpose.msra.mxu0 0
      %1560 = vmatprep.subr.bf16.mxu0 0
      %1561 = vmatpush2.bf16.xpose.msra.mxu0 0
      %1562 = vmatprep.subr.bf16.mxu0 0
      %1563 = vmatpush2.bf16.xpose.msra.mxu0 0
      %1564 = vmatprep.subr.bf16.mxu0 0
      %1565 = vmatpush2.bf16.xpose.msra.mxu0 0
      %1566 = vmatprep.subr.bf16.mxu0 0
      %1567 = vmatpush2.bf16.xpose.msra.mxu0 0
      %1568 = vmatprep.subr.bf16.mxu0 0
      %1569 = vmatpush2.bf16.xpose.msra.mxu0 0
      %1570 = vmatprep.subr.bf16.mxu0 0
      %1571 = vmatpush2.bf16.xpose.msra.mxu0 0
      %1572 = vmatprep.subr.bf16.mxu0 0
      %1573 = vmatpush2.bf16.xpose.msra.mxu0 0
      %1574 = vmatprep.mubr.bf16.mxu0 0
      %1575 = vmatmul.mubr.bf16.gmra.mxu0 %v1534
      %v1576 = vpop.f32.mrf.mxu0
      %v1577 = vadd.f32 %v1528, %v1576
      %v1578 = vpop.f32.mrf.mxu0
      %v1579 = vpop.f32.mrf.mxu0
      %v1580 = vpop.f32.mrf.mxu0
      %1581 = vdwg.mxu0
      %1582 = vrot.lane.b32.xlu0 %v1242, 112
      %v1583 = vpop.permute.xlu0 %1582
      %1584 = vrot.lane.b32.xlu0 %v1242, 80
      %v1585 = vpop.permute.xlu0 %1584
      %v1587 = vsel %vm1246, %v1583, 0
      %v1590 = vsel %vm1246, %v1585, 0
      %1592 = vmatprep.subr.bf16.mxu0 0
      %1593 = vmatpush1.bf16.xpose.msra.mxu0 0
      %1594 = vmatprep.subr.bf16.mxu0 0
      %1595 = vmatpush1.bf16.xpose.msra.mxu0 0
      %1596 = vmatprep.subr.bf16.mxu0 0
      %1597 = vmatpush1.bf16.xpose.msra.mxu0 0
      %1598 = vmatprep.subr.bf16.mxu0 0
      %1599 = vmatpush1.bf16.xpose.msra.mxu0 0
      %1600 = vmatprep.subr.bf16.mxu0 0
      %1601 = vmatpush1.bf16.xpose.msra.mxu0 0
      %1602 = vmatprep.subr.bf16.mxu0 0
      %1603 = vmatpush1.bf16.xpose.msra.mxu0 0
      %1604 = vmatprep.subr.bf16.mxu0 0
      %1605 = vmatpush1.bf16.xpose.msra.mxu0 0
      %1606 = vmatprep.subr.bf16.mxu0 0
      %1607 = vmatpush1.bf16.xpose.msra.mxu0 %v1590
      %1608 = vmatprep.subr.bf16.mxu0 0
      %1609 = vmatpush2.bf16.xpose.msra.mxu0 0
      %1610 = vmatprep.subr.bf16.mxu0 0
      %1611 = vmatpush2.bf16.xpose.msra.mxu0 0
      %1612 = vmatprep.subr.bf16.mxu0 0
      %1613 = vmatpush2.bf16.xpose.msra.mxu0 0
      %1614 = vmatprep.subr.bf16.mxu0 0
      %1615 = vmatpush2.bf16.xpose.msra.mxu0 0
      %1616 = vmatprep.subr.bf16.mxu0 0
      %1617 = vmatpush2.bf16.xpose.msra.mxu0 0
      %1618 = vmatprep.subr.bf16.mxu0 0
      %1619 = vmatpush2.bf16.xpose.msra.mxu0 0
      %1620 = vmatprep.subr.bf16.mxu0 0
      %1621 = vmatpush2.bf16.xpose.msra.mxu0 0
      %1622 = vmatprep.subr.bf16.mxu0 0
      %1623 = vmatpush2.bf16.xpose.msra.mxu0 0
      %1624 = vmatprep.mubr.bf16.mxu0 0
      %1625 = vmatmul.mubr.bf16.gmra.mxu0 %v1587
      %v1626 = vpop.f32.mrf.mxu0
      %v1627 = vadd.f32 0.0, %v1626
      %v1628 = vpop.f32.mrf.mxu0
      %v1629 = vpop.f32.mrf.mxu0
      %v1630 = vpop.f32.mrf.mxu0
      %1631 = vdwg.mxu0
      %v1632 = vmul.f32 %v1627, 0.35355338
      %v1633 = vadd.f32 %v1632, %v1241
      %v1634 = vsel %vm1246, %v1633, -inf
      %1635 = vmax.xlane.f32.xlu0 %v1634
      %v1636 = vpop.xlane.xlu0 %1635
      %v1637 = vsub.f32 %v1633, %v1636
      %v1638 = vmul.f32 %v1637, 1.442695
      %v1639 = vpow.pop %v1638
      %v1640 = vsel %vm1246, %v1639, 0.0
      %1641 = vadd.xlane.f32.xlu0 %v1640
      %v1642 = vpop.xlane.xlu0 %1641
      %v1643 = vrcp.pop %v1642
      %v1644 = vmul.f32 %v1639, %v1643
      %v1645 = vpack.c.bf16 %v1644, %v1644
      %1646 = vrot.lane.b32.xlu0 %v1242, 48
      %v1647 = vpop.permute.xlu0 %1646
      %v1649 = vsel %vm1246, %v1645, 0
      %v1652 = vsel %vm1312, %v1647, 0
      %1654 = vmatprep.subr.bf16.mxu0 0
      %1655 = vmatpush1.bf16.msra.mxu0 0
      %1656 = vmatprep.subr.bf16.mxu0 0
      %1657 = vmatpush1.bf16.msra.mxu0 0
      %1658 = vmatprep.subr.bf16.mxu0 0
      %1659 = vmatpush1.bf16.msra.mxu0 0
      %1660 = vmatprep.subr.bf16.mxu0 0
      %1661 = vmatpush1.bf16.msra.mxu0 0
      %1662 = vmatprep.subr.bf16.mxu0 0
      %1663 = vmatpush1.bf16.msra.mxu0 0
      %1664 = vmatprep.subr.bf16.mxu0 0
      %1665 = vmatpush1.bf16.msra.mxu0 0
      %1666 = vmatprep.subr.bf16.mxu0 0
      %1667 = vmatpush1.bf16.msra.mxu0 0
      %1668 = vmatprep.subr.bf16.mxu0 0
      %1669 = vmatpush1.bf16.msra.mxu0 %v1652
      %1670 = vmatprep.subr.bf16.mxu0 0
      %1671 = vmatpush2.bf16.msra.mxu0 0
      %1672 = vmatprep.subr.bf16.mxu0 0
      %1673 = vmatpush2.bf16.msra.mxu0 0
      %1674 = vmatprep.subr.bf16.mxu0 0
      %1675 = vmatpush2.bf16.msra.mxu0 0
      %1676 = vmatprep.subr.bf16.mxu0 0
      %1677 = vmatpush2.bf16.msra.mxu0 0
      %1678 = vmatprep.subr.bf16.mxu0 0
      %1679 = vmatpush2.bf16.msra.mxu0 0
      %1680 = vmatprep.subr.bf16.mxu0 0
      %1681 = vmatpush2.bf16.msra.mxu0 0
      %1682 = vmatprep.subr.bf16.mxu0 0
      %1683 = vmatpush2.bf16.msra.mxu0 0
      %1684 = vmatprep.subr.bf16.mxu0 0
      %1685 = vmatpush2.bf16.msra.mxu0 0
      %1686 = vmatprep.mubr.bf16.mxu0 0
      %1687 = vmatmul.mubr.bf16.gmra.mxu0 %v1649
      %v1688 = vpop.f32.mrf.mxu0
      %v1689 = vadd.f32 0.0, %v1688
      %v1690 = vpop.f32.mrf.mxu0
      %v1691 = vpop.f32.mrf.mxu0
      %v1692 = vpop.f32.mrf.mxu0
      %1693 = vdwg.mxu0
      %v1694 = vpack.c.bf16 %v1689, %v1689
      %1695 = vrot.lane.b32.xlu0 %v1478, 112
      %v1696 = vpop.permute.xlu0 %1695
      %1697 = vrot.lane.b32.xlu0 %v1479, 112
      %v1698 = vpop.permute.xlu0 %1697
      %v1700 = vsel %vm1246, %v1694, 0
      %v1703 = vsel %vm1246, %v1696, 0
      %v1706 = vsel %vm1246, %v1698, 0
      %1708 = vmatprep.subr.bf16.mxu0 0
      %1709 = vmatpush1.bf16.xpose.msra.mxu0 0
      %1710 = vmatprep.subr.bf16.mxu0 0
      %1711 = vmatpush1.bf16.xpose.msra.mxu0 0
      %1712 = vmatprep.subr.bf16.mxu0 0
      %1713 = vmatpush1.bf16.xpose.msra.mxu0 0
      %1714 = vmatprep.subr.bf16.mxu0 0
      %1715 = vmatpush1.bf16.xpose.msra.mxu0 0
      %1716 = vmatprep.subr.bf16.mxu0 0
      %1717 = vmatpush1.bf16.xpose.msra.mxu0 0
      %1718 = vmatprep.subr.bf16.mxu0 0
      %1719 = vmatpush1.bf16.xpose.msra.mxu0 0
      %1720 = vmatprep.subr.bf16.mxu0 0
      %1721 = vmatpush1.bf16.xpose.msra.mxu0 %v1706
      %1722 = vmatprep.subr.bf16.mxu0 0
      %1723 = vmatpush1.bf16.xpose.msra.mxu0 %v1703
      %1724 = vmatprep.subr.bf16.mxu0 0
      %1725 = vmatpush2.bf16.xpose.msra.mxu0 0
      %1726 = vmatprep.subr.bf16.mxu0 0
      %1727 = vmatpush2.bf16.xpose.msra.mxu0 0
      %1728 = vmatprep.subr.bf16.mxu0 0
      %1729 = vmatpush2.bf16.xpose.msra.mxu0 0
      %1730 = vmatprep.subr.bf16.mxu0 0
      %1731 = vmatpush2.bf16.xpose.msra.mxu0 0
      %1732 = vmatprep.subr.bf16.mxu0 0
      %1733 = vmatpush2.bf16.xpose.msra.mxu0 0
      %1734 = vmatprep.subr.bf16.mxu0 0
      %1735 = vmatpush2.bf16.xpose.msra.mxu0 0
      %1736 = vmatprep.subr.bf16.mxu0 0
      %1737 = vmatpush2.bf16.xpose.msra.mxu0 0
      %1738 = vmatprep.subr.bf16.mxu0 0
      %1739 = vmatpush2.bf16.xpose.msra.mxu0 0
      %1740 = vmatprep.mubr.bf16.mxu0 0
      %1741 = vmatmul.mubr.bf16.gmra.mxu0 %v1700
      %v1742 = vpop.f32.mrf.mxu0
      %v1743 = vadd.f32 0.0, %v1742
      %v1744 = vpop.f32.mrf.mxu0
      %v1745 = vpop.f32.mrf.mxu0
      %v1746 = vpop.f32.mrf.mxu0
      %1747 = vdwg.mxu0
      %v1748 = vadd.f32 %v1577, %v1743
      %1749 = vrot.lane.b32.xlu0 %v1242, 104
      %v1750 = vpop.permute.xlu0 %1749
      %1751 = vrot.lane.b32.xlu0 %v1242, 72
      %v1752 = vpop.permute.xlu0 %1751
      %v1754 = vsel %vm1246, %v1750, 0
      %v1757 = vsel %vm1246, %v1752, 0
      %1759 = vmatprep.subr.bf16.mxu0 0
      %1760 = vmatpush1.bf16.xpose.msra.mxu0 0
      %1761 = vmatprep.subr.bf16.mxu0 0
      %1762 = vmatpush1.bf16.xpose.msra.mxu0 0
      %1763 = vmatprep.subr.bf16.mxu0 0
      %1764 = vmatpush1.bf16.xpose.msra.mxu0 0
      %1765 = vmatprep.subr.bf16.mxu0 0
      %1766 = vmatpush1.bf16.xpose.msra.mxu0 0
      %1767 = vmatprep.subr.bf16.mxu0 0
      %1768 = vmatpush1.bf16.xpose.msra.mxu0 0
      %1769 = vmatprep.subr.bf16.mxu0 0
      %1770 = vmatpush1.bf16.xpose.msra.mxu0 0
      %1771 = vmatprep.subr.bf16.mxu0 0
      %1772 = vmatpush1.bf16.xpose.msra.mxu0 0
      %1773 = vmatprep.subr.bf16.mxu0 0
      %1774 = vmatpush1.bf16.xpose.msra.mxu0 %v1757
      %1775 = vmatprep.subr.bf16.mxu0 0
      %1776 = vmatpush2.bf16.xpose.msra.mxu0 0
      %1777 = vmatprep.subr.bf16.mxu0 0
      %1778 = vmatpush2.bf16.xpose.msra.mxu0 0
      %1779 = vmatprep.subr.bf16.mxu0 0
      %1780 = vmatpush2.bf16.xpose.msra.mxu0 0
      %1781 = vmatprep.subr.bf16.mxu0 0
      %1782 = vmatpush2.bf16.xpose.msra.mxu0 0
      %1783 = vmatprep.subr.bf16.mxu0 0
      %1784 = vmatpush2.bf16.xpose.msra.mxu0 0
      %1785 = vmatprep.subr.bf16.mxu0 0
      %1786 = vmatpush2.bf16.xpose.msra.mxu0 0
      %1787 = vmatprep.subr.bf16.mxu0 0
      %1788 = vmatpush2.bf16.xpose.msra.mxu0 0
      %1789 = vmatprep.subr.bf16.mxu0 0
      %1790 = vmatpush2.bf16.xpose.msra.mxu0 0
      %1791 = vmatprep.mubr.bf16.mxu0 0
      %1792 = vmatmul.mubr.bf16.gmra.mxu0 %v1754
      %v1793 = vpop.f32.mrf.mxu0
      %v1794 = vadd.f32 0.0, %v1793
      %v1795 = vpop.f32.mrf.mxu0
      %v1796 = vpop.f32.mrf.mxu0
      %v1797 = vpop.f32.mrf.mxu0
      %1798 = vdwg.mxu0
      %v1799 = vmul.f32 %v1794, 0.35355338
      %v1800 = vadd.f32 %v1799, %v1241
      %v1801 = vsel %vm1246, %v1800, -inf
      %1802 = vmax.xlane.f32.xlu0 %v1801
      %v1803 = vpop.xlane.xlu0 %1802
      %v1804 = vsub.f32 %v1800, %v1803
      %v1805 = vmul.f32 %v1804, 1.442695
      %v1806 = vpow.pop %v1805
      %v1807 = vsel %vm1246, %v1806, 0.0
      %1808 = vadd.xlane.f32.xlu0 %v1807
      %v1809 = vpop.xlane.xlu0 %1808
      %v1810 = vrcp.pop %v1809
      %v1811 = vmul.f32 %v1806, %v1810
      %v1812 = vpack.c.bf16 %v1811, %v1811
      %1813 = vrot.lane.b32.xlu0 %v1242, 40
      %v1814 = vpop.permute.xlu0 %1813
      %v1816 = vsel %vm1246, %v1812, 0
      %v1819 = vsel %vm1312, %v1814, 0
      %1821 = vmatprep.subr.bf16.mxu0 0
      %1822 = vmatpush1.bf16.msra.mxu0 0
      %1823 = vmatprep.subr.bf16.mxu0 0
      %1824 = vmatpush1.bf16.msra.mxu0 0
      %1825 = vmatprep.subr.bf16.mxu0 0
      %1826 = vmatpush1.bf16.msra.mxu0 0
      %1827 = vmatprep.subr.bf16.mxu0 0
      %1828 = vmatpush1.bf16.msra.mxu0 0
      %1829 = vmatprep.subr.bf16.mxu0 0
      %1830 = vmatpush1.bf16.msra.mxu0 0
      %1831 = vmatprep.subr.bf16.mxu0 0
      %1832 = vmatpush1.bf16.msra.mxu0 0
      %1833 = vmatprep.subr.bf16.mxu0 0
      %1834 = vmatpush1.bf16.msra.mxu0 0
      %1835 = vmatprep.subr.bf16.mxu0 0
      %1836 = vmatpush1.bf16.msra.mxu0 %v1819
      %1837 = vmatprep.subr.bf16.mxu0 0
      %1838 = vmatpush2.bf16.msra.mxu0 0
      %1839 = vmatprep.subr.bf16.mxu0 0
      %1840 = vmatpush2.bf16.msra.mxu0 0
      %1841 = vmatprep.subr.bf16.mxu0 0
      %1842 = vmatpush2.bf16.msra.mxu0 0
      %1843 = vmatprep.subr.bf16.mxu0 0
      %1844 = vmatpush2.bf16.msra.mxu0 0
      %1845 = vmatprep.subr.bf16.mxu0 0
      %1846 = vmatpush2.bf16.msra.mxu0 0
      %1847 = vmatprep.subr.bf16.mxu0 0
      %1848 = vmatpush2.bf16.msra.mxu0 0
      %1849 = vmatprep.subr.bf16.mxu0 0
      %1850 = vmatpush2.bf16.msra.mxu0 0
      %1851 = vmatprep.subr.bf16.mxu0 0
      %1852 = vmatpush2.bf16.msra.mxu0 0
      %1853 = vmatprep.mubr.bf16.mxu0 0
      %1854 = vmatmul.mubr.bf16.gmra.mxu0 %v1816
      %v1855 = vpop.f32.mrf.mxu0
      %v1856 = vadd.f32 0.0, %v1855
      %v1857 = vpop.f32.mrf.mxu0
      %v1858 = vpop.f32.mrf.mxu0
      %v1859 = vpop.f32.mrf.mxu0
      %1860 = vdwg.mxu0
      %v1861 = vpack.c.bf16 %v1856, %v1856
      %1862 = vrot.lane.b32.xlu0 %v1478, 104
      %v1863 = vpop.permute.xlu0 %1862
      %1864 = vrot.lane.b32.xlu0 %v1479, 104
      %v1865 = vpop.permute.xlu0 %1864
      %v1867 = vsel %vm1246, %v1861, 0
      %v1870 = vsel %vm1246, %v1863, 0
      %v1873 = vsel %vm1246, %v1865, 0
      %1875 = vmatprep.subr.bf16.mxu0 0
      %1876 = vmatpush1.bf16.xpose.msra.mxu0 0
      %1877 = vmatprep.subr.bf16.mxu0 0
      %1878 = vmatpush1.bf16.xpose.msra.mxu0 0
      %1879 = vmatprep.subr.bf16.mxu0 0
      %1880 = vmatpush1.bf16.xpose.msra.mxu0 0
      %1881 = vmatprep.subr.bf16.mxu0 0
      %1882 = vmatpush1.bf16.xpose.msra.mxu0 0
      %1883 = vmatprep.subr.bf16.mxu0 0
      %1884 = vmatpush1.bf16.xpose.msra.mxu0 0
      %1885 = vmatprep.subr.bf16.mxu0 0
      %1886 = vmatpush1.bf16.xpose.msra.mxu0 0
      %1887 = vmatprep.subr.bf16.mxu0 0
      %1888 = vmatpush1.bf16.xpose.msra.mxu0 %v1873
      %1889 = vmatprep.subr.bf16.mxu0 0
      %1890 = vmatpush1.bf16.xpose.msra.mxu0 %v1870
      %1891 = vmatprep.subr.bf16.mxu0 0
      %1892 = vmatpush2.bf16.xpose.msra.mxu0 0
      %1893 = vmatprep.subr.bf16.mxu0 0
      %1894 = vmatpush2.bf16.xpose.msra.mxu0 0
      %1895 = vmatprep.subr.bf16.mxu0 0
      %1896 = vmatpush2.bf16.xpose.msra.mxu0 0
      %1897 = vmatprep.subr.bf16.mxu0 0
      %1898 = vmatpush2.bf16.xpose.msra.mxu0 0
      %1899 = vmatprep.subr.bf16.mxu0 0
      %1900 = vmatpush2.bf16.xpose.msra.mxu0 0
      %1901 = vmatprep.subr.bf16.mxu0 0
      %1902 = vmatpush2.bf16.xpose.msra.mxu0 0
      %1903 = vmatprep.subr.bf16.mxu0 0
      %1904 = vmatpush2.bf16.xpose.msra.mxu0 0
      %1905 = vmatprep.subr.bf16.mxu0 0
      %1906 = vmatpush2.bf16.xpose.msra.mxu0 0
      %1907 = vmatprep.mubr.bf16.mxu0 0
      %1908 = vmatmul.mubr.bf16.gmra.mxu0 %v1867
      %v1909 = vpop.f32.mrf.mxu0
      %v1910 = vadd.f32 0.0, %v1909
      %v1911 = vpop.f32.mrf.mxu0
      %v1912 = vpop.f32.mrf.mxu0
      %v1913 = vpop.f32.mrf.mxu0
      %1914 = vdwg.mxu0
      %v1915 = vadd.f32 %v1748, %v1910
      %vm1916 = vcmp.eq.f32.partialorder %v1068, 0.0
      %v1917 = vsel %vm1916, -1e+09, 0.0
      %v1918 = vpack.c.bf16 %v1233, %v1233
      %1920 = vrot.lane.b32.xlu0 %v1918, 96
      %v1921 = vpop.permute.xlu0 %1920
      %v1923 = vsel %vm1246, %v1918, 0
      %v1926 = vsel %vm1246, %v1921, 0
      %1928 = vmatprep.subr.bf16.mxu0 0
      %1929 = vmatpush1.bf16.xpose.msra.mxu0 0
      %1930 = vmatprep.subr.bf16.mxu0 0
      %1931 = vmatpush1.bf16.xpose.msra.mxu0 0
      %1932 = vmatprep.subr.bf16.mxu0 0
      %1933 = vmatpush1.bf16.xpose.msra.mxu0 0
      %1934 = vmatprep.subr.bf16.mxu0 0
      %1935 = vmatpush1.bf16.xpose.msra.mxu0 0
      %1936 = vmatprep.subr.bf16.mxu0 0
      %1937 = vmatpush1.bf16.xpose.msra.mxu0 0
      %1938 = vmatprep.subr.bf16.mxu0 0
      %1939 = vmatpush1.bf16.xpose.msra.mxu0 0
      %1940 = vmatprep.subr.bf16.mxu0 0
      %1941 = vmatpush1.bf16.xpose.msra.mxu0 0
      %1942 = vmatprep.subr.bf16.mxu0 0
      %1943 = vmatpush1.bf16.xpose.msra.mxu0 %v1926
      %1944 = vmatprep.subr.bf16.mxu0 0
      %1945 = vmatpush2.bf16.xpose.msra.mxu0 0
      %1946 = vmatprep.subr.bf16.mxu0 0
      %1947 = vmatpush2.bf16.xpose.msra.mxu0 0
      %1948 = vmatprep.subr.bf16.mxu0 0
      %1949 = vmatpush2.bf16.xpose.msra.mxu0 0
      %1950 = vmatprep.subr.bf16.mxu0 0
      %1951 = vmatpush2.bf16.xpose.msra.mxu0 0
      %1952 = vmatprep.subr.bf16.mxu0 0
      %1953 = vmatpush2.bf16.xpose.msra.mxu0 0
      %1954 = vmatprep.subr.bf16.mxu0 0
      %1955 = vmatpush2.bf16.xpose.msra.mxu0 0
      %1956 = vmatprep.subr.bf16.mxu0 0
      %1957 = vmatpush2.bf16.xpose.msra.mxu0 0
      %1958 = vmatprep.subr.bf16.mxu0 0
      %1959 = vmatpush2.bf16.xpose.msra.mxu0 0
      %1960 = vmatprep.mubr.bf16.mxu0 0
      %1961 = vmatmul.mubr.bf16.gmra.mxu0 %v1923
      %v1962 = vpop.f32.mrf.mxu0
      %v1963 = vadd.f32 0.0, %v1962
      %v1964 = vpop.f32.mrf.mxu0
      %v1965 = vpop.f32.mrf.mxu0
      %v1966 = vpop.f32.mrf.mxu0
      %1967 = vdwg.mxu0
      %v1968 = vmul.f32 %v1963, 0.35355338
      %v1969 = vadd.f32 %v1968, %v1917
      %v1970 = vsel %vm1246, %v1969, -inf
      %1971 = vmax.xlane.f32.xlu0 %v1970
      %v1972 = vpop.xlane.xlu0 %1971
      %v1973 = vsub.f32 %v1969, %v1972
      %v1974 = vmul.f32 %v1973, 1.442695
      %v1975 = vpow.pop %v1974
      %v1976 = vsel %vm1246, %v1975, 0.0
      %1977 = vadd.xlane.f32.xlu0 %v1976
      %v1978 = vpop.xlane.xlu0 %1977
      %v1979 = vrcp.pop %v1978
      %v1980 = vmul.f32 %v1975, %v1979
      %v1981 = vpack.c.bf16 %v1980, %v1980
      %1982 = vrot.lane.b32.xlu0 %v1918, 64
      %v1983 = vpop.permute.xlu0 %1982
      %v1985 = vsel %vm1246, %v1981, 0
      %v1988 = vsel %vm1312, %v1983, 0
      %1990 = vmatprep.subr.bf16.mxu0 0
      %1991 = vmatpush1.bf16.msra.mxu0 0
      %1992 = vmatprep.subr.bf16.mxu0 0
      %1993 = vmatpush1.bf16.msra.mxu0 0
      %1994 = vmatprep.subr.bf16.mxu0 0
      %1995 = vmatpush1.bf16.msra.mxu0 0
      %1996 = vmatprep.subr.bf16.mxu0 0
      %1997 = vmatpush1.bf16.msra.mxu0 0
      %1998 = vmatprep.subr.bf16.mxu0 0
      %1999 = vmatpush1.bf16.msra.mxu0 0
      %2000 = vmatprep.subr.bf16.mxu0 0
      %2001 = vmatpush1.bf16.msra.mxu0 0
      %2002 = vmatprep.subr.bf16.mxu0 0
      %2003 = vmatpush1.bf16.msra.mxu0 0
      %2004 = vmatprep.subr.bf16.mxu0 0
      %2005 = vmatpush1.bf16.msra.mxu0 %v1988
      %2006 = vmatprep.subr.bf16.mxu0 0
      %2007 = vmatpush2.bf16.msra.mxu0 0
      %2008 = vmatprep.subr.bf16.mxu0 0
      %2009 = vmatpush2.bf16.msra.mxu0 0
      %2010 = vmatprep.subr.bf16.mxu0 0
      %2011 = vmatpush2.bf16.msra.mxu0 0
      %2012 = vmatprep.subr.bf16.mxu0 0
      %2013 = vmatpush2.bf16.msra.mxu0 0
      %2014 = vmatprep.subr.bf16.mxu0 0
      %2015 = vmatpush2.bf16.msra.mxu0 0
      %2016 = vmatprep.subr.bf16.mxu0 0
      %2017 = vmatpush2.bf16.msra.mxu0 0
      %2018 = vmatprep.subr.bf16.mxu0 0
      %2019 = vmatpush2.bf16.msra.mxu0 0
      %2020 = vmatprep.subr.bf16.mxu0 0
      %2021 = vmatpush2.bf16.msra.mxu0 0
      %2022 = vmatprep.mubr.bf16.mxu0 0
      %2023 = vmatmul.mubr.bf16.gmra.mxu0 %v1985
      %v2024 = vpop.f32.mrf.mxu0
      %v2025 = vadd.f32 0.0, %v2024
      %v2026 = vpop.f32.mrf.mxu0
      %v2027 = vpop.f32.mrf.mxu0
      %v2028 = vpop.f32.mrf.mxu0
      %2029 = vdwg.mxu0
      %v2030 = vpack.c.bf16 %v2025, %v2025
      %2031 = vrot.lane.b32.xlu0 %v1918, 120
      %v2032 = vpop.permute.xlu0 %2031
      %2033 = vrot.lane.b32.xlu0 %v1918, 88
      %v2034 = vpop.permute.xlu0 %2033
      %v2036 = vsel %vm1246, %v2032, 0
      %v2039 = vsel %vm1246, %v2034, 0
      %2041 = vmatprep.subr.bf16.mxu0 0
      %2042 = vmatpush1.bf16.xpose.msra.mxu0 0
      %2043 = vmatprep.subr.bf16.mxu0 0
      %2044 = vmatpush1.bf16.xpose.msra.mxu0 0
      %2045 = vmatprep.subr.bf16.mxu0 0
      %2046 = vmatpush1.bf16.xpose.msra.mxu0 0
      %2047 = vmatprep.subr.bf16.mxu0 0
      %2048 = vmatpush1.bf16.xpose.msra.mxu0 0
      %2049 = vmatprep.subr.bf16.mxu0 0
      %2050 = vmatpush1.bf16.xpose.msra.mxu0 0
      %2051 = vmatprep.subr.bf16.mxu0 0
      %2052 = vmatpush1.bf16.xpose.msra.mxu0 0
      %2053 = vmatprep.subr.bf16.mxu0 0
      %2054 = vmatpush1.bf16.xpose.msra.mxu0 0
      %2055 = vmatprep.subr.bf16.mxu0 0
      %2056 = vmatpush1.bf16.xpose.msra.mxu0 %v2039
      %2057 = vmatprep.subr.bf16.mxu0 0
      %2058 = vmatpush2.bf16.xpose.msra.mxu0 0
      %2059 = vmatprep.subr.bf16.mxu0 0
      %2060 = vmatpush2.bf16.xpose.msra.mxu0 0
      %2061 = vmatprep.subr.bf16.mxu0 0
      %2062 = vmatpush2.bf16.xpose.msra.mxu0 0
      %2063 = vmatprep.subr.bf16.mxu0 0
      %2064 = vmatpush2.bf16.xpose.msra.mxu0 0
      %2065 = vmatprep.subr.bf16.mxu0 0
      %2066 = vmatpush2.bf16.xpose.msra.mxu0 0
      %2067 = vmatprep.subr.bf16.mxu0 0
      %2068 = vmatpush2.bf16.xpose.msra.mxu0 0
      %2069 = vmatprep.subr.bf16.mxu0 0
      %2070 = vmatpush2.bf16.xpose.msra.mxu0 0
      %2071 = vmatprep.subr.bf16.mxu0 0
      %2072 = vmatpush2.bf16.xpose.msra.mxu0 0
      %2073 = vmatprep.mubr.bf16.mxu0 0
      %2074 = vmatmul.mubr.bf16.gmra.mxu0 %v2036
      %v2075 = vpop.f32.mrf.mxu0
      %v2076 = vadd.f32 0.0, %v2075
      %v2077 = vpop.f32.mrf.mxu0
      %v2078 = vpop.f32.mrf.mxu0
      %v2079 = vpop.f32.mrf.mxu0
      %2080 = vdwg.mxu0
      %v2081 = vmul.f32 %v2076, 0.35355338
      %v2082 = vadd.f32 %v2081, %v1917
      %v2083 = vsel %vm1246, %v2082, -inf
      %2084 = vmax.xlane.f32.xlu0 %v2083
      %v2085 = vpop.xlane.xlu0 %2084
      %v2086 = vsub.f32 %v2082, %v2085
      %v2087 = vmul.f32 %v2086, 1.442695
      %v2088 = vpow.pop %v2087
      %v2089 = vsel %vm1246, %v2088, 0.0
      %2090 = vadd.xlane.f32.xlu0 %v2089
      %v2091 = vpop.xlane.xlu0 %2090
      %v2092 = vrcp.pop %v2091
      %v2093 = vmul.f32 %v2088, %v2092
      %v2094 = vpack.c.bf16 %v2093, %v2093
      %2095 = vrot.lane.b32.xlu0 %v1918, 56
      %v2096 = vpop.permute.xlu0 %2095
      %v2098 = vsel %vm1246, %v2094, 0
      %v2101 = vsel %vm1312, %v2096, 0
      %2103 = vmatprep.subr.bf16.mxu0 0
      %2104 = vmatpush1.bf16.msra.mxu0 0
      %2105 = vmatprep.subr.bf16.mxu0 0
      %2106 = vmatpush1.bf16.msra.mxu0 0
      %2107 = vmatprep.subr.bf16.mxu0 0
      %2108 = vmatpush1.bf16.msra.mxu0 0
      %2109 = vmatprep.subr.bf16.mxu0 0
      %2110 = vmatpush1.bf16.msra.mxu0 0
      %2111 = vmatprep.subr.bf16.mxu0 0
      %2112 = vmatpush1.bf16.msra.mxu0 0
      %2113 = vmatprep.subr.bf16.mxu0 0
      %2114 = vmatpush1.bf16.msra.mxu0 0
      %2115 = vmatprep.subr.bf16.mxu0 0
      %2116 = vmatpush1.bf16.msra.mxu0 0
      %2117 = vmatprep.subr.bf16.mxu0 0
      %2118 = vmatpush1.bf16.msra.mxu0 %v2101
      %2119 = vmatprep.subr.bf16.mxu0 0
      %2120 = vmatpush2.bf16.msra.mxu0 0
      %2121 = vmatprep.subr.bf16.mxu0 0
      %2122 = vmatpush2.bf16.msra.mxu0 0
      %2123 = vmatprep.subr.bf16.mxu0 0
      %2124 = vmatpush2.bf16.msra.mxu0 0
      %2125 = vmatprep.subr.bf16.mxu0 0
      %2126 = vmatpush2.bf16.msra.mxu0 0
      %2127 = vmatprep.subr.bf16.mxu0 0
      %2128 = vmatpush2.bf16.msra.mxu0 0
      %2129 = vmatprep.subr.bf16.mxu0 0
      %2130 = vmatpush2.bf16.msra.mxu0 0
      %2131 = vmatprep.subr.bf16.mxu0 0
      %2132 = vmatpush2.bf16.msra.mxu0 0
      %2133 = vmatprep.subr.bf16.mxu0 0
      %2134 = vmatpush2.bf16.msra.mxu0 0
      %2135 = vmatprep.mubr.bf16.mxu0 0
      %2136 = vmatmul.mubr.bf16.gmra.mxu0 %v2098
      %v2137 = vpop.f32.mrf.mxu0
      %v2138 = vadd.f32 0.0, %v2137
      %v2139 = vpop.f32.mrf.mxu0
      %v2140 = vpop.f32.mrf.mxu0
      %v2141 = vpop.f32.mrf.mxu0
      %2142 = vdwg.mxu0
      %v2143 = vpack.c.bf16 %v2138, %v2138
      %v2145 = vsel %vm1246, %v2143, 0
      %2147 = vmatprep.subr.bf16.mxu0 0
      %2148 = vmatpush1.bf16.xpose.msra.mxu0 0
      %2149 = vmatprep.subr.bf16.mxu0 0
      %2150 = vmatpush1.bf16.xpose.msra.mxu0 0
      %2151 = vmatprep.subr.bf16.mxu0 0
      %2152 = vmatpush1.bf16.xpose.msra.mxu0 0
      %2153 = vmatprep.subr.bf16.mxu0 0
      %2154 = vmatpush1.bf16.xpose.msra.mxu0 0
      %2155 = vmatprep.subr.bf16.mxu0 0
      %2156 = vmatpush1.bf16.xpose.msra.mxu0 0
      %2157 = vmatprep.subr.bf16.mxu0 0
      %2158 = vmatpush1.bf16.xpose.msra.mxu0 0
      %2159 = vmatprep.subr.bf16.mxu0 0
      %2160 = vmatpush1.bf16.xpose.msra.mxu0 %v1491
      %2161 = vmatprep.subr.bf16.mxu0 0
      %2162 = vmatpush1.bf16.xpose.msra.mxu0 %v1488
      %2163 = vmatprep.subr.bf16.mxu0 0
      %2164 = vmatpush2.bf16.xpose.msra.mxu0 0
      %2165 = vmatprep.subr.bf16.mxu0 0
      %2166 = vmatpush2.bf16.xpose.msra.mxu0 0
      %2167 = vmatprep.subr.bf16.mxu0 0
      %2168 = vmatpush2.bf16.xpose.msra.mxu0 0
      %2169 = vmatprep.subr.bf16.mxu0 0
      %2170 = vmatpush2.bf16.xpose.msra.mxu0 0
      %2171 = vmatprep.subr.bf16.mxu0 0
      %2172 = vmatpush2.bf16.xpose.msra.mxu0 0
      %2173 = vmatprep.subr.bf16.mxu0 0
      %2174 = vmatpush2.bf16.xpose.msra.mxu0 0
      %2175 = vmatprep.subr.bf16.mxu0 0
      %2176 = vmatpush2.bf16.xpose.msra.mxu0 0
      %2177 = vmatprep.subr.bf16.mxu0 0
      %2178 = vmatpush2.bf16.xpose.msra.mxu0 0
      %2179 = vmatprep.mubr.bf16.mxu0 0
      %2180 = vmatmul.mubr.bf16.gmra.mxu0 %v2145
      %v2181 = vpop.f32.mrf.mxu0
      %v2182 = vadd.f32 0.0, %v2181
      %v2183 = vpop.f32.mrf.mxu0
      %v2184 = vpop.f32.mrf.mxu0
      %v2185 = vpop.f32.mrf.mxu0
      %2186 = vdwg.mxu0
      %v2188 = vsel %vm1246, %v2030, 0
      %2190 = vmatprep.subr.bf16.mxu0 0
      %2191 = vmatpush1.bf16.xpose.msra.mxu0 0
      %2192 = vmatprep.subr.bf16.mxu0 0
      %2193 = vmatpush1.bf16.xpose.msra.mxu0 0
      %2194 = vmatprep.subr.bf16.mxu0 0
      %2195 = vmatpush1.bf16.xpose.msra.mxu0 0
      %2196 = vmatprep.subr.bf16.mxu0 0
      %2197 = vmatpush1.bf16.xpose.msra.mxu0 0
      %2198 = vmatprep.subr.bf16.mxu0 0
      %2199 = vmatpush1.bf16.xpose.msra.mxu0 0
      %2200 = vmatprep.subr.bf16.mxu0 0
      %2201 = vmatpush1.bf16.xpose.msra.mxu0 0
      %2202 = vmatprep.subr.bf16.mxu0 0
      %2203 = vmatpush1.bf16.xpose.msra.mxu0 %v1540
      %2204 = vmatprep.subr.bf16.mxu0 0
      %2205 = vmatpush1.bf16.xpose.msra.mxu0 %v1537
      %2206 = vmatprep.subr.bf16.mxu0 0
      %2207 = vmatpush2.bf16.xpose.msra.mxu0 0
      %2208 = vmatprep.subr.bf16.mxu0 0
      %2209 = vmatpush2.bf16.xpose.msra.mxu0 0
      %2210 = vmatprep.subr.bf16.mxu0 0
      %2211 = vmatpush2.bf16.xpose.msra.mxu0 0
      %2212 = vmatprep.subr.bf16.mxu0 0
      %2213 = vmatpush2.bf16.xpose.msra.mxu0 0
      %2214 = vmatprep.subr.bf16.mxu0 0
      %2215 = vmatpush2.bf16.xpose.msra.mxu0 0
      %2216 = vmatprep.subr.bf16.mxu0 0
      %2217 = vmatpush2.bf16.xpose.msra.mxu0 0
      %2218 = vmatprep.subr.bf16.mxu0 0
      %2219 = vmatpush2.bf16.xpose.msra.mxu0 0
      %2220 = vmatprep.subr.bf16.mxu0 0
      %2221 = vmatpush2.bf16.xpose.msra.mxu0 0
      %2222 = vmatprep.mubr.bf16.mxu0 0
      %2223 = vmatmul.mubr.bf16.gmra.mxu0 %v2188
      %v2224 = vpop.f32.mrf.mxu0
      %v2225 = vadd.f32 %v2182, %v2224
      %v2226 = vpop.f32.mrf.mxu0
      %v2227 = vpop.f32.mrf.mxu0
      %v2228 = vpop.f32.mrf.mxu0
      %2229 = vdwg.mxu0
      %2230 = vrot.lane.b32.xlu0 %v1918, 112
      %v2231 = vpop.permute.xlu0 %2230
      %2232 = vrot.lane.b32.xlu0 %v1918, 80
      %v2233 = vpop.permute.xlu0 %2232
      %v2235 = vsel %vm1246, %v2231, 0
      %v2238 = vsel %vm1246, %v2233, 0
      %2240 = vmatprep.subr.bf16.mxu0 0
      %2241 = vmatpush1.bf16.xpose.msra.mxu0 0
      %2242 = vmatprep.subr.bf16.mxu0 0
      %2243 = vmatpush1.bf16.xpose.msra.mxu0 0
      %2244 = vmatprep.subr.bf16.mxu0 0
      %2245 = vmatpush1.bf16.xpose.msra.mxu0 0
      %2246 = vmatprep.subr.bf16.mxu0 0
      %2247 = vmatpush1.bf16.xpose.msra.mxu0 0
      %2248 = vmatprep.subr.bf16.mxu0 0
      %2249 = vmatpush1.bf16.xpose.msra.mxu0 0
      %2250 = vmatprep.subr.bf16.mxu0 0
      %2251 = vmatpush1.bf16.xpose.msra.mxu0 0
      %2252 = vmatprep.subr.bf16.mxu0 0
      %2253 = vmatpush1.bf16.xpose.msra.mxu0 0
      %2254 = vmatprep.subr.bf16.mxu0 0
      %2255 = vmatpush1.bf16.xpose.msra.mxu0 %v2238
      %2256 = vmatprep.subr.bf16.mxu0 0
      %2257 = vmatpush2.bf16.xpose.msra.mxu0 0
      %2258 = vmatprep.subr.bf16.mxu0 0
      %2259 = vmatpush2.bf16.xpose.msra.mxu0 0
      %2260 = vmatprep.subr.bf16.mxu0 0
      %2261 = vmatpush2.bf16.xpose.msra.mxu0 0
      %2262 = vmatprep.subr.bf16.mxu0 0
      %2263 = vmatpush2.bf16.xpose.msra.mxu0 0
      %2264 = vmatprep.subr.bf16.mxu0 0
      %2265 = vmatpush2.bf16.xpose.msra.mxu0 0
      %2266 = vmatprep.subr.bf16.mxu0 0
      %2267 = vmatpush2.bf16.xpose.msra.mxu0 0
      %2268 = vmatprep.subr.bf16.mxu0 0
      %2269 = vmatpush2.bf16.xpose.msra.mxu0 0
      %2270 = vmatprep.subr.bf16.mxu0 0
      %2271 = vmatpush2.bf16.xpose.msra.mxu0 0
      %2272 = vmatprep.mubr.bf16.mxu0 0
      %2273 = vmatmul.mubr.bf16.gmra.mxu0 %v2235
      %v2274 = vpop.f32.mrf.mxu0
      %v2275 = vadd.f32 0.0, %v2274
      %v2276 = vpop.f32.mrf.mxu0
      %v2277 = vpop.f32.mrf.mxu0
      %v2278 = vpop.f32.mrf.mxu0
      %2279 = vdwg.mxu0
      %v2280 = vmul.f32 %v2275, 0.35355338
      %v2281 = vadd.f32 %v2280, %v1917
      %v2282 = vsel %vm1246, %v2281, -inf
      %2283 = vmax.xlane.f32.xlu0 %v2282
      %v2284 = vpop.xlane.xlu0 %2283
      %v2285 = vsub.f32 %v2281, %v2284
      %v2286 = vmul.f32 %v2285, 1.442695
      %v2287 = vpow.pop %v2286
      %v2288 = vsel %vm1246, %v2287, 0.0
      %2289 = vadd.xlane.f32.xlu0 %v2288
      %v2290 = vpop.xlane.xlu0 %2289
      %v2291 = vrcp.pop %v2290
      %v2292 = vmul.f32 %v2287, %v2291
      %v2293 = vpack.c.bf16 %v2292, %v2292
      %2294 = vrot.lane.b32.xlu0 %v1918, 48
      %v2295 = vpop.permute.xlu0 %2294
      %v2297 = vsel %vm1246, %v2293, 0
      %v2300 = vsel %vm1312, %v2295, 0
      %2302 = vmatprep.subr.bf16.mxu0 0
      %2303 = vmatpush1.bf16.msra.mxu0 0
      %2304 = vmatprep.subr.bf16.mxu0 0
      %2305 = vmatpush1.bf16.msra.mxu0 0
      %2306 = vmatprep.subr.bf16.mxu0 0
      %2307 = vmatpush1.bf16.msra.mxu0 0
      %2308 = vmatprep.subr.bf16.mxu0 0
      %2309 = vmatpush1.bf16.msra.mxu0 0
      %2310 = vmatprep.subr.bf16.mxu0 0
      %2311 = vmatpush1.bf16.msra.mxu0 0
      %2312 = vmatprep.subr.bf16.mxu0 0
      %2313 = vmatpush1.bf16.msra.mxu0 0
      %2314 = vmatprep.subr.bf16.mxu0 0
      %2315 = vmatpush1.bf16.msra.mxu0 0
      %2316 = vmatprep.subr.bf16.mxu0 0
      %2317 = vmatpush1.bf16.msra.mxu0 %v2300
      %2318 = vmatprep.subr.bf16.mxu0 0
      %2319 = vmatpush2.bf16.msra.mxu0 0
      %2320 = vmatprep.subr.bf16.mxu0 0
      %2321 = vmatpush2.bf16.msra.mxu0 0
      %2322 = vmatprep.subr.bf16.mxu0 0
      %2323 = vmatpush2.bf16.msra.mxu0 0
      %2324 = vmatprep.subr.bf16.mxu0 0
      %2325 = vmatpush2.bf16.msra.mxu0 0
      %2326 = vmatprep.subr.bf16.mxu0 0
      %2327 = vmatpush2.bf16.msra.mxu0 0
      %2328 = vmatprep.subr.bf16.mxu0 0
      %2329 = vmatpush2.bf16.msra.mxu0 0
      %2330 = vmatprep.subr.bf16.mxu0 0
      %2331 = vmatpush2.bf16.msra.mxu0 0
      %2332 = vmatprep.subr.bf16.mxu0 0
      %2333 = vmatpush2.bf16.msra.mxu0 0
      %2334 = vmatprep.mubr.bf16.mxu0 0
      %2335 = vmatmul.mubr.bf16.gmra.mxu0 %v2297
      %v2336 = vpop.f32.mrf.mxu0
      %v2337 = vadd.f32 0.0, %v2336
      %v2338 = vpop.f32.mrf.mxu0
      %v2339 = vpop.f32.mrf.mxu0
      %v2340 = vpop.f32.mrf.mxu0
      %2341 = vdwg.mxu0
      %v2342 = vpack.c.bf16 %v2337, %v2337
      %v2344 = vsel %vm1246, %v2342, 0
      %2346 = vmatprep.subr.bf16.mxu0 0
      %2347 = vmatpush1.bf16.xpose.msra.mxu0 0
      %2348 = vmatprep.subr.bf16.mxu0 0
      %2349 = vmatpush1.bf16.xpose.msra.mxu0 0
      %2350 = vmatprep.subr.bf16.mxu0 0
      %2351 = vmatpush1.bf16.xpose.msra.mxu0 0
      %2352 = vmatprep.subr.bf16.mxu0 0
      %2353 = vmatpush1.bf16.xpose.msra.mxu0 0
      %2354 = vmatprep.subr.bf16.mxu0 0
      %2355 = vmatpush1.bf16.xpose.msra.mxu0 0
      %2356 = vmatprep.subr.bf16.mxu0 0
      %2357 = vmatpush1.bf16.xpose.msra.mxu0 0
      %2358 = vmatprep.subr.bf16.mxu0 0
      %2359 = vmatpush1.bf16.xpose.msra.mxu0 %v1706
      %2360 = vmatprep.subr.bf16.mxu0 0
      %2361 = vmatpush1.bf16.xpose.msra.mxu0 %v1703
      %2362 = vmatprep.subr.bf16.mxu0 0
      %2363 = vmatpush2.bf16.xpose.msra.mxu0 0
      %2364 = vmatprep.subr.bf16.mxu0 0
      %2365 = vmatpush2.bf16.xpose.msra.mxu0 0
      %2366 = vmatprep.subr.bf16.mxu0 0
      %2367 = vmatpush2.bf16.xpose.msra.mxu0 0
      %2368 = vmatprep.subr.bf16.mxu0 0
      %2369 = vmatpush2.bf16.xpose.msra.mxu0 0
      %2370 = vmatprep.subr.bf16.mxu0 0
      %2371 = vmatpush2.bf16.xpose.msra.mxu0 0
      %2372 = vmatprep.subr.bf16.mxu0 0
      %2373 = vmatpush2.bf16.xpose.msra.mxu0 0
      %2374 = vmatprep.subr.bf16.mxu0 0
      %2375 = vmatpush2.bf16.xpose.msra.mxu0 0
      %2376 = vmatprep.subr.bf16.mxu0 0
      %2377 = vmatpush2.bf16.xpose.msra.mxu0 0
      %2378 = vmatprep.mubr.bf16.mxu0 0
      %2379 = vmatmul.mubr.bf16.gmra.mxu0 %v2344
      %v2380 = vpop.f32.mrf.mxu0
      %v2381 = vadd.f32 0.0, %v2380
      %v2382 = vpop.f32.mrf.mxu0
      %v2383 = vpop.f32.mrf.mxu0
      %v2384 = vpop.f32.mrf.mxu0
      %2385 = vdwg.mxu0
      %v2386 = vadd.f32 %v2225, %v2381
      %2387 = vrot.lane.b32.xlu0 %v1918, 104
      %v2388 = vpop.permute.xlu0 %2387
      %2389 = vrot.lane.b32.xlu0 %v1918, 72
      %v2390 = vpop.permute.xlu0 %2389
      %v2392 = vsel %vm1246, %v2388, 0
      %v2395 = vsel %vm1246, %v2390, 0
      %2397 = vmatprep.subr.bf16.mxu0 0
      %2398 = vmatpush1.bf16.xpose.msra.mxu0 0
      %2399 = vmatprep.subr.bf16.mxu0 0
      %2400 = vmatpush1.bf16.xpose.msra.mxu0 0
      %2401 = vmatprep.subr.bf16.mxu0 0
      %2402 = vmatpush1.bf16.xpose.msra.mxu0 0
      %2403 = vmatprep.subr.bf16.mxu0 0
      %2404 = vmatpush1.bf16.xpose.msra.mxu0 0
      %2405 = vmatprep.subr.bf16.mxu0 0
      %2406 = vmatpush1.bf16.xpose.msra.mxu0 0
      %2407 = vmatprep.subr.bf16.mxu0 0
      %2408 = vmatpush1.bf16.xpose.msra.mxu0 0
      %2409 = vmatprep.subr.bf16.mxu0 0
      %2410 = vmatpush1.bf16.xpose.msra.mxu0 0
      %2411 = vmatprep.subr.bf16.mxu0 0
      %2412 = vmatpush1.bf16.xpose.msra.mxu0 %v2395
      %2413 = vmatprep.subr.bf16.mxu0 0
      %2414 = vmatpush2.bf16.xpose.msra.mxu0 0
      %2415 = vmatprep.subr.bf16.mxu0 0
      %2416 = vmatpush2.bf16.xpose.msra.mxu0 0
      %2417 = vmatprep.subr.bf16.mxu0 0
      %2418 = vmatpush2.bf16.xpose.msra.mxu0 0
      %2419 = vmatprep.subr.bf16.mxu0 0
      %2420 = vmatpush2.bf16.xpose.msra.mxu0 0
      %2421 = vmatprep.subr.bf16.mxu0 0
      %2422 = vmatpush2.bf16.xpose.msra.mxu0 0
      %2423 = vmatprep.subr.bf16.mxu0 0
      %2424 = vmatpush2.bf16.xpose.msra.mxu0 0
      %2425 = vmatprep.subr.bf16.mxu0 0
      %2426 = vmatpush2.bf16.xpose.msra.mxu0 0
      %2427 = vmatprep.subr.bf16.mxu0 0
      %2428 = vmatpush2.bf16.xpose.msra.mxu0 0
      %2429 = vmatprep.mubr.bf16.mxu0 0
      %2430 = vmatmul.mubr.bf16.gmra.mxu0 %v2392
      %v2431 = vpop.f32.mrf.mxu0
      %v2432 = vadd.f32 0.0, %v2431
      %v2433 = vpop.f32.mrf.mxu0
      %v2434 = vpop.f32.mrf.mxu0
      %v2435 = vpop.f32.mrf.mxu0
      %2436 = vdwg.mxu0
      %v2437 = vmul.f32 %v2432, 0.35355338
      %v2438 = vadd.f32 %v2437, %v1917
      %v2439 = vsel %vm1246, %v2438, -inf
      %2440 = vmax.xlane.f32.xlu0 %v2439
      %v2441 = vpop.xlane.xlu0 %2440
      %v2442 = vsub.f32 %v2438, %v2441
      %v2443 = vmul.f32 %v2442, 1.442695
      %v2444 = vpow.pop %v2443
      %v2445 = vsel %vm1246, %v2444, 0.0
      %2446 = vadd.xlane.f32.xlu0 %v2445
      %v2447 = vpop.xlane.xlu0 %2446
      %v2448 = vrcp.pop %v2447
      %v2449 = vmul.f32 %v2444, %v2448
      %v2450 = vpack.c.bf16 %v2449, %v2449
      %2451 = vrot.lane.b32.xlu0 %v1918, 40
      %v2452 = vpop.permute.xlu0 %2451
      %v2454 = vsel %vm1246, %v2450, 0
      %v2457 = vsel %vm1312, %v2452, 0
      %2459 = vmatprep.subr.bf16.mxu0 0
      %2460 = vmatpush1.bf16.msra.mxu0 0
      %2461 = vmatprep.subr.bf16.mxu0 0
      %2462 = vmatpush1.bf16.msra.mxu0 0
      %2463 = vmatprep.subr.bf16.mxu0 0
      %2464 = vmatpush1.bf16.msra.mxu0 0
      %2465 = vmatprep.subr.bf16.mxu0 0
      %2466 = vmatpush1.bf16.msra.mxu0 0
      %2467 = vmatprep.subr.bf16.mxu0 0
      %2468 = vmatpush1.bf16.msra.mxu0 0
      %2469 = vmatprep.subr.bf16.mxu0 0
      %2470 = vmatpush1.bf16.msra.mxu0 0
      %2471 = vmatprep.subr.bf16.mxu0 0
      %2472 = vmatpush1.bf16.msra.mxu0 0
      %2473 = vmatprep.subr.bf16.mxu0 0
      %2474 = vmatpush1.bf16.msra.mxu0 %v2457
      %2475 = vmatprep.subr.bf16.mxu0 0
      %2476 = vmatpush2.bf16.msra.mxu0 0
      %2477 = vmatprep.subr.bf16.mxu0 0
      %2478 = vmatpush2.bf16.msra.mxu0 0
      %2479 = vmatprep.subr.bf16.mxu0 0
      %2480 = vmatpush2.bf16.msra.mxu0 0
      %2481 = vmatprep.subr.bf16.mxu0 0
      %2482 = vmatpush2.bf16.msra.mxu0 0
      %2483 = vmatprep.subr.bf16.mxu0 0
      %2484 = vmatpush2.bf16.msra.mxu0 0
      %2485 = vmatprep.subr.bf16.mxu0 0
      %2486 = vmatpush2.bf16.msra.mxu0 0
      %2487 = vmatprep.subr.bf16.mxu0 0
      %2488 = vmatpush2.bf16.msra.mxu0 0
      %2489 = vmatprep.subr.bf16.mxu0 0
      %2490 = vmatpush2.bf16.msra.mxu0 0
      %2491 = vmatprep.mubr.bf16.mxu0 0
      %2492 = vmatmul.mubr.bf16.gmra.mxu0 %v2454
      %v2493 = vpop.f32.mrf.mxu0
      %v2494 = vadd.f32 0.0, %v2493
      %v2495 = vpop.f32.mrf.mxu0
      %v2496 = vpop.f32.mrf.mxu0
      %v2497 = vpop.f32.mrf.mxu0
      %2498 = vdwg.mxu0
      %v2499 = vpack.c.bf16 %v2494, %v2494
      %v2501 = vsel %vm1246, %v2499, 0
      %2503 = vmatprep.subr.bf16.mxu0 0
      %2504 = vmatpush1.bf16.xpose.msra.mxu0 0
      %2505 = vmatprep.subr.bf16.mxu0 0
      %2506 = vmatpush1.bf16.xpose.msra.mxu0 0
      %2507 = vmatprep.subr.bf16.mxu0 0
      %2508 = vmatpush1.bf16.xpose.msra.mxu0 0
      %2509 = vmatprep.subr.bf16.mxu0 0
      %2510 = vmatpush1.bf16.xpose.msra.mxu0 0
      %2511 = vmatprep.subr.bf16.mxu0 0
      %2512 = vmatpush1.bf16.xpose.msra.mxu0 0
      %2513 = vmatprep.subr.bf16.mxu0 0
      %2514 = vmatpush1.bf16.xpose.msra.mxu0 0
      %2515 = vmatprep.subr.bf16.mxu0 0
      %2516 = vmatpush1.bf16.xpose.msra.mxu0 %v1873
      %2517 = vmatprep.subr.bf16.mxu0 0
      %2518 = vmatpush1.bf16.xpose.msra.mxu0 %v1870
      %2519 = vmatprep.subr.bf16.mxu0 0
      %2520 = vmatpush2.bf16.xpose.msra.mxu0 0
      %2521 = vmatprep.subr.bf16.mxu0 0
      %2522 = vmatpush2.bf16.xpose.msra.mxu0 0
      %2523 = vmatprep.subr.bf16.mxu0 0
      %2524 = vmatpush2.bf16.xpose.msra.mxu0 0
      %2525 = vmatprep.subr.bf16.mxu0 0
      %2526 = vmatpush2.bf16.xpose.msra.mxu0 0
      %2527 = vmatprep.subr.bf16.mxu0 0
      %2528 = vmatpush2.bf16.xpose.msra.mxu0 0
      %2529 = vmatprep.subr.bf16.mxu0 0
      %2530 = vmatpush2.bf16.xpose.msra.mxu0 0
      %2531 = vmatprep.subr.bf16.mxu0 0
      %2532 = vmatpush2.bf16.xpose.msra.mxu0 0
      %2533 = vmatprep.subr.bf16.mxu0 0
      %2534 = vmatpush2.bf16.xpose.msra.mxu0 0
      %2535 = vmatprep.mubr.bf16.mxu0 0
      %2536 = vmatmul.mubr.bf16.gmra.mxu0 %v2501
      %v2537 = vpop.f32.mrf.mxu0
      %v2538 = vadd.f32 0.0, %v2537
      %v2539 = vpop.f32.mrf.mxu0
      %v2540 = vpop.f32.mrf.mxu0
      %v2541 = vpop.f32.mrf.mxu0
      %2542 = vdwg.mxu0
      %v2543 = vadd.f32 %v2386, %v2538
      %v2544 = vadd.f32 %v1061, %v1915
      %v2545 = vadd.f32 %v1062, %v2543
      %v2546 = vld [vmem:[%s996] sm:$0x1]
      %v2548 = vlaneseq
      %v2549 = vshrl.u32 %v2548, 7
      %v2550 = vsub.s32 0, %v2549
      %v2551 = vrot.slane %v2546, %v2550
      %v2553 = vadd.f32 %v2544, %v2551
      %v2554 = vadd.f32 %v2545, %v2551
      %v2555 = vld [vmem:[%s1000] sm:$0x3]
      %v2556 = vsel %vm1070, %v2553, 0.0
      %2557 = vadd.xlane.f32.xlu0 %v2556
      %v2558 = vpop.xlane.xlu0 %2557
      %v2559 = vsel %vm1070, %v2554, 0.0
      %2560 = vadd.xlane.f32.xlu0 %v2559
      %v2561 = vpop.xlane.xlu0 %2560
      %v2562 = vmul.f32 %v2558, %v1077
      %v2563 = vmul.f32 %v2561, %v1077
      %v2564 = vsub.f32 %v2553, %v2562
      %v2565 = vsub.f32 %v2554, %v2563
      %v2566 = vmul.f32 %v2564, %v2564
      %v2567 = vmul.f32 %v2565, %v2565
      %v2568 = vsel %vm1070, %v2566, 0.0
      %2569 = vadd.xlane.f32.xlu0 %v2568
      %v2570 = vpop.xlane.xlu0 %2569
      %v2571 = vsel %vm1070, %v2567, 0.0
      %2572 = vadd.xlane.f32.xlu0 %v2571
      %v2573 = vpop.xlane.xlu0 %2572
      %v2574 = vmul.f32 %v2570, 0.032258064
      %v2575 = vmul.f32 %v2573, 0.032258064
      %v2576 = vrsqrt.pop %v2574
      %v2577 = vmul.f32 %v2574, %v2576
      %vm2578 = vcmp.eq.f32.partialorder %v2574, inf
      %v2579 = vsel %vm2578, %v2574, %v2577
      %vm2580 = vcmp.eq.f32.partialorder %v2574, 0.0
      %v2581 = vand.u32 %v2574, 2147483648
      %v2582 = vsel %vm2580, %v2581, %v2579
      %v2583 = vrsqrt.pop %v2575
      %v2584 = vmul.f32 %v2575, %v2583
      %vm2585 = vcmp.eq.f32.partialorder %v2575, inf
      %v2586 = vsel %vm2585, %v2575, %v2584
      %vm2587 = vcmp.eq.f32.partialorder %v2575, 0.0
      %v2588 = vand.u32 %v2575, 2147483648
      %v2589 = vsel %vm2587, %v2588, %v2586
      %v2590 = vadd.f32 %v2582, 1e-06
      %v2591 = vadd.f32 %v2589, 1e-06
      %v2592 = vrcp.pop %v2590
      %v2593 = vrcp.pop %v2591
      %v2594 = vlaneseq
      %v2595 = vshrl.u32 %v2594, 7
      %v2596 = vsub.s32 0, %v2595
      %v2597 = vrot.slane %v2555, %v2596
      %v2598 = vmul.f32 %v2597, %v2564
      %v2599 = vmul.f32 %v2597, %v2565
      %v2600 = vmul.f32 %v2598, %v2592
      %v2601 = vmul.f32 %v2599, %v2593
      %v2602 = vlaneseq
      %v2603 = vshrl.u32 %v2602, 7
      %v2604 = vsub.s32 1, %v2603
      %v2605 = vrot.slane %v2555, %v2604
      %v2606 = vadd.f32 %v2600, %v2605
      %v2607 = vadd.f32 %v2601, %v2605
      %v2608 = vld [vmem:[%s1005] sm:$0xf]
      %v2609 = vld [vmem:[%s1005 + $0x4] sm:$0xf]
      %v2610 = vld [vmem:[%s1005 + $0x8] sm:$0xf]
      %v2611 = vld [vmem:[%s1005 + $0xc] sm:$0xf]
      %v2612 = vld [vmem:[%s1008] sm:$0x1]
      %v2613 = vpack.c.bf16 %v2607, %v2606
      %v2615 = vlaneseq
      %v2616 = vshrl.u32 %v2615, 7
      %v2617 = vsub.s32 0, %v2616
      %v2618 = vrot.slane %v2612, %v2617
      %v2624 = vunpack.c.l.b16 %v2608
      %v2625 = vunpack.c.l.b16 %v2609
      %v2626 = vunpack.c.l.b16 %v2610
      %v2627 = vunpack.c.l.b16 %v2611
      %v2628 = vpack.c.b16 %v2625, %v2624
      %v2629 = vpack.c.b16 %v2627, %v2626
      %v2631 = vsel %vm1070, %v2613, 0
      %v2634 = vsel %vm1070, %v2628, 0
      %v2637 = vsel %vm1070, %v2629, 0
      %2639 = vmatprep.subr.bf16.mxu0 0
      %2640 = vmatpush1.bf16.xpose.msra.mxu0 0
      %2641 = vmatprep.subr.bf16.mxu0 0
      %2642 = vmatpush1.bf16.xpose.msra.mxu0 0
      %2643 = vmatprep.subr.bf16.mxu0 0
      %2644 = vmatpush1.bf16.xpose.msra.mxu0 0
      %2645 = vmatprep.subr.bf16.mxu0 0
      %2646 = vmatpush1.bf16.xpose.msra.mxu0 0
      %2647 = vmatprep.subr.bf16.mxu0 0
      %2648 = vmatpush1.bf16.xpose.msra.mxu0 0
      %2649 = vmatprep.subr.bf16.mxu0 0
      %2650 = vmatpush1.bf16.xpose.msra.mxu0 0
      %2651 = vmatprep.subr.bf16.mxu0 0
      %2652 = vmatpush1.bf16.xpose.msra.mxu0 %v2637
      %2653 = vmatprep.subr.bf16.mxu0 0
      %2654 = vmatpush1.bf16.xpose.msra.mxu0 %v2634
      %2655 = vmatprep.subr.bf16.mxu0 0
      %2656 = vmatpush2.bf16.xpose.msra.mxu0 0
      %2657 = vmatprep.subr.bf16.mxu0 0
      %2658 = vmatpush2.bf16.xpose.msra.mxu0 0
      %2659 = vmatprep.subr.bf16.mxu0 0
      %2660 = vmatpush2.bf16.xpose.msra.mxu0 0
      %2661 = vmatprep.subr.bf16.mxu0 0
      %2662 = vmatpush2.bf16.xpose.msra.mxu0 0
      %2663 = vmatprep.subr.bf16.mxu0 0
      %2664 = vmatpush2.bf16.xpose.msra.mxu0 0
      %2665 = vmatprep.subr.bf16.mxu0 0
      %2666 = vmatpush2.bf16.xpose.msra.mxu0 0
      %2667 = vmatprep.subr.bf16.mxu0 0
      %2668 = vmatpush2.bf16.xpose.msra.mxu0 0
      %2669 = vmatprep.subr.bf16.mxu0 0
      %2670 = vmatpush2.bf16.xpose.msra.mxu0 0
      %2671 = vmatprep.mubr.bf16.mxu0 0
      %2672 = vmatmul.mubr.bf16.gmra.mxu0 %v2631
      %v2673 = vpop.f32.mrf.mxu0
      %v2674 = vadd.f32 %v2618, %v2673
      %v2675 = vpop.f32.mrf.mxu0
      %v2676 = vpop.f32.mrf.mxu0
      %v2677 = vadd.f32 %v2618, %v2676
      %v2678 = vpop.f32.mrf.mxu0
      %2679 = vdwg.mxu0
      %v2680 = vld [vmem:[%s1013] sm:$0xf]
      %v2681 = vld [vmem:[%s1013 + $0x4] sm:$0xf]
      %v2682 = vld [vmem:[%s1013 + $0x8] sm:$0xf]
      %v2683 = vld [vmem:[%s1013 + $0xc] sm:$0xf]
      %v2684 = vld [vmem:[%s1013 + $0x10] sm:$0xf]
      %v2685 = vld [vmem:[%s1013 + $0x14] sm:$0xf]
      %v2686 = vld [vmem:[%s1013 + $0x18] sm:$0xf]
      %v2687 = vld [vmem:[%s1013 + $0x1c] sm:$0xf]
      %v2688 = vld [vmem:[%s1016] sm:$0x1]
      %v2689 = vpack.c.bf16 %v1064, %v1063
      %v2691 = vlaneseq
      %v2692 = vshrl.u32 %v2691, 7
      %v2693 = vsub.s32 0, %v2692
      %v2694 = vrot.slane %v2688, %v2693
      %v2704 = vunpack.c.l.b16 %v2680
      %v2705 = vunpack.c.l.b16 %v2681
      %v2706 = vunpack.c.l.b16 %v2682
      %v2707 = vunpack.c.l.b16 %v2683
      %v2708 = vunpack.c.l.b16 %v2684
      %v2709 = vunpack.c.l.b16 %v2685
      %v2710 = vunpack.c.l.b16 %v2686
      %v2711 = vunpack.c.l.b16 %v2687
      %v2712 = vpack.c.b16 %v2705, %v2704
      %v2713 = vpack.c.b16 %v2707, %v2706
      %v2714 = vpack.c.b16 %v2709, %v2708
      %v2715 = vpack.c.b16 %v2711, %v2710
      %v2717 = vsel %vm1070, %v2689, 0
      %v2720 = vsel %vm1070, %v2712, 0
      %v2723 = vsel %vm1070, %v2713, 0
      %v2726 = vsel %vm1070, %v2714, 0
      %v2729 = vsel %vm1070, %v2715, 0
      %2731 = vmatprep.subr.bf16.mxu0 0
      %2732 = vmatpush1.bf16.xpose.msra.mxu0 0
      %2733 = vmatprep.subr.bf16.mxu0 0
      %2734 = vmatpush1.bf16.xpose.msra.mxu0 0
      %2735 = vmatprep.subr.bf16.mxu0 0
      %2736 = vmatpush1.bf16.xpose.msra.mxu0 0
      %2737 = vmatprep.subr.bf16.mxu0 0
      %2738 = vmatpush1.bf16.xpose.msra.mxu0 0
      %2739 = vmatprep.subr.bf16.mxu0 0
      %2740 = vmatpush1.bf16.xpose.msra.mxu0 %v2729
      %2741 = vmatprep.subr.bf16.mxu0 0
      %2742 = vmatpush1.bf16.xpose.msra.mxu0 %v2726
      %2743 = vmatprep.subr.bf16.mxu0 0
      %2744 = vmatpush1.bf16.xpose.msra.mxu0 %v2723
      %2745 = vmatprep.subr.bf16.mxu0 0
      %2746 = vmatpush1.bf16.xpose.msra.mxu0 %v2720
      %2747 = vmatprep.subr.bf16.mxu0 0
      %2748 = vmatpush2.bf16.xpose.msra.mxu0 0
      %2749 = vmatprep.subr.bf16.mxu0 0
      %2750 = vmatpush2.bf16.xpose.msra.mxu0 0
      %2751 = vmatprep.subr.bf16.mxu0 0
      %2752 = vmatpush2.bf16.xpose.msra.mxu0 0
      %2753 = vmatprep.subr.bf16.mxu0 0
      %2754 = vmatpush2.bf16.xpose.msra.mxu0 0
      %2755 = vmatprep.subr.bf16.mxu0 0
      %2756 = vmatpush2.bf16.xpose.msra.mxu0 0
      %2757 = vmatprep.subr.bf16.mxu0 0
      %2758 = vmatpush2.bf16.xpose.msra.mxu0 0
      %2759 = vmatprep.subr.bf16.mxu0 0
      %2760 = vmatpush2.bf16.xpose.msra.mxu0 0
      %2761 = vmatprep.subr.bf16.mxu0 0
      %2762 = vmatpush2.bf16.xpose.msra.mxu0 0
      %2763 = vmatprep.mubr.bf16.mxu0 0
      %2764 = vmatmul.mubr.bf16.gmra.mxu0 %v2717
      %v2765 = vpop.f32.mrf.mxu0
      %v2766 = vadd.f32 %v2694, %v2765
      %v2767 = vpop.f32.mrf.mxu0
      %v2768 = vpop.f32.mrf.mxu0
      %v2769 = vadd.f32 %v2694, %v2768
      %v2770 = vpop.f32.mrf.mxu0
      %2771 = vdwg.mxu0
      %v2772 = vld [vmem:[%s1021] sm:$0xf]
      %v2773 = vld [vmem:[%s1021 + $0x4] sm:$0xf]
      %v2774 = vld [vmem:[%s1021 + $0x8] sm:$0xf]
      %v2775 = vld [vmem:[%s1021 + $0xc] sm:$0xf]
      %vm2776 = vcmp.eq.f32.partialorder %v1065, 0.0
      %v2777 = vsel %vm2776, -1e+09, 0.0
      %v2778 = vpack.c.bf16 %v2674, %v2674
      %v2779 = vpack.c.bf16 %v2766, %v2766
      %v2781 = vsel %vm1246, %v2778, 0
      %v2784 = vsel %vm1246, %v2779, 0
      %2786 = vmatprep.subr.bf16.mxu0 0
      %2787 = vmatpush1.bf16.xpose.msra.mxu0 0
      %2788 = vmatprep.subr.bf16.mxu0 0
      %2789 = vmatpush1.bf16.xpose.msra.mxu0 0
      %2790 = vmatprep.subr.bf16.mxu0 0
      %2791 = vmatpush1.bf16.xpose.msra.mxu0 0
      %2792 = vmatprep.subr.bf16.mxu0 0
      %2793 = vmatpush1.bf16.xpose.msra.mxu0 0
      %2794 = vmatprep.subr.bf16.mxu0 0
      %2795 = vmatpush1.bf16.xpose.msra.mxu0 0
      %2796 = vmatprep.subr.bf16.mxu0 0
      %2797 = vmatpush1.bf16.xpose.msra.mxu0 0
      %2798 = vmatprep.subr.bf16.mxu0 0
      %2799 = vmatpush1.bf16.xpose.msra.mxu0 0
      %2800 = vmatprep.subr.bf16.mxu0 0
      %2801 = vmatpush1.bf16.xpose.msra.mxu0 %v2784
      %2802 = vmatprep.subr.bf16.mxu0 0
      %2803 = vmatpush2.bf16.xpose.msra.mxu0 0
      %2804 = vmatprep.subr.bf16.mxu0 0
      %2805 = vmatpush2.bf16.xpose.msra.mxu0 0
      %2806 = vmatprep.subr.bf16.mxu0 0
      %2807 = vmatpush2.bf16.xpose.msra.mxu0 0
      %2808 = vmatprep.subr.bf16.mxu0 0
      %2809 = vmatpush2.bf16.xpose.msra.mxu0 0
      %2810 = vmatprep.subr.bf16.mxu0 0
      %2811 = vmatpush2.bf16.xpose.msra.mxu0 0
      %2812 = vmatprep.subr.bf16.mxu0 0
      %2813 = vmatpush2.bf16.xpose.msra.mxu0 0
      %2814 = vmatprep.subr.bf16.mxu0 0
      %2815 = vmatpush2.bf16.xpose.msra.mxu0 0
      %2816 = vmatprep.subr.bf16.mxu0 0
      %2817 = vmatpush2.bf16.xpose.msra.mxu0 0
      %2818 = vmatprep.mubr.bf16.mxu0 0
      %2819 = vmatmul.mubr.bf16.gmra.mxu0 %v2781
      %v2820 = vpop.f32.mrf.mxu0
      %v2821 = vadd.f32 0.0, %v2820
      %v2822 = vpop.f32.mrf.mxu0
      %v2823 = vpop.f32.mrf.mxu0
      %v2824 = vpop.f32.mrf.mxu0
      %2825 = vdwg.mxu0
      %v2826 = vmul.f32 %v2821, 0.35355338
      %v2828 = vlaneseq
      %v2829 = vshrl.u32 %v2828, 7
      %v2830 = vsub.s32 0, %v2829
      %v2831 = vrot.slane %v2777, %v2830
      %v2833 = vadd.f32 %v2826, %v2831
      %v2834 = vsel %vm1246, %v2833, -inf
      %2835 = vmax.xlane.f32.xlu0 %v2834
      %v2836 = vpop.xlane.xlu0 %2835
      %v2837 = vsub.f32 %v2833, %v2836
      %v2838 = vmul.f32 %v2837, 1.442695
      %v2839 = vpow.pop %v2838
      %v2840 = vsel %vm1246, %v2839, 0.0
      %2841 = vadd.xlane.f32.xlu0 %v2840
      %v2842 = vpop.xlane.xlu0 %2841
      %v2843 = vrcp.pop %v2842
      %v2844 = vmul.f32 %v2839, %v2843
      %v2845 = vpack.c.bf16 %v2844, %v2844
      %2847 = vrot.lane.b32.xlu0 %v2779, 96
      %v2848 = vpop.permute.xlu0 %2847
      %v2850 = vsel %vm1246, %v2845, 0
      %v2853 = vsel %vm1312, %v2848, 0
      %2855 = vmatprep.subr.bf16.mxu0 0
      %2856 = vmatpush1.bf16.msra.mxu0 0
      %2857 = vmatprep.subr.bf16.mxu0 0
      %2858 = vmatpush1.bf16.msra.mxu0 0
      %2859 = vmatprep.subr.bf16.mxu0 0
      %2860 = vmatpush1.bf16.msra.mxu0 0
      %2861 = vmatprep.subr.bf16.mxu0 0
      %2862 = vmatpush1.bf16.msra.mxu0 0
      %2863 = vmatprep.subr.bf16.mxu0 0
      %2864 = vmatpush1.bf16.msra.mxu0 0
      %2865 = vmatprep.subr.bf16.mxu0 0
      %2866 = vmatpush1.bf16.msra.mxu0 0
      %2867 = vmatprep.subr.bf16.mxu0 0
      %2868 = vmatpush1.bf16.msra.mxu0 0
      %2869 = vmatprep.subr.bf16.mxu0 0
      %2870 = vmatpush1.bf16.msra.mxu0 %v2853
      %2871 = vmatprep.subr.bf16.mxu0 0
      %2872 = vmatpush2.bf16.msra.mxu0 0
      %2873 = vmatprep.subr.bf16.mxu0 0
      %2874 = vmatpush2.bf16.msra.mxu0 0
      %2875 = vmatprep.subr.bf16.mxu0 0
      %2876 = vmatpush2.bf16.msra.mxu0 0
      %2877 = vmatprep.subr.bf16.mxu0 0
      %2878 = vmatpush2.bf16.msra.mxu0 0
      %2879 = vmatprep.subr.bf16.mxu0 0
      %2880 = vmatpush2.bf16.msra.mxu0 0
      %2881 = vmatprep.subr.bf16.mxu0 0
      %2882 = vmatpush2.bf16.msra.mxu0 0
      %2883 = vmatprep.subr.bf16.mxu0 0
      %2884 = vmatpush2.bf16.msra.mxu0 0
      %2885 = vmatprep.subr.bf16.mxu0 0
      %2886 = vmatpush2.bf16.msra.mxu0 0
      %2887 = vmatprep.mubr.bf16.mxu0 0
      %2888 = vmatmul.mubr.bf16.gmra.mxu0 %v2850
      %v2889 = vpop.f32.mrf.mxu0
      %v2890 = vadd.f32 0.0, %v2889
      %v2891 = vpop.f32.mrf.mxu0
      %v2892 = vpop.f32.mrf.mxu0
      %v2893 = vpop.f32.mrf.mxu0
      %2894 = vdwg.mxu0
      %v2895 = vpack.c.bf16 %v2890, %v2890
      %2897 = vrot.lane.b32.xlu0 %v2778, 120
      %v2898 = vpop.permute.xlu0 %2897
      %2899 = vrot.lane.b32.xlu0 %v2779, 120
      %v2900 = vpop.permute.xlu0 %2899
      %v2902 = vsel %vm1246, %v2898, 0
      %v2905 = vsel %vm1246, %v2900, 0
      %2907 = vmatprep.subr.bf16.mxu0 0
      %2908 = vmatpush1.bf16.xpose.msra.mxu0 0
      %2909 = vmatprep.subr.bf16.mxu0 0
      %2910 = vmatpush1.bf16.xpose.msra.mxu0 0
      %2911 = vmatprep.subr.bf16.mxu0 0
      %2912 = vmatpush1.bf16.xpose.msra.mxu0 0
      %2913 = vmatprep.subr.bf16.mxu0 0
      %2914 = vmatpush1.bf16.xpose.msra.mxu0 0
      %2915 = vmatprep.subr.bf16.mxu0 0
      %2916 = vmatpush1.bf16.xpose.msra.mxu0 0
      %2917 = vmatprep.subr.bf16.mxu0 0
      %2918 = vmatpush1.bf16.xpose.msra.mxu0 0
      %2919 = vmatprep.subr.bf16.mxu0 0
      %2920 = vmatpush1.bf16.xpose.msra.mxu0 0
      %2921 = vmatprep.subr.bf16.mxu0 0
      %2922 = vmatpush1.bf16.xpose.msra.mxu0 %v2905
      %2923 = vmatprep.subr.bf16.mxu0 0
      %2924 = vmatpush2.bf16.xpose.msra.mxu0 0
      %2925 = vmatprep.subr.bf16.mxu0 0
      %2926 = vmatpush2.bf16.xpose.msra.mxu0 0
      %2927 = vmatprep.subr.bf16.mxu0 0
      %2928 = vmatpush2.bf16.xpose.msra.mxu0 0
      %2929 = vmatprep.subr.bf16.mxu0 0
      %2930 = vmatpush2.bf16.xpose.msra.mxu0 0
      %2931 = vmatprep.subr.bf16.mxu0 0
      %2932 = vmatpush2.bf16.xpose.msra.mxu0 0
      %2933 = vmatprep.subr.bf16.mxu0 0
      %2934 = vmatpush2.bf16.xpose.msra.mxu0 0
      %2935 = vmatprep.subr.bf16.mxu0 0
      %2936 = vmatpush2.bf16.xpose.msra.mxu0 0
      %2937 = vmatprep.subr.bf16.mxu0 0
      %2938 = vmatpush2.bf16.xpose.msra.mxu0 0
      %2939 = vmatprep.mubr.bf16.mxu0 0
      %2940 = vmatmul.mubr.bf16.gmra.mxu0 %v2902
      %v2941 = vpop.f32.mrf.mxu0
      %v2942 = vadd.f32 0.0, %v2941
      %v2943 = vpop.f32.mrf.mxu0
      %v2944 = vpop.f32.mrf.mxu0
      %v2945 = vpop.f32.mrf.mxu0
      %2946 = vdwg.mxu0
      %v2947 = vmul.f32 %v2942, 0.35355338
      %v2948 = vadd.f32 %v2947, %v2831
      %v2949 = vsel %vm1246, %v2948, -inf
      %2950 = vmax.xlane.f32.xlu0 %v2949
      %v2951 = vpop.xlane.xlu0 %2950
      %v2952 = vsub.f32 %v2948, %v2951
      %v2953 = vmul.f32 %v2952, 1.442695
      %v2954 = vpow.pop %v2953
      %v2955 = vsel %vm1246, %v2954, 0.0
      %2956 = vadd.xlane.f32.xlu0 %v2955
      %v2957 = vpop.xlane.xlu0 %2956
      %v2958 = vrcp.pop %v2957
      %v2959 = vmul.f32 %v2954, %v2958
      %v2960 = vpack.c.bf16 %v2959, %v2959
      %2961 = vrot.lane.b32.xlu0 %v2779, 88
      %v2962 = vpop.permute.xlu0 %2961
      %v2964 = vsel %vm1246, %v2960, 0
      %v2967 = vsel %vm1312, %v2962, 0
      %2969 = vmatprep.subr.bf16.mxu0 0
      %2970 = vmatpush1.bf16.msra.mxu0 0
      %2971 = vmatprep.subr.bf16.mxu0 0
      %2972 = vmatpush1.bf16.msra.mxu0 0
      %2973 = vmatprep.subr.bf16.mxu0 0
      %2974 = vmatpush1.bf16.msra.mxu0 0
      %2975 = vmatprep.subr.bf16.mxu0 0
      %2976 = vmatpush1.bf16.msra.mxu0 0
      %2977 = vmatprep.subr.bf16.mxu0 0
      %2978 = vmatpush1.bf16.msra.mxu0 0
      %2979 = vmatprep.subr.bf16.mxu0 0
      %2980 = vmatpush1.bf16.msra.mxu0 0
      %2981 = vmatprep.subr.bf16.mxu0 0
      %2982 = vmatpush1.bf16.msra.mxu0 0
      %2983 = vmatprep.subr.bf16.mxu0 0
      %2984 = vmatpush1.bf16.msra.mxu0 %v2967
      %2985 = vmatprep.subr.bf16.mxu0 0
      %2986 = vmatpush2.bf16.msra.mxu0 0
      %2987 = vmatprep.subr.bf16.mxu0 0
      %2988 = vmatpush2.bf16.msra.mxu0 0
      %2989 = vmatprep.subr.bf16.mxu0 0
      %2990 = vmatpush2.bf16.msra.mxu0 0
      %2991 = vmatprep.subr.bf16.mxu0 0
      %2992 = vmatpush2.bf16.msra.mxu0 0
      %2993 = vmatprep.subr.bf16.mxu0 0
      %2994 = vmatpush2.bf16.msra.mxu0 0
      %2995 = vmatprep.subr.bf16.mxu0 0
      %2996 = vmatpush2.bf16.msra.mxu0 0
      %2997 = vmatprep.subr.bf16.mxu0 0
      %2998 = vmatpush2.bf16.msra.mxu0 0
      %2999 = vmatprep.subr.bf16.mxu0 0
      %3000 = vmatpush2.bf16.msra.mxu0 0
      %3001 = vmatprep.mubr.bf16.mxu0 0
      %3002 = vmatmul.mubr.bf16.gmra.mxu0 %v2964
      %v3003 = vpop.f32.mrf.mxu0
      %v3004 = vadd.f32 0.0, %v3003
      %v3005 = vpop.f32.mrf.mxu0
      %v3006 = vpop.f32.mrf.mxu0
      %v3007 = vpop.f32.mrf.mxu0
      %3008 = vdwg.mxu0
      %v3009 = vpack.c.bf16 %v3004, %v3004
      %v3014 = vunpack.c.l.b16 %v2772
      %v3015 = vunpack.c.l.b16 %v2773
      %v3016 = vunpack.c.l.b16 %v2774
      %v3017 = vunpack.c.l.b16 %v2775
      %v3018 = vpack.c.b16 %v3015, %v3014
      %v3019 = vpack.c.b16 %v3017, %v3016
      %3020 = vrot.lane.b32.xlu0 %v3018, 120
      %v3021 = vpop.permute.xlu0 %3020
      %3022 = vrot.lane.b32.xlu0 %v3019, 120
      %v3023 = vpop.permute.xlu0 %3022
      %v3025 = vsel %vm1246, %v3009, 0
      %v3028 = vsel %vm1246, %v3021, 0
      %v3031 = vsel %vm1246, %v3023, 0
      %3033 = vmatprep.subr.bf16.mxu0 0
      %3034 = vmatpush1.bf16.xpose.msra.mxu0 0
      %3035 = vmatprep.subr.bf16.mxu0 0
      %3036 = vmatpush1.bf16.xpose.msra.mxu0 0
      %3037 = vmatprep.subr.bf16.mxu0 0
      %3038 = vmatpush1.bf16.xpose.msra.mxu0 0
      %3039 = vmatprep.subr.bf16.mxu0 0
      %3040 = vmatpush1.bf16.xpose.msra.mxu0 0
      %3041 = vmatprep.subr.bf16.mxu0 0
      %3042 = vmatpush1.bf16.xpose.msra.mxu0 0
      %3043 = vmatprep.subr.bf16.mxu0 0
      %3044 = vmatpush1.bf16.xpose.msra.mxu0 0
      %3045 = vmatprep.subr.bf16.mxu0 0
      %3046 = vmatpush1.bf16.xpose.msra.mxu0 %v3031
      %3047 = vmatprep.subr.bf16.mxu0 0
      %3048 = vmatpush1.bf16.xpose.msra.mxu0 %v3028
      %3049 = vmatprep.subr.bf16.mxu0 0
      %3050 = vmatpush2.bf16.xpose.msra.mxu0 0
      %3051 = vmatprep.subr.bf16.mxu0 0
      %3052 = vmatpush2.bf16.xpose.msra.mxu0 0
      %3053 = vmatprep.subr.bf16.mxu0 0
      %3054 = vmatpush2.bf16.xpose.msra.mxu0 0
      %3055 = vmatprep.subr.bf16.mxu0 0
      %3056 = vmatpush2.bf16.xpose.msra.mxu0 0
      %3057 = vmatprep.subr.bf16.mxu0 0
      %3058 = vmatpush2.bf16.xpose.msra.mxu0 0
      %3059 = vmatprep.subr.bf16.mxu0 0
      %3060 = vmatpush2.bf16.xpose.msra.mxu0 0
      %3061 = vmatprep.subr.bf16.mxu0 0
      %3062 = vmatpush2.bf16.xpose.msra.mxu0 0
      %3063 = vmatprep.subr.bf16.mxu0 0
      %3064 = vmatpush2.bf16.xpose.msra.mxu0 0
      %3065 = vmatprep.mubr.bf16.mxu0 0
      %3066 = vmatmul.mubr.bf16.gmra.mxu0 %v3025
      %v3067 = vpop.f32.mrf.mxu0
      %v3068 = vadd.f32 0.0, %v3067
      %v3069 = vpop.f32.mrf.mxu0
      %v3070 = vpop.f32.mrf.mxu0
      %v3071 = vpop.f32.mrf.mxu0
      %3072 = vdwg.mxu0
      %v3074 = vsel %vm1246, %v2895, 0
      %v3077 = vsel %vm1246, %v3018, 0
      %v3080 = vsel %vm1246, %v3019, 0
      %3082 = vmatprep.subr.bf16.mxu0 0
      %3083 = vmatpush1.bf16.xpose.msra.mxu0 0
      %3084 = vmatprep.subr.bf16.mxu0 0
      %3085 = vmatpush1.bf16.xpose.msra.mxu0 0
      %3086 = vmatprep.subr.bf16.mxu0 0
      %3087 = vmatpush1.bf16.xpose.msra.mxu0 0
      %3088 = vmatprep.subr.bf16.mxu0 0
      %3089 = vmatpush1.bf16.xpose.msra.mxu0 0
      %3090 = vmatprep.subr.bf16.mxu0 0
      %3091 = vmatpush1.bf16.xpose.msra.mxu0 0
      %3092 = vmatprep.subr.bf16.mxu0 0
      %3093 = vmatpush1.bf16.xpose.msra.mxu0 0
      %3094 = vmatprep.subr.bf16.mxu0 0
      %3095 = vmatpush1.bf16.xpose.msra.mxu0 %v3080
      %3096 = vmatprep.subr.bf16.mxu0 0
      %3097 = vmatpush1.bf16.xpose.msra.mxu0 %v3077
      %3098 = vmatprep.subr.bf16.mxu0 0
      %3099 = vmatpush2.bf16.xpose.msra.mxu0 0
      %3100 = vmatprep.subr.bf16.mxu0 0
      %3101 = vmatpush2.bf16.xpose.msra.mxu0 0
      %3102 = vmatprep.subr.bf16.mxu0 0
      %3103 = vmatpush2.bf16.xpose.msra.mxu0 0
      %3104 = vmatprep.subr.bf16.mxu0 0
      %3105 = vmatpush2.bf16.xpose.msra.mxu0 0
      %3106 = vmatprep.subr.bf16.mxu0 0
      %3107 = vmatpush2.bf16.xpose.msra.mxu0 0
      %3108 = vmatprep.subr.bf16.mxu0 0
      %3109 = vmatpush2.bf16.xpose.msra.mxu0 0
      %3110 = vmatprep.subr.bf16.mxu0 0
      %3111 = vmatpush2.bf16.xpose.msra.mxu0 0
      %3112 = vmatprep.subr.bf16.mxu0 0
      %3113 = vmatpush2.bf16.xpose.msra.mxu0 0
      %3114 = vmatprep.mubr.bf16.mxu0 0
      %3115 = vmatmul.mubr.bf16.gmra.mxu0 %v3074
      %v3116 = vpop.f32.mrf.mxu0
      %v3117 = vadd.f32 %v3068, %v3116
      %v3118 = vpop.f32.mrf.mxu0
      %v3119 = vpop.f32.mrf.mxu0
      %v3120 = vpop.f32.mrf.mxu0
      %3121 = vdwg.mxu0
      %3122 = vrot.lane.b32.xlu0 %v2778, 112
      %v3123 = vpop.permute.xlu0 %3122
      %3124 = vrot.lane.b32.xlu0 %v2779, 112
      %v3125 = vpop.permute.xlu0 %3124
      %v3127 = vsel %vm1246, %v3123, 0
      %v3130 = vsel %vm1246, %v3125, 0
      %3132 = vmatprep.subr.bf16.mxu0 0
      %3133 = vmatpush1.bf16.xpose.msra.mxu0 0
      %3134 = vmatprep.subr.bf16.mxu0 0
      %3135 = vmatpush1.bf16.xpose.msra.mxu0 0
      %3136 = vmatprep.subr.bf16.mxu0 0
      %3137 = vmatpush1.bf16.xpose.msra.mxu0 0
      %3138 = vmatprep.subr.bf16.mxu0 0
      %3139 = vmatpush1.bf16.xpose.msra.mxu0 0
      %3140 = vmatprep.subr.bf16.mxu0 0
      %3141 = vmatpush1.bf16.xpose.msra.mxu0 0
      %3142 = vmatprep.subr.bf16.mxu0 0
      %3143 = vmatpush1.bf16.xpose.msra.mxu0 0
      %3144 = vmatprep.subr.bf16.mxu0 0
      %3145 = vmatpush1.bf16.xpose.msra.mxu0 0
      %3146 = vmatprep.subr.bf16.mxu0 0
      %3147 = vmatpush1.bf16.xpose.msra.mxu0 %v3130
      %3148 = vmatprep.subr.bf16.mxu0 0
      %3149 = vmatpush2.bf16.xpose.msra.mxu0 0
      %3150 = vmatprep.subr.bf16.mxu0 0
      %3151 = vmatpush2.bf16.xpose.msra.mxu0 0
      %3152 = vmatprep.subr.bf16.mxu0 0
      %3153 = vmatpush2.bf16.xpose.msra.mxu0 0
      %3154 = vmatprep.subr.bf16.mxu0 0
      %3155 = vmatpush2.bf16.xpose.msra.mxu0 0
      %3156 = vmatprep.subr.bf16.mxu0 0
      %3157 = vmatpush2.bf16.xpose.msra.mxu0 0
      %3158 = vmatprep.subr.bf16.mxu0 0
      %3159 = vmatpush2.bf16.xpose.msra.mxu0 0
      %3160 = vmatprep.subr.bf16.mxu0 0
      %3161 = vmatpush2.bf16.xpose.msra.mxu0 0
      %3162 = vmatprep.subr.bf16.mxu0 0
      %3163 = vmatpush2.bf16.xpose.msra.mxu0 0
      %3164 = vmatprep.mubr.bf16.mxu0 0
      %3165 = vmatmul.mubr.bf16.gmra.mxu0 %v3127
      %v3166 = vpop.f32.mrf.mxu0
      %v3167 = vadd.f32 0.0, %v3166
      %v3168 = vpop.f32.mrf.mxu0
      %v3169 = vpop.f32.mrf.mxu0
      %v3170 = vpop.f32.mrf.mxu0
      %3171 = vdwg.mxu0
      %v3172 = vmul.f32 %v3167, 0.35355338
      %v3173 = vadd.f32 %v3172, %v2831
      %v3174 = vsel %vm1246, %v3173, -inf
      %3175 = vmax.xlane.f32.xlu0 %v3174
      %v3176 = vpop.xlane.xlu0 %3175
      %v3177 = vsub.f32 %v3173, %v3176
      %v3178 = vmul.f32 %v3177, 1.442695
      %v3179 = vpow.pop %v3178
      %v3180 = vsel %vm1246, %v3179, 0.0
      %3181 = vadd.xlane.f32.xlu0 %v3180
      %v3182 = vpop.xlane.xlu0 %3181
      %v3183 = vrcp.pop %v3182
      %v3184 = vmul.f32 %v3179, %v3183
      %v3185 = vpack.c.bf16 %v3184, %v3184
      %3186 = vrot.lane.b32.xlu0 %v2779, 80
      %v3187 = vpop.permute.xlu0 %3186
      %v3189 = vsel %vm1246, %v3185, 0
      %v3192 = vsel %vm1312, %v3187, 0
      %3194 = vmatprep.subr.bf16.mxu0 0
      %3195 = vmatpush1.bf16.msra.mxu0 0
      %3196 = vmatprep.subr.bf16.mxu0 0
      %3197 = vmatpush1.bf16.msra.mxu0 0
      %3198 = vmatprep.subr.bf16.mxu0 0
      %3199 = vmatpush1.bf16.msra.mxu0 0
      %3200 = vmatprep.subr.bf16.mxu0 0
      %3201 = vmatpush1.bf16.msra.mxu0 0
      %3202 = vmatprep.subr.bf16.mxu0 0
      %3203 = vmatpush1.bf16.msra.mxu0 0
      %3204 = vmatprep.subr.bf16.mxu0 0
      %3205 = vmatpush1.bf16.msra.mxu0 0
      %3206 = vmatprep.subr.bf16.mxu0 0
      %3207 = vmatpush1.bf16.msra.mxu0 0
      %3208 = vmatprep.subr.bf16.mxu0 0
      %3209 = vmatpush1.bf16.msra.mxu0 %v3192
      %3210 = vmatprep.subr.bf16.mxu0 0
      %3211 = vmatpush2.bf16.msra.mxu0 0
      %3212 = vmatprep.subr.bf16.mxu0 0
      %3213 = vmatpush2.bf16.msra.mxu0 0
      %3214 = vmatprep.subr.bf16.mxu0 0
      %3215 = vmatpush2.bf16.msra.mxu0 0
      %3216 = vmatprep.subr.bf16.mxu0 0
      %3217 = vmatpush2.bf16.msra.mxu0 0
      %3218 = vmatprep.subr.bf16.mxu0 0
      %3219 = vmatpush2.bf16.msra.mxu0 0
      %3220 = vmatprep.subr.bf16.mxu0 0
      %3221 = vmatpush2.bf16.msra.mxu0 0
      %3222 = vmatprep.subr.bf16.mxu0 0
      %3223 = vmatpush2.bf16.msra.mxu0 0
      %3224 = vmatprep.subr.bf16.mxu0 0
      %3225 = vmatpush2.bf16.msra.mxu0 0
      %3226 = vmatprep.mubr.bf16.mxu0 0
      %3227 = vmatmul.mubr.bf16.gmra.mxu0 %v3189
      %v3228 = vpop.f32.mrf.mxu0
      %v3229 = vadd.f32 0.0, %v3228
      %v3230 = vpop.f32.mrf.mxu0
      %v3231 = vpop.f32.mrf.mxu0
      %v3232 = vpop.f32.mrf.mxu0
      %3233 = vdwg.mxu0
      %v3234 = vpack.c.bf16 %v3229, %v3229
      %3235 = vrot.lane.b32.xlu0 %v3018, 112
      %v3236 = vpop.permute.xlu0 %3235
      %3237 = vrot.lane.b32.xlu0 %v3019, 112
      %v3238 = vpop.permute.xlu0 %3237
      %v3240 = vsel %vm1246, %v3234, 0
      %v3243 = vsel %vm1246, %v3236, 0
      %v3246 = vsel %vm1246, %v3238, 0
      %3248 = vmatprep.subr.bf16.mxu0 0
      %3249 = vmatpush1.bf16.xpose.msra.mxu0 0
      %3250 = vmatprep.subr.bf16.mxu0 0
      %3251 = vmatpush1.bf16.xpose.msra.mxu0 0
      %3252 = vmatprep.subr.bf16.mxu0 0
      %3253 = vmatpush1.bf16.xpose.msra.mxu0 0
      %3254 = vmatprep.subr.bf16.mxu0 0
      %3255 = vmatpush1.bf16.xpose.msra.mxu0 0
      %3256 = vmatprep.subr.bf16.mxu0 0
      %3257 = vmatpush1.bf16.xpose.msra.mxu0 0
      %3258 = vmatprep.subr.bf16.mxu0 0
      %3259 = vmatpush1.bf16.xpose.msra.mxu0 0
      %3260 = vmatprep.subr.bf16.mxu0 0
      %3261 = vmatpush1.bf16.xpose.msra.mxu0 %v3246
      %3262 = vmatprep.subr.bf16.mxu0 0
      %3263 = vmatpush1.bf16.xpose.msra.mxu0 %v3243
      %3264 = vmatprep.subr.bf16.mxu0 0
      %3265 = vmatpush2.bf16.xpose.msra.mxu0 0
      %3266 = vmatprep.subr.bf16.mxu0 0
      %3267 = vmatpush2.bf16.xpose.msra.mxu0 0
      %3268 = vmatprep.subr.bf16.mxu0 0
      %3269 = vmatpush2.bf16.xpose.msra.mxu0 0
      %3270 = vmatprep.subr.bf16.mxu0 0
      %3271 = vmatpush2.bf16.xpose.msra.mxu0 0
      %3272 = vmatprep.subr.bf16.mxu0 0
      %3273 = vmatpush2.bf16.xpose.msra.mxu0 0
      %3274 = vmatprep.subr.bf16.mxu0 0
      %3275 = vmatpush2.bf16.xpose.msra.mxu0 0
      %3276 = vmatprep.subr.bf16.mxu0 0
      %3277 = vmatpush2.bf16.xpose.msra.mxu0 0
      %3278 = vmatprep.subr.bf16.mxu0 0
      %3279 = vmatpush2.bf16.xpose.msra.mxu0 0
      %3280 = vmatprep.mubr.bf16.mxu0 0
      %3281 = vmatmul.mubr.bf16.gmra.mxu0 %v3240
      %v3282 = vpop.f32.mrf.mxu0
      %v3283 = vadd.f32 0.0, %v3282
      %v3284 = vpop.f32.mrf.mxu0
      %v3285 = vpop.f32.mrf.mxu0
      %v3286 = vpop.f32.mrf.mxu0
      %3287 = vdwg.mxu0
      %v3288 = vadd.f32 %v3117, %v3283
      %3289 = vrot.lane.b32.xlu0 %v2778, 104
      %v3290 = vpop.permute.xlu0 %3289
      %3291 = vrot.lane.b32.xlu0 %v2779, 104
      %v3292 = vpop.permute.xlu0 %3291
      %v3294 = vsel %vm1246, %v3290, 0
      %v3297 = vsel %vm1246, %v3292, 0
      %3299 = vmatprep.subr.bf16.mxu0 0
      %3300 = vmatpush1.bf16.xpose.msra.mxu0 0
      %3301 = vmatprep.subr.bf16.mxu0 0
      %3302 = vmatpush1.bf16.xpose.msra.mxu0 0
      %3303 = vmatprep.subr.bf16.mxu0 0
      %3304 = vmatpush1.bf16.xpose.msra.mxu0 0
      %3305 = vmatprep.subr.bf16.mxu0 0
      %3306 = vmatpush1.bf16.xpose.msra.mxu0 0
      %3307 = vmatprep.subr.bf16.mxu0 0
      %3308 = vmatpush1.bf16.xpose.msra.mxu0 0
      %3309 = vmatprep.subr.bf16.mxu0 0
      %3310 = vmatpush1.bf16.xpose.msra.mxu0 0
      %3311 = vmatprep.subr.bf16.mxu0 0
      %3312 = vmatpush1.bf16.xpose.msra.mxu0 0
      %3313 = vmatprep.subr.bf16.mxu0 0
      %3314 = vmatpush1.bf16.xpose.msra.mxu0 %v3297
      %3315 = vmatprep.subr.bf16.mxu0 0
      %3316 = vmatpush2.bf16.xpose.msra.mxu0 0
      %3317 = vmatprep.subr.bf16.mxu0 0
      %3318 = vmatpush2.bf16.xpose.msra.mxu0 0
      %3319 = vmatprep.subr.bf16.mxu0 0
      %3320 = vmatpush2.bf16.xpose.msra.mxu0 0
      %3321 = vmatprep.subr.bf16.mxu0 0
      %3322 = vmatpush2.bf16.xpose.msra.mxu0 0
      %3323 = vmatprep.subr.bf16.mxu0 0
      %3324 = vmatpush2.bf16.xpose.msra.mxu0 0
      %3325 = vmatprep.subr.bf16.mxu0 0
      %3326 = vmatpush2.bf16.xpose.msra.mxu0 0
      %3327 = vmatprep.subr.bf16.mxu0 0
      %3328 = vmatpush2.bf16.xpose.msra.mxu0 0
      %3329 = vmatprep.subr.bf16.mxu0 0
      %3330 = vmatpush2.bf16.xpose.msra.mxu0 0
      %3331 = vmatprep.mubr.bf16.mxu0 0
      %3332 = vmatmul.mubr.bf16.gmra.mxu0 %v3294
      %v3333 = vpop.f32.mrf.mxu0
      %v3334 = vadd.f32 0.0, %v3333
      %v3335 = vpop.f32.mrf.mxu0
      %v3336 = vpop.f32.mrf.mxu0
      %v3337 = vpop.f32.mrf.mxu0
      %3338 = vdwg.mxu0
      %v3339 = vmul.f32 %v3334, 0.35355338
      %v3340 = vadd.f32 %v3339, %v2831
      %v3341 = vsel %vm1246, %v3340, -inf
      %3342 = vmax.xlane.f32.xlu0 %v3341
      %v3343 = vpop.xlane.xlu0 %3342
      %v3344 = vsub.f32 %v3340, %v3343
      %v3345 = vmul.f32 %v3344, 1.442695
      %v3346 = vpow.pop %v3345
      %v3347 = vsel %vm1246, %v3346, 0.0
      %3348 = vadd.xlane.f32.xlu0 %v3347
      %v3349 = vpop.xlane.xlu0 %3348
      %v3350 = vrcp.pop %v3349
      %v3351 = vmul.f32 %v3346, %v3350
      %v3352 = vpack.c.bf16 %v3351, %v3351
      %3353 = vrot.lane.b32.xlu0 %v2779, 72
      %v3354 = vpop.permute.xlu0 %3353
      %v3356 = vsel %vm1246, %v3352, 0
      %v3359 = vsel %vm1312, %v3354, 0
      %3361 = vmatprep.subr.bf16.mxu0 0
      %3362 = vmatpush1.bf16.msra.mxu0 0
      %3363 = vmatprep.subr.bf16.mxu0 0
      %3364 = vmatpush1.bf16.msra.mxu0 0
      %3365 = vmatprep.subr.bf16.mxu0 0
      %3366 = vmatpush1.bf16.msra.mxu0 0
      %3367 = vmatprep.subr.bf16.mxu0 0
      %3368 = vmatpush1.bf16.msra.mxu0 0
      %3369 = vmatprep.subr.bf16.mxu0 0
      %3370 = vmatpush1.bf16.msra.mxu0 0
      %3371 = vmatprep.subr.bf16.mxu0 0
      %3372 = vmatpush1.bf16.msra.mxu0 0
      %3373 = vmatprep.subr.bf16.mxu0 0
      %3374 = vmatpush1.bf16.msra.mxu0 0
      %3375 = vmatprep.subr.bf16.mxu0 0
      %3376 = vmatpush1.bf16.msra.mxu0 %v3359
      %3377 = vmatprep.subr.bf16.mxu0 0
      %3378 = vmatpush2.bf16.msra.mxu0 0
      %3379 = vmatprep.subr.bf16.mxu0 0
      %3380 = vmatpush2.bf16.msra.mxu0 0
      %3381 = vmatprep.subr.bf16.mxu0 0
      %3382 = vmatpush2.bf16.msra.mxu0 0
      %3383 = vmatprep.subr.bf16.mxu0 0
      %3384 = vmatpush2.bf16.msra.mxu0 0
      %3385 = vmatprep.subr.bf16.mxu0 0
      %3386 = vmatpush2.bf16.msra.mxu0 0
      %3387 = vmatprep.subr.bf16.mxu0 0
      %3388 = vmatpush2.bf16.msra.mxu0 0
      %3389 = vmatprep.subr.bf16.mxu0 0
      %3390 = vmatpush2.bf16.msra.mxu0 0
      %3391 = vmatprep.subr.bf16.mxu0 0
      %3392 = vmatpush2.bf16.msra.mxu0 0
      %3393 = vmatprep.mubr.bf16.mxu0 0
      %3394 = vmatmul.mubr.bf16.gmra.mxu0 %v3356
      %v3395 = vpop.f32.mrf.mxu0
      %v3396 = vadd.f32 0.0, %v3395
      %v3397 = vpop.f32.mrf.mxu0
      %v3398 = vpop.f32.mrf.mxu0
      %v3399 = vpop.f32.mrf.mxu0
      %3400 = vdwg.mxu0
      %v3401 = vpack.c.bf16 %v3396, %v3396
      %3402 = vrot.lane.b32.xlu0 %v3018, 104
      %v3403 = vpop.permute.xlu0 %3402
      %3404 = vrot.lane.b32.xlu0 %v3019, 104
      %v3405 = vpop.permute.xlu0 %3404
      %v3407 = vsel %vm1246, %v3401, 0
      %v3410 = vsel %vm1246, %v3403, 0
      %v3413 = vsel %vm1246, %v3405, 0
      %3415 = vmatprep.subr.bf16.mxu0 0
      %3416 = vmatpush1.bf16.xpose.msra.mxu0 0
      %3417 = vmatprep.subr.bf16.mxu0 0
      %3418 = vmatpush1.bf16.xpose.msra.mxu0 0
      %3419 = vmatprep.subr.bf16.mxu0 0
      %3420 = vmatpush1.bf16.xpose.msra.mxu0 0
      %3421 = vmatprep.subr.bf16.mxu0 0
      %3422 = vmatpush1.bf16.xpose.msra.mxu0 0
      %3423 = vmatprep.subr.bf16.mxu0 0
      %3424 = vmatpush1.bf16.xpose.msra.mxu0 0
      %3425 = vmatprep.subr.bf16.mxu0 0
      %3426 = vmatpush1.bf16.xpose.msra.mxu0 0
      %3427 = vmatprep.subr.bf16.mxu0 0
      %3428 = vmatpush1.bf16.xpose.msra.mxu0 %v3413
      %3429 = vmatprep.subr.bf16.mxu0 0
      %3430 = vmatpush1.bf16.xpose.msra.mxu0 %v3410
      %3431 = vmatprep.subr.bf16.mxu0 0
      %3432 = vmatpush2.bf16.xpose.msra.mxu0 0
      %3433 = vmatprep.subr.bf16.mxu0 0
      %3434 = vmatpush2.bf16.xpose.msra.mxu0 0
      %3435 = vmatprep.subr.bf16.mxu0 0
      %3436 = vmatpush2.bf16.xpose.msra.mxu0 0
      %3437 = vmatprep.subr.bf16.mxu0 0
      %3438 = vmatpush2.bf16.xpose.msra.mxu0 0
      %3439 = vmatprep.subr.bf16.mxu0 0
      %3440 = vmatpush2.bf16.xpose.msra.mxu0 0
      %3441 = vmatprep.subr.bf16.mxu0 0
      %3442 = vmatpush2.bf16.xpose.msra.mxu0 0
      %3443 = vmatprep.subr.bf16.mxu0 0
      %3444 = vmatpush2.bf16.xpose.msra.mxu0 0
      %3445 = vmatprep.subr.bf16.mxu0 0
      %3446 = vmatpush2.bf16.xpose.msra.mxu0 0
      %3447 = vmatprep.mubr.bf16.mxu0 0
      %3448 = vmatmul.mubr.bf16.gmra.mxu0 %v3407
      %v3449 = vpop.f32.mrf.mxu0
      %v3450 = vadd.f32 0.0, %v3449
      %v3451 = vpop.f32.mrf.mxu0
      %v3452 = vpop.f32.mrf.mxu0
      %v3453 = vpop.f32.mrf.mxu0
      %3454 = vdwg.mxu0
      %v3455 = vadd.f32 %v3288, %v3450
      %vm3456 = vcmp.eq.f32.partialorder %v1066, 0.0
      %v3457 = vsel %vm3456, -1e+09, 0.0
      %v3458 = vpack.c.bf16 %v2677, %v2677
      %v3459 = vpack.c.bf16 %v2769, %v2769
      %v3461 = vsel %vm1246, %v3458, 0
      %v3464 = vsel %vm1246, %v3459, 0
      %3466 = vmatprep.subr.bf16.mxu0 0
      %3467 = vmatpush1.bf16.xpose.msra.mxu0 0
      %3468 = vmatprep.subr.bf16.mxu0 0
      %3469 = vmatpush1.bf16.xpose.msra.mxu0 0
      %3470 = vmatprep.subr.bf16.mxu0 0
      %3471 = vmatpush1.bf16.xpose.msra.mxu0 0
      %3472 = vmatprep.subr.bf16.mxu0 0
      %3473 = vmatpush1.bf16.xpose.msra.mxu0 0
      %3474 = vmatprep.subr.bf16.mxu0 0
      %3475 = vmatpush1.bf16.xpose.msra.mxu0 0
      %3476 = vmatprep.subr.bf16.mxu0 0
      %3477 = vmatpush1.bf16.xpose.msra.mxu0 0
      %3478 = vmatprep.subr.bf16.mxu0 0
      %3479 = vmatpush1.bf16.xpose.msra.mxu0 0
      %3480 = vmatprep.subr.bf16.mxu0 0
      %3481 = vmatpush1.bf16.xpose.msra.mxu0 %v3464
      %3482 = vmatprep.subr.bf16.mxu0 0
      %3483 = vmatpush2.bf16.xpose.msra.mxu0 0
      %3484 = vmatprep.subr.bf16.mxu0 0
      %3485 = vmatpush2.bf16.xpose.msra.mxu0 0
      %3486 = vmatprep.subr.bf16.mxu0 0
      %3487 = vmatpush2.bf16.xpose.msra.mxu0 0
      %3488 = vmatprep.subr.bf16.mxu0 0
      %3489 = vmatpush2.bf16.xpose.msra.mxu0 0
      %3490 = vmatprep.subr.bf16.mxu0 0
      %3491 = vmatpush2.bf16.xpose.msra.mxu0 0
      %3492 = vmatprep.subr.bf16.mxu0 0
      %3493 = vmatpush2.bf16.xpose.msra.mxu0 0
      %3494 = vmatprep.subr.bf16.mxu0 0
      %3495 = vmatpush2.bf16.xpose.msra.mxu0 0
      %3496 = vmatprep.subr.bf16.mxu0 0
      %3497 = vmatpush2.bf16.xpose.msra.mxu0 0
      %3498 = vmatprep.mubr.bf16.mxu0 0
      %3499 = vmatmul.mubr.bf16.gmra.mxu0 %v3461
      %v3500 = vpop.f32.mrf.mxu0
      %v3501 = vadd.f32 0.0, %v3500
      %v3502 = vpop.f32.mrf.mxu0
      %v3503 = vpop.f32.mrf.mxu0
      %v3504 = vpop.f32.mrf.mxu0
      %3505 = vdwg.mxu0
      %v3506 = vmul.f32 %v3501, 0.35355338
      %v3508 = vlaneseq
      %v3509 = vshrl.u32 %v3508, 7
      %v3510 = vsub.s32 0, %v3509
      %v3511 = vrot.slane %v3457, %v3510
      %v3513 = vadd.f32 %v3506, %v3511
      %v3514 = vsel %vm1246, %v3513, -inf
      %3515 = vmax.xlane.f32.xlu0 %v3514
      %v3516 = vpop.xlane.xlu0 %3515
      %v3517 = vsub.f32 %v3513, %v3516
      %v3518 = vmul.f32 %v3517, 1.442695
      %v3519 = vpow.pop %v3518
      %v3520 = vsel %vm1246, %v3519, 0.0
      %3521 = vadd.xlane.f32.xlu0 %v3520
      %v3522 = vpop.xlane.xlu0 %3521
      %v3523 = vrcp.pop %v3522
      %v3524 = vmul.f32 %v3519, %v3523
      %v3525 = vpack.c.bf16 %v3524, %v3524
      %3527 = vrot.lane.b32.xlu0 %v3459, 96
      %v3528 = vpop.permute.xlu0 %3527
      %v3530 = vsel %vm1246, %v3525, 0
      %v3533 = vsel %vm1312, %v3528, 0
      %3535 = vmatprep.subr.bf16.mxu0 0
      %3536 = vmatpush1.bf16.msra.mxu0 0
      %3537 = vmatprep.subr.bf16.mxu0 0
      %3538 = vmatpush1.bf16.msra.mxu0 0
      %3539 = vmatprep.subr.bf16.mxu0 0
      %3540 = vmatpush1.bf16.msra.mxu0 0
      %3541 = vmatprep.subr.bf16.mxu0 0
      %3542 = vmatpush1.bf16.msra.mxu0 0
      %3543 = vmatprep.subr.bf16.mxu0 0
      %3544 = vmatpush1.bf16.msra.mxu0 0
      %3545 = vmatprep.subr.bf16.mxu0 0
      %3546 = vmatpush1.bf16.msra.mxu0 0
      %3547 = vmatprep.subr.bf16.mxu0 0
      %3548 = vmatpush1.bf16.msra.mxu0 0
      %3549 = vmatprep.subr.bf16.mxu0 0
      %3550 = vmatpush1.bf16.msra.mxu0 %v3533
      %3551 = vmatprep.subr.bf16.mxu0 0
      %3552 = vmatpush2.bf16.msra.mxu0 0
      %3553 = vmatprep.subr.bf16.mxu0 0
      %3554 = vmatpush2.bf16.msra.mxu0 0
      %3555 = vmatprep.subr.bf16.mxu0 0
      %3556 = vmatpush2.bf16.msra.mxu0 0
      %3557 = vmatprep.subr.bf16.mxu0 0
      %3558 = vmatpush2.bf16.msra.mxu0 0
      %3559 = vmatprep.subr.bf16.mxu0 0
      %3560 = vmatpush2.bf16.msra.mxu0 0
      %3561 = vmatprep.subr.bf16.mxu0 0
      %3562 = vmatpush2.bf16.msra.mxu0 0
      %3563 = vmatprep.subr.bf16.mxu0 0
      %3564 = vmatpush2.bf16.msra.mxu0 0
      %3565 = vmatprep.subr.bf16.mxu0 0
      %3566 = vmatpush2.bf16.msra.mxu0 0
      %3567 = vmatprep.mubr.bf16.mxu0 0
      %3568 = vmatmul.mubr.bf16.gmra.mxu0 %v3530
      %v3569 = vpop.f32.mrf.mxu0
      %v3570 = vadd.f32 0.0, %v3569
      %v3571 = vpop.f32.mrf.mxu0
      %v3572 = vpop.f32.mrf.mxu0
      %v3573 = vpop.f32.mrf.mxu0
      %3574 = vdwg.mxu0
      %v3575 = vpack.c.bf16 %v3570, %v3570
      %3577 = vrot.lane.b32.xlu0 %v3458, 120
      %v3578 = vpop.permute.xlu0 %3577
      %3579 = vrot.lane.b32.xlu0 %v3459, 120
      %v3580 = vpop.permute.xlu0 %3579
      %v3582 = vsel %vm1246, %v3578, 0
      %v3585 = vsel %vm1246, %v3580, 0
      %3587 = vmatprep.subr.bf16.mxu0 0
      %3588 = vmatpush1.bf16.xpose.msra.mxu0 0
      %3589 = vmatprep.subr.bf16.mxu0 0
      %3590 = vmatpush1.bf16.xpose.msra.mxu0 0
      %3591 = vmatprep.subr.bf16.mxu0 0
      %3592 = vmatpush1.bf16.xpose.msra.mxu0 0
      %3593 = vmatprep.subr.bf16.mxu0 0
      %3594 = vmatpush1.bf16.xpose.msra.mxu0 0
      %3595 = vmatprep.subr.bf16.mxu0 0
      %3596 = vmatpush1.bf16.xpose.msra.mxu0 0
      %3597 = vmatprep.subr.bf16.mxu0 0
      %3598 = vmatpush1.bf16.xpose.msra.mxu0 0
      %3599 = vmatprep.subr.bf16.mxu0 0
      %3600 = vmatpush1.bf16.xpose.msra.mxu0 0
      %3601 = vmatprep.subr.bf16.mxu0 0
      %3602 = vmatpush1.bf16.xpose.msra.mxu0 %v3585
      %3603 = vmatprep.subr.bf16.mxu0 0
      %3604 = vmatpush2.bf16.xpose.msra.mxu0 0
      %3605 = vmatprep.subr.bf16.mxu0 0
      %3606 = vmatpush2.bf16.xpose.msra.mxu0 0
      %3607 = vmatprep.subr.bf16.mxu0 0
      %3608 = vmatpush2.bf16.xpose.msra.mxu0 0
      %3609 = vmatprep.subr.bf16.mxu0 0
      %3610 = vmatpush2.bf16.xpose.msra.mxu0 0
      %3611 = vmatprep.subr.bf16.mxu0 0
      %3612 = vmatpush2.bf16.xpose.msra.mxu0 0
      %3613 = vmatprep.subr.bf16.mxu0 0
      %3614 = vmatpush2.bf16.xpose.msra.mxu0 0
      %3615 = vmatprep.subr.bf16.mxu0 0
      %3616 = vmatpush2.bf16.xpose.msra.mxu0 0
      %3617 = vmatprep.subr.bf16.mxu0 0
      %3618 = vmatpush2.bf16.xpose.msra.mxu0 0
      %3619 = vmatprep.mubr.bf16.mxu0 0
      %3620 = vmatmul.mubr.bf16.gmra.mxu0 %v3582
      %v3621 = vpop.f32.mrf.mxu0
      %v3622 = vadd.f32 0.0, %v3621
      %v3623 = vpop.f32.mrf.mxu0
      %v3624 = vpop.f32.mrf.mxu0
      %v3625 = vpop.f32.mrf.mxu0
      %3626 = vdwg.mxu0
      %v3627 = vmul.f32 %v3622, 0.35355338
      %v3628 = vadd.f32 %v3627, %v3511
      %v3629 = vsel %vm1246, %v3628, -inf
      %3630 = vmax.xlane.f32.xlu0 %v3629
      %v3631 = vpop.xlane.xlu0 %3630
      %v3632 = vsub.f32 %v3628, %v3631
      %v3633 = vmul.f32 %v3632, 1.442695
      %v3634 = vpow.pop %v3633
      %v3635 = vsel %vm1246, %v3634, 0.0
      %3636 = vadd.xlane.f32.xlu0 %v3635
      %v3637 = vpop.xlane.xlu0 %3636
      %v3638 = vrcp.pop %v3637
      %v3639 = vmul.f32 %v3634, %v3638
      %v3640 = vpack.c.bf16 %v3639, %v3639
      %3641 = vrot.lane.b32.xlu0 %v3459, 88
      %v3642 = vpop.permute.xlu0 %3641
      %v3644 = vsel %vm1246, %v3640, 0
      %v3647 = vsel %vm1312, %v3642, 0
      %3649 = vmatprep.subr.bf16.mxu0 0
      %3650 = vmatpush1.bf16.msra.mxu0 0
      %3651 = vmatprep.subr.bf16.mxu0 0
      %3652 = vmatpush1.bf16.msra.mxu0 0
      %3653 = vmatprep.subr.bf16.mxu0 0
      %3654 = vmatpush1.bf16.msra.mxu0 0
      %3655 = vmatprep.subr.bf16.mxu0 0
      %3656 = vmatpush1.bf16.msra.mxu0 0
      %3657 = vmatprep.subr.bf16.mxu0 0
      %3658 = vmatpush1.bf16.msra.mxu0 0
      %3659 = vmatprep.subr.bf16.mxu0 0
      %3660 = vmatpush1.bf16.msra.mxu0 0
      %3661 = vmatprep.subr.bf16.mxu0 0
      %3662 = vmatpush1.bf16.msra.mxu0 0
      %3663 = vmatprep.subr.bf16.mxu0 0
      %3664 = vmatpush1.bf16.msra.mxu0 %v3647
      %3665 = vmatprep.subr.bf16.mxu0 0
      %3666 = vmatpush2.bf16.msra.mxu0 0
      %3667 = vmatprep.subr.bf16.mxu0 0
      %3668 = vmatpush2.bf16.msra.mxu0 0
      %3669 = vmatprep.subr.bf16.mxu0 0
      %3670 = vmatpush2.bf16.msra.mxu0 0
      %3671 = vmatprep.subr.bf16.mxu0 0
      %3672 = vmatpush2.bf16.msra.mxu0 0
      %3673 = vmatprep.subr.bf16.mxu0 0
      %3674 = vmatpush2.bf16.msra.mxu0 0
      %3675 = vmatprep.subr.bf16.mxu0 0
      %3676 = vmatpush2.bf16.msra.mxu0 0
      %3677 = vmatprep.subr.bf16.mxu0 0
      %3678 = vmatpush2.bf16.msra.mxu0 0
      %3679 = vmatprep.subr.bf16.mxu0 0
      %3680 = vmatpush2.bf16.msra.mxu0 0
      %3681 = vmatprep.mubr.bf16.mxu0 0
      %3682 = vmatmul.mubr.bf16.gmra.mxu0 %v3644
      %v3683 = vpop.f32.mrf.mxu0
      %v3684 = vadd.f32 0.0, %v3683
      %v3685 = vpop.f32.mrf.mxu0
      %v3686 = vpop.f32.mrf.mxu0
      %v3687 = vpop.f32.mrf.mxu0
      %3688 = vdwg.mxu0
      %v3689 = vpack.c.bf16 %v3684, %v3684
      %v3691 = vsel %vm1246, %v3689, 0
      %3693 = vmatprep.subr.bf16.mxu0 0
      %3694 = vmatpush1.bf16.xpose.msra.mxu0 0
      %3695 = vmatprep.subr.bf16.mxu0 0
      %3696 = vmatpush1.bf16.xpose.msra.mxu0 0
      %3697 = vmatprep.subr.bf16.mxu0 0
      %3698 = vmatpush1.bf16.xpose.msra.mxu0 0
      %3699 = vmatprep.subr.bf16.mxu0 0
      %3700 = vmatpush1.bf16.xpose.msra.mxu0 0
      %3701 = vmatprep.subr.bf16.mxu0 0
      %3702 = vmatpush1.bf16.xpose.msra.mxu0 0
      %3703 = vmatprep.subr.bf16.mxu0 0
      %3704 = vmatpush1.bf16.xpose.msra.mxu0 0
      %3705 = vmatprep.subr.bf16.mxu0 0
      %3706 = vmatpush1.bf16.xpose.msra.mxu0 %v3031
      %3707 = vmatprep.subr.bf16.mxu0 0
      %3708 = vmatpush1.bf16.xpose.msra.mxu0 %v3028
      %3709 = vmatprep.subr.bf16.mxu0 0
      %3710 = vmatpush2.bf16.xpose.msra.mxu0 0
      %3711 = vmatprep.subr.bf16.mxu0 0
      %3712 = vmatpush2.bf16.xpose.msra.mxu0 0
      %3713 = vmatprep.subr.bf16.mxu0 0
      %3714 = vmatpush2.bf16.xpose.msra.mxu0 0
      %3715 = vmatprep.subr.bf16.mxu0 0
      %3716 = vmatpush2.bf16.xpose.msra.mxu0 0
      %3717 = vmatprep.subr.bf16.mxu0 0
      %3718 = vmatpush2.bf16.xpose.msra.mxu0 0
      %3719 = vmatprep.subr.bf16.mxu0 0
      %3720 = vmatpush2.bf16.xpose.msra.mxu0 0
      %3721 = vmatprep.subr.bf16.mxu0 0
      %3722 = vmatpush2.bf16.xpose.msra.mxu0 0
      %3723 = vmatprep.subr.bf16.mxu0 0
      %3724 = vmatpush2.bf16.xpose.msra.mxu0 0
      %3725 = vmatprep.mubr.bf16.mxu0 0
      %3726 = vmatmul.mubr.bf16.gmra.mxu0 %v3691
      %v3727 = vpop.f32.mrf.mxu0
      %v3728 = vadd.f32 0.0, %v3727
      %v3729 = vpop.f32.mrf.mxu0
      %v3730 = vpop.f32.mrf.mxu0
      %v3731 = vpop.f32.mrf.mxu0
      %3732 = vdwg.mxu0
      %v3734 = vsel %vm1246, %v3575, 0
      %3736 = vmatprep.subr.bf16.mxu0 0
      %3737 = vmatpush1.bf16.xpose.msra.mxu0 0
      %3738 = vmatprep.subr.bf16.mxu0 0
      %3739 = vmatpush1.bf16.xpose.msra.mxu0 0
      %3740 = vmatprep.subr.bf16.mxu0 0
      %3741 = vmatpush1.bf16.xpose.msra.mxu0 0
      %3742 = vmatprep.subr.bf16.mxu0 0
      %3743 = vmatpush1.bf16.xpose.msra.mxu0 0
      %3744 = vmatprep.subr.bf16.mxu0 0
      %3745 = vmatpush1.bf16.xpose.msra.mxu0 0
      %3746 = vmatprep.subr.bf16.mxu0 0
      %3747 = vmatpush1.bf16.xpose.msra.mxu0 0
      %3748 = vmatprep.subr.bf16.mxu0 0
      %3749 = vmatpush1.bf16.xpose.msra.mxu0 %v3080
      %3750 = vmatprep.subr.bf16.mxu0 0
      %3751 = vmatpush1.bf16.xpose.msra.mxu0 %v3077
      %3752 = vmatprep.subr.bf16.mxu0 0
      %3753 = vmatpush2.bf16.xpose.msra.mxu0 0
      %3754 = vmatprep.subr.bf16.mxu0 0
      %3755 = vmatpush2.bf16.xpose.msra.mxu0 0
      %3756 = vmatprep.subr.bf16.mxu0 0
      %3757 = vmatpush2.bf16.xpose.msra.mxu0 0
      %3758 = vmatprep.subr.bf16.mxu0 0
      %3759 = vmatpush2.bf16.xpose.msra.mxu0 0
      %3760 = vmatprep.subr.bf16.mxu0 0
      %3761 = vmatpush2.bf16.xpose.msra.mxu0 0
      %3762 = vmatprep.subr.bf16.mxu0 0
      %3763 = vmatpush2.bf16.xpose.msra.mxu0 0
      %3764 = vmatprep.subr.bf16.mxu0 0
      %3765 = vmatpush2.bf16.xpose.msra.mxu0 0
      %3766 = vmatprep.subr.bf16.mxu0 0
      %3767 = vmatpush2.bf16.xpose.msra.mxu0 0
      %3768 = vmatprep.mubr.bf16.mxu0 0
      %3769 = vmatmul.mubr.bf16.gmra.mxu0 %v3734
      %v3770 = vpop.f32.mrf.mxu0
      %v3771 = vadd.f32 %v3728, %v3770
      %v3772 = vpop.f32.mrf.mxu0
      %v3773 = vpop.f32.mrf.mxu0
      %v3774 = vpop.f32.mrf.mxu0
      %3775 = vdwg.mxu0
      %3776 = vrot.lane.b32.xlu0 %v3458, 112
      %v3777 = vpop.permute.xlu0 %3776
      %3778 = vrot.lane.b32.xlu0 %v3459, 112
      %v3779 = vpop.permute.xlu0 %3778
      %v3781 = vsel %vm1246, %v3777, 0
      %v3784 = vsel %vm1246, %v3779, 0
      %3786 = vmatprep.subr.bf16.mxu0 0
      %3787 = vmatpush1.bf16.xpose.msra.mxu0 0
      %3788 = vmatprep.subr.bf16.mxu0 0
      %3789 = vmatpush1.bf16.xpose.msra.mxu0 0
      %3790 = vmatprep.subr.bf16.mxu0 0
      %3791 = vmatpush1.bf16.xpose.msra.mxu0 0
      %3792 = vmatprep.subr.bf16.mxu0 0
      %3793 = vmatpush1.bf16.xpose.msra.mxu0 0
      %3794 = vmatprep.subr.bf16.mxu0 0
      %3795 = vmatpush1.bf16.xpose.msra.mxu0 0
      %3796 = vmatprep.subr.bf16.mxu0 0
      %3797 = vmatpush1.bf16.xpose.msra.mxu0 0
      %3798 = vmatprep.subr.bf16.mxu0 0
      %3799 = vmatpush1.bf16.xpose.msra.mxu0 0
      %3800 = vmatprep.subr.bf16.mxu0 0
      %3801 = vmatpush1.bf16.xpose.msra.mxu0 %v3784
      %3802 = vmatprep.subr.bf16.mxu0 0
      %3803 = vmatpush2.bf16.xpose.msra.mxu0 0
      %3804 = vmatprep.subr.bf16.mxu0 0
      %3805 = vmatpush2.bf16.xpose.msra.mxu0 0
      %3806 = vmatprep.subr.bf16.mxu0 0
      %3807 = vmatpush2.bf16.xpose.msra.mxu0 0
      %3808 = vmatprep.subr.bf16.mxu0 0
      %3809 = vmatpush2.bf16.xpose.msra.mxu0 0
      %3810 = vmatprep.subr.bf16.mxu0 0
      %3811 = vmatpush2.bf16.xpose.msra.mxu0 0
      %3812 = vmatprep.subr.bf16.mxu0 0
      %3813 = vmatpush2.bf16.xpose.msra.mxu0 0
      %3814 = vmatprep.subr.bf16.mxu0 0
      %3815 = vmatpush2.bf16.xpose.msra.mxu0 0
      %3816 = vmatprep.subr.bf16.mxu0 0
      %3817 = vmatpush2.bf16.xpose.msra.mxu0 0
      %3818 = vmatprep.mubr.bf16.mxu0 0
      %3819 = vmatmul.mubr.bf16.gmra.mxu0 %v3781
      %v3820 = vpop.f32.mrf.mxu0
      %v3821 = vadd.f32 0.0, %v3820
      %v3822 = vpop.f32.mrf.mxu0
      %v3823 = vpop.f32.mrf.mxu0
      %v3824 = vpop.f32.mrf.mxu0
      %3825 = vdwg.mxu0
      %v3826 = vmul.f32 %v3821, 0.35355338
      %v3827 = vadd.f32 %v3826, %v3511
      %v3828 = vsel %vm1246, %v3827, -inf
      %3829 = vmax.xlane.f32.xlu0 %v3828
      %v3830 = vpop.xlane.xlu0 %3829
      %v3831 = vsub.f32 %v3827, %v3830
      %v3832 = vmul.f32 %v3831, 1.442695
      %v3833 = vpow.pop %v3832
      %v3834 = vsel %vm1246, %v3833, 0.0
      %3835 = vadd.xlane.f32.xlu0 %v3834
      %v3836 = vpop.xlane.xlu0 %3835
      %v3837 = vrcp.pop %v3836
      %v3838 = vmul.f32 %v3833, %v3837
      %v3839 = vpack.c.bf16 %v3838, %v3838
      %3840 = vrot.lane.b32.xlu0 %v3459, 80
      %v3841 = vpop.permute.xlu0 %3840
      %v3843 = vsel %vm1246, %v3839, 0
      %v3846 = vsel %vm1312, %v3841, 0
      %3848 = vmatprep.subr.bf16.mxu0 0
      %3849 = vmatpush1.bf16.msra.mxu0 0
      %3850 = vmatprep.subr.bf16.mxu0 0
      %3851 = vmatpush1.bf16.msra.mxu0 0
      %3852 = vmatprep.subr.bf16.mxu0 0
      %3853 = vmatpush1.bf16.msra.mxu0 0
      %3854 = vmatprep.subr.bf16.mxu0 0
      %3855 = vmatpush1.bf16.msra.mxu0 0
      %3856 = vmatprep.subr.bf16.mxu0 0
      %3857 = vmatpush1.bf16.msra.mxu0 0
      %3858 = vmatprep.subr.bf16.mxu0 0
      %3859 = vmatpush1.bf16.msra.mxu0 0
      %3860 = vmatprep.subr.bf16.mxu0 0
      %3861 = vmatpush1.bf16.msra.mxu0 0
      %3862 = vmatprep.subr.bf16.mxu0 0
      %3863 = vmatpush1.bf16.msra.mxu0 %v3846
      %3864 = vmatprep.subr.bf16.mxu0 0
      %3865 = vmatpush2.bf16.msra.mxu0 0
      %3866 = vmatprep.subr.bf16.mxu0 0
      %3867 = vmatpush2.bf16.msra.mxu0 0
      %3868 = vmatprep.subr.bf16.mxu0 0
      %3869 = vmatpush2.bf16.msra.mxu0 0
      %3870 = vmatprep.subr.bf16.mxu0 0
      %3871 = vmatpush2.bf16.msra.mxu0 0
      %3872 = vmatprep.subr.bf16.mxu0 0
      %3873 = vmatpush2.bf16.msra.mxu0 0
      %3874 = vmatprep.subr.bf16.mxu0 0
      %3875 = vmatpush2.bf16.msra.mxu0 0
      %3876 = vmatprep.subr.bf16.mxu0 0
      %3877 = vmatpush2.bf16.msra.mxu0 0
      %3878 = vmatprep.subr.bf16.mxu0 0
      %3879 = vmatpush2.bf16.msra.mxu0 0
      %3880 = vmatprep.mubr.bf16.mxu0 0
      %3881 = vmatmul.mubr.bf16.gmra.mxu0 %v3843
      %v3882 = vpop.f32.mrf.mxu0
      %v3883 = vadd.f32 0.0, %v3882
      %v3884 = vpop.f32.mrf.mxu0
      %v3885 = vpop.f32.mrf.mxu0
      %v3886 = vpop.f32.mrf.mxu0
      %3887 = vdwg.mxu0
      %v3888 = vpack.c.bf16 %v3883, %v3883
      %v3890 = vsel %vm1246, %v3888, 0
      %3892 = vmatprep.subr.bf16.mxu0 0
      %3893 = vmatpush1.bf16.xpose.msra.mxu0 0
      %3894 = vmatprep.subr.bf16.mxu0 0
      %3895 = vmatpush1.bf16.xpose.msra.mxu0 0
      %3896 = vmatprep.subr.bf16.mxu0 0
      %3897 = vmatpush1.bf16.xpose.msra.mxu0 0
      %3898 = vmatprep.subr.bf16.mxu0 0
      %3899 = vmatpush1.bf16.xpose.msra.mxu0 0
      %3900 = vmatprep.subr.bf16.mxu0 0
      %3901 = vmatpush1.bf16.xpose.msra.mxu0 0
      %3902 = vmatprep.subr.bf16.mxu0 0
      %3903 = vmatpush1.bf16.xpose.msra.mxu0 0
      %3904 = vmatprep.subr.bf16.mxu0 0
      %3905 = vmatpush1.bf16.xpose.msra.mxu0 %v3246
      %3906 = vmatprep.subr.bf16.mxu0 0
      %3907 = vmatpush1.bf16.xpose.msra.mxu0 %v3243
      %3908 = vmatprep.subr.bf16.mxu0 0
      %3909 = vmatpush2.bf16.xpose.msra.mxu0 0
      %3910 = vmatprep.subr.bf16.mxu0 0
      %3911 = vmatpush2.bf16.xpose.msra.mxu0 0
      %3912 = vmatprep.subr.bf16.mxu0 0
      %3913 = vmatpush2.bf16.xpose.msra.mxu0 0
      %3914 = vmatprep.subr.bf16.mxu0 0
      %3915 = vmatpush2.bf16.xpose.msra.mxu0 0
      %3916 = vmatprep.subr.bf16.mxu0 0
      %3917 = vmatpush2.bf16.xpose.msra.mxu0 0
      %3918 = vmatprep.subr.bf16.mxu0 0
      %3919 = vmatpush2.bf16.xpose.msra.mxu0 0
      %3920 = vmatprep.subr.bf16.mxu0 0
      %3921 = vmatpush2.bf16.xpose.msra.mxu0 0
      %3922 = vmatprep.subr.bf16.mxu0 0
      %3923 = vmatpush2.bf16.xpose.msra.mxu0 0
      %3924 = vmatprep.mubr.bf16.mxu0 0
      %3925 = vmatmul.mubr.bf16.gmra.mxu0 %v3890
      %v3926 = vpop.f32.mrf.mxu0
      %v3927 = vadd.f32 0.0, %v3926
      %v3928 = vpop.f32.mrf.mxu0
      %v3929 = vpop.f32.mrf.mxu0
      %v3930 = vpop.f32.mrf.mxu0
      %3931 = vdwg.mxu0
      %v3932 = vadd.f32 %v3771, %v3927
      %3933 = vrot.lane.b32.xlu0 %v3458, 104
      %v3934 = vpop.permute.xlu0 %3933
      %3935 = vrot.lane.b32.xlu0 %v3459, 104
      %v3936 = vpop.permute.xlu0 %3935
      %v3938 = vsel %vm1246, %v3934, 0
      %v3941 = vsel %vm1246, %v3936, 0
      %3943 = vmatprep.subr.bf16.mxu0 0
      %3944 = vmatpush1.bf16.xpose.msra.mxu0 0
      %3945 = vmatprep.subr.bf16.mxu0 0
      %3946 = vmatpush1.bf16.xpose.msra.mxu0 0
      %3947 = vmatprep.subr.bf16.mxu0 0
      %3948 = vmatpush1.bf16.xpose.msra.mxu0 0
      %3949 = vmatprep.subr.bf16.mxu0 0
      %3950 = vmatpush1.bf16.xpose.msra.mxu0 0
      %3951 = vmatprep.subr.bf16.mxu0 0
      %3952 = vmatpush1.bf16.xpose.msra.mxu0 0
      %3953 = vmatprep.subr.bf16.mxu0 0
      %3954 = vmatpush1.bf16.xpose.msra.mxu0 0
      %3955 = vmatprep.subr.bf16.mxu0 0
      %3956 = vmatpush1.bf16.xpose.msra.mxu0 0
      %3957 = vmatprep.subr.bf16.mxu0 0
      %3958 = vmatpush1.bf16.xpose.msra.mxu0 %v3941
      %3959 = vmatprep.subr.bf16.mxu0 0
      %3960 = vmatpush2.bf16.xpose.msra.mxu0 0
      %3961 = vmatprep.subr.bf16.mxu0 0
      %3962 = vmatpush2.bf16.xpose.msra.mxu0 0
      %3963 = vmatprep.subr.bf16.mxu0 0
      %3964 = vmatpush2.bf16.xpose.msra.mxu0 0
      %3965 = vmatprep.subr.bf16.mxu0 0
      %3966 = vmatpush2.bf16.xpose.msra.mxu0 0
      %3967 = vmatprep.subr.bf16.mxu0 0
      %3968 = vmatpush2.bf16.xpose.msra.mxu0 0
      %3969 = vmatprep.subr.bf16.mxu0 0
      %3970 = vmatpush2.bf16.xpose.msra.mxu0 0
      %3971 = vmatprep.subr.bf16.mxu0 0
      %3972 = vmatpush2.bf16.xpose.msra.mxu0 0
      %3973 = vmatprep.subr.bf16.mxu0 0
      %3974 = vmatpush2.bf16.xpose.msra.mxu0 0
      %3975 = vmatprep.mubr.bf16.mxu0 0
      %3976 = vmatmul.mubr.bf16.gmra.mxu0 %v3938
      %v3977 = vpop.f32.mrf.mxu0
      %v3978 = vadd.f32 0.0, %v3977
      %v3979 = vpop.f32.mrf.mxu0
      %v3980 = vpop.f32.mrf.mxu0
      %v3981 = vpop.f32.mrf.mxu0
      %3982 = vdwg.mxu0
      %v3983 = vmul.f32 %v3978, 0.35355338
      %v3984 = vadd.f32 %v3983, %v3511
      %v3985 = vsel %vm1246, %v3984, -inf
      %3986 = vmax.xlane.f32.xlu0 %v3985
      %v3987 = vpop.xlane.xlu0 %3986
      %v3988 = vsub.f32 %v3984, %v3987
      %v3989 = vmul.f32 %v3988, 1.442695
      %v3990 = vpow.pop %v3989
      %v3991 = vsel %vm1246, %v3990, 0.0
      %3992 = vadd.xlane.f32.xlu0 %v3991
      %v3993 = vpop.xlane.xlu0 %3992
      %v3994 = vrcp.pop %v3993
      %v3995 = vmul.f32 %v3990, %v3994
      %v3996 = vpack.c.bf16 %v3995, %v3995
      %3997 = vrot.lane.b32.xlu0 %v3459, 72
      %v3998 = vpop.permute.xlu0 %3997
      %v4000 = vsel %vm1246, %v3996, 0
      %v4003 = vsel %vm1312, %v3998, 0
      %4005 = vmatprep.subr.bf16.mxu0 0
      %4006 = vmatpush1.bf16.msra.mxu0 0
      %4007 = vmatprep.subr.bf16.mxu0 0
      %4008 = vmatpush1.bf16.msra.mxu0 0
      %4009 = vmatprep.subr.bf16.mxu0 0
      %4010 = vmatpush1.bf16.msra.mxu0 0
      %4011 = vmatprep.subr.bf16.mxu0 0
      %4012 = vmatpush1.bf16.msra.mxu0 0
      %4013 = vmatprep.subr.bf16.mxu0 0
      %4014 = vmatpush1.bf16.msra.mxu0 0
      %4015 = vmatprep.subr.bf16.mxu0 0
      %4016 = vmatpush1.bf16.msra.mxu0 0
      %4017 = vmatprep.subr.bf16.mxu0 0
      %4018 = vmatpush1.bf16.msra.mxu0 0
      %4019 = vmatprep.subr.bf16.mxu0 0
      %4020 = vmatpush1.bf16.msra.mxu0 %v4003
      %4021 = vmatprep.subr.bf16.mxu0 0
      %4022 = vmatpush2.bf16.msra.mxu0 0
      %4023 = vmatprep.subr.bf16.mxu0 0
      %4024 = vmatpush2.bf16.msra.mxu0 0
      %4025 = vmatprep.subr.bf16.mxu0 0
      %4026 = vmatpush2.bf16.msra.mxu0 0
      %4027 = vmatprep.subr.bf16.mxu0 0
      %4028 = vmatpush2.bf16.msra.mxu0 0
      %4029 = vmatprep.subr.bf16.mxu0 0
      %4030 = vmatpush2.bf16.msra.mxu0 0
      %4031 = vmatprep.subr.bf16.mxu0 0
      %4032 = vmatpush2.bf16.msra.mxu0 0
      %4033 = vmatprep.subr.bf16.mxu0 0
      %4034 = vmatpush2.bf16.msra.mxu0 0
      %4035 = vmatprep.subr.bf16.mxu0 0
      %4036 = vmatpush2.bf16.msra.mxu0 0
      %4037 = vmatprep.mubr.bf16.mxu0 0
      %4038 = vmatmul.mubr.bf16.gmra.mxu0 %v4000
      %v4039 = vpop.f32.mrf.mxu0
      %v4040 = vadd.f32 0.0, %v4039
      %v4041 = vpop.f32.mrf.mxu0
      %v4042 = vpop.f32.mrf.mxu0
      %v4043 = vpop.f32.mrf.mxu0
      %4044 = vdwg.mxu0
      %v4045 = vpack.c.bf16 %v4040, %v4040
      %v4047 = vsel %vm1246, %v4045, 0
      %4049 = vmatprep.subr.bf16.mxu0 0
      %4050 = vmatpush1.bf16.xpose.msra.mxu0 0
      %4051 = vmatprep.subr.bf16.mxu0 0
      %4052 = vmatpush1.bf16.xpose.msra.mxu0 0
      %4053 = vmatprep.subr.bf16.mxu0 0
      %4054 = vmatpush1.bf16.xpose.msra.mxu0 0
      %4055 = vmatprep.subr.bf16.mxu0 0
      %4056 = vmatpush1.bf16.xpose.msra.mxu0 0
      %4057 = vmatprep.subr.bf16.mxu0 0
      %4058 = vmatpush1.bf16.xpose.msra.mxu0 0
      %4059 = vmatprep.subr.bf16.mxu0 0
      %4060 = vmatpush1.bf16.xpose.msra.mxu0 0
      %4061 = vmatprep.subr.bf16.mxu0 0
      %4062 = vmatpush1.bf16.xpose.msra.mxu0 %v3413
      %4063 = vmatprep.subr.bf16.mxu0 0
      %4064 = vmatpush1.bf16.xpose.msra.mxu0 %v3410
      %4065 = vmatprep.subr.bf16.mxu0 0
      %4066 = vmatpush2.bf16.xpose.msra.mxu0 0
      %4067 = vmatprep.subr.bf16.mxu0 0
      %4068 = vmatpush2.bf16.xpose.msra.mxu0 0
      %4069 = vmatprep.subr.bf16.mxu0 0
      %4070 = vmatpush2.bf16.xpose.msra.mxu0 0
      %4071 = vmatprep.subr.bf16.mxu0 0
      %4072 = vmatpush2.bf16.xpose.msra.mxu0 0
      %4073 = vmatprep.subr.bf16.mxu0 0
      %4074 = vmatpush2.bf16.xpose.msra.mxu0 0
      %4075 = vmatprep.subr.bf16.mxu0 0
      %4076 = vmatpush2.bf16.xpose.msra.mxu0 0
      %4077 = vmatprep.subr.bf16.mxu0 0
      %4078 = vmatpush2.bf16.xpose.msra.mxu0 0
      %4079 = vmatprep.subr.bf16.mxu0 0
      %4080 = vmatpush2.bf16.xpose.msra.mxu0 0
      %4081 = vmatprep.mubr.bf16.mxu0 0
      %4082 = vmatmul.mubr.bf16.gmra.mxu0 %v4047
      %v4083 = vpop.f32.mrf.mxu0
      %v4084 = vadd.f32 0.0, %v4083
      %v4085 = vpop.f32.mrf.mxu0
      %v4086 = vpop.f32.mrf.mxu0
      %v4087 = vpop.f32.mrf.mxu0
      %4088 = vdwg.mxu0
      %v4089 = vadd.f32 %v3932, %v4084
      %v4090 = vadd.f32 %v2553, %v3455
      %v4091 = vadd.f32 %v2554, %v4089
      %v4092 = vld [vmem:[%s1024] sm:$0x1]
      %v4094 = vlaneseq
      %v4095 = vshrl.u32 %v4094, 7
      %v4096 = vsub.s32 0, %v4095
      %v4097 = vrot.slane %v4092, %v4096
      %v4099 = vadd.f32 %v4090, %v4097
      %v4100 = vadd.f32 %v4091, %v4097
      %v4101 = vld [vmem:[%s1028] sm:$0x3]
      %v4102 = vsel %vm1070, %v4099, 0.0
      %4103 = vadd.xlane.f32.xlu0 %v4102
      %v4104 = vpop.xlane.xlu0 %4103
      %v4105 = vsel %vm1070, %v4100, 0.0
      %4106 = vadd.xlane.f32.xlu0 %v4105
      %v4107 = vpop.xlane.xlu0 %4106
      %v4108 = vmul.f32 %v4104, %v1077
      %v4109 = vmul.f32 %v4107, %v1077
      %v4110 = vsub.f32 %v4099, %v4108
      %v4111 = vsub.f32 %v4100, %v4109
      %v4112 = vmul.f32 %v4110, %v4110
      %v4113 = vmul.f32 %v4111, %v4111
      %v4114 = vsel %vm1070, %v4112, 0.0
      %4115 = vadd.xlane.f32.xlu0 %v4114
      %v4116 = vpop.xlane.xlu0 %4115
      %v4117 = vsel %vm1070, %v4113, 0.0
      %4118 = vadd.xlane.f32.xlu0 %v4117
      %v4119 = vpop.xlane.xlu0 %4118
      %v4120 = vmul.f32 %v4116, 0.032258064
      %v4121 = vmul.f32 %v4119, 0.032258064
      %v4122 = vrsqrt.pop %v4120
      %v4123 = vmul.f32 %v4120, %v4122
      %vm4124 = vcmp.eq.f32.partialorder %v4120, inf
      %v4125 = vsel %vm4124, %v4120, %v4123
      %vm4126 = vcmp.eq.f32.partialorder %v4120, 0.0
      %v4127 = vand.u32 %v4120, 2147483648
      %v4128 = vsel %vm4126, %v4127, %v4125
      %v4129 = vrsqrt.pop %v4121
      %v4130 = vmul.f32 %v4121, %v4129
      %vm4131 = vcmp.eq.f32.partialorder %v4121, inf
      %v4132 = vsel %vm4131, %v4121, %v4130
      %vm4133 = vcmp.eq.f32.partialorder %v4121, 0.0
      %v4134 = vand.u32 %v4121, 2147483648
      %v4135 = vsel %vm4133, %v4134, %v4132
      %v4136 = vadd.f32 %v4128, 1e-06
      %v4137 = vadd.f32 %v4135, 1e-06
      %v4138 = vrcp.pop %v4136
      %v4139 = vrcp.pop %v4137
      %v4140 = vlaneseq
      %v4141 = vshrl.u32 %v4140, 7
      %v4142 = vsub.s32 0, %v4141
      %v4143 = vrot.slane %v4101, %v4142
      %v4144 = vmul.f32 %v4143, %v4110
      %v4145 = vmul.f32 %v4143, %v4111
      %v4146 = vmul.f32 %v4144, %v4138
      %v4147 = vmul.f32 %v4145, %v4139
      %v4148 = vlaneseq
      %v4149 = vshrl.u32 %v4148, 7
      %v4150 = vsub.s32 1, %v4149
      %v4151 = vrot.slane %v4101, %v4150
      %v4152 = vadd.f32 %v4146, %v4151
      %v4153 = vadd.f32 %v4147, %v4151
      %v4154 = vld [vmem:[%s1033] sm:$0xf]
      %v4155 = vld [vmem:[%s1033 + $0x4] sm:$0xf]
      %v4156 = vld [vmem:[%s1033 + $0x8] sm:$0xf]
      %v4157 = vld [vmem:[%s1033 + $0xc] sm:$0xf]
      %v4158 = vld [vmem:[%s1033 + $0x10] sm:$0xf]
      %v4159 = vld [vmem:[%s1033 + $0x14] sm:$0xf]
      %v4160 = vld [vmem:[%s1033 + $0x18] sm:$0xf]
      %v4161 = vld [vmem:[%s1033 + $0x1c] sm:$0xf]
      %v4162 = vld [vmem:[%s1036] sm:$0x1]
      %v4163 = vpack.c.bf16 %v4153, %v4152
      %v4165 = vlaneseq
      %v4166 = vshrl.u32 %v4165, 7
      %v4167 = vsub.s32 0, %v4166
      %v4168 = vrot.slane %v4162, %v4167
      %v4178 = vunpack.c.l.b16 %v4154
      %v4179 = vunpack.c.l.b16 %v4155
      %v4180 = vunpack.c.l.b16 %v4156
      %v4181 = vunpack.c.l.b16 %v4157
      %v4182 = vunpack.c.l.b16 %v4158
      %v4183 = vunpack.c.l.b16 %v4159
      %v4184 = vunpack.c.l.b16 %v4160
      %v4185 = vunpack.c.l.b16 %v4161
      %v4186 = vpack.c.b16 %v4179, %v4178
      %v4187 = vpack.c.b16 %v4181, %v4180
      %v4188 = vpack.c.b16 %v4183, %v4182
      %v4189 = vpack.c.b16 %v4185, %v4184
      %v4191 = vsel %vm1070, %v4163, 0
      %v4194 = vsel %vm1070, %v4186, 0
      %v4197 = vsel %vm1070, %v4187, 0
      %v4200 = vsel %vm1070, %v4188, 0
      %v4203 = vsel %vm1070, %v4189, 0
      %4205 = vmatprep.subr.bf16.mxu0 0
      %4206 = vmatpush1.bf16.xpose.msra.mxu0 0
      %4207 = vmatprep.subr.bf16.mxu0 0
      %4208 = vmatpush1.bf16.xpose.msra.mxu0 0
      %4209 = vmatprep.subr.bf16.mxu0 0
      %4210 = vmatpush1.bf16.xpose.msra.mxu0 0
      %4211 = vmatprep.subr.bf16.mxu0 0
      %4212 = vmatpush1.bf16.xpose.msra.mxu0 0
      %4213 = vmatprep.subr.bf16.mxu0 0
      %4214 = vmatpush1.bf16.xpose.msra.mxu0 %v4203
      %4215 = vmatprep.subr.bf16.mxu0 0
      %4216 = vmatpush1.bf16.xpose.msra.mxu0 %v4200
      %4217 = vmatprep.subr.bf16.mxu0 0
      %4218 = vmatpush1.bf16.xpose.msra.mxu0 %v4197
      %4219 = vmatprep.subr.bf16.mxu0 0
      %4220 = vmatpush1.bf16.xpose.msra.mxu0 %v4194
      %4221 = vmatprep.subr.bf16.mxu0 0
      %4222 = vmatpush2.bf16.xpose.msra.mxu0 0
      %4223 = vmatprep.subr.bf16.mxu0 0
      %4224 = vmatpush2.bf16.xpose.msra.mxu0 0
      %4225 = vmatprep.subr.bf16.mxu0 0
      %4226 = vmatpush2.bf16.xpose.msra.mxu0 0
      %4227 = vmatprep.subr.bf16.mxu0 0
      %4228 = vmatpush2.bf16.xpose.msra.mxu0 0
      %4229 = vmatprep.subr.bf16.mxu0 0
      %4230 = vmatpush2.bf16.xpose.msra.mxu0 0
      %4231 = vmatprep.subr.bf16.mxu0 0
      %4232 = vmatpush2.bf16.xpose.msra.mxu0 0
      %4233 = vmatprep.subr.bf16.mxu0 0
      %4234 = vmatpush2.bf16.xpose.msra.mxu0 0
      %4235 = vmatprep.subr.bf16.mxu0 0
      %4236 = vmatpush2.bf16.xpose.msra.mxu0 0
      %4237 = vmatprep.mubr.bf16.mxu0 0
      %4238 = vmatmul.mubr.bf16.gmra.mxu0 %v4191
      %v4239 = vpop.f32.mrf.mxu0
      %v4240 = vadd.f32 %v4168, %v4239
      %v4241 = vpop.f32.mrf.mxu0
      %v4242 = vpop.f32.mrf.mxu0
      %v4243 = vadd.f32 %v4168, %v4242
      %v4244 = vpop.f32.mrf.mxu0
      %4245 = vdwg.mxu0
      %v4246 = vmax.f32 %v4240, 0.0
      %v4247 = vmax.f32 %v4243, 0.0
      %v4248 = vld [vmem:[%s1041] sm:$0xf]
      %v4249 = vld [vmem:[%s1041 + $0x4] sm:$0xf]
      %v4250 = vld [vmem:[%s1041 + $0x8] sm:$0xf]
      %v4251 = vld [vmem:[%s1041 + $0xc] sm:$0xf]
      %v4252 = vld [vmem:[%s1044] sm:$0x1]
      %v4253 = vpack.c.bf16 %v4247, %v4246
      %v4255 = vlaneseq
      %v4256 = vshrl.u32 %v4255, 7
      %v4257 = vsub.s32 0, %v4256
      %v4258 = vrot.slane %v4252, %v4257
      %v4264 = vunpack.c.l.b16 %v4248
      %v4265 = vunpack.c.l.b16 %v4249
      %v4266 = vunpack.c.l.b16 %v4250
      %v4267 = vunpack.c.l.b16 %v4251
      %v4268 = vpack.c.b16 %v4265, %v4264
      %v4269 = vpack.c.b16 %v4267, %v4266
      %vm4270 = vcmask 523264
      %v4272 = vsel %vm4270, %v4253, 0
      %v4275 = vsel %vm4270, %v4268, 0
      %v4278 = vsel %vm4270, %v4269, 0
      %4280 = vmatprep.subr.bf16.mxu0 0
      %4281 = vmatpush1.bf16.xpose.msra.mxu0 0
      %4282 = vmatprep.subr.bf16.mxu0 0
      %4283 = vmatpush1.bf16.xpose.msra.mxu0 0
      %4284 = vmatprep.subr.bf16.mxu0 0
      %4285 = vmatpush1.bf16.xpose.msra.mxu0 0
      %4286 = vmatprep.subr.bf16.mxu0 0
      %4287 = vmatpush1.bf16.xpose.msra.mxu0 0
      %4288 = vmatprep.subr.bf16.mxu0 0
      %4289 = vmatpush1.bf16.xpose.msra.mxu0 0
      %4290 = vmatprep.subr.bf16.mxu0 0
      %4291 = vmatpush1.bf16.xpose.msra.mxu0 0
      %4292 = vmatprep.subr.bf16.mxu0 0
      %4293 = vmatpush1.bf16.xpose.msra.mxu0 %v4278
      %4294 = vmatprep.subr.bf16.mxu0 0
      %4295 = vmatpush1.bf16.xpose.msra.mxu0 %v4275
      %4296 = vmatprep.subr.bf16.mxu0 0
      %4297 = vmatpush2.bf16.xpose.msra.mxu0 0
      %4298 = vmatprep.subr.bf16.mxu0 0
      %4299 = vmatpush2.bf16.xpose.msra.mxu0 0
      %4300 = vmatprep.subr.bf16.mxu0 0
      %4301 = vmatpush2.bf16.xpose.msra.mxu0 0
      %4302 = vmatprep.subr.bf16.mxu0 0
      %4303 = vmatpush2.bf16.xpose.msra.mxu0 0
      %4304 = vmatprep.subr.bf16.mxu0 0
      %4305 = vmatpush2.bf16.xpose.msra.mxu0 0
      %4306 = vmatprep.subr.bf16.mxu0 0
      %4307 = vmatpush2.bf16.xpose.msra.mxu0 0
      %4308 = vmatprep.subr.bf16.mxu0 0
      %4309 = vmatpush2.bf16.xpose.msra.mxu0 0
      %4310 = vmatprep.subr.bf16.mxu0 0
      %4311 = vmatpush2.bf16.xpose.msra.mxu0 0
      %4312 = vmatprep.mubr.bf16.mxu0 0
      %4313 = vmatmul.mubr.bf16.gmra.mxu0 %v4272
      %v4314 = vpop.f32.mrf.mxu0
      %v4315 = vadd.f32 %v4258, %v4314
      %v4316 = vpop.f32.mrf.mxu0
      %v4317 = vpop.f32.mrf.mxu0
      %v4318 = vadd.f32 %v4258, %v4317
      %v4319 = vpop.f32.mrf.mxu0
      %4320 = vdwg.mxu0
      %v4321 = vadd.f32 %v4099, %v4315
      %v4322 = vadd.f32 %v4100, %v4318
      %4323 = vst.msk [vmem:[#allocation2] sm:$0xff] %vm1070, %v4321
      %4324 = vst.msk [vmem:[#allocation2 + $0x8] sm:$0xff] %vm1070, %v4322
      %p4325 = scmp.eq.s32.totalorder %s38, 1
      // Predicated region
      $region113: #{transformer_forward.4} parent=107 // pred_check
        %p4326 = pneg %p4325
      $region114: #{transformer_forward.4} parent=107 // pred_check_branch
        %4328 = sbr.rel (%p4326) target = $region116
      $region115: #{transformer_forward.4} parent=107 // pred_region
        %v4329 = vld [vmem:[%s21] sm:$0x3]
        %v4330 = vsel %vm1070, %v4321, 0.0
        %4331 = vadd.xlane.f32.xlu0 %v4330
        %v4332 = vpop.xlane.xlu0 %4331
        %v4333 = vsel %vm1070, %v4322, 0.0
        %4334 = vadd.xlane.f32.xlu0 %v4333
        %v4335 = vpop.xlane.xlu0 %4334
        %v4336 = vmul.f32 %v4332, %v1077
        %v4337 = vmul.f32 %v4335, %v1077
        %v4338 = vsub.f32 %v4321, %v4336
        %v4339 = vsub.f32 %v4322, %v4337
        %v4340 = vmul.f32 %v4338, %v4338
        %v4341 = vmul.f32 %v4339, %v4339
        %v4342 = vsel %vm1070, %v4340, 0.0
        %4343 = vadd.xlane.f32.xlu0 %v4342
        %v4344 = vpop.xlane.xlu0 %4343
        %v4345 = vsel %vm1070, %v4341, 0.0
        %4346 = vadd.xlane.f32.xlu0 %v4345
        %v4347 = vpop.xlane.xlu0 %4346
        %v4348 = vmul.f32 %v4344, 0.032258064
        %v4349 = vmul.f32 %v4347, 0.032258064
        %v4350 = vrsqrt.pop %v4348
        %v4351 = vmul.f32 %v4348, %v4350
        %vm4352 = vcmp.eq.f32.partialorder %v4348, inf
        %v4353 = vsel %vm4352, %v4348, %v4351
        %vm4354 = vcmp.eq.f32.partialorder %v4348, 0.0
        %v4355 = vand.u32 %v4348, 2147483648
        %v4356 = vsel %vm4354, %v4355, %v4353
        %v4357 = vrsqrt.pop %v4349
        %v4358 = vmul.f32 %v4349, %v4357
        %vm4359 = vcmp.eq.f32.partialorder %v4349, inf
        %v4360 = vsel %vm4359, %v4349, %v4358
        %vm4361 = vcmp.eq.f32.partialorder %v4349, 0.0
        %v4362 = vand.u32 %v4349, 2147483648
        %v4363 = vsel %vm4361, %v4362, %v4360
        %v4364 = vadd.f32 %v4356, 1e-06
        %v4365 = vadd.f32 %v4363, 1e-06
        %v4366 = vrcp.pop %v4364
        %v4367 = vrcp.pop %v4365
        %v4368 = vlaneseq
        %v4369 = vshrl.u32 %v4368, 7
        %v4370 = vsub.s32 0, %v4369
        %v4371 = vrot.slane %v4329, %v4370
        %v4372 = vmul.f32 %v4371, %v4338
        %v4373 = vmul.f32 %v4371, %v4339
        %v4374 = vmul.f32 %v4372, %v4366
        %v4375 = vmul.f32 %v4373, %v4367
        %v4376 = vlaneseq
        %v4377 = vshrl.u32 %v4376, 7
        %v4378 = vsub.s32 1, %v4377
        %v4379 = vrot.slane %v4329, %v4378
        %v4380 = vadd.f32 %v4374, %v4379
        %v4381 = vadd.f32 %v4375, %v4379
        %4382 = vst.msk [vmem:[%s1049] sm:$0xff] %vm1070, %v4380
        %4383 = vst.msk [vmem:[%s1049 + $0x8] sm:$0xff] %vm1070, %v4381
      $region116: #{transformer_forward.4} parent=107 // pred_fallthru
        _
      %s4384 = smul.u32 2, %s37
      %p4385 = scmp.lt.s32.totalorder %s4384, 1
      %s4386 = scalar_select %p4385, %s4384, 1
      %s4387 = smul.addr %s4386, 8
      %s4388 = scalar_lea.vmem %s22, %s4387
      // Predicated region
      $region117: #{transformer_forward.4} parent=107 // pred_check
        %p4389 = pneg %p630
      $region118: #{transformer_forward.4} parent=107 // pred_check_branch
        %4391 = sbr.rel (%p4389) target = $region120
      $region119: #{transformer_forward.4} parent=107 // pred_region
        %s4392 = smul.u32 2, %s37
      $region120: #{transformer_forward.4} parent=107 // pred_fallthru
        _
      // Predicated region
      $region121: #{transformer_forward.4} parent=107 // pred_check
        %p4393 = pneg %p630
      $region122: #{transformer_forward.4} parent=107 // pred_check_branch
        %4395 = sbr.rel (%p4393) target = $region124
      $region123: #{transformer_forward.4} parent=107 // pred_region
        %s4396 = smul.u32 2, %s37
        %p4397 = scmp.lt.s32.totalorder %s4396, 1
        %s4398 = scalar_select %p4397, %s4396, 1
        %s4399 = smul.addr %s4398, 8
        %s4400 = scalar_lea.vmem %s22, %s4399
      $region124: #{transformer_forward.4} parent=107 // pred_fallthru
        _
    $region108: #{transformer_forward.4} parent=5 // pred_fallthru
      _
    %p4401 = scmp.le.s32.totalorder 2, %s28
    // Predicated region
    $region125: #{transformer_forward.4} parent=5 // pred_check
      %p4402 = pneg %p4401
    $region126: #{transformer_forward.4} parent=5 // pred_check_branch
      %4404 = sbr.rel (%p4402) target = $region128
    $region127: #{transformer_forward.4} parent=5 // pred_region
      %s4405 = ssub.s32 %s28, 2
    $region128: #{transformer_forward.4} parent=5 // pred_fallthru
      _
  $region6: #{transformer_forward.4} parent=0 // loop_footer
    %s32 = sadd.s32 1, %s28
  $region7: #{transformer_forward.4} parent=0 // loop_footer_branch
    %27 = sbr.rel target = $region3
  $region8: #{transformer_forward.4} parent=0 // loop_exit
    _

</llo_original>
